<compile_context>
chip_gen: v7x
topology: tpu7x:2x2x1
jax: 0.10.0
libtpu: 0.0.40
codegen_flags: <defaults>
</compile_context>

<pallas_src>
import functools

import jax
import jax.numpy as jnp
from jax.experimental import pallas as pl
from jax.experimental.pallas import tpu as pltpu

NEG_SLOPE = 0.01          # nn.LeakyReLU default negative_slope
BN_EPS = 1e-5             # nn.BatchNorm default eps
VMEM_LIMIT = 32 * 1024 * 1024


def _leaky(x):
    return jnp.maximum(x, NEG_SLOPE * x)


# ----------------------- fused DownsampleBlock kernel -----------------------

def _down_block_kernel(p1_ref, w_ab_ref, s_ab_ref, w1b_ref, s1b_ref,
                       o_ref, pad_ref, *, ho, wo, cout):
    """One whole DownsampleBlock for a single sample, entirely in VMEM.

    Stage 1: ONE GEMM computes both branches:
               cols [0, cout)      = conv1a(3x3, s2) + BN   (-> LeakyReLU)
               cols [cout, 2*cout) = conv2a(1x1, s2) + BN   (residual, linear)
             (the 1x1 branch uses only the centre tap of the 3x3 im2col patch,
              zero-padded into the combined weight matrix at init).
    Stage 2: conv1b(3x3, s1) + BN on `ha`, computed row-by-row from a padded
             VMEM scratch (no HBM round trip), + residual + LeakyReLU.
    """
    # ---- stage 1: combined GEMM (bf16 operands, f32 accumulate) ----
    y1 = jnp.dot(p1_ref[...].astype(jnp.bfloat16), w_ab_ref[...],
                 preferred_element_type=jnp.float32) + s_ab_ref[...]
    ha = _leaky(y1[:, :cout])              # (ho*wo, cout) branch A, activated
    hb = y1[:, cout:2 * cout]              # (ho*wo, cout) residual branch

    # ---- stage 2: zero-padded scratch for the stride-1 3x3 conv (pad=1) ----
    pad_ref[...] = jnp.zeros(pad_ref.shape, pad_ref.dtype)
    for y in range(ho):
        pad_ref[y + 1, 1:wo + 1, :] = ha[y * wo:(y + 1) * wo, :]

    # conv1b + BN shift + residual + LeakyReLU, one output row at a time
    # (avoids in-kernel reshapes; 9 small MXU dots per row, fully unrolled).
    for y in range(ho):
        acc = s1b_ref[...] + hb[y * wo:(y + 1) * wo, :]        # (wo, cout) f32
        for di in range(3):
            for dj in range(3):
                a = pad_ref[y + di, dj:dj + wo, :].astype(jnp.bfloat16)
                acc = acc + jnp.dot(a, w1b_ref[di * 3 + dj],
                                    preferred_element_type=jnp.float32)
        o_ref[y * wo:(y + 1) * wo, :] = _leaky(acc)


# --------------------------- fused FC-head kernel ---------------------------

def _fc_kernel(x_ref, w1_ref, s1_ref, w2_ref, b2_ref, o_ref):
    # fc1 (BN1d scale folded into w1) + shift + LeakyReLU
    z = jnp.dot(x_ref[...].astype(jnp.bfloat16), w1_ref[...],
                preferred_element_type=jnp.float32) + s1_ref[...]
    h = _leaky(z)
    # fc2 + Sigmoid
    z2 = jnp.dot(h.astype(jnp.bfloat16), w2_ref[...],
                 preferred_element_type=jnp.float32) + b2_ref[...]
    o_ref[...] = 1.0 / (1.0 + jnp.exp(-z2))


# ------------------------------ JAX glue -----------------------------------

def im2col(x_nhwc, k, stride, pad):
    """kxk patches -> (N*Ho*Wo, k*k*C); tap-index major, channel minor."""
    if pad:
        x_nhwc = jnp.pad(x_nhwc, ((0, 0), (pad, pad), (pad, pad), (0, 0)))
    n, h, w, c = x_nhwc.shape
    ho = (h - k) // stride + 1
    wo = (w - k) // stride + 1
    patches = []
    for i in range(k):
        for j in range(k):
            patches.append(
                x_nhwc[:, i:i + ho * stride:stride, j:j + wo * stride:stride, :])
    p = jnp.stack(patches, axis=3)                       # (N, Ho, Wo, k*k, C)
    return p.reshape(n * ho * wo, k * k * c), (n, ho, wo)


def downsample_block(x_nhwc, prm):
    """Whole DownsampleBlock as ONE pallas_call, batch-parallel grid."""
    n, _, _, cin = x_nhwc.shape
    cout = prm["w_ab"].shape[1] // 2
    p1, (_, ho, wo) = im2col(x_nhwc, k=3, stride=2, pad=1)   # (n*ho*wo, 9*cin)
    m1 = ho * wo
    kk = 9 * cin

    kernel = functools.partial(_down_block_kernel, ho=ho, wo=wo, cout=cout)
    args = (p1, prm["w_ab"], prm["s_ab"], prm["w1b"], prm["s1b"])
    flops = 2 * n * m1 * kk * (2 * cout) + 2 * n * m1 * 9 * cout * cout
    bytes_acc = int(sum(a.size * a.dtype.itemsize for a in args)
                    + n * m1 * cout * 4)

    out = pl.pallas_call(
        kernel,
        grid=(n,),
        in_specs=[
            pl.BlockSpec((m1, kk), lambda i: (i, 0)),            # im2col patches
            pl.BlockSpec((kk, 2 * cout), lambda i: (0, 0)),      # merged W (bf16)
            pl.BlockSpec((1, 2 * cout), lambda i: (0, 0)),       # merged BN shift
            pl.BlockSpec((9, cout, cout), lambda i: (0, 0, 0)),  # conv1b W (bf16)
            pl.BlockSpec((1, cout), lambda i: (0, 0)),           # conv1b BN shift
        ],
        out_specs=pl.BlockSpec((m1, cout), lambda i: (i, 0)),
        out_shape=jax.ShapeDtypeStruct((n * m1, cout), jnp.float32),
        scratch_shapes=[pltpu.VMEM((ho + 2, wo + 2, cout), jnp.float32)],
        compiler_params=pltpu.CompilerParams(
            dimension_semantics=("parallel",),     # per-sample across TCs (v7x)
            vmem_limit_bytes=VMEM_LIMIT),
        cost_estimate=pl.CostEstimate(flops=flops, transcendentals=0,
                                      bytes_accessed=bytes_acc),
    )(*args)
    return out.reshape(n, ho, wo, cout)


def _full_spec(shape):
    nd = len(shape)
    return pl.BlockSpec(shape, lambda *_, _nd=nd: (0,) * _nd)


def fc_head(x_flat, params):
    n, din = x_flat.shape
    code = params["fc2_w"].shape[1]
    args = (x_flat, params["fc1_w"], params["fc1_shift"],
            params["fc2_w"], params["fc2_b"])
    flops = 2 * n * din * 64 + 2 * n * 64 * code
    bytes_acc = int(sum(a.size * a.dtype.itemsize for a in args) + n * code * 4)
    return pl.pallas_call(
        _fc_kernel,
        grid=(1,),
        in_specs=[_full_spec(a.shape) for a in args],
        out_specs=_full_spec((n, code)),
        out_shape=jax.ShapeDtypeStruct((n, code), jnp.float32),
        compiler_params=pltpu.CompilerParams(vmem_limit_bytes=VMEM_LIMIT),
        cost_estimate=pl.CostEstimate(flops=flops, transcendentals=n * code,
                                      bytes_accessed=bytes_acc),
    )(*args)


def encoder_forward(x_nchw, params):
    x = jnp.transpose(x_nchw, (0, 2, 3, 1))         # NCHW -> NHWC once at entry
    x = downsample_block(x, params["block1"])        # (N, H/2, W/2, 32)
    x = downsample_block(x, params["block2"])        # (N, H/4, W/4, 64)
    n = x.shape[0]
    # Flatten in NHWC order; the NCHW->NHWC row permutation is baked into
    # fc1_w at init, so this matches PyTorch's x.view(len(x), -1) with no
    # runtime transpose.
    x_flat = x.reshape(n, -1)
    return fc_head(x_flat, params)


# --------------------------- parameter init --------------------------------

def _fold_bn(gamma, beta, mean, var):
    scale = gamma / jnp.sqrt(var + BN_EPS)
    shift = beta - mean * scale
    return scale, shift


def init_conv_bn(key, cin, cout, k):
    kw, kg, kb, km, kv = jax.random.split(key, 5)
    w = 0.1 * jax.random.normal(kw, (k, k, cin, cout), jnp.float32)
    gamma = 1.0 + 0.1 * jax.random.normal(kg, (cout,), jnp.float32)
    beta = 0.1 * jax.random.normal(kb, (cout,), jnp.float32)
    mean = 0.1 * jax.random.normal(km, (cout,), jnp.float32)
    var = 1.0 + jnp.abs(jax.random.normal(kv, (cout,), jnp.float32))
    scale, shift = _fold_bn(gamma, beta, mean, var)
    w_folded = (w * scale).reshape(k * k * cin, cout)    # BN scale folded into W
    return w_folded, shift


def init_block(key, cin, cout):
    k1, k2, k3 = jax.random.split(key, 3)
    w1a, s1a = init_conv_bn(k1, cin, cout, 3)    # conv1a 3x3/s2 + BN
    w1b, s1b = init_conv_bn(k2, cout, cout, 3)   # conv1b 3x3/s1 + BN
    w2a, s2a = init_conv_bn(k3, cin, cout, 1)    # conv2a 1x1/s2 + BN (residual)
    # Merge the 1x1 stride-2 branch into the 3x3 GEMM: it only reads the
    # centre tap, i.e. rows [4*cin, 5*cin) of the 3x3 im2col patch.
    w2a_exp = jnp.zeros((9 * cin, cout), jnp.float32).at[4 * cin:5 * cin].set(w2a)
    return dict(
        w_ab=jnp.concatenate([w1a, w2a_exp], axis=1).astype(jnp.bfloat16),
        s_ab=jnp.concatenate([s1a, s2a]).reshape(1, 2 * cout),
        w1b=w1b.reshape(9, cout, cout).astype(jnp.bfloat16),
        s1b=s1b.reshape(1, cout),
    )


def init_params(key, input_shape, code_length):
    c, h, w = input_shape
    k1, k2, k3, k4 = jax.random.split(key, 4)
    block1 = init_block(k1, c, 32)
    block2 = init_block(k2, 32, 64)

    hq, wq = h // 4, w // 4
    din = 64 * hq * wq
    kw, kb, kg, kbe, km, kv = jax.random.split(k3, 6)
    # fc1 weight with rows in PyTorch NCHW-flatten order ...
    fc1_w_nchw = jax.random.normal(kw, (din, 64), jnp.float32) / jnp.sqrt(din)
    fc1_b = 0.1 * jax.random.normal(kb, (64,), jnp.float32)
    gamma = 1.0 + 0.1 * jax.random.normal(kg, (64,), jnp.float32)
    beta = 0.1 * jax.random.normal(kbe, (64,), jnp.float32)
    mean = 0.1 * jax.random.normal(km, (64,), jnp.float32)
    var = 1.0 + jnp.abs(jax.random.normal(kv, (64,), jnp.float32))
    fc1_scale = gamma / jnp.sqrt(var + BN_EPS)
    fc1_shift = (fc1_b - mean) * fc1_scale + beta
    # ... permuted into NHWC-flatten order so the runtime transpose before
    # flatten can be dropped (perm[p_nhwc] = p_nchw).
    perm = (jnp.arange(hq)[:, None, None] * wq
            + jnp.arange(wq)[None, :, None]
            + jnp.arange(64)[None, None, :] * (hq * wq)).reshape(-1)
    fc1_w = (fc1_w_nchw[perm] * fc1_scale).astype(jnp.bfloat16)

    kw2, kb2 = jax.random.split(k4)
    fc2_w = (jax.random.normal(kw2, (64, code_length), jnp.float32) / 8.0
             ).astype(jnp.bfloat16)
    fc2_b = (0.1 * jax.random.normal(kb2, (code_length,), jnp.float32)
             ).reshape(1, code_length)

    return dict(block1=block1, block2=block2,
                fc1_w=fc1_w, fc1_shift=fc1_shift.reshape(1, 64),
                fc2_w=fc2_w, fc2_b=fc2_b)


# --------------------------------- main ------------------------------------

if __name__ == "__main__":
    key = jax.random.PRNGKey(0)
    kx, kp = jax.random.split(key)

    input_shape = (1, 16, 16)   # (C, H, W), MNIST-like at small spatial size
    code_length = 8
    batch = 2

    x = jax.random.normal(kx, (batch,) + input_shape, jnp.float32)  # NCHW
    params = init_params(kp, input_shape, code_length)

    fwd = jax.jit(functools.partial(encoder_forward, params=params))
    out = fwd(x)
    jax.block_until_ready(out)

    assert out.shape == (batch, code_length), out.shape
    assert bool(jnp.all(jnp.isfinite(out)))
    assert bool(jnp.all((out >= 0.0) & (out <= 1.0)))  # sigmoid output range
    print("KERNEL_OK")
</pallas_src>

<mosaic_0001>
module attributes {stable_mosaic.version = 11 : i64} {
  func.func @_down_block_kernel(%arg0: i32, %arg1: memref<64x9xf32, #tpu.memory_space<vmem>>, %arg2: memref<9x64xbf16, #tpu.memory_space<vmem>>, %arg3: memref<1x64xf32, #tpu.memory_space<vmem>>, %arg4: memref<9x32x32xbf16, #tpu.memory_space<vmem>>, %arg5: memref<1x32xf32, #tpu.memory_space<vmem>>, %arg6: memref<64x32xf32, #tpu.memory_space<vmem>>, %arg7: memref<10x10x32xf32, #tpu.memory_space<vmem>>) attributes {dimension_semantics = [#tpu.dimension_semantics<parallel>], iteration_bounds = array<i64: 2>, scalar_prefetch = 0 : i64, scratch_operands = 1 : i64, tpu.core_type = #tpu.core_type<tc>, window_params = [{transform_indices = @transform_0, window_bounds = array<i64: 64, 9>}, {pipeline_mode = #tpu.pipeline_mode<synchronous>, transform_indices = @transform_1, window_bounds = array<i64: 9, 64>}, {pipeline_mode = #tpu.pipeline_mode<synchronous>, transform_indices = @transform_2, window_bounds = array<i64: 1, 64>}, {pipeline_mode = #tpu.pipeline_mode<synchronous>, transform_indices = @transform_3, window_bounds = array<i64: 9, 32, 32>}, {pipeline_mode = #tpu.pipeline_mode<synchronous>, transform_indices = @transform_4, window_bounds = array<i64: 1, 32>}, {transform_indices = @transform_5, window_bounds = array<i64: 64, 32>}]} {
    %c0 = arith.constant 0 : index
    %c0_0 = arith.constant 0 : index
    %0 = vector.load %arg1[%c0, %c0_0] : memref<64x9xf32, #tpu.memory_space<vmem>>, vector<64x9xf32>
    %1 = arith.truncf %0 : vector<64x9xf32> to vector<64x9xbf16>
    %c0_1 = arith.constant 0 : index
    %c0_2 = arith.constant 0 : index
    %2 = vector.load %arg2[%c0_1, %c0_2] : memref<9x64xbf16, #tpu.memory_space<vmem>>, vector<9x64xbf16>
    %cst = arith.constant dense<0.000000e+00> : vector<64x64xf32>
    %3 = tpu.matmul %1, %2, %cst {dimension_numbers = #tpu.dot_dimension_numbers<[1], [0], [0], [1], [0, 0, 1, 1], [], []>} : vector<64x9xbf16>, vector<9x64xbf16>, vector<64x64xf32> -> vector<64x64xf32>
    %c0_3 = arith.constant 0 : index
    %c0_4 = arith.constant 0 : index
    %4 = vector.load %arg3[%c0_3, %c0_4] : memref<1x64xf32, #tpu.memory_space<vmem>>, vector<1x64xf32>
    %5 = vector.broadcast %4 : vector<1x64xf32> to vector<64x64xf32>
    %6 = arith.addf %3, %5 : vector<64x64xf32>
    %7 = vector.extract_strided_slice %6 {offsets = [0, 0], sizes = [64, 32], strides = [1, 1]} : vector<64x64xf32> to vector<64x32xf32>
    %cst_5 = arith.constant 0.00999999977 : f32
    %8 = vector.broadcast %cst_5 : f32 to vector<64x32xf32>
    %9 = arith.mulf %8, %7 : vector<64x32xf32>
    %10 = arith.maximumf %7, %9 : vector<64x32xf32>
    %11 = vector.extract_strided_slice %6 {offsets = [0, 32], sizes = [64, 32], strides = [1, 1]} : vector<64x64xf32> to vector<64x32xf32>
    %cst_6 = arith.constant 0.000000e+00 : f32
    %12 = vector.broadcast %cst_6 : f32 to vector<10x10x32xf32>
    %c0_7 = arith.constant 0 : index
    %c0_8 = arith.constant 0 : index
    %c0_9 = arith.constant 0 : index
    %13 = vector.load %arg7[%c0_7, %c0_8, %c0_9] : memref<10x10x32xf32, #tpu.memory_space<vmem>>, vector<10x10x32xf32>
    tpu.vector_store %arg7[%c0_7, %c0_8, %c0_9], %12 {strides = array<i32>} : memref<10x10x32xf32, #tpu.memory_space<vmem>>, vector<10x10x32xf32>,
    %14 = vector.extract_strided_slice %10 {offsets = [0, 0], sizes = [8, 32], strides = [1, 1]} : vector<64x32xf32> to vector<8x32xf32>
    %c1 = arith.constant 1 : index
    %c1_10 = arith.constant 1 : index
    %c0_11 = arith.constant 0 : index
    %15 = vector.load %arg7[%c1, %c1_10, %c0_11] : memref<10x10x32xf32, #tpu.memory_space<vmem>>, vector<1x8x32xf32>
    %16 = vector.shape_cast %15 : vector<1x8x32xf32> to vector<8x32xf32>
    %17 = vector.shape_cast %14 : vector<8x32xf32> to vector<1x8x32xf32>
    tpu.vector_store %arg7[%c1, %c1_10, %c0_11], %17 {strides = array<i32>} : memref<10x10x32xf32, #tpu.memory_space<vmem>>, vector<1x8x32xf32>,
    %18 = vector.extract_strided_slice %10 {offsets = [8, 0], sizes = [8, 32], strides = [1, 1]} : vector<64x32xf32> to vector<8x32xf32>
    %c2 = arith.constant 2 : index
    %c1_12 = arith.constant 1 : index
    %c0_13 = arith.constant 0 : index
    %19 = vector.load %arg7[%c2, %c1_12, %c0_13] : memref<10x10x32xf32, #tpu.memory_space<vmem>>, vector<1x8x32xf32>
    %20 = vector.shape_cast %19 : vector<1x8x32xf32> to vector<8x32xf32>
    %21 = vector.shape_cast %18 : vector<8x32xf32> to vector<1x8x32xf32>
    tpu.vector_store %arg7[%c2, %c1_12, %c0_13], %21 {strides = array<i32>} : memref<10x10x32xf32, #tpu.memory_space<vmem>>, vector<1x8x32xf32>,
    %22 = vector.extract_strided_slice %10 {offsets = [16, 0], sizes = [8, 32], strides = [1, 1]} : vector<64x32xf32> to vector<8x32xf32>
    %c3 = arith.constant 3 : index
    %c1_14 = arith.constant 1 : index
    %c0_15 = arith.constant 0 : index
    %23 = vector.load %arg7[%c3, %c1_14, %c0_15] : memref<10x10x32xf32, #tpu.memory_space<vmem>>, vector<1x8x32xf32>
    %24 = vector.shape_cast %23 : vector<1x8x32xf32> to vector<8x32xf32>
    %25 = vector.shape_cast %22 : vector<8x32xf32> to vector<1x8x32xf32>
    tpu.vector_store %arg7[%c3, %c1_14, %c0_15], %25 {strides = array<i32>} : memref<10x10x32xf32, #tpu.memory_space<vmem>>, vector<1x8x32xf32>,
    %26 = vector.extract_strided_slice %10 {offsets = [24, 0], sizes = [8, 32], strides = [1, 1]} : vector<64x32xf32> to vector<8x32xf32>
    %c4 = arith.constant 4 : index
    %c1_16 = arith.constant 1 : index
    %c0_17 = arith.constant 0 : index
    %27 = vector.load %arg7[%c4, %c1_16, %c0_17] : memref<10x10x32xf32, #tpu.memory_space<vmem>>, vector<1x8x32xf32>
    %28 = vector.shape_cast %27 : vector<1x8x32xf32> to vector<8x32xf32>
    %29 = vector.shape_cast %26 : vector<8x32xf32> to vector<1x8x32xf32>
    tpu.vector_store %arg7[%c4, %c1_16, %c0_17], %29 {strides = array<i32>} : memref<10x10x32xf32, #tpu.memory_space<vmem>>, vector<1x8x32xf32>,
    %30 = vector.extract_strided_slice %10 {offsets = [32, 0], sizes = [8, 32], strides = [1, 1]} : vector<64x32xf32> to vector<8x32xf32>
    %c5 = arith.constant 5 : index
    %c1_18 = arith.constant 1 : index
    %c0_19 = arith.constant 0 : index
    %31 = vector.load %arg7[%c5, %c1_18, %c0_19] : memref<10x10x32xf32, #tpu.memory_space<vmem>>, vector<1x8x32xf32>
    %32 = vector.shape_cast %31 : vector<1x8x32xf32> to vector<8x32xf32>
    %33 = vector.shape_cast %30 : vector<8x32xf32> to vector<1x8x32xf32>
    tpu.vector_store %arg7[%c5, %c1_18, %c0_19], %33 {strides = array<i32>} : memref<10x10x32xf32, #tpu.memory_space<vmem>>, vector<1x8x32xf32>,
    %34 = vector.extract_strided_slice %10 {offsets = [40, 0], sizes = [8, 32], strides = [1, 1]} : vector<64x32xf32> to vector<8x32xf32>
    %c6 = arith.constant 6 : index
    %c1_20 = arith.constant 1 : index
    %c0_21 = arith.constant 0 : index
    %35 = vector.load %arg7[%c6, %c1_20, %c0_21] : memref<10x10x32xf32, #tpu.memory_space<vmem>>, vector<1x8x32xf32>
    %36 = vector.shape_cast %35 : vector<1x8x32xf32> to vector<8x32xf32>
    %37 = vector.shape_cast %34 : vector<8x32xf32> to vector<1x8x32xf32>
    tpu.vector_store %arg7[%c6, %c1_20, %c0_21], %37 {strides = array<i32>} : memref<10x10x32xf32, #tpu.memory_space<vmem>>, vector<1x8x32xf32>,
    %38 = vector.extract_strided_slice %10 {offsets = [48, 0], sizes = [8, 32], strides = [1, 1]} : vector<64x32xf32> to vector<8x32xf32>
    %c7 = arith.constant 7 : index
    %c1_22 = arith.constant 1 : index
    %c0_23 = arith.constant 0 : index
    %39 = vector.load %arg7[%c7, %c1_22, %c0_23] : memref<10x10x32xf32, #tpu.memory_space<vmem>>, vector<1x8x32xf32>
    %40 = vector.shape_cast %39 : vector<1x8x32xf32> to vector<8x32xf32>
    %41 = vector.shape_cast %38 : vector<8x32xf32> to vector<1x8x32xf32>
    tpu.vector_store %arg7[%c7, %c1_22, %c0_23], %41 {strides = array<i32>} : memref<10x10x32xf32, #tpu.memory_space<vmem>>, vector<1x8x32xf32>,
    %42 = vector.extract_strided_slice %10 {offsets = [56, 0], sizes = [8, 32], strides = [1, 1]} : vector<64x32xf32> to vector<8x32xf32>
    %c8 = arith.constant 8 : index
    %c1_24 = arith.constant 1 : index
    %c0_25 = arith.constant 0 : index
    %43 = vector.load %arg7[%c8, %c1_24, %c0_25] : memref<10x10x32xf32, #tpu.memory_space<vmem>>, vector<1x8x32xf32>
    %44 = vector.shape_cast %43 : vector<1x8x32xf32> to vector<8x32xf32>
    %45 = vector.shape_cast %42 : vector<8x32xf32> to vector<1x8x32xf32>
    tpu.vector_store %arg7[%c8, %c1_24, %c0_25], %45 {strides = array<i32>} : memref<10x10x32xf32, #tpu.memory_space<vmem>>, vector<1x8x32xf32>,
    %c0_26 = arith.constant 0 : index
    %c0_27 = arith.constant 0 : index
    %46 = vector.load %arg5[%c0_26, %c0_27] : memref<1x32xf32, #tpu.memory_space<vmem>>, vector<1x32xf32>
    %47 = vector.extract_strided_slice %11 {offsets = [0, 0], sizes = [8, 32], strides = [1, 1]} : vector<64x32xf32> to vector<8x32xf32>
    %48 = vector.broadcast %46 : vector<1x32xf32> to vector<8x32xf32>
    %49 = arith.addf %48, %47 : vector<8x32xf32>
    %c0_28 = arith.constant 0 : index
    %c0_29 = arith.constant 0 : index
    %c0_30 = arith.constant 0 : index
    %50 = vector.load %arg7[%c0_28, %c0_29, %c0_30] : memref<10x10x32xf32, #tpu.memory_space<vmem>>, vector<1x8x32xf32>
    %51 = vector.shape_cast %50 : vector<1x8x32xf32> to vector<8x32xf32>
    %52 = arith.truncf %51 : vector<8x32xf32> to vector<8x32xbf16>
    %c0_31 = arith.constant 0 : index
    %c0_32 = arith.constant 0 : index
    %c0_33 = arith.constant 0 : index
    %53 = vector.load %arg4[%c0_31, %c0_32, %c0_33] : memref<9x32x32xbf16, #tpu.memory_space<vmem>>, vector<1x32x32xbf16>
    %54 = vector.shape_cast %53 : vector<1x32x32xbf16> to vector<32x32xbf16>
    %cst_34 = arith.constant dense<0.000000e+00> : vector<8x32xf32>
    %55 = tpu.matmul %52, %54, %cst_34 {dimension_numbers = #tpu.dot_dimension_numbers<[1], [0], [0], [1], [0, 0, 1, 1], [], []>} : vector<8x32xbf16>, vector<32x32xbf16>, vector<8x32xf32> -> vector<8x32xf32>
    %56 = arith.addf %49, %55 : vector<8x32xf32>
    %c0_35 = arith.constant 0 : index
    %c1_36 = arith.constant 1 : index
    %c0_37 = arith.constant 0 : index
    %57 = vector.load %arg7[%c0_35, %c1_36, %c0_37] : memref<10x10x32xf32, #tpu.memory_space<vmem>>, vector<1x8x32xf32>
    %58 = vector.shape_cast %57 : vector<1x8x32xf32> to vector<8x32xf32>
    %59 = arith.truncf %58 : vector<8x32xf32> to vector<8x32xbf16>
    %c1_38 = arith.constant 1 : index
    %c0_39 = arith.constant 0 : index
    %c0_40 = arith.constant 0 : index
    %60 = vector.load %arg4[%c1_38, %c0_39, %c0_40] : memref<9x32x32xbf16, #tpu.memory_space<vmem>>, vector<1x32x32xbf16>
    %61 = vector.shape_cast %60 : vector<1x32x32xbf16> to vector<32x32xbf16>
    %cst_41 = arith.constant dense<0.000000e+00> : vector<8x32xf32>
    %62 = tpu.matmul %59, %61, %cst_41 {dimension_numbers = #tpu.dot_dimension_numbers<[1], [0], [0], [1], [0, 0, 1, 1], [], []>} : vector<8x32xbf16>, vector<32x32xbf16>, vector<8x32xf32> -> vector<8x32xf32>
    %63 = arith.addf %56, %62 : vector<8x32xf32>
    %c0_42 = arith.constant 0 : index
    %c2_43 = arith.constant 2 : index
    %c0_44 = arith.constant 0 : index
    %64 = vector.load %arg7[%c0_42, %c2_43, %c0_44] : memref<10x10x32xf32, #tpu.memory_space<vmem>>, vector<1x8x32xf32>
    %65 = vector.shape_cast %64 : vector<1x8x32xf32> to vector<8x32xf32>
    %66 = arith.truncf %65 : vector<8x32xf32> to vector<8x32xbf16>
    %c2_45 = arith.constant 2 : index
    %c0_46 = arith.constant 0 : index
    %c0_47 = arith.constant 0 : index
    %67 = vector.load %arg4[%c2_45, %c0_46, %c0_47] : memref<9x32x32xbf16, #tpu.memory_space<vmem>>, vector<1x32x32xbf16>
    %68 = vector.shape_cast %67 : vector<1x32x32xbf16> to vector<32x32xbf16>
    %cst_48 = arith.constant dense<0.000000e+00> : vector<8x32xf32>
    %69 = tpu.matmul %66, %68, %cst_48 {dimension_numbers = #tpu.dot_dimension_numbers<[1], [0], [0], [1], [0, 0, 1, 1], [], []>} : vector<8x32xbf16>, vector<32x32xbf16>, vector<8x32xf32> -> vector<8x32xf32>
    %70 = arith.addf %63, %69 : vector<8x32xf32>
    %c1_49 = arith.constant 1 : index
    %c0_50 = arith.constant 0 : index
    %c0_51 = arith.constant 0 : index
    %71 = vector.load %arg7[%c1_49, %c0_50, %c0_51] : memref<10x10x32xf32, #tpu.memory_space<vmem>>, vector<1x8x32xf32>
    %72 = vector.shape_cast %71 : vector<1x8x32xf32> to vector<8x32xf32>
    %73 = arith.truncf %72 : vector<8x32xf32> to vector<8x32xbf16>
    %c3_52 = arith.constant 3 : index
    %c0_53 = arith.constant 0 : index
    %c0_54 = arith.constant 0 : index
    %74 = vector.load %arg4[%c3_52, %c0_53, %c0_54] : memref<9x32x32xbf16, #tpu.memory_space<vmem>>, vector<1x32x32xbf16>
    %75 = vector.shape_cast %74 : vector<1x32x32xbf16> to vector<32x32xbf16>
    %cst_55 = arith.constant dense<0.000000e+00> : vector<8x32xf32>
    %76 = tpu.matmul %73, %75, %cst_55 {dimension_numbers = #tpu.dot_dimension_numbers<[1], [0], [0], [1], [0, 0, 1, 1], [], []>} : vector<8x32xbf16>, vector<32x32xbf16>, vector<8x32xf32> -> vector<8x32xf32>
    %77 = arith.addf %70, %76 : vector<8x32xf32>
    %c1_56 = arith.constant 1 : index
    %c1_57 = arith.constant 1 : index
    %c0_58 = arith.constant 0 : index
    %78 = vector.load %arg7[%c1_56, %c1_57, %c0_58] : memref<10x10x32xf32, #tpu.memory_space<vmem>>, vector<1x8x32xf32>
    %79 = vector.shape_cast %78 : vector<1x8x32xf32> to vector<8x32xf32>
    %80 = arith.truncf %79 : vector<8x32xf32> to vector<8x32xbf16>
    %c4_59 = arith.constant 4 : index
    %c0_60 = arith.constant 0 : index
    %c0_61 = arith.constant 0 : index
    %81 = vector.load %arg4[%c4_59, %c0_60, %c0_61] : memref<9x32x32xbf16, #tpu.memory_space<vmem>>, vector<1x32x32xbf16>
    %82 = vector.shape_cast %81 : vector<1x32x32xbf16> to vector<32x32xbf16>
    %cst_62 = arith.constant dense<0.000000e+00> : vector<8x32xf32>
    %83 = tpu.matmul %80, %82, %cst_62 {dimension_numbers = #tpu.dot_dimension_numbers<[1], [0], [0], [1], [0, 0, 1, 1], [], []>} : vector<8x32xbf16>, vector<32x32xbf16>, vector<8x32xf32> -> vector<8x32xf32>
    %84 = arith.addf %77, %83 : vector<8x32xf32>
    %c1_63 = arith.constant 1 : index
    %c2_64 = arith.constant 2 : index
    %c0_65 = arith.constant 0 : index
    %85 = vector.load %arg7[%c1_63, %c2_64, %c0_65] : memref<10x10x32xf32, #tpu.memory_space<vmem>>, vector<1x8x32xf32>
    %86 = vector.shape_cast %85 : vector<1x8x32xf32> to vector<8x32xf32>
    %87 = arith.truncf %86 : vector<8x32xf32> to vector<8x32xbf16>
    %c5_66 = arith.constant 5 : index
    %c0_67 = arith.constant 0 : index
    %c0_68 = arith.constant 0 : index
    %88 = vector.load %arg4[%c5_66, %c0_67, %c0_68] : memref<9x32x32xbf16, #tpu.memory_space<vmem>>, vector<1x32x32xbf16>
    %89 = vector.shape_cast %88 : vector<1x32x32xbf16> to vector<32x32xbf16>
    %cst_69 = arith.constant dense<0.000000e+00> : vector<8x32xf32>
    %90 = tpu.matmul %87, %89, %cst_69 {dimension_numbers = #tpu.dot_dimension_numbers<[1], [0], [0], [1], [0, 0, 1, 1], [], []>} : vector<8x32xbf16>, vector<32x32xbf16>, vector<8x32xf32> -> vector<8x32xf32>
    %91 = arith.addf %84, %90 : vector<8x32xf32>
    %c2_70 = arith.constant 2 : index
    %c0_71 = arith.constant 0 : index
    %c0_72 = arith.constant 0 : index
    %92 = vector.load %arg7[%c2_70, %c0_71, %c0_72] : memref<10x10x32xf32, #tpu.memory_space<vmem>>, vector<1x8x32xf32>
    %93 = vector.shape_cast %92 : vector<1x8x32xf32> to vector<8x32xf32>
    %94 = arith.truncf %93 : vector<8x32xf32> to vector<8x32xbf16>
    %c6_73 = arith.constant 6 : index
    %c0_74 = arith.constant 0 : index
    %c0_75 = arith.constant 0 : index
    %95 = vector.load %arg4[%c6_73, %c0_74, %c0_75] : memref<9x32x32xbf16, #tpu.memory_space<vmem>>, vector<1x32x32xbf16>
    %96 = vector.shape_cast %95 : vector<1x32x32xbf16> to vector<32x32xbf16>
    %cst_76 = arith.constant dense<0.000000e+00> : vector<8x32xf32>
    %97 = tpu.matmul %94, %96, %cst_76 {dimension_numbers = #tpu.dot_dimension_numbers<[1], [0], [0], [1], [0, 0, 1, 1], [], []>} : vector<8x32xbf16>, vector<32x32xbf16>, vector<8x32xf32> -> vector<8x32xf32>
    %98 = arith.addf %91, %97 : vector<8x32xf32>
    %c2_77 = arith.constant 2 : index
    %c1_78 = arith.constant 1 : index
    %c0_79 = arith.constant 0 : index
    %99 = vector.load %arg7[%c2_77, %c1_78, %c0_79] : memref<10x10x32xf32, #tpu.memory_space<vmem>>, vector<1x8x32xf32>
    %100 = vector.shape_cast %99 : vector<1x8x32xf32> to vector<8x32xf32>
    %101 = arith.truncf %100 : vector<8x32xf32> to vector<8x32xbf16>
    %c7_80 = arith.constant 7 : index
    %c0_81 = arith.constant 0 : index
    %c0_82 = arith.constant 0 : index
    %102 = vector.load %arg4[%c7_80, %c0_81, %c0_82] : memref<9x32x32xbf16, #tpu.memory_space<vmem>>, vector<1x32x32xbf16>
    %103 = vector.shape_cast %102 : vector<1x32x32xbf16> to vector<32x32xbf16>
    %cst_83 = arith.constant dense<0.000000e+00> : vector<8x32xf32>
    %104 = tpu.matmul %101, %103, %cst_83 {dimension_numbers = #tpu.dot_dimension_numbers<[1], [0], [0], [1], [0, 0, 1, 1], [], []>} : vector<8x32xbf16>, vector<32x32xbf16>, vector<8x32xf32> -> vector<8x32xf32>
    %105 = arith.addf %98, %104 : vector<8x32xf32>
    %c2_84 = arith.constant 2 : index
    %c2_85 = arith.constant 2 : index
    %c0_86 = arith.constant 0 : index
    %106 = vector.load %arg7[%c2_84, %c2_85, %c0_86] : memref<10x10x32xf32, #tpu.memory_space<vmem>>, vector<1x8x32xf32>
    %107 = vector.shape_cast %106 : vector<1x8x32xf32> to vector<8x32xf32>
    %108 = arith.truncf %107 : vector<8x32xf32> to vector<8x32xbf16>
    %c8_87 = arith.constant 8 : index
    %c0_88 = arith.constant 0 : index
    %c0_89 = arith.constant 0 : index
    %109 = vector.load %arg4[%c8_87, %c0_88, %c0_89] : memref<9x32x32xbf16, #tpu.memory_space<vmem>>, vector<1x32x32xbf16>
    %110 = vector.shape_cast %109 : vector<1x32x32xbf16> to vector<32x32xbf16>
    %cst_90 = arith.constant dense<0.000000e+00> : vector<8x32xf32>
    %111 = tpu.matmul %108, %110, %cst_90 {dimension_numbers = #tpu.dot_dimension_numbers<[1], [0], [0], [1], [0, 0, 1, 1], [], []>} : vector<8x32xbf16>, vector<32x32xbf16>, vector<8x32xf32> -> vector<8x32xf32>
    %112 = arith.addf %105, %111 : vector<8x32xf32>
    %cst_91 = arith.constant 0.00999999977 : f32
    %113 = vector.broadcast %cst_91 : f32 to vector<8x32xf32>
    %114 = arith.mulf %113, %112 : vector<8x32xf32>
    %115 = arith.maximumf %112, %114 : vector<8x32xf32>
    %c0_92 = arith.constant 0 : index
    %c0_93 = arith.constant 0 : index
    %116 = vector.load %arg6[%c0_92, %c0_93] : memref<64x32xf32, #tpu.memory_space<vmem>>, vector<8x32xf32>
    tpu.vector_store %arg6[%c0_92, %c0_93], %115 {strides = array<i32>} : memref<64x32xf32, #tpu.memory_space<vmem>>, vector<8x32xf32>,
    %c0_94 = arith.constant 0 : index
    %c0_95 = arith.constant 0 : index
    %117 = vector.load %arg5[%c0_94, %c0_95] : memref<1x32xf32, #tpu.memory_space<vmem>>, vector<1x32xf32>
    %118 = vector.extract_strided_slice %11 {offsets = [8, 0], sizes = [8, 32], strides = [1, 1]} : vector<64x32xf32> to vector<8x32xf32>
    %119 = vector.broadcast %117 : vector<1x32xf32> to vector<8x32xf32>
    %120 = arith.addf %119, %118 : vector<8x32xf32>
    %c1_96 = arith.constant 1 : index
    %c0_97 = arith.constant 0 : index
    %c0_98 = arith.constant 0 : index
    %121 = vector.load %arg7[%c1_96, %c0_97, %c0_98] : memref<10x10x32xf32, #tpu.memory_space<vmem>>, vector<1x8x32xf32>
    %122 = vector.shape_cast %121 : vector<1x8x32xf32> to vector<8x32xf32>
    %123 = arith.truncf %122 : vector<8x32xf32> to vector<8x32xbf16>
    %c0_99 = arith.constant 0 : index
    %c0_100 = arith.constant 0 : index
    %c0_101 = arith.constant 0 : index
    %124 = vector.load %arg4[%c0_99, %c0_100, %c0_101] : memref<9x32x32xbf16, #tpu.memory_space<vmem>>, vector<1x32x32xbf16>
    %125 = vector.shape_cast %124 : vector<1x32x32xbf16> to vector<32x32xbf16>
    %cst_102 = arith.constant dense<0.000000e+00> : vector<8x32xf32>
    %126 = tpu.matmul %123, %125, %cst_102 {dimension_numbers = #tpu.dot_dimension_numbers<[1], [0], [0], [1], [0, 0, 1, 1], [], []>} : vector<8x32xbf16>, vector<32x32xbf16>, vector<8x32xf32> -> vector<8x32xf32>
    %127 = arith.addf %120, %126 : vector<8x32xf32>
    %c1_103 = arith.constant 1 : index
    %c1_104 = arith.constant 1 : index
    %c0_105 = arith.constant 0 : index
    %128 = vector.load %arg7[%c1_103, %c1_104, %c0_105] : memref<10x10x32xf32, #tpu.memory_space<vmem>>, vector<1x8x32xf32>
    %129 = vector.shape_cast %128 : vector<1x8x32xf32> to vector<8x32xf32>
    %130 = arith.truncf %129 : vector<8x32xf32> to vector<8x32xbf16>
    %c1_106 = arith.constant 1 : index
    %c0_107 = arith.constant 0 : index
    %c0_108 = arith.constant 0 : index
    %131 = vector.load %arg4[%c1_106, %c0_107, %c0_108] : memref<9x32x32xbf16, #tpu.memory_space<vmem>>, vector<1x32x32xbf16>
    %132 = vector.shape_cast %131 : vector<1x32x32xbf16> to vector<32x32xbf16>
    %cst_109 = arith.constant dense<0.000000e+00> : vector<8x32xf32>
    %133 = tpu.matmul %130, %132, %cst_109 {dimension_numbers = #tpu.dot_dimension_numbers<[1], [0], [0], [1], [0, 0, 1, 1], [], []>} : vector<8x32xbf16>, vector<32x32xbf16>, vector<8x32xf32> -> vector<8x32xf32>
    %134 = arith.addf %127, %133 : vector<8x32xf32>
    %c1_110 = arith.constant 1 : index
    %c2_111 = arith.constant 2 : index
    %c0_112 = arith.constant 0 : index
    %135 = vector.load %arg7[%c1_110, %c2_111, %c0_112] : memref<10x10x32xf32, #tpu.memory_space<vmem>>, vector<1x8x32xf32>
    %136 = vector.shape_cast %135 : vector<1x8x32xf32> to vector<8x32xf32>
    %137 = arith.truncf %136 : vector<8x32xf32> to vector<8x32xbf16>
    %c2_113 = arith.constant 2 : index
    %c0_114 = arith.constant 0 : index
    %c0_115 = arith.constant 0 : index
    %138 = vector.load %arg4[%c2_113, %c0_114, %c0_115] : memref<9x32x32xbf16, #tpu.memory_space<vmem>>, vector<1x32x32xbf16>
    %139 = vector.shape_cast %138 : vector<1x32x32xbf16> to vector<32x32xbf16>
    %cst_116 = arith.constant dense<0.000000e+00> : vector<8x32xf32>
    %140 = tpu.matmul %137, %139, %cst_116 {dimension_numbers = #tpu.dot_dimension_numbers<[1], [0], [0], [1], [0, 0, 1, 1], [], []>} : vector<8x32xbf16>, vector<32x32xbf16>, vector<8x32xf32> -> vector<8x32xf32>
    %141 = arith.addf %134, %140 : vector<8x32xf32>
    %c2_117 = arith.constant 2 : index
    %c0_118 = arith.constant 0 : index
    %c0_119 = arith.constant 0 : index
    %142 = vector.load %arg7[%c2_117, %c0_118, %c0_119] : memref<10x10x32xf32, #tpu.memory_space<vmem>>, vector<1x8x32xf32>
    %143 = vector.shape_cast %142 : vector<1x8x32xf32> to vector<8x32xf32>
    %144 = arith.truncf %143 : vector<8x32xf32> to vector<8x32xbf16>
    %c3_120 = arith.constant 3 : index
    %c0_121 = arith.constant 0 : index
    %c0_122 = arith.constant 0 : index
    %145 = vector.load %arg4[%c3_120, %c0_121, %c0_122] : memref<9x32x32xbf16, #tpu.memory_space<vmem>>, vector<1x32x32xbf16>
    %146 = vector.shape_cast %145 : vector<1x32x32xbf16> to vector<32x32xbf16>
    %cst_123 = arith.constant dense<0.000000e+00> : vector<8x32xf32>
    %147 = tpu.matmul %144, %146, %cst_123 {dimension_numbers = #tpu.dot_dimension_numbers<[1], [0], [0], [1], [0, 0, 1, 1], [], []>} : vector<8x32xbf16>, vector<32x32xbf16>, vector<8x32xf32> -> vector<8x32xf32>
    %148 = arith.addf %141, %147 : vector<8x32xf32>
    %c2_124 = arith.constant 2 : index
    %c1_125 = arith.constant 1 : index
    %c0_126 = arith.constant 0 : index
    %149 = vector.load %arg7[%c2_124, %c1_125, %c0_126] : memref<10x10x32xf32, #tpu.memory_space<vmem>>, vector<1x8x32xf32>
    %150 = vector.shape_cast %149 : vector<1x8x32xf32> to vector<8x32xf32>
    %151 = arith.truncf %150 : vector<8x32xf32> to vector<8x32xbf16>
    %c4_127 = arith.constant 4 : index
    %c0_128 = arith.constant 0 : index
    %c0_129 = arith.constant 0 : index
    %152 = vector.load %arg4[%c4_127, %c0_128, %c0_129] : memref<9x32x32xbf16, #tpu.memory_space<vmem>>, vector<1x32x32xbf16>
    %153 = vector.shape_cast %152 : vector<1x32x32xbf16> to vector<32x32xbf16>
    %cst_130 = arith.constant dense<0.000000e+00> : vector<8x32xf32>
    %154 = tpu.matmul %151, %153, %cst_130 {dimension_numbers = #tpu.dot_dimension_numbers<[1], [0], [0], [1], [0, 0, 1, 1], [], []>} : vector<8x32xbf16>, vector<32x32xbf16>, vector<8x32xf32> -> vector<8x32xf32>
    %155 = arith.addf %148, %154 : vector<8x32xf32>
    %c2_131 = arith.constant 2 : index
    %c2_132 = arith.constant 2 : index
    %c0_133 = arith.constant 0 : index
    %156 = vector.load %arg7[%c2_131, %c2_132, %c0_133] : memref<10x10x32xf32, #tpu.memory_space<vmem>>, vector<1x8x32xf32>
    %157 = vector.shape_cast %156 : vector<1x8x32xf32> to vector<8x32xf32>
    %158 = arith.truncf %157 : vector<8x32xf32> to vector<8x32xbf16>
    %c5_134 = arith.constant 5 : index
    %c0_135 = arith.constant 0 : index
    %c0_136 = arith.constant 0 : index
    %159 = vector.load %arg4[%c5_134, %c0_135, %c0_136] : memref<9x32x32xbf16, #tpu.memory_space<vmem>>, vector<1x32x32xbf16>
    %160 = vector.shape_cast %159 : vector<1x32x32xbf16> to vector<32x32xbf16>
    %cst_137 = arith.constant dense<0.000000e+00> : vector<8x32xf32>
    %161 = tpu.matmul %158, %160, %cst_137 {dimension_numbers = #tpu.dot_dimension_numbers<[1], [0], [0], [1], [0, 0, 1, 1], [], []>} : vector<8x32xbf16>, vector<32x32xbf16>, vector<8x32xf32> -> vector<8x32xf32>
    %162 = arith.addf %155, %161 : vector<8x32xf32>
    %c3_138 = arith.constant 3 : index
    %c0_139 = arith.constant 0 : index
    %c0_140 = arith.constant 0 : index
    %163 = vector.load %arg7[%c3_138, %c0_139, %c0_140] : memref<10x10x32xf32, #tpu.memory_space<vmem>>, vector<1x8x32xf32>
    %164 = vector.shape_cast %163 : vector<1x8x32xf32> to vector<8x32xf32>
    %165 = arith.truncf %164 : vector<8x32xf32> to vector<8x32xbf16>
    %c6_141 = arith.constant 6 : index
    %c0_142 = arith.constant 0 : index
    %c0_143 = arith.constant 0 : index
    %166 = vector.load %arg4[%c6_141, %c0_142, %c0_143] : memref<9x32x32xbf16, #tpu.memory_space<vmem>>, vector<1x32x32xbf16>
    %167 = vector.shape_cast %166 : vector<1x32x32xbf16> to vector<32x32xbf16>
    %cst_144 = arith.constant dense<0.000000e+00> : vector<8x32xf32>
    %168 = tpu.matmul %165, %167, %cst_144 {dimension_numbers = #tpu.dot_dimension_numbers<[1], [0], [0], [1], [0, 0, 1, 1], [], []>} : vector<8x32xbf16>, vector<32x32xbf16>, vector<8x32xf32> -> vector<8x32xf32>
    %169 = arith.addf %162, %168 : vector<8x32xf32>
    %c3_145 = arith.constant 3 : index
    %c1_146 = arith.constant 1 : index
    %c0_147 = arith.constant 0 : index
    %170 = vector.load %arg7[%c3_145, %c1_146, %c0_147] : memref<10x10x32xf32, #tpu.memory_space<vmem>>, vector<1x8x32xf32>
    %171 = vector.shape_cast %170 : vector<1x8x32xf32> to vector<8x32xf32>
    %172 = arith.truncf %171 : vector<8x32xf32> to vector<8x32xbf16>
    %c7_148 = arith.constant 7 : index
    %c0_149 = arith.constant 0 : index
    %c0_150 = arith.constant 0 : index
    %173 = vector.load %arg4[%c7_148, %c0_149, %c0_150] : memref<9x32x32xbf16, #tpu.memory_space<vmem>>, vector<1x32x32xbf16>
    %174 = vector.shape_cast %173 : vector<1x32x32xbf16> to vector<32x32xbf16>
    %cst_151 = arith.constant dense<0.000000e+00> : vector<8x32xf32>
    %175 = tpu.matmul %172, %174, %cst_151 {dimension_numbers = #tpu.dot_dimension_numbers<[1], [0], [0], [1], [0, 0, 1, 1], [], []>} : vector<8x32xbf16>, vector<32x32xbf16>, vector<8x32xf32> -> vector<8x32xf32>
    %176 = arith.addf %169, %175 : vector<8x32xf32>
    %c3_152 = arith.constant 3 : index
    %c2_153 = arith.constant 2 : index
    %c0_154 = arith.constant 0 : index
    %177 = vector.load %arg7[%c3_152, %c2_153, %c0_154] : memref<10x10x32xf32, #tpu.memory_space<vmem>>, vector<1x8x32xf32>
    %178 = vector.shape_cast %177 : vector<1x8x32xf32> to vector<8x32xf32>
    %179 = arith.truncf %178 : vector<8x32xf32> to vector<8x32xbf16>
    %c8_155 = arith.constant 8 : index
    %c0_156 = arith.constant 0 : index
    %c0_157 = arith.constant 0 : index
    %180 = vector.load %arg4[%c8_155, %c0_156, %c0_157] : memref<9x32x32xbf16, #tpu.memory_space<vmem>>, vector<1x32x32xbf16>
    %181 = vector.shape_cast %180 : vector<1x32x32xbf16> to vector<32x32xbf16>
    %cst_158 = arith.constant dense<0.000000e+00> : vector<8x32xf32>
    %182 = tpu.matmul %179, %181, %cst_158 {dimension_numbers = #tpu.dot_dimension_numbers<[1], [0], [0], [1], [0, 0, 1, 1], [], []>} : vector<8x32xbf16>, vector<32x32xbf16>, vector<8x32xf32> -> vector<8x32xf32>
    %183 = arith.addf %176, %182 : vector<8x32xf32>
    %cst_159 = arith.constant 0.00999999977 : f32
    %184 = vector.broadcast %cst_159 : f32 to vector<8x32xf32>
    %185 = arith.mulf %184, %183 : vector<8x32xf32>
    %186 = arith.maximumf %183, %185 : vector<8x32xf32>
    %c8_160 = arith.constant 8 : index
    %c0_161 = arith.constant 0 : index
    %187 = vector.load %arg6[%c8_160, %c0_161] : memref<64x32xf32, #tpu.memory_space<vmem>>, vector<8x32xf32>
    tpu.vector_store %arg6[%c8_160, %c0_161], %186 {strides = array<i32>} : memref<64x32xf32, #tpu.memory_space<vmem>>, vector<8x32xf32>,
    %c0_162 = arith.constant 0 : index
    %c0_163 = arith.constant 0 : index
    %188 = vector.load %arg5[%c0_162, %c0_163] : memref<1x32xf32, #tpu.memory_space<vmem>>, vector<1x32xf32>
    %189 = vector.extract_strided_slice %11 {offsets = [16, 0], sizes = [8, 32], strides = [1, 1]} : vector<64x32xf32> to vector<8x32xf32>
    %190 = vector.broadcast %188 : vector<1x32xf32> to vector<8x32xf32>
    %191 = arith.addf %190, %189 : vector<8x32xf32>
    %c2_164 = arith.constant 2 : index
    %c0_165 = arith.constant 0 : index
    %c0_166 = arith.constant 0 : index
    %192 = vector.load %arg7[%c2_164, %c0_165, %c0_166] : memref<10x10x32xf32, #tpu.memory_space<vmem>>, vector<1x8x32xf32>
    %193 = vector.shape_cast %192 : vector<1x8x32xf32> to vector<8x32xf32>
    %194 = arith.truncf %193 : vector<8x32xf32> to vector<8x32xbf16>
    %c0_167 = arith.constant 0 : index
    %c0_168 = arith.constant 0 : index
    %c0_169 = arith.constant 0 : index
    %195 = vector.load %arg4[%c0_167, %c0_168, %c0_169] : memref<9x32x32xbf16, #tpu.memory_space<vmem>>, vector<1x32x32xbf16>
    %196 = vector.shape_cast %195 : vector<1x32x32xbf16> to vector<32x32xbf16>
    %cst_170 = arith.constant dense<0.000000e+00> : vector<8x32xf32>
    %197 = tpu.matmul %194, %196, %cst_170 {dimension_numbers = #tpu.dot_dimension_numbers<[1], [0], [0], [1], [0, 0, 1, 1], [], []>} : vector<8x32xbf16>, vector<32x32xbf16>, vector<8x32xf32> -> vector<8x32xf32>
    %198 = arith.addf %191, %197 : vector<8x32xf32>
    %c2_171 = arith.constant 2 : index
    %c1_172 = arith.constant 1 : index
    %c0_173 = arith.constant 0 : index
    %199 = vector.load %arg7[%c2_171, %c1_172, %c0_173] : memref<10x10x32xf32, #tpu.memory_space<vmem>>, vector<1x8x32xf32>
    %200 = vector.shape_cast %199 : vector<1x8x32xf32> to vector<8x32xf32>
    %201 = arith.truncf %200 : vector<8x32xf32> to vector<8x32xbf16>
    %c1_174 = arith.constant 1 : index
    %c0_175 = arith.constant 0 : index
    %c0_176 = arith.constant 0 : index
    %202 = vector.load %arg4[%c1_174, %c0_175, %c0_176] : memref<9x32x32xbf16, #tpu.memory_space<vmem>>, vector<1x32x32xbf16>
    %203 = vector.shape_cast %202 : vector<1x32x32xbf16> to vector<32x32xbf16>
    %cst_177 = arith.constant dense<0.000000e+00> : vector<8x32xf32>
    %204 = tpu.matmul %201, %203, %cst_177 {dimension_numbers = #tpu.dot_dimension_numbers<[1], [0], [0], [1], [0, 0, 1, 1], [], []>} : vector<8x32xbf16>, vector<32x32xbf16>, vector<8x32xf32> -> vector<8x32xf32>
    %205 = arith.addf %198, %204 : vector<8x32xf32>
    %c2_178 = arith.constant 2 : index
    %c2_179 = arith.constant 2 : index
    %c0_180 = arith.constant 0 : index
    %206 = vector.load %arg7[%c2_178, %c2_179, %c0_180] : memref<10x10x32xf32, #tpu.memory_space<vmem>>, vector<1x8x32xf32>
    %207 = vector.shape_cast %206 : vector<1x8x32xf32> to vector<8x32xf32>
    %208 = arith.truncf %207 : vector<8x32xf32> to vector<8x32xbf16>
    %c2_181 = arith.constant 2 : index
    %c0_182 = arith.constant 0 : index
    %c0_183 = arith.constant 0 : index
    %209 = vector.load %arg4[%c2_181, %c0_182, %c0_183] : memref<9x32x32xbf16, #tpu.memory_space<vmem>>, vector<1x32x32xbf16>
    %210 = vector.shape_cast %209 : vector<1x32x32xbf16> to vector<32x32xbf16>
    %cst_184 = arith.constant dense<0.000000e+00> : vector<8x32xf32>
    %211 = tpu.matmul %208, %210, %cst_184 {dimension_numbers = #tpu.dot_dimension_numbers<[1], [0], [0], [1], [0, 0, 1, 1], [], []>} : vector<8x32xbf16>, vector<32x32xbf16>, vector<8x32xf32> -> vector<8x32xf32>
    %212 = arith.addf %205, %211 : vector<8x32xf32>
    %c3_185 = arith.constant 3 : index
    %c0_186 = arith.constant 0 : index
    %c0_187 = arith.constant 0 : index
    %213 = vector.load %arg7[%c3_185, %c0_186, %c0_187] : memref<10x10x32xf32, #tpu.memory_space<vmem>>, vector<1x8x32xf32>
    %214 = vector.shape_cast %213 : vector<1x8x32xf32> to vector<8x32xf32>
    %215 = arith.truncf %214 : vector<8x32xf32> to vector<8x32xbf16>
    %c3_188 = arith.constant 3 : index
    %c0_189 = arith.constant 0 : index
    %c0_190 = arith.constant 0 : index
    %216 = vector.load %arg4[%c3_188, %c0_189, %c0_190] : memref<9x32x32xbf16, #tpu.memory_space<vmem>>, vector<1x32x32xbf16>
    %217 = vector.shape_cast %216 : vector<1x32x32xbf16> to vector<32x32xbf16>
    %cst_191 = arith.constant dense<0.000000e+00> : vector<8x32xf32>
    %218 = tpu.matmul %215, %217, %cst_191 {dimension_numbers = #tpu.dot_dimension_numbers<[1], [0], [0], [1], [0, 0, 1, 1], [], []>} : vector<8x32xbf16>, vector<32x32xbf16>, vector<8x32xf32> -> vector<8x32xf32>
    %219 = arith.addf %212, %218 : vector<8x32xf32>
    %c3_192 = arith.constant 3 : index
    %c1_193 = arith.constant 1 : index
    %c0_194 = arith.constant 0 : index
    %220 = vector.load %arg7[%c3_192, %c1_193, %c0_194] : memref<10x10x32xf32, #tpu.memory_space<vmem>>, vector<1x8x32xf32>
    %221 = vector.shape_cast %220 : vector<1x8x32xf32> to vector<8x32xf32>
    %222 = arith.truncf %221 : vector<8x32xf32> to vector<8x32xbf16>
    %c4_195 = arith.constant 4 : index
    %c0_196 = arith.constant 0 : index
    %c0_197 = arith.constant 0 : index
    %223 = vector.load %arg4[%c4_195, %c0_196, %c0_197] : memref<9x32x32xbf16, #tpu.memory_space<vmem>>, vector<1x32x32xbf16>
    %224 = vector.shape_cast %223 : vector<1x32x32xbf16> to vector<32x32xbf16>
    %cst_198 = arith.constant dense<0.000000e+00> : vector<8x32xf32>
    %225 = tpu.matmul %222, %224, %cst_198 {dimension_numbers = #tpu.dot_dimension_numbers<[1], [0], [0], [1], [0, 0, 1, 1], [], []>} : vector<8x32xbf16>, vector<32x32xbf16>, vector<8x32xf32> -> vector<8x32xf32>
    %226 = arith.addf %219, %225 : vector<8x32xf32>
    %c3_199 = arith.constant 3 : index
    %c2_200 = arith.constant 2 : index
    %c0_201 = arith.constant 0 : index
    %227 = vector.load %arg7[%c3_199, %c2_200, %c0_201] : memref<10x10x32xf32, #tpu.memory_space<vmem>>, vector<1x8x32xf32>
    %228 = vector.shape_cast %227 : vector<1x8x32xf32> to vector<8x32xf32>
    %229 = arith.truncf %228 : vector<8x32xf32> to vector<8x32xbf16>
    %c5_202 = arith.constant 5 : index
    %c0_203 = arith.constant 0 : index
    %c0_204 = arith.constant 0 : index
    %230 = vector.load %arg4[%c5_202, %c0_203, %c0_204] : memref<9x32x32xbf16, #tpu.memory_space<vmem>>, vector<1x32x32xbf16>
    %231 = vector.shape_cast %230 : vector<1x32x32xbf16> to vector<32x32xbf16>
    %cst_205 = arith.constant dense<0.000000e+00> : vector<8x32xf32>
    %232 = tpu.matmul %229, %231, %cst_205 {dimension_numbers = #tpu.dot_dimension_numbers<[1], [0], [0], [1], [0, 0, 1, 1], [], []>} : vector<8x32xbf16>, vector<32x32xbf16>, vector<8x32xf32> -> vector<8x32xf32>
    %233 = arith.addf %226, %232 : vector<8x32xf32>
    %c4_206 = arith.constant 4 : index
    %c0_207 = arith.constant 0 : index
    %c0_208 = arith.constant 0 : index
    %234 = vector.load %arg7[%c4_206, %c0_207, %c0_208] : memref<10x10x32xf32, #tpu.memory_space<vmem>>, vector<1x8x32xf32>
    %235 = vector.shape_cast %234 : vector<1x8x32xf32> to vector<8x32xf32>
    %236 = arith.truncf %235 : vector<8x32xf32> to vector<8x32xbf16>
    %c6_209 = arith.constant 6 : index
    %c0_210 = arith.constant 0 : index
    %c0_211 = arith.constant 0 : index
    %237 = vector.load %arg4[%c6_209, %c0_210, %c0_211] : memref<9x32x32xbf16, #tpu.memory_space<vmem>>, vector<1x32x32xbf16>
    %238 = vector.shape_cast %237 : vector<1x32x32xbf16> to vector<32x32xbf16>
    %cst_212 = arith.constant dense<0.000000e+00> : vector<8x32xf32>
    %239 = tpu.matmul %236, %238, %cst_212 {dimension_numbers = #tpu.dot_dimension_numbers<[1], [0], [0], [1], [0, 0, 1, 1], [], []>} : vector<8x32xbf16>, vector<32x32xbf16>, vector<8x32xf32> -> vector<8x32xf32>
    %240 = arith.addf %233, %239 : vector<8x32xf32>
    %c4_213 = arith.constant 4 : index
    %c1_214 = arith.constant 1 : index
    %c0_215 = arith.constant 0 : index
    %241 = vector.load %arg7[%c4_213, %c1_214, %c0_215] : memref<10x10x32xf32, #tpu.memory_space<vmem>>, vector<1x8x32xf32>
    %242 = vector.shape_cast %241 : vector<1x8x32xf32> to vector<8x32xf32>
    %243 = arith.truncf %242 : vector<8x32xf32> to vector<8x32xbf16>
    %c7_216 = arith.constant 7 : index
    %c0_217 = arith.constant 0 : index
    %c0_218 = arith.constant 0 : index
    %244 = vector.load %arg4[%c7_216, %c0_217, %c0_218] : memref<9x32x32xbf16, #tpu.memory_space<vmem>>, vector<1x32x32xbf16>
    %245 = vector.shape_cast %244 : vector<1x32x32xbf16> to vector<32x32xbf16>
    %cst_219 = arith.constant dense<0.000000e+00> : vector<8x32xf32>
    %246 = tpu.matmul %243, %245, %cst_219 {dimension_numbers = #tpu.dot_dimension_numbers<[1], [0], [0], [1], [0, 0, 1, 1], [], []>} : vector<8x32xbf16>, vector<32x32xbf16>, vector<8x32xf32> -> vector<8x32xf32>
    %247 = arith.addf %240, %246 : vector<8x32xf32>
    %c4_220 = arith.constant 4 : index
    %c2_221 = arith.constant 2 : index
    %c0_222 = arith.constant 0 : index
    %248 = vector.load %arg7[%c4_220, %c2_221, %c0_222] : memref<10x10x32xf32, #tpu.memory_space<vmem>>, vector<1x8x32xf32>
    %249 = vector.shape_cast %248 : vector<1x8x32xf32> to vector<8x32xf32>
    %250 = arith.truncf %249 : vector<8x32xf32> to vector<8x32xbf16>
    %c8_223 = arith.constant 8 : index
    %c0_224 = arith.constant 0 : index
    %c0_225 = arith.constant 0 : index
    %251 = vector.load %arg4[%c8_223, %c0_224, %c0_225] : memref<9x32x32xbf16, #tpu.memory_space<vmem>>, vector<1x32x32xbf16>
    %252 = vector.shape_cast %251 : vector<1x32x32xbf16> to vector<32x32xbf16>
    %cst_226 = arith.constant dense<0.000000e+00> : vector<8x32xf32>
    %253 = tpu.matmul %250, %252, %cst_226 {dimension_numbers = #tpu.dot_dimension_numbers<[1], [0], [0], [1], [0, 0, 1, 1], [], []>} : vector<8x32xbf16>, vector<32x32xbf16>, vector<8x32xf32> -> vector<8x32xf32>
    %254 = arith.addf %247, %253 : vector<8x32xf32>
    %cst_227 = arith.constant 0.00999999977 : f32
    %255 = vector.broadcast %cst_227 : f32 to vector<8x32xf32>
    %256 = arith.mulf %255, %254 : vector<8x32xf32>
    %257 = arith.maximumf %254, %256 : vector<8x32xf32>
    %c16 = arith.constant 16 : index
    %c0_228 = arith.constant 0 : index
    %258 = vector.load %arg6[%c16, %c0_228] : memref<64x32xf32, #tpu.memory_space<vmem>>, vector<8x32xf32>
    tpu.vector_store %arg6[%c16, %c0_228], %257 {strides = array<i32>} : memref<64x32xf32, #tpu.memory_space<vmem>>, vector<8x32xf32>,
    %c0_229 = arith.constant 0 : index
    %c0_230 = arith.constant 0 : index
    %259 = vector.load %arg5[%c0_229, %c0_230] : memref<1x32xf32, #tpu.memory_space<vmem>>, vector<1x32xf32>
    %260 = vector.extract_strided_slice %11 {offsets = [24, 0], sizes = [8, 32], strides = [1, 1]} : vector<64x32xf32> to vector<8x32xf32>
    %261 = vector.broadcast %259 : vector<1x32xf32> to vector<8x32xf32>
    %262 = arith.addf %261, %260 : vector<8x32xf32>
    %c3_231 = arith.constant 3 : index
    %c0_232 = arith.constant 0 : index
    %c0_233 = arith.constant 0 : index
    %263 = vector.load %arg7[%c3_231, %c0_232, %c0_233] : memref<10x10x32xf32, #tpu.memory_space<vmem>>, vector<1x8x32xf32>
    %264 = vector.shape_cast %263 : vector<1x8x32xf32> to vector<8x32xf32>
    %265 = arith.truncf %264 : vector<8x32xf32> to vector<8x32xbf16>
    %c0_234 = arith.constant 0 : index
    %c0_235 = arith.constant 0 : index
    %c0_236 = arith.constant 0 : index
    %266 = vector.load %arg4[%c0_234, %c0_235, %c0_236] : memref<9x32x32xbf16, #tpu.memory_space<vmem>>, vector<1x32x32xbf16>
    %267 = vector.shape_cast %266 : vector<1x32x32xbf16> to vector<32x32xbf16>
    %cst_237 = arith.constant dense<0.000000e+00> : vector<8x32xf32>
    %268 = tpu.matmul %265, %267, %cst_237 {dimension_numbers = #tpu.dot_dimension_numbers<[1], [0], [0], [1], [0, 0, 1, 1], [], []>} : vector<8x32xbf16>, vector<32x32xbf16>, vector<8x32xf32> -> vector<8x32xf32>
    %269 = arith.addf %262, %268 : vector<8x32xf32>
    %c3_238 = arith.constant 3 : index
    %c1_239 = arith.constant 1 : index
    %c0_240 = arith.constant 0 : index
    %270 = vector.load %arg7[%c3_238, %c1_239, %c0_240] : memref<10x10x32xf32, #tpu.memory_space<vmem>>, vector<1x8x32xf32>
    %271 = vector.shape_cast %270 : vector<1x8x32xf32> to vector<8x32xf32>
    %272 = arith.truncf %271 : vector<8x32xf32> to vector<8x32xbf16>
    %c1_241 = arith.constant 1 : index
    %c0_242 = arith.constant 0 : index
    %c0_243 = arith.constant 0 : index
    %273 = vector.load %arg4[%c1_241, %c0_242, %c0_243] : memref<9x32x32xbf16, #tpu.memory_space<vmem>>, vector<1x32x32xbf16>
    %274 = vector.shape_cast %273 : vector<1x32x32xbf16> to vector<32x32xbf16>
    %cst_244 = arith.constant dense<0.000000e+00> : vector<8x32xf32>
    %275 = tpu.matmul %272, %274, %cst_244 {dimension_numbers = #tpu.dot_dimension_numbers<[1], [0], [0], [1], [0, 0, 1, 1], [], []>} : vector<8x32xbf16>, vector<32x32xbf16>, vector<8x32xf32> -> vector<8x32xf32>
    %276 = arith.addf %269, %275 : vector<8x32xf32>
    %c3_245 = arith.constant 3 : index
    %c2_246 = arith.constant 2 : index
    %c0_247 = arith.constant 0 : index
    %277 = vector.load %arg7[%c3_245, %c2_246, %c0_247] : memref<10x10x32xf32, #tpu.memory_space<vmem>>, vector<1x8x32xf32>
    %278 = vector.shape_cast %277 : vector<1x8x32xf32> to vector<8x32xf32>
    %279 = arith.truncf %278 : vector<8x32xf32> to vector<8x32xbf16>
    %c2_248 = arith.constant 2 : index
    %c0_249 = arith.constant 0 : index
    %c0_250 = arith.constant 0 : index
    %280 = vector.load %arg4[%c2_248, %c0_249, %c0_250] : memref<9x32x32xbf16, #tpu.memory_space<vmem>>, vector<1x32x32xbf16>
    %281 = vector.shape_cast %280 : vector<1x32x32xbf16> to vector<32x32xbf16>
    %cst_251 = arith.constant dense<0.000000e+00> : vector<8x32xf32>
    %282 = tpu.matmul %279, %281, %cst_251 {dimension_numbers = #tpu.dot_dimension_numbers<[1], [0], [0], [1], [0, 0, 1, 1], [], []>} : vector<8x32xbf16>, vector<32x32xbf16>, vector<8x32xf32> -> vector<8x32xf32>
    %283 = arith.addf %276, %282 : vector<8x32xf32>
    %c4_252 = arith.constant 4 : index
    %c0_253 = arith.constant 0 : index
    %c0_254 = arith.constant 0 : index
    %284 = vector.load %arg7[%c4_252, %c0_253, %c0_254] : memref<10x10x32xf32, #tpu.memory_space<vmem>>, vector<1x8x32xf32>
    %285 = vector.shape_cast %284 : vector<1x8x32xf32> to vector<8x32xf32>
    %286 = arith.truncf %285 : vector<8x32xf32> to vector<8x32xbf16>
    %c3_255 = arith.constant 3 : index
    %c0_256 = arith.constant 0 : index
    %c0_257 = arith.constant 0 : index
    %287 = vector.load %arg4[%c3_255, %c0_256, %c0_257] : memref<9x32x32xbf16, #tpu.memory_space<vmem>>, vector<1x32x32xbf16>
    %288 = vector.shape_cast %287 : vector<1x32x32xbf16> to vector<32x32xbf16>
    %cst_258 = arith.constant dense<0.000000e+00> : vector<8x32xf32>
    %289 = tpu.matmul %286, %288, %cst_258 {dimension_numbers = #tpu.dot_dimension_numbers<[1], [0], [0], [1], [0, 0, 1, 1], [], []>} : vector<8x32xbf16>, vector<32x32xbf16>, vector<8x32xf32> -> vector<8x32xf32>
    %290 = arith.addf %283, %289 : vector<8x32xf32>
    %c4_259 = arith.constant 4 : index
    %c1_260 = arith.constant 1 : index
    %c0_261 = arith.constant 0 : index
    %291 = vector.load %arg7[%c4_259, %c1_260, %c0_261] : memref<10x10x32xf32, #tpu.memory_space<vmem>>, vector<1x8x32xf32>
    %292 = vector.shape_cast %291 : vector<1x8x32xf32> to vector<8x32xf32>
    %293 = arith.truncf %292 : vector<8x32xf32> to vector<8x32xbf16>
    %c4_262 = arith.constant 4 : index
    %c0_263 = arith.constant 0 : index
    %c0_264 = arith.constant 0 : index
    %294 = vector.load %arg4[%c4_262, %c0_263, %c0_264] : memref<9x32x32xbf16, #tpu.memory_space<vmem>>, vector<1x32x32xbf16>
    %295 = vector.shape_cast %294 : vector<1x32x32xbf16> to vector<32x32xbf16>
    %cst_265 = arith.constant dense<0.000000e+00> : vector<8x32xf32>
    %296 = tpu.matmul %293, %295, %cst_265 {dimension_numbers = #tpu.dot_dimension_numbers<[1], [0], [0], [1], [0, 0, 1, 1], [], []>} : vector<8x32xbf16>, vector<32x32xbf16>, vector<8x32xf32> -> vector<8x32xf32>
    %297 = arith.addf %290, %296 : vector<8x32xf32>
    %c4_266 = arith.constant 4 : index
    %c2_267 = arith.constant 2 : index
    %c0_268 = arith.constant 0 : index
    %298 = vector.load %arg7[%c4_266, %c2_267, %c0_268] : memref<10x10x32xf32, #tpu.memory_space<vmem>>, vector<1x8x32xf32>
    %299 = vector.shape_cast %298 : vector<1x8x32xf32> to vector<8x32xf32>
    %300 = arith.truncf %299 : vector<8x32xf32> to vector<8x32xbf16>
    %c5_269 = arith.constant 5 : index
    %c0_270 = arith.constant 0 : index
    %c0_271 = arith.constant 0 : index
    %301 = vector.load %arg4[%c5_269, %c0_270, %c0_271] : memref<9x32x32xbf16, #tpu.memory_space<vmem>>, vector<1x32x32xbf16>
    %302 = vector.shape_cast %301 : vector<1x32x32xbf16> to vector<32x32xbf16>
    %cst_272 = arith.constant dense<0.000000e+00> : vector<8x32xf32>
    %303 = tpu.matmul %300, %302, %cst_272 {dimension_numbers = #tpu.dot_dimension_numbers<[1], [0], [0], [1], [0, 0, 1, 1], [], []>} : vector<8x32xbf16>, vector<32x32xbf16>, vector<8x32xf32> -> vector<8x32xf32>
    %304 = arith.addf %297, %303 : vector<8x32xf32>
    %c5_273 = arith.constant 5 : index
    %c0_274 = arith.constant 0 : index
    %c0_275 = arith.constant 0 : index
    %305 = vector.load %arg7[%c5_273, %c0_274, %c0_275] : memref<10x10x32xf32, #tpu.memory_space<vmem>>, vector<1x8x32xf32>
    %306 = vector.shape_cast %305 : vector<1x8x32xf32> to vector<8x32xf32>
    %307 = arith.truncf %306 : vector<8x32xf32> to vector<8x32xbf16>
    %c6_276 = arith.constant 6 : index
    %c0_277 = arith.constant 0 : index
    %c0_278 = arith.constant 0 : index
    %308 = vector.load %arg4[%c6_276, %c0_277, %c0_278] : memref<9x32x32xbf16, #tpu.memory_space<vmem>>, vector<1x32x32xbf16>
    %309 = vector.shape_cast %308 : vector<1x32x32xbf16> to vector<32x32xbf16>
    %cst_279 = arith.constant dense<0.000000e+00> : vector<8x32xf32>
    %310 = tpu.matmul %307, %309, %cst_279 {dimension_numbers = #tpu.dot_dimension_numbers<[1], [0], [0], [1], [0, 0, 1, 1], [], []>} : vector<8x32xbf16>, vector<32x32xbf16>, vector<8x32xf32> -> vector<8x32xf32>
    %311 = arith.addf %304, %310 : vector<8x32xf32>
    %c5_280 = arith.constant 5 : index
    %c1_281 = arith.constant 1 : index
    %c0_282 = arith.constant 0 : index
    %312 = vector.load %arg7[%c5_280, %c1_281, %c0_282] : memref<10x10x32xf32, #tpu.memory_space<vmem>>, vector<1x8x32xf32>
    %313 = vector.shape_cast %312 : vector<1x8x32xf32> to vector<8x32xf32>
    %314 = arith.truncf %313 : vector<8x32xf32> to vector<8x32xbf16>
    %c7_283 = arith.constant 7 : index
    %c0_284 = arith.constant 0 : index
    %c0_285 = arith.constant 0 : index
    %315 = vector.load %arg4[%c7_283, %c0_284, %c0_285] : memref<9x32x32xbf16, #tpu.memory_space<vmem>>, vector<1x32x32xbf16>
    %316 = vector.shape_cast %315 : vector<1x32x32xbf16> to vector<32x32xbf16>
    %cst_286 = arith.constant dense<0.000000e+00> : vector<8x32xf32>
    %317 = tpu.matmul %314, %316, %cst_286 {dimension_numbers = #tpu.dot_dimension_numbers<[1], [0], [0], [1], [0, 0, 1, 1], [], []>} : vector<8x32xbf16>, vector<32x32xbf16>, vector<8x32xf32> -> vector<8x32xf32>
    %318 = arith.addf %311, %317 : vector<8x32xf32>
    %c5_287 = arith.constant 5 : index
    %c2_288 = arith.constant 2 : index
    %c0_289 = arith.constant 0 : index
    %319 = vector.load %arg7[%c5_287, %c2_288, %c0_289] : memref<10x10x32xf32, #tpu.memory_space<vmem>>, vector<1x8x32xf32>
    %320 = vector.shape_cast %319 : vector<1x8x32xf32> to vector<8x32xf32>
    %321 = arith.truncf %320 : vector<8x32xf32> to vector<8x32xbf16>
    %c8_290 = arith.constant 8 : index
    %c0_291 = arith.constant 0 : index
    %c0_292 = arith.constant 0 : index
    %322 = vector.load %arg4[%c8_290, %c0_291, %c0_292] : memref<9x32x32xbf16, #tpu.memory_space<vmem>>, vector<1x32x32xbf16>
    %323 = vector.shape_cast %322 : vector<1x32x32xbf16> to vector<32x32xbf16>
    %cst_293 = arith.constant dense<0.000000e+00> : vector<8x32xf32>
    %324 = tpu.matmul %321, %323, %cst_293 {dimension_numbers = #tpu.dot_dimension_numbers<[1], [0], [0], [1], [0, 0, 1, 1], [], []>} : vector<8x32xbf16>, vector<32x32xbf16>, vector<8x32xf32> -> vector<8x32xf32>
    %325 = arith.addf %318, %324 : vector<8x32xf32>
    %cst_294 = arith.constant 0.00999999977 : f32
    %326 = vector.broadcast %cst_294 : f32 to vector<8x32xf32>
    %327 = arith.mulf %326, %325 : vector<8x32xf32>
    %328 = arith.maximumf %325, %327 : vector<8x32xf32>
    %c24 = arith.constant 24 : index
    %c0_295 = arith.constant 0 : index
    %329 = vector.load %arg6[%c24, %c0_295] : memref<64x32xf32, #tpu.memory_space<vmem>>, vector<8x32xf32>
    tpu.vector_store %arg6[%c24, %c0_295], %328 {strides = array<i32>} : memref<64x32xf32, #tpu.memory_space<vmem>>, vector<8x32xf32>,
    %c0_296 = arith.constant 0 : index
    %c0_297 = arith.constant 0 : index
    %330 = vector.load %arg5[%c0_296, %c0_297] : memref<1x32xf32, #tpu.memory_space<vmem>>, vector<1x32xf32>
    %331 = vector.extract_strided_slice %11 {offsets = [32, 0], sizes = [8, 32], strides = [1, 1]} : vector<64x32xf32> to vector<8x32xf32>
    %332 = vector.broadcast %330 : vector<1x32xf32> to vector<8x32xf32>
    %333 = arith.addf %332, %331 : vector<8x32xf32>
    %c4_298 = arith.constant 4 : index
    %c0_299 = arith.constant 0 : index
    %c0_300 = arith.constant 0 : index
    %334 = vector.load %arg7[%c4_298, %c0_299, %c0_300] : memref<10x10x32xf32, #tpu.memory_space<vmem>>, vector<1x8x32xf32>
    %335 = vector.shape_cast %334 : vector<1x8x32xf32> to vector<8x32xf32>
    %336 = arith.truncf %335 : vector<8x32xf32> to vector<8x32xbf16>
    %c0_301 = arith.constant 0 : index
    %c0_302 = arith.constant 0 : index
    %c0_303 = arith.constant 0 : index
    %337 = vector.load %arg4[%c0_301, %c0_302, %c0_303] : memref<9x32x32xbf16, #tpu.memory_space<vmem>>, vector<1x32x32xbf16>
    %338 = vector.shape_cast %337 : vector<1x32x32xbf16> to vector<32x32xbf16>
    %cst_304 = arith.constant dense<0.000000e+00> : vector<8x32xf32>
    %339 = tpu.matmul %336, %338, %cst_304 {dimension_numbers = #tpu.dot_dimension_numbers<[1], [0], [0], [1], [0, 0, 1, 1], [], []>} : vector<8x32xbf16>, vector<32x32xbf16>, vector<8x32xf32> -> vector<8x32xf32>
    %340 = arith.addf %333, %339 : vector<8x32xf32>
    %c4_305 = arith.constant 4 : index
    %c1_306 = arith.constant 1 : index
    %c0_307 = arith.constant 0 : index
    %341 = vector.load %arg7[%c4_305, %c1_306, %c0_307] : memref<10x10x32xf32, #tpu.memory_space<vmem>>, vector<1x8x32xf32>
    %342 = vector.shape_cast %341 : vector<1x8x32xf32> to vector<8x32xf32>
    %343 = arith.truncf %342 : vector<8x32xf32> to vector<8x32xbf16>
    %c1_308 = arith.constant 1 : index
    %c0_309 = arith.constant 0 : index
    %c0_310 = arith.constant 0 : index
    %344 = vector.load %arg4[%c1_308, %c0_309, %c0_310] : memref<9x32x32xbf16, #tpu.memory_space<vmem>>, vector<1x32x32xbf16>
    %345 = vector.shape_cast %344 : vector<1x32x32xbf16> to vector<32x32xbf16>
    %cst_311 = arith.constant dense<0.000000e+00> : vector<8x32xf32>
    %346 = tpu.matmul %343, %345, %cst_311 {dimension_numbers = #tpu.dot_dimension_numbers<[1], [0], [0], [1], [0, 0, 1, 1], [], []>} : vector<8x32xbf16>, vector<32x32xbf16>, vector<8x32xf32> -> vector<8x32xf32>
    %347 = arith.addf %340, %346 : vector<8x32xf32>
    %c4_312 = arith.constant 4 : index
    %c2_313 = arith.constant 2 : index
    %c0_314 = arith.constant 0 : index
    %348 = vector.load %arg7[%c4_312, %c2_313, %c0_314] : memref<10x10x32xf32, #tpu.memory_space<vmem>>, vector<1x8x32xf32>
    %349 = vector.shape_cast %348 : vector<1x8x32xf32> to vector<8x32xf32>
    %350 = arith.truncf %349 : vector<8x32xf32> to vector<8x32xbf16>
    %c2_315 = arith.constant 2 : index
    %c0_316 = arith.constant 0 : index
    %c0_317 = arith.constant 0 : index
    %351 = vector.load %arg4[%c2_315, %c0_316, %c0_317] : memref<9x32x32xbf16, #tpu.memory_space<vmem>>, vector<1x32x32xbf16>
    %352 = vector.shape_cast %351 : vector<1x32x32xbf16> to vector<32x32xbf16>
    %cst_318 = arith.constant dense<0.000000e+00> : vector<8x32xf32>
    %353 = tpu.matmul %350, %352, %cst_318 {dimension_numbers = #tpu.dot_dimension_numbers<[1], [0], [0], [1], [0, 0, 1, 1], [], []>} : vector<8x32xbf16>, vector<32x32xbf16>, vector<8x32xf32> -> vector<8x32xf32>
    %354 = arith.addf %347, %353 : vector<8x32xf32>
    %c5_319 = arith.constant 5 : index
    %c0_320 = arith.constant 0 : index
    %c0_321 = arith.constant 0 : index
    %355 = vector.load %arg7[%c5_319, %c0_320, %c0_321] : memref<10x10x32xf32, #tpu.memory_space<vmem>>, vector<1x8x32xf32>
    %356 = vector.shape_cast %355 : vector<1x8x32xf32> to vector<8x32xf32>
    %357 = arith.truncf %356 : vector<8x32xf32> to vector<8x32xbf16>
    %c3_322 = arith.constant 3 : index
    %c0_323 = arith.constant 0 : index
    %c0_324 = arith.constant 0 : index
    %358 = vector.load %arg4[%c3_322, %c0_323, %c0_324] : memref<9x32x32xbf16, #tpu.memory_space<vmem>>, vector<1x32x32xbf16>
    %359 = vector.shape_cast %358 : vector<1x32x32xbf16> to vector<32x32xbf16>
    %cst_325 = arith.constant dense<0.000000e+00> : vector<8x32xf32>
    %360 = tpu.matmul %357, %359, %cst_325 {dimension_numbers = #tpu.dot_dimension_numbers<[1], [0], [0], [1], [0, 0, 1, 1], [], []>} : vector<8x32xbf16>, vector<32x32xbf16>, vector<8x32xf32> -> vector<8x32xf32>
    %361 = arith.addf %354, %360 : vector<8x32xf32>
    %c5_326 = arith.constant 5 : index
    %c1_327 = arith.constant 1 : index
    %c0_328 = arith.constant 0 : index
    %362 = vector.load %arg7[%c5_326, %c1_327, %c0_328] : memref<10x10x32xf32, #tpu.memory_space<vmem>>, vector<1x8x32xf32>
    %363 = vector.shape_cast %362 : vector<1x8x32xf32> to vector<8x32xf32>
    %364 = arith.truncf %363 : vector<8x32xf32> to vector<8x32xbf16>
    %c4_329 = arith.constant 4 : index
    %c0_330 = arith.constant 0 : index
    %c0_331 = arith.constant 0 : index
    %365 = vector.load %arg4[%c4_329, %c0_330, %c0_331] : memref<9x32x32xbf16, #tpu.memory_space<vmem>>, vector<1x32x32xbf16>
    %366 = vector.shape_cast %365 : vector<1x32x32xbf16> to vector<32x32xbf16>
    %cst_332 = arith.constant dense<0.000000e+00> : vector<8x32xf32>
    %367 = tpu.matmul %364, %366, %cst_332 {dimension_numbers = #tpu.dot_dimension_numbers<[1], [0], [0], [1], [0, 0, 1, 1], [], []>} : vector<8x32xbf16>, vector<32x32xbf16>, vector<8x32xf32> -> vector<8x32xf32>
    %368 = arith.addf %361, %367 : vector<8x32xf32>
    %c5_333 = arith.constant 5 : index
    %c2_334 = arith.constant 2 : index
    %c0_335 = arith.constant 0 : index
    %369 = vector.load %arg7[%c5_333, %c2_334, %c0_335] : memref<10x10x32xf32, #tpu.memory_space<vmem>>, vector<1x8x32xf32>
    %370 = vector.shape_cast %369 : vector<1x8x32xf32> to vector<8x32xf32>
    %371 = arith.truncf %370 : vector<8x32xf32> to vector<8x32xbf16>
    %c5_336 = arith.constant 5 : index
    %c0_337 = arith.constant 0 : index
    %c0_338 = arith.constant 0 : index
    %372 = vector.load %arg4[%c5_336, %c0_337, %c0_338] : memref<9x32x32xbf16, #tpu.memory_space<vmem>>, vector<1x32x32xbf16>
    %373 = vector.shape_cast %372 : vector<1x32x32xbf16> to vector<32x32xbf16>
    %cst_339 = arith.constant dense<0.000000e+00> : vector<8x32xf32>
    %374 = tpu.matmul %371, %373, %cst_339 {dimension_numbers = #tpu.dot_dimension_numbers<[1], [0], [0], [1], [0, 0, 1, 1], [], []>} : vector<8x32xbf16>, vector<32x32xbf16>, vector<8x32xf32> -> vector<8x32xf32>
    %375 = arith.addf %368, %374 : vector<8x32xf32>
    %c6_340 = arith.constant 6 : index
    %c0_341 = arith.constant 0 : index
    %c0_342 = arith.constant 0 : index
    %376 = vector.load %arg7[%c6_340, %c0_341, %c0_342] : memref<10x10x32xf32, #tpu.memory_space<vmem>>, vector<1x8x32xf32>
    %377 = vector.shape_cast %376 : vector<1x8x32xf32> to vector<8x32xf32>
    %378 = arith.truncf %377 : vector<8x32xf32> to vector<8x32xbf16>
    %c6_343 = arith.constant 6 : index
    %c0_344 = arith.constant 0 : index
    %c0_345 = arith.constant 0 : index
    %379 = vector.load %arg4[%c6_343, %c0_344, %c0_345] : memref<9x32x32xbf16, #tpu.memory_space<vmem>>, vector<1x32x32xbf16>
    %380 = vector.shape_cast %379 : vector<1x32x32xbf16> to vector<32x32xbf16>
    %cst_346 = arith.constant dense<0.000000e+00> : vector<8x32xf32>
    %381 = tpu.matmul %378, %380, %cst_346 {dimension_numbers = #tpu.dot_dimension_numbers<[1], [0], [0], [1], [0, 0, 1, 1], [], []>} : vector<8x32xbf16>, vector<32x32xbf16>, vector<8x32xf32> -> vector<8x32xf32>
    %382 = arith.addf %375, %381 : vector<8x32xf32>
    %c6_347 = arith.constant 6 : index
    %c1_348 = arith.constant 1 : index
    %c0_349 = arith.constant 0 : index
    %383 = vector.load %arg7[%c6_347, %c1_348, %c0_349] : memref<10x10x32xf32, #tpu.memory_space<vmem>>, vector<1x8x32xf32>
    %384 = vector.shape_cast %383 : vector<1x8x32xf32> to vector<8x32xf32>
    %385 = arith.truncf %384 : vector<8x32xf32> to vector<8x32xbf16>
    %c7_350 = arith.constant 7 : index
    %c0_351 = arith.constant 0 : index
    %c0_352 = arith.constant 0 : index
    %386 = vector.load %arg4[%c7_350, %c0_351, %c0_352] : memref<9x32x32xbf16, #tpu.memory_space<vmem>>, vector<1x32x32xbf16>
    %387 = vector.shape_cast %386 : vector<1x32x32xbf16> to vector<32x32xbf16>
    %cst_353 = arith.constant dense<0.000000e+00> : vector<8x32xf32>
    %388 = tpu.matmul %385, %387, %cst_353 {dimension_numbers = #tpu.dot_dimension_numbers<[1], [0], [0], [1], [0, 0, 1, 1], [], []>} : vector<8x32xbf16>, vector<32x32xbf16>, vector<8x32xf32> -> vector<8x32xf32>
    %389 = arith.addf %382, %388 : vector<8x32xf32>
    %c6_354 = arith.constant 6 : index
    %c2_355 = arith.constant 2 : index
    %c0_356 = arith.constant 0 : index
    %390 = vector.load %arg7[%c6_354, %c2_355, %c0_356] : memref<10x10x32xf32, #tpu.memory_space<vmem>>, vector<1x8x32xf32>
    %391 = vector.shape_cast %390 : vector<1x8x32xf32> to vector<8x32xf32>
    %392 = arith.truncf %391 : vector<8x32xf32> to vector<8x32xbf16>
    %c8_357 = arith.constant 8 : index
    %c0_358 = arith.constant 0 : index
    %c0_359 = arith.constant 0 : index
    %393 = vector.load %arg4[%c8_357, %c0_358, %c0_359] : memref<9x32x32xbf16, #tpu.memory_space<vmem>>, vector<1x32x32xbf16>
    %394 = vector.shape_cast %393 : vector<1x32x32xbf16> to vector<32x32xbf16>
    %cst_360 = arith.constant dense<0.000000e+00> : vector<8x32xf32>
    %395 = tpu.matmul %392, %394, %cst_360 {dimension_numbers = #tpu.dot_dimension_numbers<[1], [0], [0], [1], [0, 0, 1, 1], [], []>} : vector<8x32xbf16>, vector<32x32xbf16>, vector<8x32xf32> -> vector<8x32xf32>
    %396 = arith.addf %389, %395 : vector<8x32xf32>
    %cst_361 = arith.constant 0.00999999977 : f32
    %397 = vector.broadcast %cst_361 : f32 to vector<8x32xf32>
    %398 = arith.mulf %397, %396 : vector<8x32xf32>
    %399 = arith.maximumf %396, %398 : vector<8x32xf32>
    %c32 = arith.constant 32 : index
    %c0_362 = arith.constant 0 : index
    %400 = vector.load %arg6[%c32, %c0_362] : memref<64x32xf32, #tpu.memory_space<vmem>>, vector<8x32xf32>
    tpu.vector_store %arg6[%c32, %c0_362], %399 {strides = array<i32>} : memref<64x32xf32, #tpu.memory_space<vmem>>, vector<8x32xf32>,
    %c0_363 = arith.constant 0 : index
    %c0_364 = arith.constant 0 : index
    %401 = vector.load %arg5[%c0_363, %c0_364] : memref<1x32xf32, #tpu.memory_space<vmem>>, vector<1x32xf32>
    %402 = vector.extract_strided_slice %11 {offsets = [40, 0], sizes = [8, 32], strides = [1, 1]} : vector<64x32xf32> to vector<8x32xf32>
    %403 = vector.broadcast %401 : vector<1x32xf32> to vector<8x32xf32>
    %404 = arith.addf %403, %402 : vector<8x32xf32>
    %c5_365 = arith.constant 5 : index
    %c0_366 = arith.constant 0 : index
    %c0_367 = arith.constant 0 : index
    %405 = vector.load %arg7[%c5_365, %c0_366, %c0_367] : memref<10x10x32xf32, #tpu.memory_space<vmem>>, vector<1x8x32xf32>
    %406 = vector.shape_cast %405 : vector<1x8x32xf32> to vector<8x32xf32>
    %407 = arith.truncf %406 : vector<8x32xf32> to vector<8x32xbf16>
    %c0_368 = arith.constant 0 : index
    %c0_369 = arith.constant 0 : index
    %c0_370 = arith.constant 0 : index
    %408 = vector.load %arg4[%c0_368, %c0_369, %c0_370] : memref<9x32x32xbf16, #tpu.memory_space<vmem>>, vector<1x32x32xbf16>
    %409 = vector.shape_cast %408 : vector<1x32x32xbf16> to vector<32x32xbf16>
    %cst_371 = arith.constant dense<0.000000e+00> : vector<8x32xf32>
    %410 = tpu.matmul %407, %409, %cst_371 {dimension_numbers = #tpu.dot_dimension_numbers<[1], [0], [0], [1], [0, 0, 1, 1], [], []>} : vector<8x32xbf16>, vector<32x32xbf16>, vector<8x32xf32> -> vector<8x32xf32>
    %411 = arith.addf %404, %410 : vector<8x32xf32>
    %c5_372 = arith.constant 5 : index
    %c1_373 = arith.constant 1 : index
    %c0_374 = arith.constant 0 : index
    %412 = vector.load %arg7[%c5_372, %c1_373, %c0_374] : memref<10x10x32xf32, #tpu.memory_space<vmem>>, vector<1x8x32xf32>
    %413 = vector.shape_cast %412 : vector<1x8x32xf32> to vector<8x32xf32>
    %414 = arith.truncf %413 : vector<8x32xf32> to vector<8x32xbf16>
    %c1_375 = arith.constant 1 : index
    %c0_376 = arith.constant 0 : index
    %c0_377 = arith.constant 0 : index
    %415 = vector.load %arg4[%c1_375, %c0_376, %c0_377] : memref<9x32x32xbf16, #tpu.memory_space<vmem>>, vector<1x32x32xbf16>
    %416 = vector.shape_cast %415 : vector<1x32x32xbf16> to vector<32x32xbf16>
    %cst_378 = arith.constant dense<0.000000e+00> : vector<8x32xf32>
    %417 = tpu.matmul %414, %416, %cst_378 {dimension_numbers = #tpu.dot_dimension_numbers<[1], [0], [0], [1], [0, 0, 1, 1], [], []>} : vector<8x32xbf16>, vector<32x32xbf16>, vector<8x32xf32> -> vector<8x32xf32>
    %418 = arith.addf %411, %417 : vector<8x32xf32>
    %c5_379 = arith.constant 5 : index
    %c2_380 = arith.constant 2 : index
    %c0_381 = arith.constant 0 : index
    %419 = vector.load %arg7[%c5_379, %c2_380, %c0_381] : memref<10x10x32xf32, #tpu.memory_space<vmem>>, vector<1x8x32xf32>
    %420 = vector.shape_cast %419 : vector<1x8x32xf32> to vector<8x32xf32>
    %421 = arith.truncf %420 : vector<8x32xf32> to vector<8x32xbf16>
    %c2_382 = arith.constant 2 : index
    %c0_383 = arith.constant 0 : index
    %c0_384 = arith.constant 0 : index
    %422 = vector.load %arg4[%c2_382, %c0_383, %c0_384] : memref<9x32x32xbf16, #tpu.memory_space<vmem>>, vector<1x32x32xbf16>
    %423 = vector.shape_cast %422 : vector<1x32x32xbf16> to vector<32x32xbf16>
    %cst_385 = arith.constant dense<0.000000e+00> : vector<8x32xf32>
    %424 = tpu.matmul %421, %423, %cst_385 {dimension_numbers = #tpu.dot_dimension_numbers<[1], [0], [0], [1], [0, 0, 1, 1], [], []>} : vector<8x32xbf16>, vector<32x32xbf16>, vector<8x32xf32> -> vector<8x32xf32>
    %425 = arith.addf %418, %424 : vector<8x32xf32>
    %c6_386 = arith.constant 6 : index
    %c0_387 = arith.constant 0 : index
    %c0_388 = arith.constant 0 : index
    %426 = vector.load %arg7[%c6_386, %c0_387, %c0_388] : memref<10x10x32xf32, #tpu.memory_space<vmem>>, vector<1x8x32xf32>
    %427 = vector.shape_cast %426 : vector<1x8x32xf32> to vector<8x32xf32>
    %428 = arith.truncf %427 : vector<8x32xf32> to vector<8x32xbf16>
    %c3_389 = arith.constant 3 : index
    %c0_390 = arith.constant 0 : index
    %c0_391 = arith.constant 0 : index
    %429 = vector.load %arg4[%c3_389, %c0_390, %c0_391] : memref<9x32x32xbf16, #tpu.memory_space<vmem>>, vector<1x32x32xbf16>
    %430 = vector.shape_cast %429 : vector<1x32x32xbf16> to vector<32x32xbf16>
    %cst_392 = arith.constant dense<0.000000e+00> : vector<8x32xf32>
    %431 = tpu.matmul %428, %430, %cst_392 {dimension_numbers = #tpu.dot_dimension_numbers<[1], [0], [0], [1], [0, 0, 1, 1], [], []>} : vector<8x32xbf16>, vector<32x32xbf16>, vector<8x32xf32> -> vector<8x32xf32>
    %432 = arith.addf %425, %431 : vector<8x32xf32>
    %c6_393 = arith.constant 6 : index
    %c1_394 = arith.constant 1 : index
    %c0_395 = arith.constant 0 : index
    %433 = vector.load %arg7[%c6_393, %c1_394, %c0_395] : memref<10x10x32xf32, #tpu.memory_space<vmem>>, vector<1x8x32xf32>
    %434 = vector.shape_cast %433 : vector<1x8x32xf32> to vector<8x32xf32>
    %435 = arith.truncf %434 : vector<8x32xf32> to vector<8x32xbf16>
    %c4_396 = arith.constant 4 : index
    %c0_397 = arith.constant 0 : index
    %c0_398 = arith.constant 0 : index
    %436 = vector.load %arg4[%c4_396, %c0_397, %c0_398] : memref<9x32x32xbf16, #tpu.memory_space<vmem>>, vector<1x32x32xbf16>
    %437 = vector.shape_cast %436 : vector<1x32x32xbf16> to vector<32x32xbf16>
    %cst_399 = arith.constant dense<0.000000e+00> : vector<8x32xf32>
    %438 = tpu.matmul %435, %437, %cst_399 {dimension_numbers = #tpu.dot_dimension_numbers<[1], [0], [0], [1], [0, 0, 1, 1], [], []>} : vector<8x32xbf16>, vector<32x32xbf16>, vector<8x32xf32> -> vector<8x32xf32>
    %439 = arith.addf %432, %438 : vector<8x32xf32>
    %c6_400 = arith.constant 6 : index
    %c2_401 = arith.constant 2 : index
    %c0_402 = arith.constant 0 : index
    %440 = vector.load %arg7[%c6_400, %c2_401, %c0_402] : memref<10x10x32xf32, #tpu.memory_space<vmem>>, vector<1x8x32xf32>
    %441 = vector.shape_cast %440 : vector<1x8x32xf32> to vector<8x32xf32>
    %442 = arith.truncf %441 : vector<8x32xf32> to vector<8x32xbf16>
    %c5_403 = arith.constant 5 : index
    %c0_404 = arith.constant 0 : index
    %c0_405 = arith.constant 0 : index
    %443 = vector.load %arg4[%c5_403, %c0_404, %c0_405] : memref<9x32x32xbf16, #tpu.memory_space<vmem>>, vector<1x32x32xbf16>
    %444 = vector.shape_cast %443 : vector<1x32x32xbf16> to vector<32x32xbf16>
    %cst_406 = arith.constant dense<0.000000e+00> : vector<8x32xf32>
    %445 = tpu.matmul %442, %444, %cst_406 {dimension_numbers = #tpu.dot_dimension_numbers<[1], [0], [0], [1], [0, 0, 1, 1], [], []>} : vector<8x32xbf16>, vector<32x32xbf16>, vector<8x32xf32> -> vector<8x32xf32>
    %446 = arith.addf %439, %445 : vector<8x32xf32>
    %c7_407 = arith.constant 7 : index
    %c0_408 = arith.constant 0 : index
    %c0_409 = arith.constant 0 : index
    %447 = vector.load %arg7[%c7_407, %c0_408, %c0_409] : memref<10x10x32xf32, #tpu.memory_space<vmem>>, vector<1x8x32xf32>
    %448 = vector.shape_cast %447 : vector<1x8x32xf32> to vector<8x32xf32>
    %449 = arith.truncf %448 : vector<8x32xf32> to vector<8x32xbf16>
    %c6_410 = arith.constant 6 : index
    %c0_411 = arith.constant 0 : index
    %c0_412 = arith.constant 0 : index
    %450 = vector.load %arg4[%c6_410, %c0_411, %c0_412] : memref<9x32x32xbf16, #tpu.memory_space<vmem>>, vector<1x32x32xbf16>
    %451 = vector.shape_cast %450 : vector<1x32x32xbf16> to vector<32x32xbf16>
    %cst_413 = arith.constant dense<0.000000e+00> : vector<8x32xf32>
    %452 = tpu.matmul %449, %451, %cst_413 {dimension_numbers = #tpu.dot_dimension_numbers<[1], [0], [0], [1], [0, 0, 1, 1], [], []>} : vector<8x32xbf16>, vector<32x32xbf16>, vector<8x32xf32> -> vector<8x32xf32>
    %453 = arith.addf %446, %452 : vector<8x32xf32>
    %c7_414 = arith.constant 7 : index
    %c1_415 = arith.constant 1 : index
    %c0_416 = arith.constant 0 : index
    %454 = vector.load %arg7[%c7_414, %c1_415, %c0_416] : memref<10x10x32xf32, #tpu.memory_space<vmem>>, vector<1x8x32xf32>
    %455 = vector.shape_cast %454 : vector<1x8x32xf32> to vector<8x32xf32>
    %456 = arith.truncf %455 : vector<8x32xf32> to vector<8x32xbf16>
    %c7_417 = arith.constant 7 : index
    %c0_418 = arith.constant 0 : index
    %c0_419 = arith.constant 0 : index
    %457 = vector.load %arg4[%c7_417, %c0_418, %c0_419] : memref<9x32x32xbf16, #tpu.memory_space<vmem>>, vector<1x32x32xbf16>
    %458 = vector.shape_cast %457 : vector<1x32x32xbf16> to vector<32x32xbf16>
    %cst_420 = arith.constant dense<0.000000e+00> : vector<8x32xf32>
    %459 = tpu.matmul %456, %458, %cst_420 {dimension_numbers = #tpu.dot_dimension_numbers<[1], [0], [0], [1], [0, 0, 1, 1], [], []>} : vector<8x32xbf16>, vector<32x32xbf16>, vector<8x32xf32> -> vector<8x32xf32>
    %460 = arith.addf %453, %459 : vector<8x32xf32>
    %c7_421 = arith.constant 7 : index
    %c2_422 = arith.constant 2 : index
    %c0_423 = arith.constant 0 : index
    %461 = vector.load %arg7[%c7_421, %c2_422, %c0_423] : memref<10x10x32xf32, #tpu.memory_space<vmem>>, vector<1x8x32xf32>
    %462 = vector.shape_cast %461 : vector<1x8x32xf32> to vector<8x32xf32>
    %463 = arith.truncf %462 : vector<8x32xf32> to vector<8x32xbf16>
    %c8_424 = arith.constant 8 : index
    %c0_425 = arith.constant 0 : index
    %c0_426 = arith.constant 0 : index
    %464 = vector.load %arg4[%c8_424, %c0_425, %c0_426] : memref<9x32x32xbf16, #tpu.memory_space<vmem>>, vector<1x32x32xbf16>
    %465 = vector.shape_cast %464 : vector<1x32x32xbf16> to vector<32x32xbf16>
    %cst_427 = arith.constant dense<0.000000e+00> : vector<8x32xf32>
    %466 = tpu.matmul %463, %465, %cst_427 {dimension_numbers = #tpu.dot_dimension_numbers<[1], [0], [0], [1], [0, 0, 1, 1], [], []>} : vector<8x32xbf16>, vector<32x32xbf16>, vector<8x32xf32> -> vector<8x32xf32>
    %467 = arith.addf %460, %466 : vector<8x32xf32>
    %cst_428 = arith.constant 0.00999999977 : f32
    %468 = vector.broadcast %cst_428 : f32 to vector<8x32xf32>
    %469 = arith.mulf %468, %467 : vector<8x32xf32>
    %470 = arith.maximumf %467, %469 : vector<8x32xf32>
    %c40 = arith.constant 40 : index
    %c0_429 = arith.constant 0 : index
    %471 = vector.load %arg6[%c40, %c0_429] : memref<64x32xf32, #tpu.memory_space<vmem>>, vector<8x32xf32>
    tpu.vector_store %arg6[%c40, %c0_429], %470 {strides = array<i32>} : memref<64x32xf32, #tpu.memory_space<vmem>>, vector<8x32xf32>,
    %c0_430 = arith.constant 0 : index
    %c0_431 = arith.constant 0 : index
    %472 = vector.load %arg5[%c0_430, %c0_431] : memref<1x32xf32, #tpu.memory_space<vmem>>, vector<1x32xf32>
    %473 = vector.extract_strided_slice %11 {offsets = [48, 0], sizes = [8, 32], strides = [1, 1]} : vector<64x32xf32> to vector<8x32xf32>
    %474 = vector.broadcast %472 : vector<1x32xf32> to vector<8x32xf32>
    %475 = arith.addf %474, %473 : vector<8x32xf32>
    %c6_432 = arith.constant 6 : index
    %c0_433 = arith.constant 0 : index
    %c0_434 = arith.constant 0 : index
    %476 = vector.load %arg7[%c6_432, %c0_433, %c0_434] : memref<10x10x32xf32, #tpu.memory_space<vmem>>, vector<1x8x32xf32>
    %477 = vector.shape_cast %476 : vector<1x8x32xf32> to vector<8x32xf32>
    %478 = arith.truncf %477 : vector<8x32xf32> to vector<8x32xbf16>
    %c0_435 = arith.constant 0 : index
    %c0_436 = arith.constant 0 : index
    %c0_437 = arith.constant 0 : index
    %479 = vector.load %arg4[%c0_435, %c0_436, %c0_437] : memref<9x32x32xbf16, #tpu.memory_space<vmem>>, vector<1x32x32xbf16>
    %480 = vector.shape_cast %479 : vector<1x32x32xbf16> to vector<32x32xbf16>
    %cst_438 = arith.constant dense<0.000000e+00> : vector<8x32xf32>
    %481 = tpu.matmul %478, %480, %cst_438 {dimension_numbers = #tpu.dot_dimension_numbers<[1], [0], [0], [1], [0, 0, 1, 1], [], []>} : vector<8x32xbf16>, vector<32x32xbf16>, vector<8x32xf32> -> vector<8x32xf32>
    %482 = arith.addf %475, %481 : vector<8x32xf32>
    %c6_439 = arith.constant 6 : index
    %c1_440 = arith.constant 1 : index
    %c0_441 = arith.constant 0 : index
    %483 = vector.load %arg7[%c6_439, %c1_440, %c0_441] : memref<10x10x32xf32, #tpu.memory_space<vmem>>, vector<1x8x32xf32>
    %484 = vector.shape_cast %483 : vector<1x8x32xf32> to vector<8x32xf32>
    %485 = arith.truncf %484 : vector<8x32xf32> to vector<8x32xbf16>
    %c1_442 = arith.constant 1 : index
    %c0_443 = arith.constant 0 : index
    %c0_444 = arith.constant 0 : index
    %486 = vector.load %arg4[%c1_442, %c0_443, %c0_444] : memref<9x32x32xbf16, #tpu.memory_space<vmem>>, vector<1x32x32xbf16>
    %487 = vector.shape_cast %486 : vector<1x32x32xbf16> to vector<32x32xbf16>
    %cst_445 = arith.constant dense<0.000000e+00> : vector<8x32xf32>
    %488 = tpu.matmul %485, %487, %cst_445 {dimension_numbers = #tpu.dot_dimension_numbers<[1], [0], [0], [1], [0, 0, 1, 1], [], []>} : vector<8x32xbf16>, vector<32x32xbf16>, vector<8x32xf32> -> vector<8x32xf32>
    %489 = arith.addf %482, %488 : vector<8x32xf32>
    %c6_446 = arith.constant 6 : index
    %c2_447 = arith.constant 2 : index
    %c0_448 = arith.constant 0 : index
    %490 = vector.load %arg7[%c6_446, %c2_447, %c0_448] : memref<10x10x32xf32, #tpu.memory_space<vmem>>, vector<1x8x32xf32>
    %491 = vector.shape_cast %490 : vector<1x8x32xf32> to vector<8x32xf32>
    %492 = arith.truncf %491 : vector<8x32xf32> to vector<8x32xbf16>
    %c2_449 = arith.constant 2 : index
    %c0_450 = arith.constant 0 : index
    %c0_451 = arith.constant 0 : index
    %493 = vector.load %arg4[%c2_449, %c0_450, %c0_451] : memref<9x32x32xbf16, #tpu.memory_space<vmem>>, vector<1x32x32xbf16>
    %494 = vector.shape_cast %493 : vector<1x32x32xbf16> to vector<32x32xbf16>
    %cst_452 = arith.constant dense<0.000000e+00> : vector<8x32xf32>
    %495 = tpu.matmul %492, %494, %cst_452 {dimension_numbers = #tpu.dot_dimension_numbers<[1], [0], [0], [1], [0, 0, 1, 1], [], []>} : vector<8x32xbf16>, vector<32x32xbf16>, vector<8x32xf32> -> vector<8x32xf32>
    %496 = arith.addf %489, %495 : vector<8x32xf32>
    %c7_453 = arith.constant 7 : index
    %c0_454 = arith.constant 0 : index
    %c0_455 = arith.constant 0 : index
    %497 = vector.load %arg7[%c7_453, %c0_454, %c0_455] : memref<10x10x32xf32, #tpu.memory_space<vmem>>, vector<1x8x32xf32>
    %498 = vector.shape_cast %497 : vector<1x8x32xf32> to vector<8x32xf32>
    %499 = arith.truncf %498 : vector<8x32xf32> to vector<8x32xbf16>
    %c3_456 = arith.constant 3 : index
    %c0_457 = arith.constant 0 : index
    %c0_458 = arith.constant 0 : index
    %500 = vector.load %arg4[%c3_456, %c0_457, %c0_458] : memref<9x32x32xbf16, #tpu.memory_space<vmem>>, vector<1x32x32xbf16>
    %501 = vector.shape_cast %500 : vector<1x32x32xbf16> to vector<32x32xbf16>
    %cst_459 = arith.constant dense<0.000000e+00> : vector<8x32xf32>
    %502 = tpu.matmul %499, %501, %cst_459 {dimension_numbers = #tpu.dot_dimension_numbers<[1], [0], [0], [1], [0, 0, 1, 1], [], []>} : vector<8x32xbf16>, vector<32x32xbf16>, vector<8x32xf32> -> vector<8x32xf32>
    %503 = arith.addf %496, %502 : vector<8x32xf32>
    %c7_460 = arith.constant 7 : index
    %c1_461 = arith.constant 1 : index
    %c0_462 = arith.constant 0 : index
    %504 = vector.load %arg7[%c7_460, %c1_461, %c0_462] : memref<10x10x32xf32, #tpu.memory_space<vmem>>, vector<1x8x32xf32>
    %505 = vector.shape_cast %504 : vector<1x8x32xf32> to vector<8x32xf32>
    %506 = arith.truncf %505 : vector<8x32xf32> to vector<8x32xbf16>
    %c4_463 = arith.constant 4 : index
    %c0_464 = arith.constant 0 : index
    %c0_465 = arith.constant 0 : index
    %507 = vector.load %arg4[%c4_463, %c0_464, %c0_465] : memref<9x32x32xbf16, #tpu.memory_space<vmem>>, vector<1x32x32xbf16>
    %508 = vector.shape_cast %507 : vector<1x32x32xbf16> to vector<32x32xbf16>
    %cst_466 = arith.constant dense<0.000000e+00> : vector<8x32xf32>
    %509 = tpu.matmul %506, %508, %cst_466 {dimension_numbers = #tpu.dot_dimension_numbers<[1], [0], [0], [1], [0, 0, 1, 1], [], []>} : vector<8x32xbf16>, vector<32x32xbf16>, vector<8x32xf32> -> vector<8x32xf32>
    %510 = arith.addf %503, %509 : vector<8x32xf32>
    %c7_467 = arith.constant 7 : index
    %c2_468 = arith.constant 2 : index
    %c0_469 = arith.constant 0 : index
    %511 = vector.load %arg7[%c7_467, %c2_468, %c0_469] : memref<10x10x32xf32, #tpu.memory_space<vmem>>, vector<1x8x32xf32>
    %512 = vector.shape_cast %511 : vector<1x8x32xf32> to vector<8x32xf32>
    %513 = arith.truncf %512 : vector<8x32xf32> to vector<8x32xbf16>
    %c5_470 = arith.constant 5 : index
    %c0_471 = arith.constant 0 : index
    %c0_472 = arith.constant 0 : index
    %514 = vector.load %arg4[%c5_470, %c0_471, %c0_472] : memref<9x32x32xbf16, #tpu.memory_space<vmem>>, vector<1x32x32xbf16>
    %515 = vector.shape_cast %514 : vector<1x32x32xbf16> to vector<32x32xbf16>
    %cst_473 = arith.constant dense<0.000000e+00> : vector<8x32xf32>
    %516 = tpu.matmul %513, %515, %cst_473 {dimension_numbers = #tpu.dot_dimension_numbers<[1], [0], [0], [1], [0, 0, 1, 1], [], []>} : vector<8x32xbf16>, vector<32x32xbf16>, vector<8x32xf32> -> vector<8x32xf32>
    %517 = arith.addf %510, %516 : vector<8x32xf32>
    %c8_474 = arith.constant 8 : index
    %c0_475 = arith.constant 0 : index
    %c0_476 = arith.constant 0 : index
    %518 = vector.load %arg7[%c8_474, %c0_475, %c0_476] : memref<10x10x32xf32, #tpu.memory_space<vmem>>, vector<1x8x32xf32>
    %519 = vector.shape_cast %518 : vector<1x8x32xf32> to vector<8x32xf32>
    %520 = arith.truncf %519 : vector<8x32xf32> to vector<8x32xbf16>
    %c6_477 = arith.constant 6 : index
    %c0_478 = arith.constant 0 : index
    %c0_479 = arith.constant 0 : index
    %521 = vector.load %arg4[%c6_477, %c0_478, %c0_479] : memref<9x32x32xbf16, #tpu.memory_space<vmem>>, vector<1x32x32xbf16>
    %522 = vector.shape_cast %521 : vector<1x32x32xbf16> to vector<32x32xbf16>
    %cst_480 = arith.constant dense<0.000000e+00> : vector<8x32xf32>
    %523 = tpu.matmul %520, %522, %cst_480 {dimension_numbers = #tpu.dot_dimension_numbers<[1], [0], [0], [1], [0, 0, 1, 1], [], []>} : vector<8x32xbf16>, vector<32x32xbf16>, vector<8x32xf32> -> vector<8x32xf32>
    %524 = arith.addf %517, %523 : vector<8x32xf32>
    %c8_481 = arith.constant 8 : index
    %c1_482 = arith.constant 1 : index
    %c0_483 = arith.constant 0 : index
    %525 = vector.load %arg7[%c8_481, %c1_482, %c0_483] : memref<10x10x32xf32, #tpu.memory_space<vmem>>, vector<1x8x32xf32>
    %526 = vector.shape_cast %525 : vector<1x8x32xf32> to vector<8x32xf32>
    %527 = arith.truncf %526 : vector<8x32xf32> to vector<8x32xbf16>
    %c7_484 = arith.constant 7 : index
    %c0_485 = arith.constant 0 : index
    %c0_486 = arith.constant 0 : index
    %528 = vector.load %arg4[%c7_484, %c0_485, %c0_486] : memref<9x32x32xbf16, #tpu.memory_space<vmem>>, vector<1x32x32xbf16>
    %529 = vector.shape_cast %528 : vector<1x32x32xbf16> to vector<32x32xbf16>
    %cst_487 = arith.constant dense<0.000000e+00> : vector<8x32xf32>
    %530 = tpu.matmul %527, %529, %cst_487 {dimension_numbers = #tpu.dot_dimension_numbers<[1], [0], [0], [1], [0, 0, 1, 1], [], []>} : vector<8x32xbf16>, vector<32x32xbf16>, vector<8x32xf32> -> vector<8x32xf32>
    %531 = arith.addf %524, %530 : vector<8x32xf32>
    %c8_488 = arith.constant 8 : index
    %c2_489 = arith.constant 2 : index
    %c0_490 = arith.constant 0 : index
    %532 = vector.load %arg7[%c8_488, %c2_489, %c0_490] : memref<10x10x32xf32, #tpu.memory_space<vmem>>, vector<1x8x32xf32>
    %533 = vector.shape_cast %532 : vector<1x8x32xf32> to vector<8x32xf32>
    %534 = arith.truncf %533 : vector<8x32xf32> to vector<8x32xbf16>
    %c8_491 = arith.constant 8 : index
    %c0_492 = arith.constant 0 : index
    %c0_493 = arith.constant 0 : index
    %535 = vector.load %arg4[%c8_491, %c0_492, %c0_493] : memref<9x32x32xbf16, #tpu.memory_space<vmem>>, vector<1x32x32xbf16>
    %536 = vector.shape_cast %535 : vector<1x32x32xbf16> to vector<32x32xbf16>
    %cst_494 = arith.constant dense<0.000000e+00> : vector<8x32xf32>
    %537 = tpu.matmul %534, %536, %cst_494 {dimension_numbers = #tpu.dot_dimension_numbers<[1], [0], [0], [1], [0, 0, 1, 1], [], []>} : vector<8x32xbf16>, vector<32x32xbf16>, vector<8x32xf32> -> vector<8x32xf32>
    %538 = arith.addf %531, %537 : vector<8x32xf32>
    %cst_495 = arith.constant 0.00999999977 : f32
    %539 = vector.broadcast %cst_495 : f32 to vector<8x32xf32>
    %540 = arith.mulf %539, %538 : vector<8x32xf32>
    %541 = arith.maximumf %538, %540 : vector<8x32xf32>
    %c48 = arith.constant 48 : index
    %c0_496 = arith.constant 0 : index
    %542 = vector.load %arg6[%c48, %c0_496] : memref<64x32xf32, #tpu.memory_space<vmem>>, vector<8x32xf32>
    tpu.vector_store %arg6[%c48, %c0_496], %541 {strides = array<i32>} : memref<64x32xf32, #tpu.memory_space<vmem>>, vector<8x32xf32>,
    %c0_497 = arith.constant 0 : index
    %c0_498 = arith.constant 0 : index
    %543 = vector.load %arg5[%c0_497, %c0_498] : memref<1x32xf32, #tpu.memory_space<vmem>>, vector<1x32xf32>
    %544 = vector.extract_strided_slice %11 {offsets = [56, 0], sizes = [8, 32], strides = [1, 1]} : vector<64x32xf32> to vector<8x32xf32>
    %545 = vector.broadcast %543 : vector<1x32xf32> to vector<8x32xf32>
    %546 = arith.addf %545, %544 : vector<8x32xf32>
    %c7_499 = arith.constant 7 : index
    %c0_500 = arith.constant 0 : index
    %c0_501 = arith.constant 0 : index
    %547 = vector.load %arg7[%c7_499, %c0_500, %c0_501] : memref<10x10x32xf32, #tpu.memory_space<vmem>>, vector<1x8x32xf32>
    %548 = vector.shape_cast %547 : vector<1x8x32xf32> to vector<8x32xf32>
    %549 = arith.truncf %548 : vector<8x32xf32> to vector<8x32xbf16>
    %c0_502 = arith.constant 0 : index
    %c0_503 = arith.constant 0 : index
    %c0_504 = arith.constant 0 : index
    %550 = vector.load %arg4[%c0_502, %c0_503, %c0_504] : memref<9x32x32xbf16, #tpu.memory_space<vmem>>, vector<1x32x32xbf16>
    %551 = vector.shape_cast %550 : vector<1x32x32xbf16> to vector<32x32xbf16>
    %cst_505 = arith.constant dense<0.000000e+00> : vector<8x32xf32>
    %552 = tpu.matmul %549, %551, %cst_505 {dimension_numbers = #tpu.dot_dimension_numbers<[1], [0], [0], [1], [0, 0, 1, 1], [], []>} : vector<8x32xbf16>, vector<32x32xbf16>, vector<8x32xf32> -> vector<8x32xf32>
    %553 = arith.addf %546, %552 : vector<8x32xf32>
    %c7_506 = arith.constant 7 : index
    %c1_507 = arith.constant 1 : index
    %c0_508 = arith.constant 0 : index
    %554 = vector.load %arg7[%c7_506, %c1_507, %c0_508] : memref<10x10x32xf32, #tpu.memory_space<vmem>>, vector<1x8x32xf32>
    %555 = vector.shape_cast %554 : vector<1x8x32xf32> to vector<8x32xf32>
    %556 = arith.truncf %555 : vector<8x32xf32> to vector<8x32xbf16>
    %c1_509 = arith.constant 1 : index
    %c0_510 = arith.constant 0 : index
    %c0_511 = arith.constant 0 : index
    %557 = vector.load %arg4[%c1_509, %c0_510, %c0_511] : memref<9x32x32xbf16, #tpu.memory_space<vmem>>, vector<1x32x32xbf16>
    %558 = vector.shape_cast %557 : vector<1x32x32xbf16> to vector<32x32xbf16>
    %cst_512 = arith.constant dense<0.000000e+00> : vector<8x32xf32>
    %559 = tpu.matmul %556, %558, %cst_512 {dimension_numbers = #tpu.dot_dimension_numbers<[1], [0], [0], [1], [0, 0, 1, 1], [], []>} : vector<8x32xbf16>, vector<32x32xbf16>, vector<8x32xf32> -> vector<8x32xf32>
    %560 = arith.addf %553, %559 : vector<8x32xf32>
    %c7_513 = arith.constant 7 : index
    %c2_514 = arith.constant 2 : index
    %c0_515 = arith.constant 0 : index
    %561 = vector.load %arg7[%c7_513, %c2_514, %c0_515] : memref<10x10x32xf32, #tpu.memory_space<vmem>>, vector<1x8x32xf32>
    %562 = vector.shape_cast %561 : vector<1x8x32xf32> to vector<8x32xf32>
    %563 = arith.truncf %562 : vector<8x32xf32> to vector<8x32xbf16>
    %c2_516 = arith.constant 2 : index
    %c0_517 = arith.constant 0 : index
    %c0_518 = arith.constant 0 : index
    %564 = vector.load %arg4[%c2_516, %c0_517, %c0_518] : memref<9x32x32xbf16, #tpu.memory_space<vmem>>, vector<1x32x32xbf16>
    %565 = vector.shape_cast %564 : vector<1x32x32xbf16> to vector<32x32xbf16>
    %cst_519 = arith.constant dense<0.000000e+00> : vector<8x32xf32>
    %566 = tpu.matmul %563, %565, %cst_519 {dimension_numbers = #tpu.dot_dimension_numbers<[1], [0], [0], [1], [0, 0, 1, 1], [], []>} : vector<8x32xbf16>, vector<32x32xbf16>, vector<8x32xf32> -> vector<8x32xf32>
    %567 = arith.addf %560, %566 : vector<8x32xf32>
    %c8_520 = arith.constant 8 : index
    %c0_521 = arith.constant 0 : index
    %c0_522 = arith.constant 0 : index
    %568 = vector.load %arg7[%c8_520, %c0_521, %c0_522] : memref<10x10x32xf32, #tpu.memory_space<vmem>>, vector<1x8x32xf32>
    %569 = vector.shape_cast %568 : vector<1x8x32xf32> to vector<8x32xf32>
    %570 = arith.truncf %569 : vector<8x32xf32> to vector<8x32xbf16>
    %c3_523 = arith.constant 3 : index
    %c0_524 = arith.constant 0 : index
    %c0_525 = arith.constant 0 : index
    %571 = vector.load %arg4[%c3_523, %c0_524, %c0_525] : memref<9x32x32xbf16, #tpu.memory_space<vmem>>, vector<1x32x32xbf16>
    %572 = vector.shape_cast %571 : vector<1x32x32xbf16> to vector<32x32xbf16>
    %cst_526 = arith.constant dense<0.000000e+00> : vector<8x32xf32>
    %573 = tpu.matmul %570, %572, %cst_526 {dimension_numbers = #tpu.dot_dimension_numbers<[1], [0], [0], [1], [0, 0, 1, 1], [], []>} : vector<8x32xbf16>, vector<32x32xbf16>, vector<8x32xf32> -> vector<8x32xf32>
    %574 = arith.addf %567, %573 : vector<8x32xf32>
    %c8_527 = arith.constant 8 : index
    %c1_528 = arith.constant 1 : index
    %c0_529 = arith.constant 0 : index
    %575 = vector.load %arg7[%c8_527, %c1_528, %c0_529] : memref<10x10x32xf32, #tpu.memory_space<vmem>>, vector<1x8x32xf32>
    %576 = vector.shape_cast %575 : vector<1x8x32xf32> to vector<8x32xf32>
    %577 = arith.truncf %576 : vector<8x32xf32> to vector<8x32xbf16>
    %c4_530 = arith.constant 4 : index
    %c0_531 = arith.constant 0 : index
    %c0_532 = arith.constant 0 : index
    %578 = vector.load %arg4[%c4_530, %c0_531, %c0_532] : memref<9x32x32xbf16, #tpu.memory_space<vmem>>, vector<1x32x32xbf16>
    %579 = vector.shape_cast %578 : vector<1x32x32xbf16> to vector<32x32xbf16>
    %cst_533 = arith.constant dense<0.000000e+00> : vector<8x32xf32>
    %580 = tpu.matmul %577, %579, %cst_533 {dimension_numbers = #tpu.dot_dimension_numbers<[1], [0], [0], [1], [0, 0, 1, 1], [], []>} : vector<8x32xbf16>, vector<32x32xbf16>, vector<8x32xf32> -> vector<8x32xf32>
    %581 = arith.addf %574, %580 : vector<8x32xf32>
    %c8_534 = arith.constant 8 : index
    %c2_535 = arith.constant 2 : index
    %c0_536 = arith.constant 0 : index
    %582 = vector.load %arg7[%c8_534, %c2_535, %c0_536] : memref<10x10x32xf32, #tpu.memory_space<vmem>>, vector<1x8x32xf32>
    %583 = vector.shape_cast %582 : vector<1x8x32xf32> to vector<8x32xf32>
    %584 = arith.truncf %583 : vector<8x32xf32> to vector<8x32xbf16>
    %c5_537 = arith.constant 5 : index
    %c0_538 = arith.constant 0 : index
    %c0_539 = arith.constant 0 : index
    %585 = vector.load %arg4[%c5_537, %c0_538, %c0_539] : memref<9x32x32xbf16, #tpu.memory_space<vmem>>, vector<1x32x32xbf16>
    %586 = vector.shape_cast %585 : vector<1x32x32xbf16> to vector<32x32xbf16>
    %cst_540 = arith.constant dense<0.000000e+00> : vector<8x32xf32>
    %587 = tpu.matmul %584, %586, %cst_540 {dimension_numbers = #tpu.dot_dimension_numbers<[1], [0], [0], [1], [0, 0, 1, 1], [], []>} : vector<8x32xbf16>, vector<32x32xbf16>, vector<8x32xf32> -> vector<8x32xf32>
    %588 = arith.addf %581, %587 : vector<8x32xf32>
    %c9 = arith.constant 9 : index
    %c0_541 = arith.constant 0 : index
    %c0_542 = arith.constant 0 : index
    %589 = vector.load %arg7[%c9, %c0_541, %c0_542] : memref<10x10x32xf32, #tpu.memory_space<vmem>>, vector<1x8x32xf32>
    %590 = vector.shape_cast %589 : vector<1x8x32xf32> to vector<8x32xf32>
    %591 = arith.truncf %590 : vector<8x32xf32> to vector<8x32xbf16>
    %c6_543 = arith.constant 6 : index
    %c0_544 = arith.constant 0 : index
    %c0_545 = arith.constant 0 : index
    %592 = vector.load %arg4[%c6_543, %c0_544, %c0_545] : memref<9x32x32xbf16, #tpu.memory_space<vmem>>, vector<1x32x32xbf16>
    %593 = vector.shape_cast %592 : vector<1x32x32xbf16> to vector<32x32xbf16>
    %cst_546 = arith.constant dense<0.000000e+00> : vector<8x32xf32>
    %594 = tpu.matmul %591, %593, %cst_546 {dimension_numbers = #tpu.dot_dimension_numbers<[1], [0], [0], [1], [0, 0, 1, 1], [], []>} : vector<8x32xbf16>, vector<32x32xbf16>, vector<8x32xf32> -> vector<8x32xf32>
    %595 = arith.addf %588, %594 : vector<8x32xf32>
    %c9_547 = arith.constant 9 : index
    %c1_548 = arith.constant 1 : index
    %c0_549 = arith.constant 0 : index
    %596 = vector.load %arg7[%c9_547, %c1_548, %c0_549] : memref<10x10x32xf32, #tpu.memory_space<vmem>>, vector<1x8x32xf32>
    %597 = vector.shape_cast %596 : vector<1x8x32xf32> to vector<8x32xf32>
    %598 = arith.truncf %597 : vector<8x32xf32> to vector<8x32xbf16>
    %c7_550 = arith.constant 7 : index
    %c0_551 = arith.constant 0 : index
    %c0_552 = arith.constant 0 : index
    %599 = vector.load %arg4[%c7_550, %c0_551, %c0_552] : memref<9x32x32xbf16, #tpu.memory_space<vmem>>, vector<1x32x32xbf16>
    %600 = vector.shape_cast %599 : vector<1x32x32xbf16> to vector<32x32xbf16>
    %cst_553 = arith.constant dense<0.000000e+00> : vector<8x32xf32>
    %601 = tpu.matmul %598, %600, %cst_553 {dimension_numbers = #tpu.dot_dimension_numbers<[1], [0], [0], [1], [0, 0, 1, 1], [], []>} : vector<8x32xbf16>, vector<32x32xbf16>, vector<8x32xf32> -> vector<8x32xf32>
    %602 = arith.addf %595, %601 : vector<8x32xf32>
    %c9_554 = arith.constant 9 : index
    %c2_555 = arith.constant 2 : index
    %c0_556 = arith.constant 0 : index
    %603 = vector.load %arg7[%c9_554, %c2_555, %c0_556] : memref<10x10x32xf32, #tpu.memory_space<vmem>>, vector<1x8x32xf32>
    %604 = vector.shape_cast %603 : vector<1x8x32xf32> to vector<8x32xf32>
    %605 = arith.truncf %604 : vector<8x32xf32> to vector<8x32xbf16>
    %c8_557 = arith.constant 8 : index
    %c0_558 = arith.constant 0 : index
    %c0_559 = arith.constant 0 : index
    %606 = vector.load %arg4[%c8_557, %c0_558, %c0_559] : memref<9x32x32xbf16, #tpu.memory_space<vmem>>, vector<1x32x32xbf16>
    %607 = vector.shape_cast %606 : vector<1x32x32xbf16> to vector<32x32xbf16>
    %cst_560 = arith.constant dense<0.000000e+00> : vector<8x32xf32>
    %608 = tpu.matmul %605, %607, %cst_560 {dimension_numbers = #tpu.dot_dimension_numbers<[1], [0], [0], [1], [0, 0, 1, 1], [], []>} : vector<8x32xbf16>, vector<32x32xbf16>, vector<8x32xf32> -> vector<8x32xf32>
    %609 = arith.addf %602, %608 : vector<8x32xf32>
    %cst_561 = arith.constant 0.00999999977 : f32
    %610 = vector.broadcast %cst_561 : f32 to vector<8x32xf32>
    %611 = arith.mulf %610, %609 : vector<8x32xf32>
    %612 = arith.maximumf %609, %611 : vector<8x32xf32>
    %c56 = arith.constant 56 : index
    %c0_562 = arith.constant 0 : index
    %613 = vector.load %arg6[%c56, %c0_562] : memref<64x32xf32, #tpu.memory_space<vmem>>, vector<8x32xf32>
    tpu.vector_store %arg6[%c56, %c0_562], %612 {strides = array<i32>} : memref<64x32xf32, #tpu.memory_space<vmem>>, vector<8x32xf32>,
    return
  }
  func.func @transform_0(%arg0: i32) -> (i32, i32) {
    %c0_i32 = arith.constant 0 : i32
    %c0_i32_0 = arith.constant 0 : i32
    return %arg0, %c0_i32 : i32, i32
  }
  func.func @transform_1(%arg0: i32) -> (i32, i32) {
    %c0_i32 = arith.constant 0 : i32
    %c0_i32_0 = arith.constant 0 : i32
    %c0_i32_1 = arith.constant 0 : i32
    return %c0_i32, %c0_i32_0 : i32, i32
  }
  func.func @transform_2(%arg0: i32) -> (i32, i32) {
    %c0_i32 = arith.constant 0 : i32
    %c0_i32_0 = arith.constant 0 : i32
    %c0_i32_1 = arith.constant 0 : i32
    return %c0_i32, %c0_i32_0 : i32, i32
  }
  func.func @transform_3(%arg0: i32) -> (i32, i32, i32) {
    %c0_i32 = arith.constant 0 : i32
    %c0_i32_0 = arith.constant 0 : i32
    %c0_i32_1 = arith.constant 0 : i32
    %c0_i32_2 = arith.constant 0 : i32
    return %c0_i32, %c0_i32_0, %c0_i32_1 : i32, i32, i32
  }
  func.func @transform_4(%arg0: i32) -> (i32, i32) {
    %c0_i32 = arith.constant 0 : i32
    %c0_i32_0 = arith.constant 0 : i32
    %c0_i32_1 = arith.constant 0 : i32
    return %c0_i32, %c0_i32_0 : i32, i32
  }
  func.func @transform_5(%arg0: i32) -> (i32, i32) {
    %c0_i32 = arith.constant 0 : i32
    %c0_i32_0 = arith.constant 0 : i32
    return %arg0, %c0_i32 : i32, i32
  }
}

module attributes {stable_mosaic.version = 11 : i64} {
  func.func @_fc_kernel(%arg0: i32, %arg1: memref<2x1024xf32, #tpu.memory_space<vmem>>, %arg2: memref<1024x64xbf16, #tpu.memory_space<vmem>>, %arg3: memref<1x64xf32, #tpu.memory_space<vmem>>, %arg4: memref<64x8xbf16, #tpu.memory_space<vmem>>, %arg5: memref<1x8xf32, #tpu.memory_space<vmem>>, %arg6: memref<2x8xf32, #tpu.memory_space<vmem>>) attributes {dimension_semantics = [#tpu.dimension_semantics<arbitrary>], iteration_bounds = array<i64: 1>, scalar_prefetch = 0 : i64, scratch_operands = 0 : i64, tpu.core_type = #tpu.core_type<tc>, window_params = [{pipeline_mode = #tpu.pipeline_mode<synchronous>, transform_indices = @transform_0, window_bounds = array<i64: 2, 1024>}, {pipeline_mode = #tpu.pipeline_mode<synchronous>, transform_indices = @transform_1, window_bounds = array<i64: 1024, 64>}, {pipeline_mode = #tpu.pipeline_mode<synchronous>, transform_indices = @transform_2, window_bounds = array<i64: 1, 64>}, {pipeline_mode = #tpu.pipeline_mode<synchronous>, transform_indices = @transform_3, window_bounds = array<i64: 64, 8>}, {pipeline_mode = #tpu.pipeline_mode<synchronous>, transform_indices = @transform_4, window_bounds = array<i64: 1, 8>}, {pipeline_mode = #tpu.pipeline_mode<synchronous>, transform_indices = @transform_5, window_bounds = array<i64: 2, 8>}]} {
    %c0 = arith.constant 0 : index
    %c0_0 = arith.constant 0 : index
    %0 = vector.load %arg1[%c0, %c0_0] : memref<2x1024xf32, #tpu.memory_space<vmem>>, vector<2x1024xf32>
    %1 = arith.truncf %0 : vector<2x1024xf32> to vector<2x1024xbf16>
    %c0_1 = arith.constant 0 : index
    %c0_2 = arith.constant 0 : index
    %2 = vector.load %arg2[%c0_1, %c0_2] : memref<1024x64xbf16, #tpu.memory_space<vmem>>, vector<1024x64xbf16>
    %cst = arith.constant dense<0.000000e+00> : vector<2x64xf32>
    %3 = tpu.matmul %1, %2, %cst {dimension_numbers = #tpu.dot_dimension_numbers<[1], [0], [0], [1], [0, 0, 1, 1], [], []>} : vector<2x1024xbf16>, vector<1024x64xbf16>, vector<2x64xf32> -> vector<2x64xf32>
    %c0_3 = arith.constant 0 : index
    %c0_4 = arith.constant 0 : index
    %4 = vector.load %arg3[%c0_3, %c0_4] : memref<1x64xf32, #tpu.memory_space<vmem>>, vector<1x64xf32>
    %5 = vector.broadcast %4 : vector<1x64xf32> to vector<2x64xf32>
    %6 = arith.addf %3, %5 : vector<2x64xf32>
    %cst_5 = arith.constant 0.00999999977 : f32
    %7 = vector.broadcast %cst_5 : f32 to vector<2x64xf32>
    %8 = arith.mulf %7, %6 : vector<2x64xf32>
    %9 = arith.maximumf %6, %8 : vector<2x64xf32>
    %10 = arith.truncf %9 : vector<2x64xf32> to vector<2x64xbf16>
    %c0_6 = arith.constant 0 : index
    %c0_7 = arith.constant 0 : index
    %11 = vector.load %arg4[%c0_6, %c0_7] : memref<64x8xbf16, #tpu.memory_space<vmem>>, vector<64x8xbf16>
    %cst_8 = arith.constant dense<0.000000e+00> : vector<2x8xf32>
    %12 = tpu.matmul %10, %11, %cst_8 {dimension_numbers = #tpu.dot_dimension_numbers<[1], [0], [0], [1], [0, 0, 1, 1], [], []>} : vector<2x64xbf16>, vector<64x8xbf16>, vector<2x8xf32> -> vector<2x8xf32>
    %c0_9 = arith.constant 0 : index
    %c0_10 = arith.constant 0 : index
    %13 = vector.load %arg5[%c0_9, %c0_10] : memref<1x8xf32, #tpu.memory_space<vmem>>, vector<1x8xf32>
    %14 = vector.broadcast %13 : vector<1x8xf32> to vector<2x8xf32>
    %15 = arith.addf %12, %14 : vector<2x8xf32>
    %cst_11 = arith.constant 0.000000e+00 : f32
    %16 = vector.broadcast %cst_11 : f32 to vector<2x8xf32>
    %17 = arith.subf %16, %15 : vector<2x8xf32>
    %18 = math.exp %17 : vector<2x8xf32>
    %cst_12 = arith.constant 1.000000e+00 : f32
    %19 = vector.broadcast %cst_12 : f32 to vector<2x8xf32>
    %20 = arith.addf %19, %18 : vector<2x8xf32>
    %cst_13 = arith.constant 1.000000e+00 : f32
    %21 = vector.broadcast %cst_13 : f32 to vector<2x8xf32>
    %22 = arith.divf %21, %20 : vector<2x8xf32>
    %c0_14 = arith.constant 0 : index
    %c0_15 = arith.constant 0 : index
    %23 = vector.load %arg6[%c0_14, %c0_15] : memref<2x8xf32, #tpu.memory_space<vmem>>, vector<2x8xf32>
    tpu.vector_store %arg6[%c0_14, %c0_15], %22 {strides = array<i32>} : memref<2x8xf32, #tpu.memory_space<vmem>>, vector<2x8xf32>,
    return
  }
  func.func @transform_0(%arg0: i32) -> (i32, i32) {
    %c0_i32 = arith.constant 0 : i32
    %c0_i32_0 = arith.constant 0 : i32
    %c0_i32_1 = arith.constant 0 : i32
    return %c0_i32, %c0_i32_0 : i32, i32
  }
  func.func @transform_1(%arg0: i32) -> (i32, i32) {
    %c0_i32 = arith.constant 0 : i32
    %c0_i32_0 = arith.constant 0 : i32
    %c0_i32_1 = arith.constant 0 : i32
    return %c0_i32, %c0_i32_0 : i32, i32
  }
  func.func @transform_2(%arg0: i32) -> (i32, i32) {
    %c0_i32 = arith.constant 0 : i32
    %c0_i32_0 = arith.constant 0 : i32
    %c0_i32_1 = arith.constant 0 : i32
    return %c0_i32, %c0_i32_0 : i32, i32
  }
  func.func @transform_3(%arg0: i32) -> (i32, i32) {
    %c0_i32 = arith.constant 0 : i32
    %c0_i32_0 = arith.constant 0 : i32
    %c0_i32_1 = arith.constant 0 : i32
    return %c0_i32, %c0_i32_0 : i32, i32
  }
  func.func @transform_4(%arg0: i32) -> (i32, i32) {
    %c0_i32 = arith.constant 0 : i32
    %c0_i32_0 = arith.constant 0 : i32
    %c0_i32_1 = arith.constant 0 : i32
    return %c0_i32, %c0_i32_0 : i32, i32
  }
  func.func @transform_5(%arg0: i32) -> (i32, i32) {
    %c0_i32 = arith.constant 0 : i32
    %c0_i32_0 = arith.constant 0 : i32
    %c0_i32_1 = arith.constant 0 : i32
    return %c0_i32, %c0_i32_0 : i32, i32
  }
}

module attributes {stable_mosaic.version = 11 : i64} {
  func.func @_down_block_kernel(%arg0: i32, %arg1: memref<16x288xf32, #tpu.memory_space<vmem>>, %arg2: memref<288x128xbf16, #tpu.memory_space<vmem>>, %arg3: memref<1x128xf32, #tpu.memory_space<vmem>>, %arg4: memref<9x64x64xbf16, #tpu.memory_space<vmem>>, %arg5: memref<1x64xf32, #tpu.memory_space<vmem>>, %arg6: memref<16x64xf32, #tpu.memory_space<vmem>>, %arg7: memref<6x6x64xf32, #tpu.memory_space<vmem>>) attributes {dimension_semantics = [#tpu.dimension_semantics<parallel>], iteration_bounds = array<i64: 2>, scalar_prefetch = 0 : i64, scratch_operands = 1 : i64, tpu.core_type = #tpu.core_type<tc>, window_params = [{transform_indices = @transform_0, window_bounds = array<i64: 16, 288>}, {pipeline_mode = #tpu.pipeline_mode<synchronous>, transform_indices = @transform_1, window_bounds = array<i64: 288, 128>}, {pipeline_mode = #tpu.pipeline_mode<synchronous>, transform_indices = @transform_2, window_bounds = array<i64: 1, 128>}, {pipeline_mode = #tpu.pipeline_mode<synchronous>, transform_indices = @transform_3, window_bounds = array<i64: 9, 64, 64>}, {pipeline_mode = #tpu.pipeline_mode<synchronous>, transform_indices = @transform_4, window_bounds = array<i64: 1, 64>}, {transform_indices = @transform_5, window_bounds = array<i64: 16, 64>}]} {
    %c0 = arith.constant 0 : index
    %c0_0 = arith.constant 0 : index
    %0 = vector.load %arg1[%c0, %c0_0] : memref<16x288xf32, #tpu.memory_space<vmem>>, vector<16x288xf32>
    %1 = arith.truncf %0 : vector<16x288xf32> to vector<16x288xbf16>
    %c0_1 = arith.constant 0 : index
    %c0_2 = arith.constant 0 : index
    %2 = vector.load %arg2[%c0_1, %c0_2] : memref<288x128xbf16, #tpu.memory_space<vmem>>, vector<288x128xbf16>
    %cst = arith.constant dense<0.000000e+00> : vector<16x128xf32>
    %3 = tpu.matmul %1, %2, %cst {dimension_numbers = #tpu.dot_dimension_numbers<[1], [0], [0], [1], [0, 0, 1, 1], [], []>} : vector<16x288xbf16>, vector<288x128xbf16>, vector<16x128xf32> -> vector<16x128xf32>
    %c0_3 = arith.constant 0 : index
    %c0_4 = arith.constant 0 : index
    %4 = vector.load %arg3[%c0_3, %c0_4] : memref<1x128xf32, #tpu.memory_space<vmem>>, vector<1x128xf32>
    %5 = vector.broadcast %4 : vector<1x128xf32> to vector<16x128xf32>
    %6 = arith.addf %3, %5 : vector<16x128xf32>
    %7 = vector.extract_strided_slice %6 {offsets = [0, 0], sizes = [16, 64], strides = [1, 1]} : vector<16x128xf32> to vector<16x64xf32>
    %cst_5 = arith.constant 0.00999999977 : f32
    %8 = vector.broadcast %cst_5 : f32 to vector<16x64xf32>
    %9 = arith.mulf %8, %7 : vector<16x64xf32>
    %10 = arith.maximumf %7, %9 : vector<16x64xf32>
    %11 = vector.extract_strided_slice %6 {offsets = [0, 64], sizes = [16, 64], strides = [1, 1]} : vector<16x128xf32> to vector<16x64xf32>
    %cst_6 = arith.constant 0.000000e+00 : f32
    %12 = vector.broadcast %cst_6 : f32 to vector<6x6x64xf32>
    %c0_7 = arith.constant 0 : index
    %c0_8 = arith.constant 0 : index
    %c0_9 = arith.constant 0 : index
    %13 = vector.load %arg7[%c0_7, %c0_8, %c0_9] : memref<6x6x64xf32, #tpu.memory_space<vmem>>, vector<6x6x64xf32>
    tpu.vector_store %arg7[%c0_7, %c0_8, %c0_9], %12 {strides = array<i32>} : memref<6x6x64xf32, #tpu.memory_space<vmem>>, vector<6x6x64xf32>,
    %14 = vector.extract_strided_slice %10 {offsets = [0, 0], sizes = [4, 64], strides = [1, 1]} : vector<16x64xf32> to vector<4x64xf32>
    %c1 = arith.constant 1 : index
    %c1_10 = arith.constant 1 : index
    %c0_11 = arith.constant 0 : index
    %15 = vector.load %arg7[%c1, %c1_10, %c0_11] : memref<6x6x64xf32, #tpu.memory_space<vmem>>, vector<1x4x64xf32>
    %16 = vector.shape_cast %15 : vector<1x4x64xf32> to vector<4x64xf32>
    %17 = vector.shape_cast %14 : vector<4x64xf32> to vector<1x4x64xf32>
    tpu.vector_store %arg7[%c1, %c1_10, %c0_11], %17 {strides = array<i32>} : memref<6x6x64xf32, #tpu.memory_space<vmem>>, vector<1x4x64xf32>,
    %18 = vector.extract_strided_slice %10 {offsets = [4, 0], sizes = [4, 64], strides = [1, 1]} : vector<16x64xf32> to vector<4x64xf32>
    %c2 = arith.constant 2 : index
    %c1_12 = arith.constant 1 : index
    %c0_13 = arith.constant 0 : index
    %19 = vector.load %arg7[%c2, %c1_12, %c0_13] : memref<6x6x64xf32, #tpu.memory_space<vmem>>, vector<1x4x64xf32>
    %20 = vector.shape_cast %19 : vector<1x4x64xf32> to vector<4x64xf32>
    %21 = vector.shape_cast %18 : vector<4x64xf32> to vector<1x4x64xf32>
    tpu.vector_store %arg7[%c2, %c1_12, %c0_13], %21 {strides = array<i32>} : memref<6x6x64xf32, #tpu.memory_space<vmem>>, vector<1x4x64xf32>,
    %22 = vector.extract_strided_slice %10 {offsets = [8, 0], sizes = [4, 64], strides = [1, 1]} : vector<16x64xf32> to vector<4x64xf32>
    %c3 = arith.constant 3 : index
    %c1_14 = arith.constant 1 : index
    %c0_15 = arith.constant 0 : index
    %23 = vector.load %arg7[%c3, %c1_14, %c0_15] : memref<6x6x64xf32, #tpu.memory_space<vmem>>, vector<1x4x64xf32>
    %24 = vector.shape_cast %23 : vector<1x4x64xf32> to vector<4x64xf32>
    %25 = vector.shape_cast %22 : vector<4x64xf32> to vector<1x4x64xf32>
    tpu.vector_store %arg7[%c3, %c1_14, %c0_15], %25 {strides = array<i32>} : memref<6x6x64xf32, #tpu.memory_space<vmem>>, vector<1x4x64xf32>,
    %26 = vector.extract_strided_slice %10 {offsets = [12, 0], sizes = [4, 64], strides = [1, 1]} : vector<16x64xf32> to vector<4x64xf32>
    %c4 = arith.constant 4 : index
    %c1_16 = arith.constant 1 : index
    %c0_17 = arith.constant 0 : index
    %27 = vector.load %arg7[%c4, %c1_16, %c0_17] : memref<6x6x64xf32, #tpu.memory_space<vmem>>, vector<1x4x64xf32>
    %28 = vector.shape_cast %27 : vector<1x4x64xf32> to vector<4x64xf32>
    %29 = vector.shape_cast %26 : vector<4x64xf32> to vector<1x4x64xf32>
    tpu.vector_store %arg7[%c4, %c1_16, %c0_17], %29 {strides = array<i32>} : memref<6x6x64xf32, #tpu.memory_space<vmem>>, vector<1x4x64xf32>,
    %c0_18 = arith.constant 0 : index
    %c0_19 = arith.constant 0 : index
    %30 = vector.load %arg5[%c0_18, %c0_19] : memref<1x64xf32, #tpu.memory_space<vmem>>, vector<1x64xf32>
    %31 = vector.extract_strided_slice %11 {offsets = [0, 0], sizes = [4, 64], strides = [1, 1]} : vector<16x64xf32> to vector<4x64xf32>
    %32 = vector.broadcast %30 : vector<1x64xf32> to vector<4x64xf32>
    %33 = arith.addf %32, %31 : vector<4x64xf32>
    %c0_20 = arith.constant 0 : index
    %c0_21 = arith.constant 0 : index
    %c0_22 = arith.constant 0 : index
    %34 = vector.load %arg7[%c0_20, %c0_21, %c0_22] : memref<6x6x64xf32, #tpu.memory_space<vmem>>, vector<1x4x64xf32>
    %35 = vector.shape_cast %34 : vector<1x4x64xf32> to vector<4x64xf32>
    %36 = arith.truncf %35 : vector<4x64xf32> to vector<4x64xbf16>
    %c0_23 = arith.constant 0 : index
    %c0_24 = arith.constant 0 : index
    %c0_25 = arith.constant 0 : index
    %37 = vector.load %arg4[%c0_23, %c0_24, %c0_25] : memref<9x64x64xbf16, #tpu.memory_space<vmem>>, vector<1x64x64xbf16>
    %38 = vector.shape_cast %37 : vector<1x64x64xbf16> to vector<64x64xbf16>
    %cst_26 = arith.constant dense<0.000000e+00> : vector<4x64xf32>
    %39 = tpu.matmul %36, %38, %cst_26 {dimension_numbers = #tpu.dot_dimension_numbers<[1], [0], [0], [1], [0, 0, 1, 1], [], []>} : vector<4x64xbf16>, vector<64x64xbf16>, vector<4x64xf32> -> vector<4x64xf32>
    %40 = arith.addf %33, %39 : vector<4x64xf32>
    %c0_27 = arith.constant 0 : index
    %c1_28 = arith.constant 1 : index
    %c0_29 = arith.constant 0 : index
    %41 = vector.load %arg7[%c0_27, %c1_28, %c0_29] : memref<6x6x64xf32, #tpu.memory_space<vmem>>, vector<1x4x64xf32>
    %42 = vector.shape_cast %41 : vector<1x4x64xf32> to vector<4x64xf32>
    %43 = arith.truncf %42 : vector<4x64xf32> to vector<4x64xbf16>
    %c1_30 = arith.constant 1 : index
    %c0_31 = arith.constant 0 : index
    %c0_32 = arith.constant 0 : index
    %44 = vector.load %arg4[%c1_30, %c0_31, %c0_32] : memref<9x64x64xbf16, #tpu.memory_space<vmem>>, vector<1x64x64xbf16>
    %45 = vector.shape_cast %44 : vector<1x64x64xbf16> to vector<64x64xbf16>
    %cst_33 = arith.constant dense<0.000000e+00> : vector<4x64xf32>
    %46 = tpu.matmul %43, %45, %cst_33 {dimension_numbers = #tpu.dot_dimension_numbers<[1], [0], [0], [1], [0, 0, 1, 1], [], []>} : vector<4x64xbf16>, vector<64x64xbf16>, vector<4x64xf32> -> vector<4x64xf32>
    %47 = arith.addf %40, %46 : vector<4x64xf32>
    %c0_34 = arith.constant 0 : index
    %c2_35 = arith.constant 2 : index
    %c0_36 = arith.constant 0 : index
    %48 = vector.load %arg7[%c0_34, %c2_35, %c0_36] : memref<6x6x64xf32, #tpu.memory_space<vmem>>, vector<1x4x64xf32>
    %49 = vector.shape_cast %48 : vector<1x4x64xf32> to vector<4x64xf32>
    %50 = arith.truncf %49 : vector<4x64xf32> to vector<4x64xbf16>
    %c2_37 = arith.constant 2 : index
    %c0_38 = arith.constant 0 : index
    %c0_39 = arith.constant 0 : index
    %51 = vector.load %arg4[%c2_37, %c0_38, %c0_39] : memref<9x64x64xbf16, #tpu.memory_space<vmem>>, vector<1x64x64xbf16>
    %52 = vector.shape_cast %51 : vector<1x64x64xbf16> to vector<64x64xbf16>
    %cst_40 = arith.constant dense<0.000000e+00> : vector<4x64xf32>
    %53 = tpu.matmul %50, %52, %cst_40 {dimension_numbers = #tpu.dot_dimension_numbers<[1], [0], [0], [1], [0, 0, 1, 1], [], []>} : vector<4x64xbf16>, vector<64x64xbf16>, vector<4x64xf32> -> vector<4x64xf32>
    %54 = arith.addf %47, %53 : vector<4x64xf32>
    %c1_41 = arith.constant 1 : index
    %c0_42 = arith.constant 0 : index
    %c0_43 = arith.constant 0 : index
    %55 = vector.load %arg7[%c1_41, %c0_42, %c0_43] : memref<6x6x64xf32, #tpu.memory_space<vmem>>, vector<1x4x64xf32>
    %56 = vector.shape_cast %55 : vector<1x4x64xf32> to vector<4x64xf32>
    %57 = arith.truncf %56 : vector<4x64xf32> to vector<4x64xbf16>
    %c3_44 = arith.constant 3 : index
    %c0_45 = arith.constant 0 : index
    %c0_46 = arith.constant 0 : index
    %58 = vector.load %arg4[%c3_44, %c0_45, %c0_46] : memref<9x64x64xbf16, #tpu.memory_space<vmem>>, vector<1x64x64xbf16>
    %59 = vector.shape_cast %58 : vector<1x64x64xbf16> to vector<64x64xbf16>
    %cst_47 = arith.constant dense<0.000000e+00> : vector<4x64xf32>
    %60 = tpu.matmul %57, %59, %cst_47 {dimension_numbers = #tpu.dot_dimension_numbers<[1], [0], [0], [1], [0, 0, 1, 1], [], []>} : vector<4x64xbf16>, vector<64x64xbf16>, vector<4x64xf32> -> vector<4x64xf32>
    %61 = arith.addf %54, %60 : vector<4x64xf32>
    %c1_48 = arith.constant 1 : index
    %c1_49 = arith.constant 1 : index
    %c0_50 = arith.constant 0 : index
    %62 = vector.load %arg7[%c1_48, %c1_49, %c0_50] : memref<6x6x64xf32, #tpu.memory_space<vmem>>, vector<1x4x64xf32>
    %63 = vector.shape_cast %62 : vector<1x4x64xf32> to vector<4x64xf32>
    %64 = arith.truncf %63 : vector<4x64xf32> to vector<4x64xbf16>
    %c4_51 = arith.constant 4 : index
    %c0_52 = arith.constant 0 : index
    %c0_53 = arith.constant 0 : index
    %65 = vector.load %arg4[%c4_51, %c0_52, %c0_53] : memref<9x64x64xbf16, #tpu.memory_space<vmem>>, vector<1x64x64xbf16>
    %66 = vector.shape_cast %65 : vector<1x64x64xbf16> to vector<64x64xbf16>
    %cst_54 = arith.constant dense<0.000000e+00> : vector<4x64xf32>
    %67 = tpu.matmul %64, %66, %cst_54 {dimension_numbers = #tpu.dot_dimension_numbers<[1], [0], [0], [1], [0, 0, 1, 1], [], []>} : vector<4x64xbf16>, vector<64x64xbf16>, vector<4x64xf32> -> vector<4x64xf32>
    %68 = arith.addf %61, %67 : vector<4x64xf32>
    %c1_55 = arith.constant 1 : index
    %c2_56 = arith.constant 2 : index
    %c0_57 = arith.constant 0 : index
    %69 = vector.load %arg7[%c1_55, %c2_56, %c0_57] : memref<6x6x64xf32, #tpu.memory_space<vmem>>, vector<1x4x64xf32>
    %70 = vector.shape_cast %69 : vector<1x4x64xf32> to vector<4x64xf32>
    %71 = arith.truncf %70 : vector<4x64xf32> to vector<4x64xbf16>
    %c5 = arith.constant 5 : index
    %c0_58 = arith.constant 0 : index
    %c0_59 = arith.constant 0 : index
    %72 = vector.load %arg4[%c5, %c0_58, %c0_59] : memref<9x64x64xbf16, #tpu.memory_space<vmem>>, vector<1x64x64xbf16>
    %73 = vector.shape_cast %72 : vector<1x64x64xbf16> to vector<64x64xbf16>
    %cst_60 = arith.constant dense<0.000000e+00> : vector<4x64xf32>
    %74 = tpu.matmul %71, %73, %cst_60 {dimension_numbers = #tpu.dot_dimension_numbers<[1], [0], [0], [1], [0, 0, 1, 1], [], []>} : vector<4x64xbf16>, vector<64x64xbf16>, vector<4x64xf32> -> vector<4x64xf32>
    %75 = arith.addf %68, %74 : vector<4x64xf32>
    %c2_61 = arith.constant 2 : index
    %c0_62 = arith.constant 0 : index
    %c0_63 = arith.constant 0 : index
    %76 = vector.load %arg7[%c2_61, %c0_62, %c0_63] : memref<6x6x64xf32, #tpu.memory_space<vmem>>, vector<1x4x64xf32>
    %77 = vector.shape_cast %76 : vector<1x4x64xf32> to vector<4x64xf32>
    %78 = arith.truncf %77 : vector<4x64xf32> to vector<4x64xbf16>
    %c6 = arith.constant 6 : index
    %c0_64 = arith.constant 0 : index
    %c0_65 = arith.constant 0 : index
    %79 = vector.load %arg4[%c6, %c0_64, %c0_65] : memref<9x64x64xbf16, #tpu.memory_space<vmem>>, vector<1x64x64xbf16>
    %80 = vector.shape_cast %79 : vector<1x64x64xbf16> to vector<64x64xbf16>
    %cst_66 = arith.constant dense<0.000000e+00> : vector<4x64xf32>
    %81 = tpu.matmul %78, %80, %cst_66 {dimension_numbers = #tpu.dot_dimension_numbers<[1], [0], [0], [1], [0, 0, 1, 1], [], []>} : vector<4x64xbf16>, vector<64x64xbf16>, vector<4x64xf32> -> vector<4x64xf32>
    %82 = arith.addf %75, %81 : vector<4x64xf32>
    %c2_67 = arith.constant 2 : index
    %c1_68 = arith.constant 1 : index
    %c0_69 = arith.constant 0 : index
    %83 = vector.load %arg7[%c2_67, %c1_68, %c0_69] : memref<6x6x64xf32, #tpu.memory_space<vmem>>, vector<1x4x64xf32>
    %84 = vector.shape_cast %83 : vector<1x4x64xf32> to vector<4x64xf32>
    %85 = arith.truncf %84 : vector<4x64xf32> to vector<4x64xbf16>
    %c7 = arith.constant 7 : index
    %c0_70 = arith.constant 0 : index
    %c0_71 = arith.constant 0 : index
    %86 = vector.load %arg4[%c7, %c0_70, %c0_71] : memref<9x64x64xbf16, #tpu.memory_space<vmem>>, vector<1x64x64xbf16>
    %87 = vector.shape_cast %86 : vector<1x64x64xbf16> to vector<64x64xbf16>
    %cst_72 = arith.constant dense<0.000000e+00> : vector<4x64xf32>
    %88 = tpu.matmul %85, %87, %cst_72 {dimension_numbers = #tpu.dot_dimension_numbers<[1], [0], [0], [1], [0, 0, 1, 1], [], []>} : vector<4x64xbf16>, vector<64x64xbf16>, vector<4x64xf32> -> vector<4x64xf32>
    %89 = arith.addf %82, %88 : vector<4x64xf32>
    %c2_73 = arith.constant 2 : index
    %c2_74 = arith.constant 2 : index
    %c0_75 = arith.constant 0 : index
    %90 = vector.load %arg7[%c2_73, %c2_74, %c0_75] : memref<6x6x64xf32, #tpu.memory_space<vmem>>, vector<1x4x64xf32>
    %91 = vector.shape_cast %90 : vector<1x4x64xf32> to vector<4x64xf32>
    %92 = arith.truncf %91 : vector<4x64xf32> to vector<4x64xbf16>
    %c8 = arith.constant 8 : index
    %c0_76 = arith.constant 0 : index
    %c0_77 = arith.constant 0 : index
    %93 = vector.load %arg4[%c8, %c0_76, %c0_77] : memref<9x64x64xbf16, #tpu.memory_space<vmem>>, vector<1x64x64xbf16>
    %94 = vector.shape_cast %93 : vector<1x64x64xbf16> to vector<64x64xbf16>
    %cst_78 = arith.constant dense<0.000000e+00> : vector<4x64xf32>
    %95 = tpu.matmul %92, %94, %cst_78 {dimension_numbers = #tpu.dot_dimension_numbers<[1], [0], [0], [1], [0, 0, 1, 1], [], []>} : vector<4x64xbf16>, vector<64x64xbf16>, vector<4x64xf32> -> vector<4x64xf32>
    %96 = arith.addf %89, %95 : vector<4x64xf32>
    %cst_79 = arith.constant 0.00999999977 : f32
    %97 = vector.broadcast %cst_79 : f32 to vector<4x64xf32>
    %98 = arith.mulf %97, %96 : vector<4x64xf32>
    %99 = arith.maximumf %96, %98 : vector<4x64xf32>
    %c0_80 = arith.constant 0 : index
    %c0_81 = arith.constant 0 : index
    %100 = vector.load %arg6[%c0_80, %c0_81] : memref<16x64xf32, #tpu.memory_space<vmem>>, vector<4x64xf32>
    tpu.vector_store %arg6[%c0_80, %c0_81], %99 {strides = array<i32>} : memref<16x64xf32, #tpu.memory_space<vmem>>, vector<4x64xf32>,
    %c0_82 = arith.constant 0 : index
    %c0_83 = arith.constant 0 : index
    %101 = vector.load %arg5[%c0_82, %c0_83] : memref<1x64xf32, #tpu.memory_space<vmem>>, vector<1x64xf32>
    %102 = vector.extract_strided_slice %11 {offsets = [4, 0], sizes = [4, 64], strides = [1, 1]} : vector<16x64xf32> to vector<4x64xf32>
    %103 = vector.broadcast %101 : vector<1x64xf32> to vector<4x64xf32>
    %104 = arith.addf %103, %102 : vector<4x64xf32>
    %c1_84 = arith.constant 1 : index
    %c0_85 = arith.constant 0 : index
    %c0_86 = arith.constant 0 : index
    %105 = vector.load %arg7[%c1_84, %c0_85, %c0_86] : memref<6x6x64xf32, #tpu.memory_space<vmem>>, vector<1x4x64xf32>
    %106 = vector.shape_cast %105 : vector<1x4x64xf32> to vector<4x64xf32>
    %107 = arith.truncf %106 : vector<4x64xf32> to vector<4x64xbf16>
    %c0_87 = arith.constant 0 : index
    %c0_88 = arith.constant 0 : index
    %c0_89 = arith.constant 0 : index
    %108 = vector.load %arg4[%c0_87, %c0_88, %c0_89] : memref<9x64x64xbf16, #tpu.memory_space<vmem>>, vector<1x64x64xbf16>
    %109 = vector.shape_cast %108 : vector<1x64x64xbf16> to vector<64x64xbf16>
    %cst_90 = arith.constant dense<0.000000e+00> : vector<4x64xf32>
    %110 = tpu.matmul %107, %109, %cst_90 {dimension_numbers = #tpu.dot_dimension_numbers<[1], [0], [0], [1], [0, 0, 1, 1], [], []>} : vector<4x64xbf16>, vector<64x64xbf16>, vector<4x64xf32> -> vector<4x64xf32>
    %111 = arith.addf %104, %110 : vector<4x64xf32>
    %c1_91 = arith.constant 1 : index
    %c1_92 = arith.constant 1 : index
    %c0_93 = arith.constant 0 : index
    %112 = vector.load %arg7[%c1_91, %c1_92, %c0_93] : memref<6x6x64xf32, #tpu.memory_space<vmem>>, vector<1x4x64xf32>
    %113 = vector.shape_cast %112 : vector<1x4x64xf32> to vector<4x64xf32>
    %114 = arith.truncf %113 : vector<4x64xf32> to vector<4x64xbf16>
    %c1_94 = arith.constant 1 : index
    %c0_95 = arith.constant 0 : index
    %c0_96 = arith.constant 0 : index
    %115 = vector.load %arg4[%c1_94, %c0_95, %c0_96] : memref<9x64x64xbf16, #tpu.memory_space<vmem>>, vector<1x64x64xbf16>
    %116 = vector.shape_cast %115 : vector<1x64x64xbf16> to vector<64x64xbf16>
    %cst_97 = arith.constant dense<0.000000e+00> : vector<4x64xf32>
    %117 = tpu.matmul %114, %116, %cst_97 {dimension_numbers = #tpu.dot_dimension_numbers<[1], [0], [0], [1], [0, 0, 1, 1], [], []>} : vector<4x64xbf16>, vector<64x64xbf16>, vector<4x64xf32> -> vector<4x64xf32>
    %118 = arith.addf %111, %117 : vector<4x64xf32>
    %c1_98 = arith.constant 1 : index
    %c2_99 = arith.constant 2 : index
    %c0_100 = arith.constant 0 : index
    %119 = vector.load %arg7[%c1_98, %c2_99, %c0_100] : memref<6x6x64xf32, #tpu.memory_space<vmem>>, vector<1x4x64xf32>
    %120 = vector.shape_cast %119 : vector<1x4x64xf32> to vector<4x64xf32>
    %121 = arith.truncf %120 : vector<4x64xf32> to vector<4x64xbf16>
    %c2_101 = arith.constant 2 : index
    %c0_102 = arith.constant 0 : index
    %c0_103 = arith.constant 0 : index
    %122 = vector.load %arg4[%c2_101, %c0_102, %c0_103] : memref<9x64x64xbf16, #tpu.memory_space<vmem>>, vector<1x64x64xbf16>
    %123 = vector.shape_cast %122 : vector<1x64x64xbf16> to vector<64x64xbf16>
    %cst_104 = arith.constant dense<0.000000e+00> : vector<4x64xf32>
    %124 = tpu.matmul %121, %123, %cst_104 {dimension_numbers = #tpu.dot_dimension_numbers<[1], [0], [0], [1], [0, 0, 1, 1], [], []>} : vector<4x64xbf16>, vector<64x64xbf16>, vector<4x64xf32> -> vector<4x64xf32>
    %125 = arith.addf %118, %124 : vector<4x64xf32>
    %c2_105 = arith.constant 2 : index
    %c0_106 = arith.constant 0 : index
    %c0_107 = arith.constant 0 : index
    %126 = vector.load %arg7[%c2_105, %c0_106, %c0_107] : memref<6x6x64xf32, #tpu.memory_space<vmem>>, vector<1x4x64xf32>
    %127 = vector.shape_cast %126 : vector<1x4x64xf32> to vector<4x64xf32>
    %128 = arith.truncf %127 : vector<4x64xf32> to vector<4x64xbf16>
    %c3_108 = arith.constant 3 : index
    %c0_109 = arith.constant 0 : index
    %c0_110 = arith.constant 0 : index
    %129 = vector.load %arg4[%c3_108, %c0_109, %c0_110] : memref<9x64x64xbf16, #tpu.memory_space<vmem>>, vector<1x64x64xbf16>
    %130 = vector.shape_cast %129 : vector<1x64x64xbf16> to vector<64x64xbf16>
    %cst_111 = arith.constant dense<0.000000e+00> : vector<4x64xf32>
    %131 = tpu.matmul %128, %130, %cst_111 {dimension_numbers = #tpu.dot_dimension_numbers<[1], [0], [0], [1], [0, 0, 1, 1], [], []>} : vector<4x64xbf16>, vector<64x64xbf16>, vector<4x64xf32> -> vector<4x64xf32>
    %132 = arith.addf %125, %131 : vector<4x64xf32>
    %c2_112 = arith.constant 2 : index
    %c1_113 = arith.constant 1 : index
    %c0_114 = arith.constant 0 : index
    %133 = vector.load %arg7[%c2_112, %c1_113, %c0_114] : memref<6x6x64xf32, #tpu.memory_space<vmem>>, vector<1x4x64xf32>
    %134 = vector.shape_cast %133 : vector<1x4x64xf32> to vector<4x64xf32>
    %135 = arith.truncf %134 : vector<4x64xf32> to vector<4x64xbf16>
    %c4_115 = arith.constant 4 : index
    %c0_116 = arith.constant 0 : index
    %c0_117 = arith.constant 0 : index
    %136 = vector.load %arg4[%c4_115, %c0_116, %c0_117] : memref<9x64x64xbf16, #tpu.memory_space<vmem>>, vector<1x64x64xbf16>
    %137 = vector.shape_cast %136 : vector<1x64x64xbf16> to vector<64x64xbf16>
    %cst_118 = arith.constant dense<0.000000e+00> : vector<4x64xf32>
    %138 = tpu.matmul %135, %137, %cst_118 {dimension_numbers = #tpu.dot_dimension_numbers<[1], [0], [0], [1], [0, 0, 1, 1], [], []>} : vector<4x64xbf16>, vector<64x64xbf16>, vector<4x64xf32> -> vector<4x64xf32>
    %139 = arith.addf %132, %138 : vector<4x64xf32>
    %c2_119 = arith.constant 2 : index
    %c2_120 = arith.constant 2 : index
    %c0_121 = arith.constant 0 : index
    %140 = vector.load %arg7[%c2_119, %c2_120, %c0_121] : memref<6x6x64xf32, #tpu.memory_space<vmem>>, vector<1x4x64xf32>
    %141 = vector.shape_cast %140 : vector<1x4x64xf32> to vector<4x64xf32>
    %142 = arith.truncf %141 : vector<4x64xf32> to vector<4x64xbf16>
    %c5_122 = arith.constant 5 : index
    %c0_123 = arith.constant 0 : index
    %c0_124 = arith.constant 0 : index
    %143 = vector.load %arg4[%c5_122, %c0_123, %c0_124] : memref<9x64x64xbf16, #tpu.memory_space<vmem>>, vector<1x64x64xbf16>
    %144 = vector.shape_cast %143 : vector<1x64x64xbf16> to vector<64x64xbf16>
    %cst_125 = arith.constant dense<0.000000e+00> : vector<4x64xf32>
    %145 = tpu.matmul %142, %144, %cst_125 {dimension_numbers = #tpu.dot_dimension_numbers<[1], [0], [0], [1], [0, 0, 1, 1], [], []>} : vector<4x64xbf16>, vector<64x64xbf16>, vector<4x64xf32> -> vector<4x64xf32>
    %146 = arith.addf %139, %145 : vector<4x64xf32>
    %c3_126 = arith.constant 3 : index
    %c0_127 = arith.constant 0 : index
    %c0_128 = arith.constant 0 : index
    %147 = vector.load %arg7[%c3_126, %c0_127, %c0_128] : memref<6x6x64xf32, #tpu.memory_space<vmem>>, vector<1x4x64xf32>
    %148 = vector.shape_cast %147 : vector<1x4x64xf32> to vector<4x64xf32>
    %149 = arith.truncf %148 : vector<4x64xf32> to vector<4x64xbf16>
    %c6_129 = arith.constant 6 : index
    %c0_130 = arith.constant 0 : index
    %c0_131 = arith.constant 0 : index
    %150 = vector.load %arg4[%c6_129, %c0_130, %c0_131] : memref<9x64x64xbf16, #tpu.memory_space<vmem>>, vector<1x64x64xbf16>
    %151 = vector.shape_cast %150 : vector<1x64x64xbf16> to vector<64x64xbf16>
    %cst_132 = arith.constant dense<0.000000e+00> : vector<4x64xf32>
    %152 = tpu.matmul %149, %151, %cst_132 {dimension_numbers = #tpu.dot_dimension_numbers<[1], [0], [0], [1], [0, 0, 1, 1], [], []>} : vector<4x64xbf16>, vector<64x64xbf16>, vector<4x64xf32> -> vector<4x64xf32>
    %153 = arith.addf %146, %152 : vector<4x64xf32>
    %c3_133 = arith.constant 3 : index
    %c1_134 = arith.constant 1 : index
    %c0_135 = arith.constant 0 : index
    %154 = vector.load %arg7[%c3_133, %c1_134, %c0_135] : memref<6x6x64xf32, #tpu.memory_space<vmem>>, vector<1x4x64xf32>
    %155 = vector.shape_cast %154 : vector<1x4x64xf32> to vector<4x64xf32>
    %156 = arith.truncf %155 : vector<4x64xf32> to vector<4x64xbf16>
    %c7_136 = arith.constant 7 : index
    %c0_137 = arith.constant 0 : index
    %c0_138 = arith.constant 0 : index
    %157 = vector.load %arg4[%c7_136, %c0_137, %c0_138] : memref<9x64x64xbf16, #tpu.memory_space<vmem>>, vector<1x64x64xbf16>
    %158 = vector.shape_cast %157 : vector<1x64x64xbf16> to vector<64x64xbf16>
    %cst_139 = arith.constant dense<0.000000e+00> : vector<4x64xf32>
    %159 = tpu.matmul %156, %158, %cst_139 {dimension_numbers = #tpu.dot_dimension_numbers<[1], [0], [0], [1], [0, 0, 1, 1], [], []>} : vector<4x64xbf16>, vector<64x64xbf16>, vector<4x64xf32> -> vector<4x64xf32>
    %160 = arith.addf %153, %159 : vector<4x64xf32>
    %c3_140 = arith.constant 3 : index
    %c2_141 = arith.constant 2 : index
    %c0_142 = arith.constant 0 : index
    %161 = vector.load %arg7[%c3_140, %c2_141, %c0_142] : memref<6x6x64xf32, #tpu.memory_space<vmem>>, vector<1x4x64xf32>
    %162 = vector.shape_cast %161 : vector<1x4x64xf32> to vector<4x64xf32>
    %163 = arith.truncf %162 : vector<4x64xf32> to vector<4x64xbf16>
    %c8_143 = arith.constant 8 : index
    %c0_144 = arith.constant 0 : index
    %c0_145 = arith.constant 0 : index
    %164 = vector.load %arg4[%c8_143, %c0_144, %c0_145] : memref<9x64x64xbf16, #tpu.memory_space<vmem>>, vector<1x64x64xbf16>
    %165 = vector.shape_cast %164 : vector<1x64x64xbf16> to vector<64x64xbf16>
    %cst_146 = arith.constant dense<0.000000e+00> : vector<4x64xf32>
    %166 = tpu.matmul %163, %165, %cst_146 {dimension_numbers = #tpu.dot_dimension_numbers<[1], [0], [0], [1], [0, 0, 1, 1], [], []>} : vector<4x64xbf16>, vector<64x64xbf16>, vector<4x64xf32> -> vector<4x64xf32>
    %167 = arith.addf %160, %166 : vector<4x64xf32>
    %cst_147 = arith.constant 0.00999999977 : f32
    %168 = vector.broadcast %cst_147 : f32 to vector<4x64xf32>
    %169 = arith.mulf %168, %167 : vector<4x64xf32>
    %170 = arith.maximumf %167, %169 : vector<4x64xf32>
    %c4_148 = arith.constant 4 : index
    %c0_149 = arith.constant 0 : index
    %171 = vector.load %arg6[%c4_148, %c0_149] : memref<16x64xf32, #tpu.memory_space<vmem>>, vector<4x64xf32>
    tpu.vector_store %arg6[%c4_148, %c0_149], %170 {strides = array<i32>} : memref<16x64xf32, #tpu.memory_space<vmem>>, vector<4x64xf32>,
    %c0_150 = arith.constant 0 : index
    %c0_151 = arith.constant 0 : index
    %172 = vector.load %arg5[%c0_150, %c0_151] : memref<1x64xf32, #tpu.memory_space<vmem>>, vector<1x64xf32>
    %173 = vector.extract_strided_slice %11 {offsets = [8, 0], sizes = [4, 64], strides = [1, 1]} : vector<16x64xf32> to vector<4x64xf32>
    %174 = vector.broadcast %172 : vector<1x64xf32> to vector<4x64xf32>
    %175 = arith.addf %174, %173 : vector<4x64xf32>
    %c2_152 = arith.constant 2 : index
    %c0_153 = arith.constant 0 : index
    %c0_154 = arith.constant 0 : index
    %176 = vector.load %arg7[%c2_152, %c0_153, %c0_154] : memref<6x6x64xf32, #tpu.memory_space<vmem>>, vector<1x4x64xf32>
    %177 = vector.shape_cast %176 : vector<1x4x64xf32> to vector<4x64xf32>
    %178 = arith.truncf %177 : vector<4x64xf32> to vector<4x64xbf16>
    %c0_155 = arith.constant 0 : index
    %c0_156 = arith.constant 0 : index
    %c0_157 = arith.constant 0 : index
    %179 = vector.load %arg4[%c0_155, %c0_156, %c0_157] : memref<9x64x64xbf16, #tpu.memory_space<vmem>>, vector<1x64x64xbf16>
    %180 = vector.shape_cast %179 : vector<1x64x64xbf16> to vector<64x64xbf16>
    %cst_158 = arith.constant dense<0.000000e+00> : vector<4x64xf32>
    %181 = tpu.matmul %178, %180, %cst_158 {dimension_numbers = #tpu.dot_dimension_numbers<[1], [0], [0], [1], [0, 0, 1, 1], [], []>} : vector<4x64xbf16>, vector<64x64xbf16>, vector<4x64xf32> -> vector<4x64xf32>
    %182 = arith.addf %175, %181 : vector<4x64xf32>
    %c2_159 = arith.constant 2 : index
    %c1_160 = arith.constant 1 : index
    %c0_161 = arith.constant 0 : index
    %183 = vector.load %arg7[%c2_159, %c1_160, %c0_161] : memref<6x6x64xf32, #tpu.memory_space<vmem>>, vector<1x4x64xf32>
    %184 = vector.shape_cast %183 : vector<1x4x64xf32> to vector<4x64xf32>
    %185 = arith.truncf %184 : vector<4x64xf32> to vector<4x64xbf16>
    %c1_162 = arith.constant 1 : index
    %c0_163 = arith.constant 0 : index
    %c0_164 = arith.constant 0 : index
    %186 = vector.load %arg4[%c1_162, %c0_163, %c0_164] : memref<9x64x64xbf16, #tpu.memory_space<vmem>>, vector<1x64x64xbf16>
    %187 = vector.shape_cast %186 : vector<1x64x64xbf16> to vector<64x64xbf16>
    %cst_165 = arith.constant dense<0.000000e+00> : vector<4x64xf32>
    %188 = tpu.matmul %185, %187, %cst_165 {dimension_numbers = #tpu.dot_dimension_numbers<[1], [0], [0], [1], [0, 0, 1, 1], [], []>} : vector<4x64xbf16>, vector<64x64xbf16>, vector<4x64xf32> -> vector<4x64xf32>
    %189 = arith.addf %182, %188 : vector<4x64xf32>
    %c2_166 = arith.constant 2 : index
    %c2_167 = arith.constant 2 : index
    %c0_168 = arith.constant 0 : index
    %190 = vector.load %arg7[%c2_166, %c2_167, %c0_168] : memref<6x6x64xf32, #tpu.memory_space<vmem>>, vector<1x4x64xf32>
    %191 = vector.shape_cast %190 : vector<1x4x64xf32> to vector<4x64xf32>
    %192 = arith.truncf %191 : vector<4x64xf32> to vector<4x64xbf16>
    %c2_169 = arith.constant 2 : index
    %c0_170 = arith.constant 0 : index
    %c0_171 = arith.constant 0 : index
    %193 = vector.load %arg4[%c2_169, %c0_170, %c0_171] : memref<9x64x64xbf16, #tpu.memory_space<vmem>>, vector<1x64x64xbf16>
    %194 = vector.shape_cast %193 : vector<1x64x64xbf16> to vector<64x64xbf16>
    %cst_172 = arith.constant dense<0.000000e+00> : vector<4x64xf32>
    %195 = tpu.matmul %192, %194, %cst_172 {dimension_numbers = #tpu.dot_dimension_numbers<[1], [0], [0], [1], [0, 0, 1, 1], [], []>} : vector<4x64xbf16>, vector<64x64xbf16>, vector<4x64xf32> -> vector<4x64xf32>
    %196 = arith.addf %189, %195 : vector<4x64xf32>
    %c3_173 = arith.constant 3 : index
    %c0_174 = arith.constant 0 : index
    %c0_175 = arith.constant 0 : index
    %197 = vector.load %arg7[%c3_173, %c0_174, %c0_175] : memref<6x6x64xf32, #tpu.memory_space<vmem>>, vector<1x4x64xf32>
    %198 = vector.shape_cast %197 : vector<1x4x64xf32> to vector<4x64xf32>
    %199 = arith.truncf %198 : vector<4x64xf32> to vector<4x64xbf16>
    %c3_176 = arith.constant 3 : index
    %c0_177 = arith.constant 0 : index
    %c0_178 = arith.constant 0 : index
    %200 = vector.load %arg4[%c3_176, %c0_177, %c0_178] : memref<9x64x64xbf16, #tpu.memory_space<vmem>>, vector<1x64x64xbf16>
    %201 = vector.shape_cast %200 : vector<1x64x64xbf16> to vector<64x64xbf16>
    %cst_179 = arith.constant dense<0.000000e+00> : vector<4x64xf32>
    %202 = tpu.matmul %199, %201, %cst_179 {dimension_numbers = #tpu.dot_dimension_numbers<[1], [0], [0], [1], [0, 0, 1, 1], [], []>} : vector<4x64xbf16>, vector<64x64xbf16>, vector<4x64xf32> -> vector<4x64xf32>
    %203 = arith.addf %196, %202 : vector<4x64xf32>
    %c3_180 = arith.constant 3 : index
    %c1_181 = arith.constant 1 : index
    %c0_182 = arith.constant 0 : index
    %204 = vector.load %arg7[%c3_180, %c1_181, %c0_182] : memref<6x6x64xf32, #tpu.memory_space<vmem>>, vector<1x4x64xf32>
    %205 = vector.shape_cast %204 : vector<1x4x64xf32> to vector<4x64xf32>
    %206 = arith.truncf %205 : vector<4x64xf32> to vector<4x64xbf16>
    %c4_183 = arith.constant 4 : index
    %c0_184 = arith.constant 0 : index
    %c0_185 = arith.constant 0 : index
    %207 = vector.load %arg4[%c4_183, %c0_184, %c0_185] : memref<9x64x64xbf16, #tpu.memory_space<vmem>>, vector<1x64x64xbf16>
    %208 = vector.shape_cast %207 : vector<1x64x64xbf16> to vector<64x64xbf16>
    %cst_186 = arith.constant dense<0.000000e+00> : vector<4x64xf32>
    %209 = tpu.matmul %206, %208, %cst_186 {dimension_numbers = #tpu.dot_dimension_numbers<[1], [0], [0], [1], [0, 0, 1, 1], [], []>} : vector<4x64xbf16>, vector<64x64xbf16>, vector<4x64xf32> -> vector<4x64xf32>
    %210 = arith.addf %203, %209 : vector<4x64xf32>
    %c3_187 = arith.constant 3 : index
    %c2_188 = arith.constant 2 : index
    %c0_189 = arith.constant 0 : index
    %211 = vector.load %arg7[%c3_187, %c2_188, %c0_189] : memref<6x6x64xf32, #tpu.memory_space<vmem>>, vector<1x4x64xf32>
    %212 = vector.shape_cast %211 : vector<1x4x64xf32> to vector<4x64xf32>
    %213 = arith.truncf %212 : vector<4x64xf32> to vector<4x64xbf16>
    %c5_190 = arith.constant 5 : index
    %c0_191 = arith.constant 0 : index
    %c0_192 = arith.constant 0 : index
    %214 = vector.load %arg4[%c5_190, %c0_191, %c0_192] : memref<9x64x64xbf16, #tpu.memory_space<vmem>>, vector<1x64x64xbf16>
    %215 = vector.shape_cast %214 : vector<1x64x64xbf16> to vector<64x64xbf16>
    %cst_193 = arith.constant dense<0.000000e+00> : vector<4x64xf32>
    %216 = tpu.matmul %213, %215, %cst_193 {dimension_numbers = #tpu.dot_dimension_numbers<[1], [0], [0], [1], [0, 0, 1, 1], [], []>} : vector<4x64xbf16>, vector<64x64xbf16>, vector<4x64xf32> -> vector<4x64xf32>
    %217 = arith.addf %210, %216 : vector<4x64xf32>
    %c4_194 = arith.constant 4 : index
    %c0_195 = arith.constant 0 : index
    %c0_196 = arith.constant 0 : index
    %218 = vector.load %arg7[%c4_194, %c0_195, %c0_196] : memref<6x6x64xf32, #tpu.memory_space<vmem>>, vector<1x4x64xf32>
    %219 = vector.shape_cast %218 : vector<1x4x64xf32> to vector<4x64xf32>
    %220 = arith.truncf %219 : vector<4x64xf32> to vector<4x64xbf16>
    %c6_197 = arith.constant 6 : index
    %c0_198 = arith.constant 0 : index
    %c0_199 = arith.constant 0 : index
    %221 = vector.load %arg4[%c6_197, %c0_198, %c0_199] : memref<9x64x64xbf16, #tpu.memory_space<vmem>>, vector<1x64x64xbf16>
    %222 = vector.shape_cast %221 : vector<1x64x64xbf16> to vector<64x64xbf16>
    %cst_200 = arith.constant dense<0.000000e+00> : vector<4x64xf32>
    %223 = tpu.matmul %220, %222, %cst_200 {dimension_numbers = #tpu.dot_dimension_numbers<[1], [0], [0], [1], [0, 0, 1, 1], [], []>} : vector<4x64xbf16>, vector<64x64xbf16>, vector<4x64xf32> -> vector<4x64xf32>
    %224 = arith.addf %217, %223 : vector<4x64xf32>
    %c4_201 = arith.constant 4 : index
    %c1_202 = arith.constant 1 : index
    %c0_203 = arith.constant 0 : index
    %225 = vector.load %arg7[%c4_201, %c1_202, %c0_203] : memref<6x6x64xf32, #tpu.memory_space<vmem>>, vector<1x4x64xf32>
    %226 = vector.shape_cast %225 : vector<1x4x64xf32> to vector<4x64xf32>
    %227 = arith.truncf %226 : vector<4x64xf32> to vector<4x64xbf16>
    %c7_204 = arith.constant 7 : index
    %c0_205 = arith.constant 0 : index
    %c0_206 = arith.constant 0 : index
    %228 = vector.load %arg4[%c7_204, %c0_205, %c0_206] : memref<9x64x64xbf16, #tpu.memory_space<vmem>>, vector<1x64x64xbf16>
    %229 = vector.shape_cast %228 : vector<1x64x64xbf16> to vector<64x64xbf16>
    %cst_207 = arith.constant dense<0.000000e+00> : vector<4x64xf32>
    %230 = tpu.matmul %227, %229, %cst_207 {dimension_numbers = #tpu.dot_dimension_numbers<[1], [0], [0], [1], [0, 0, 1, 1], [], []>} : vector<4x64xbf16>, vector<64x64xbf16>, vector<4x64xf32> -> vector<4x64xf32>
    %231 = arith.addf %224, %230 : vector<4x64xf32>
    %c4_208 = arith.constant 4 : index
    %c2_209 = arith.constant 2 : index
    %c0_210 = arith.constant 0 : index
    %232 = vector.load %arg7[%c4_208, %c2_209, %c0_210] : memref<6x6x64xf32, #tpu.memory_space<vmem>>, vector<1x4x64xf32>
    %233 = vector.shape_cast %232 : vector<1x4x64xf32> to vector<4x64xf32>
    %234 = arith.truncf %233 : vector<4x64xf32> to vector<4x64xbf16>
    %c8_211 = arith.constant 8 : index
    %c0_212 = arith.constant 0 : index
    %c0_213 = arith.constant 0 : index
    %235 = vector.load %arg4[%c8_211, %c0_212, %c0_213] : memref<9x64x64xbf16, #tpu.memory_space<vmem>>, vector<1x64x64xbf16>
    %236 = vector.shape_cast %235 : vector<1x64x64xbf16> to vector<64x64xbf16>
    %cst_214 = arith.constant dense<0.000000e+00> : vector<4x64xf32>
    %237 = tpu.matmul %234, %236, %cst_214 {dimension_numbers = #tpu.dot_dimension_numbers<[1], [0], [0], [1], [0, 0, 1, 1], [], []>} : vector<4x64xbf16>, vector<64x64xbf16>, vector<4x64xf32> -> vector<4x64xf32>
    %238 = arith.addf %231, %237 : vector<4x64xf32>
    %cst_215 = arith.constant 0.00999999977 : f32
    %239 = vector.broadcast %cst_215 : f32 to vector<4x64xf32>
    %240 = arith.mulf %239, %238 : vector<4x64xf32>
    %241 = arith.maximumf %238, %240 : vector<4x64xf32>
    %c8_216 = arith.constant 8 : index
    %c0_217 = arith.constant 0 : index
    %242 = vector.load %arg6[%c8_216, %c0_217] : memref<16x64xf32, #tpu.memory_space<vmem>>, vector<4x64xf32>
    tpu.vector_store %arg6[%c8_216, %c0_217], %241 {strides = array<i32>} : memref<16x64xf32, #tpu.memory_space<vmem>>, vector<4x64xf32>,
    %c0_218 = arith.constant 0 : index
    %c0_219 = arith.constant 0 : index
    %243 = vector.load %arg5[%c0_218, %c0_219] : memref<1x64xf32, #tpu.memory_space<vmem>>, vector<1x64xf32>
    %244 = vector.extract_strided_slice %11 {offsets = [12, 0], sizes = [4, 64], strides = [1, 1]} : vector<16x64xf32> to vector<4x64xf32>
    %245 = vector.broadcast %243 : vector<1x64xf32> to vector<4x64xf32>
    %246 = arith.addf %245, %244 : vector<4x64xf32>
    %c3_220 = arith.constant 3 : index
    %c0_221 = arith.constant 0 : index
    %c0_222 = arith.constant 0 : index
    %247 = vector.load %arg7[%c3_220, %c0_221, %c0_222] : memref<6x6x64xf32, #tpu.memory_space<vmem>>, vector<1x4x64xf32>
    %248 = vector.shape_cast %247 : vector<1x4x64xf32> to vector<4x64xf32>
    %249 = arith.truncf %248 : vector<4x64xf32> to vector<4x64xbf16>
    %c0_223 = arith.constant 0 : index
    %c0_224 = arith.constant 0 : index
    %c0_225 = arith.constant 0 : index
    %250 = vector.load %arg4[%c0_223, %c0_224, %c0_225] : memref<9x64x64xbf16, #tpu.memory_space<vmem>>, vector<1x64x64xbf16>
    %251 = vector.shape_cast %250 : vector<1x64x64xbf16> to vector<64x64xbf16>
    %cst_226 = arith.constant dense<0.000000e+00> : vector<4x64xf32>
    %252 = tpu.matmul %249, %251, %cst_226 {dimension_numbers = #tpu.dot_dimension_numbers<[1], [0], [0], [1], [0, 0, 1, 1], [], []>} : vector<4x64xbf16>, vector<64x64xbf16>, vector<4x64xf32> -> vector<4x64xf32>
    %253 = arith.addf %246, %252 : vector<4x64xf32>
    %c3_227 = arith.constant 3 : index
    %c1_228 = arith.constant 1 : index
    %c0_229 = arith.constant 0 : index
    %254 = vector.load %arg7[%c3_227, %c1_228, %c0_229] : memref<6x6x64xf32, #tpu.memory_space<vmem>>, vector<1x4x64xf32>
    %255 = vector.shape_cast %254 : vector<1x4x64xf32> to vector<4x64xf32>
    %256 = arith.truncf %255 : vector<4x64xf32> to vector<4x64xbf16>
    %c1_230 = arith.constant 1 : index
    %c0_231 = arith.constant 0 : index
    %c0_232 = arith.constant 0 : index
    %257 = vector.load %arg4[%c1_230, %c0_231, %c0_232] : memref<9x64x64xbf16, #tpu.memory_space<vmem>>, vector<1x64x64xbf16>
    %258 = vector.shape_cast %257 : vector<1x64x64xbf16> to vector<64x64xbf16>
    %cst_233 = arith.constant dense<0.000000e+00> : vector<4x64xf32>
    %259 = tpu.matmul %256, %258, %cst_233 {dimension_numbers = #tpu.dot_dimension_numbers<[1], [0], [0], [1], [0, 0, 1, 1], [], []>} : vector<4x64xbf16>, vector<64x64xbf16>, vector<4x64xf32> -> vector<4x64xf32>
    %260 = arith.addf %253, %259 : vector<4x64xf32>
    %c3_234 = arith.constant 3 : index
    %c2_235 = arith.constant 2 : index
    %c0_236 = arith.constant 0 : index
    %261 = vector.load %arg7[%c3_234, %c2_235, %c0_236] : memref<6x6x64xf32, #tpu.memory_space<vmem>>, vector<1x4x64xf32>
    %262 = vector.shape_cast %261 : vector<1x4x64xf32> to vector<4x64xf32>
    %263 = arith.truncf %262 : vector<4x64xf32> to vector<4x64xbf16>
    %c2_237 = arith.constant 2 : index
    %c0_238 = arith.constant 0 : index
    %c0_239 = arith.constant 0 : index
    %264 = vector.load %arg4[%c2_237, %c0_238, %c0_239] : memref<9x64x64xbf16, #tpu.memory_space<vmem>>, vector<1x64x64xbf16>
    %265 = vector.shape_cast %264 : vector<1x64x64xbf16> to vector<64x64xbf16>
    %cst_240 = arith.constant dense<0.000000e+00> : vector<4x64xf32>
    %266 = tpu.matmul %263, %265, %cst_240 {dimension_numbers = #tpu.dot_dimension_numbers<[1], [0], [0], [1], [0, 0, 1, 1], [], []>} : vector<4x64xbf16>, vector<64x64xbf16>, vector<4x64xf32> -> vector<4x64xf32>
    %267 = arith.addf %260, %266 : vector<4x64xf32>
    %c4_241 = arith.constant 4 : index
    %c0_242 = arith.constant 0 : index
    %c0_243 = arith.constant 0 : index
    %268 = vector.load %arg7[%c4_241, %c0_242, %c0_243] : memref<6x6x64xf32, #tpu.memory_space<vmem>>, vector<1x4x64xf32>
    %269 = vector.shape_cast %268 : vector<1x4x64xf32> to vector<4x64xf32>
    %270 = arith.truncf %269 : vector<4x64xf32> to vector<4x64xbf16>
    %c3_244 = arith.constant 3 : index
    %c0_245 = arith.constant 0 : index
    %c0_246 = arith.constant 0 : index
    %271 = vector.load %arg4[%c3_244, %c0_245, %c0_246] : memref<9x64x64xbf16, #tpu.memory_space<vmem>>, vector<1x64x64xbf16>
    %272 = vector.shape_cast %271 : vector<1x64x64xbf16> to vector<64x64xbf16>
    %cst_247 = arith.constant dense<0.000000e+00> : vector<4x64xf32>
    %273 = tpu.matmul %270, %272, %cst_247 {dimension_numbers = #tpu.dot_dimension_numbers<[1], [0], [0], [1], [0, 0, 1, 1], [], []>} : vector<4x64xbf16>, vector<64x64xbf16>, vector<4x64xf32> -> vector<4x64xf32>
    %274 = arith.addf %267, %273 : vector<4x64xf32>
    %c4_248 = arith.constant 4 : index
    %c1_249 = arith.constant 1 : index
    %c0_250 = arith.constant 0 : index
    %275 = vector.load %arg7[%c4_248, %c1_249, %c0_250] : memref<6x6x64xf32, #tpu.memory_space<vmem>>, vector<1x4x64xf32>
    %276 = vector.shape_cast %275 : vector<1x4x64xf32> to vector<4x64xf32>
    %277 = arith.truncf %276 : vector<4x64xf32> to vector<4x64xbf16>
    %c4_251 = arith.constant 4 : index
    %c0_252 = arith.constant 0 : index
    %c0_253 = arith.constant 0 : index
    %278 = vector.load %arg4[%c4_251, %c0_252, %c0_253] : memref<9x64x64xbf16, #tpu.memory_space<vmem>>, vector<1x64x64xbf16>
    %279 = vector.shape_cast %278 : vector<1x64x64xbf16> to vector<64x64xbf16>
    %cst_254 = arith.constant dense<0.000000e+00> : vector<4x64xf32>
    %280 = tpu.matmul %277, %279, %cst_254 {dimension_numbers = #tpu.dot_dimension_numbers<[1], [0], [0], [1], [0, 0, 1, 1], [], []>} : vector<4x64xbf16>, vector<64x64xbf16>, vector<4x64xf32> -> vector<4x64xf32>
    %281 = arith.addf %274, %280 : vector<4x64xf32>
    %c4_255 = arith.constant 4 : index
    %c2_256 = arith.constant 2 : index
    %c0_257 = arith.constant 0 : index
    %282 = vector.load %arg7[%c4_255, %c2_256, %c0_257] : memref<6x6x64xf32, #tpu.memory_space<vmem>>, vector<1x4x64xf32>
    %283 = vector.shape_cast %282 : vector<1x4x64xf32> to vector<4x64xf32>
    %284 = arith.truncf %283 : vector<4x64xf32> to vector<4x64xbf16>
    %c5_258 = arith.constant 5 : index
    %c0_259 = arith.constant 0 : index
    %c0_260 = arith.constant 0 : index
    %285 = vector.load %arg4[%c5_258, %c0_259, %c0_260] : memref<9x64x64xbf16, #tpu.memory_space<vmem>>, vector<1x64x64xbf16>
    %286 = vector.shape_cast %285 : vector<1x64x64xbf16> to vector<64x64xbf16>
    %cst_261 = arith.constant dense<0.000000e+00> : vector<4x64xf32>
    %287 = tpu.matmul %284, %286, %cst_261 {dimension_numbers = #tpu.dot_dimension_numbers<[1], [0], [0], [1], [0, 0, 1, 1], [], []>} : vector<4x64xbf16>, vector<64x64xbf16>, vector<4x64xf32> -> vector<4x64xf32>
    %288 = arith.addf %281, %287 : vector<4x64xf32>
    %c5_262 = arith.constant 5 : index
    %c0_263 = arith.constant 0 : index
    %c0_264 = arith.constant 0 : index
    %289 = vector.load %arg7[%c5_262, %c0_263, %c0_264] : memref<6x6x64xf32, #tpu.memory_space<vmem>>, vector<1x4x64xf32>
    %290 = vector.shape_cast %289 : vector<1x4x64xf32> to vector<4x64xf32>
    %291 = arith.truncf %290 : vector<4x64xf32> to vector<4x64xbf16>
    %c6_265 = arith.constant 6 : index
    %c0_266 = arith.constant 0 : index
    %c0_267 = arith.constant 0 : index
    %292 = vector.load %arg4[%c6_265, %c0_266, %c0_267] : memref<9x64x64xbf16, #tpu.memory_space<vmem>>, vector<1x64x64xbf16>
    %293 = vector.shape_cast %292 : vector<1x64x64xbf16> to vector<64x64xbf16>
    %cst_268 = arith.constant dense<0.000000e+00> : vector<4x64xf32>
    %294 = tpu.matmul %291, %293, %cst_268 {dimension_numbers = #tpu.dot_dimension_numbers<[1], [0], [0], [1], [0, 0, 1, 1], [], []>} : vector<4x64xbf16>, vector<64x64xbf16>, vector<4x64xf32> -> vector<4x64xf32>
    %295 = arith.addf %288, %294 : vector<4x64xf32>
    %c5_269 = arith.constant 5 : index
    %c1_270 = arith.constant 1 : index
    %c0_271 = arith.constant 0 : index
    %296 = vector.load %arg7[%c5_269, %c1_270, %c0_271] : memref<6x6x64xf32, #tpu.memory_space<vmem>>, vector<1x4x64xf32>
    %297 = vector.shape_cast %296 : vector<1x4x64xf32> to vector<4x64xf32>
    %298 = arith.truncf %297 : vector<4x64xf32> to vector<4x64xbf16>
    %c7_272 = arith.constant 7 : index
    %c0_273 = arith.constant 0 : index
    %c0_274 = arith.constant 0 : index
    %299 = vector.load %arg4[%c7_272, %c0_273, %c0_274] : memref<9x64x64xbf16, #tpu.memory_space<vmem>>, vector<1x64x64xbf16>
    %300 = vector.shape_cast %299 : vector<1x64x64xbf16> to vector<64x64xbf16>
    %cst_275 = arith.constant dense<0.000000e+00> : vector<4x64xf32>
    %301 = tpu.matmul %298, %300, %cst_275 {dimension_numbers = #tpu.dot_dimension_numbers<[1], [0], [0], [1], [0, 0, 1, 1], [], []>} : vector<4x64xbf16>, vector<64x64xbf16>, vector<4x64xf32> -> vector<4x64xf32>
    %302 = arith.addf %295, %301 : vector<4x64xf32>
    %c5_276 = arith.constant 5 : index
    %c2_277 = arith.constant 2 : index
    %c0_278 = arith.constant 0 : index
    %303 = vector.load %arg7[%c5_276, %c2_277, %c0_278] : memref<6x6x64xf32, #tpu.memory_space<vmem>>, vector<1x4x64xf32>
    %304 = vector.shape_cast %303 : vector<1x4x64xf32> to vector<4x64xf32>
    %305 = arith.truncf %304 : vector<4x64xf32> to vector<4x64xbf16>
    %c8_279 = arith.constant 8 : index
    %c0_280 = arith.constant 0 : index
    %c0_281 = arith.constant 0 : index
    %306 = vector.load %arg4[%c8_279, %c0_280, %c0_281] : memref<9x64x64xbf16, #tpu.memory_space<vmem>>, vector<1x64x64xbf16>
    %307 = vector.shape_cast %306 : vector<1x64x64xbf16> to vector<64x64xbf16>
    %cst_282 = arith.constant dense<0.000000e+00> : vector<4x64xf32>
    %308 = tpu.matmul %305, %307, %cst_282 {dimension_numbers = #tpu.dot_dimension_numbers<[1], [0], [0], [1], [0, 0, 1, 1], [], []>} : vector<4x64xbf16>, vector<64x64xbf16>, vector<4x64xf32> -> vector<4x64xf32>
    %309 = arith.addf %302, %308 : vector<4x64xf32>
    %cst_283 = arith.constant 0.00999999977 : f32
    %310 = vector.broadcast %cst_283 : f32 to vector<4x64xf32>
    %311 = arith.mulf %310, %309 : vector<4x64xf32>
    %312 = arith.maximumf %309, %311 : vector<4x64xf32>
    %c12 = arith.constant 12 : index
    %c0_284 = arith.constant 0 : index
    %313 = vector.load %arg6[%c12, %c0_284] : memref<16x64xf32, #tpu.memory_space<vmem>>, vector<4x64xf32>
    tpu.vector_store %arg6[%c12, %c0_284], %312 {strides = array<i32>} : memref<16x64xf32, #tpu.memory_space<vmem>>, vector<4x64xf32>,
    return
  }
  func.func @transform_0(%arg0: i32) -> (i32, i32) {
    %c0_i32 = arith.constant 0 : i32
    %c0_i32_0 = arith.constant 0 : i32
    return %arg0, %c0_i32 : i32, i32
  }
  func.func @transform_1(%arg0: i32) -> (i32, i32) {
    %c0_i32 = arith.constant 0 : i32
    %c0_i32_0 = arith.constant 0 : i32
    %c0_i32_1 = arith.constant 0 : i32
    return %c0_i32, %c0_i32_0 : i32, i32
  }
  func.func @transform_2(%arg0: i32) -> (i32, i32) {
    %c0_i32 = arith.constant 0 : i32
    %c0_i32_0 = arith.constant 0 : i32
    %c0_i32_1 = arith.constant 0 : i32
    return %c0_i32, %c0_i32_0 : i32, i32
  }
  func.func @transform_3(%arg0: i32) -> (i32, i32, i32) {
    %c0_i32 = arith.constant 0 : i32
    %c0_i32_0 = arith.constant 0 : i32
    %c0_i32_1 = arith.constant 0 : i32
    %c0_i32_2 = arith.constant 0 : i32
    return %c0_i32, %c0_i32_0, %c0_i32_1 : i32, i32, i32
  }
  func.func @transform_4(%arg0: i32) -> (i32, i32) {
    %c0_i32 = arith.constant 0 : i32
    %c0_i32_0 = arith.constant 0 : i32
    %c0_i32_1 = arith.constant 0 : i32
    return %c0_i32, %c0_i32_0 : i32, i32
  }
  func.func @transform_5(%arg0: i32) -> (i32, i32) {
    %c0_i32 = arith.constant 0 : i32
    %c0_i32_0 = arith.constant 0 : i32
    return %arg0, %c0_i32 : i32, i32
  }
}

</mosaic_0001>

<llo_original>
// kernel: encoder_forward.5
$region0: #{encoder_forward.5}
  #allocation0 [shape = 'u32[]', space=smem, size = 0x4, offset = 0x4, fixed_abs, tag = 'smem constant byte address 0x4 - core index']
  #allocation1 [shape = 'u32[144,128]{1,0:T(1,128)}', space=vmem, size = 0x12000, scoped, tag = 'internal scratch']
  %s0 = inlined_call_operand.vmem [shape: f32[2,1024], index: 0, kind: input, shape index: {}]
  %s1 = inlined_call_operand.vmem [shape: bf16[1024,64], index: 1, kind: input, shape index: {}]
  %s2 = inlined_call_operand.vmem [shape: f32[1,64], index: 2, kind: input, shape index: {}]
  %s3 = inlined_call_operand.vmem [shape: bf16[64,8], index: 3, kind: input, shape index: {}]
  %s4 = inlined_call_operand.vmem [shape: f32[1,8], index: 4, kind: input, shape index: {}]
  %s5 = inlined_call_operand.hbm [shape: f32[2,8], index: 5, kind: output, shape index: {}]
  %s6 = sld [smem:[#allocation0]]
  $region30: #{encoder_forward.5} parent=0
    _
  %s8 = ssub.s32 1, %s6
  %s9 = scalar_select 0, %s8, %s6
  $region1: #{encoder_forward.5} parent=0
    #allocation2 [shape = 'u8[1024]{0}', space=vmem, size = 0x400, scoped, tag = 'output window, operand 0, single buffered']
    #allocation3 [shape = 's32[1]{0}', space=sflag, size = 0x4, scoped, tag = 'scoped memory for encoder_forward.5']
    %10 = vsyncpa [#allocation3], 0
    // Predicated region
    $region2: #{encoder_forward.5} parent=1 // pred_check
      _
    $region3: #{encoder_forward.5} parent=1 // pred_check_branch
      %12 = sbr.rel (0) target = $region5
    $region4: #{encoder_forward.5} parent=1 // pred_region
      _
    $region5: #{encoder_forward.5} parent=1 // pred_fallthru
      _
    // Predicated region
    $region6: #{encoder_forward.5} parent=1 // pred_check
      _
    $region7: #{encoder_forward.5} parent=1 // pred_check_branch
      %14 = sbr.rel (0) target = $region9
    $region8: #{encoder_forward.5} parent=1 // pred_region
      _
    $region9: #{encoder_forward.5} parent=1 // pred_fallthru
      _
    // Predicated region
    $region10: #{encoder_forward.5} parent=1 // pred_check
      _
    $region11: #{encoder_forward.5} parent=1 // pred_check_branch
      %16 = sbr.rel (0) target = $region13
    $region12: #{encoder_forward.5} parent=1 // pred_region
      _
    $region13: #{encoder_forward.5} parent=1 // pred_fallthru
      _
    // Predicated region
    $region14: #{encoder_forward.5} parent=1 // pred_check
      _
    $region15: #{encoder_forward.5} parent=1 // pred_check_branch
      %18 = sbr.rel (0) target = $region17
    $region16: #{encoder_forward.5} parent=1 // pred_region
      _
    $region17: #{encoder_forward.5} parent=1 // pred_fallthru
      _
    // Predicated region
    $region18: #{encoder_forward.5} parent=1 // pred_check
      _
    $region19: #{encoder_forward.5} parent=1 // pred_check_branch
      %20 = sbr.rel (0) target = $region21
    $region20: #{encoder_forward.5} parent=1 // pred_region
      _
    $region21: #{encoder_forward.5} parent=1 // pred_fallthru
      _
    %v22 = vld [vmem:[%s0] sm:$0xff]
    %v23 = vld [vmem:[%s0 + $0x8] sm:$0xff]
    %v26 = vcombine.high %v22, %v22
    %v28 = vunpack.c.l.s4 1983009808
    %v29 = vunpack.c.0.s8 %v28
    %v30 = vlaneseq
    %v31 = vshrl.u32 %v30, 7
    %v32 = vsub.s32 %v29, %v31
    %v33 = vrot.slane %v22, %v32
    %v35 = vunpack.c.l.s4 1983009808
    %v36 = vunpack.c.0.s8 %v35
    %v37 = vlaneseq
    %v38 = vshrl.u32 %v37, 7
    %v39 = vsub.s32 %v36, %v38
    %v40 = vrot.slane %v26, %v39
    %v41 = vcombine.high %v33, %v33
    %v42 = vcombine.high %v40, %v40
    %v43 = vcombine.high %v23, %v23
    %v45 = vunpack.c.l.s4 1983009808
    %v46 = vunpack.c.0.s8 %v45
    %v47 = vlaneseq
    %v48 = vshrl.u32 %v47, 7
    %v49 = vsub.s32 %v46, %v48
    %v50 = vrot.slane %v23, %v49
    %v52 = vunpack.c.l.s4 1983009808
    %v53 = vunpack.c.0.s8 %v52
    %v54 = vlaneseq
    %v55 = vshrl.u32 %v54, 7
    %v56 = vsub.s32 %v53, %v55
    %v57 = vrot.slane %v43, %v56
    %v58 = vcombine.high %v50, %v50
    %v59 = vcombine.high %v57, %v57
    %v68 = vpack.c.bf16 %v33, %v33
    %v69 = vpack.c.bf16 %v41, %v41
    %v70 = vpack.c.bf16 %v40, %v40
    %v71 = vpack.c.bf16 %v42, %v42
    %v72 = vpack.c.bf16 %v50, %v50
    %v73 = vpack.c.bf16 %v58, %v58
    %v74 = vpack.c.bf16 %v57, %v57
    %v75 = vpack.c.bf16 %v59, %v59
    %v76 = vld [vmem:[%s1] sm:$0xf]
    %v77 = vld [vmem:[%s1 + $0x4] sm:$0xf]
    %v78 = vld [vmem:[%s1 + $0x8] sm:$0xf]
    %v79 = vld [vmem:[%s1 + $0xc] sm:$0xf]
    %v80 = vld [vmem:[%s1 + $0x10] sm:$0xf]
    %v81 = vld [vmem:[%s1 + $0x14] sm:$0xf]
    %v82 = vld [vmem:[%s1 + $0x18] sm:$0xf]
    %v83 = vld [vmem:[%s1 + $0x1c] sm:$0xf]
    %v84 = vld [vmem:[%s1 + $0x20] sm:$0xf]
    %v85 = vld [vmem:[%s1 + $0x24] sm:$0xf]
    %v86 = vld [vmem:[%s1 + $0x28] sm:$0xf]
    %v87 = vld [vmem:[%s1 + $0x2c] sm:$0xf]
    %v88 = vld [vmem:[%s1 + $0x30] sm:$0xf]
    %v89 = vld [vmem:[%s1 + $0x34] sm:$0xf]
    %v90 = vld [vmem:[%s1 + $0x38] sm:$0xf]
    %v91 = vld [vmem:[%s1 + $0x3c] sm:$0xf]
    %v92 = vld [vmem:[%s1 + $0x40] sm:$0xf]
    %v93 = vld [vmem:[%s1 + $0x44] sm:$0xf]
    %v94 = vld [vmem:[%s1 + $0x48] sm:$0xf]
    %v95 = vld [vmem:[%s1 + $0x4c] sm:$0xf]
    %v96 = vld [vmem:[%s1 + $0x50] sm:$0xf]
    %v97 = vld [vmem:[%s1 + $0x54] sm:$0xf]
    %v98 = vld [vmem:[%s1 + $0x58] sm:$0xf]
    %v99 = vld [vmem:[%s1 + $0x5c] sm:$0xf]
    %v100 = vld [vmem:[%s1 + $0x60] sm:$0xf]
    %v101 = vld [vmem:[%s1 + $0x64] sm:$0xf]
    %v102 = vld [vmem:[%s1 + $0x68] sm:$0xf]
    %v103 = vld [vmem:[%s1 + $0x6c] sm:$0xf]
    %v104 = vld [vmem:[%s1 + $0x70] sm:$0xf]
    %v105 = vld [vmem:[%s1 + $0x74] sm:$0xf]
    %v106 = vld [vmem:[%s1 + $0x78] sm:$0xf]
    %v107 = vld [vmem:[%s1 + $0x7c] sm:$0xf]
    %v108 = vld [vmem:[%s1 + $0x80] sm:$0xf]
    %v109 = vld [vmem:[%s1 + $0x84] sm:$0xf]
    %v110 = vld [vmem:[%s1 + $0x88] sm:$0xf]
    %v111 = vld [vmem:[%s1 + $0x8c] sm:$0xf]
    %v112 = vld [vmem:[%s1 + $0x90] sm:$0xf]
    %v113 = vld [vmem:[%s1 + $0x94] sm:$0xf]
    %v114 = vld [vmem:[%s1 + $0x98] sm:$0xf]
    %v115 = vld [vmem:[%s1 + $0x9c] sm:$0xf]
    %v116 = vld [vmem:[%s1 + $0xa0] sm:$0xf]
    %v117 = vld [vmem:[%s1 + $0xa4] sm:$0xf]
    %v118 = vld [vmem:[%s1 + $0xa8] sm:$0xf]
    %v119 = vld [vmem:[%s1 + $0xac] sm:$0xf]
    %v120 = vld [vmem:[%s1 + $0xb0] sm:$0xf]
    %v121 = vld [vmem:[%s1 + $0xb4] sm:$0xf]
    %v122 = vld [vmem:[%s1 + $0xb8] sm:$0xf]
    %v123 = vld [vmem:[%s1 + $0xbc] sm:$0xf]
    %v124 = vld [vmem:[%s1 + $0xc0] sm:$0xf]
    %v125 = vld [vmem:[%s1 + $0xc4] sm:$0xf]
    %v126 = vld [vmem:[%s1 + $0xc8] sm:$0xf]
    %v127 = vld [vmem:[%s1 + $0xcc] sm:$0xf]
    %v128 = vld [vmem:[%s1 + $0xd0] sm:$0xf]
    %v129 = vld [vmem:[%s1 + $0xd4] sm:$0xf]
    %v130 = vld [vmem:[%s1 + $0xd8] sm:$0xf]
    %v131 = vld [vmem:[%s1 + $0xdc] sm:$0xf]
    %v132 = vld [vmem:[%s1 + $0xe0] sm:$0xf]
    %v133 = vld [vmem:[%s1 + $0xe4] sm:$0xf]
    %v134 = vld [vmem:[%s1 + $0xe8] sm:$0xf]
    %v135 = vld [vmem:[%s1 + $0xec] sm:$0xf]
    %v136 = vld [vmem:[%s1 + $0xf0] sm:$0xf]
    %v137 = vld [vmem:[%s1 + $0xf4] sm:$0xf]
    %v138 = vld [vmem:[%s1 + $0xf8] sm:$0xf]
    %v139 = vld [vmem:[%s1 + $0xfc] sm:$0xf]
    %v140 = vld [vmem:[%s1 + $0x100] sm:$0xf]
    %v141 = vld [vmem:[%s1 + $0x104] sm:$0xf]
    %v142 = vld [vmem:[%s1 + $0x108] sm:$0xf]
    %v143 = vld [vmem:[%s1 + $0x10c] sm:$0xf]
    %v144 = vld [vmem:[%s1 + $0x110] sm:$0xf]
    %v145 = vld [vmem:[%s1 + $0x114] sm:$0xf]
    %v146 = vld [vmem:[%s1 + $0x118] sm:$0xf]
    %v147 = vld [vmem:[%s1 + $0x11c] sm:$0xf]
    %v148 = vld [vmem:[%s1 + $0x120] sm:$0xf]
    %v149 = vld [vmem:[%s1 + $0x124] sm:$0xf]
    %v150 = vld [vmem:[%s1 + $0x128] sm:$0xf]
    %v151 = vld [vmem:[%s1 + $0x12c] sm:$0xf]
    %v152 = vld [vmem:[%s1 + $0x130] sm:$0xf]
    %v153 = vld [vmem:[%s1 + $0x134] sm:$0xf]
    %v154 = vld [vmem:[%s1 + $0x138] sm:$0xf]
    %v155 = vld [vmem:[%s1 + $0x13c] sm:$0xf]
    %v156 = vld [vmem:[%s1 + $0x140] sm:$0xf]
    %v157 = vld [vmem:[%s1 + $0x144] sm:$0xf]
    %v158 = vld [vmem:[%s1 + $0x148] sm:$0xf]
    %v159 = vld [vmem:[%s1 + $0x14c] sm:$0xf]
    %v160 = vld [vmem:[%s1 + $0x150] sm:$0xf]
    %v161 = vld [vmem:[%s1 + $0x154] sm:$0xf]
    %v162 = vld [vmem:[%s1 + $0x158] sm:$0xf]
    %v163 = vld [vmem:[%s1 + $0x15c] sm:$0xf]
    %v164 = vld [vmem:[%s1 + $0x160] sm:$0xf]
    %v165 = vld [vmem:[%s1 + $0x164] sm:$0xf]
    %v166 = vld [vmem:[%s1 + $0x168] sm:$0xf]
    %v167 = vld [vmem:[%s1 + $0x16c] sm:$0xf]
    %v168 = vld [vmem:[%s1 + $0x170] sm:$0xf]
    %v169 = vld [vmem:[%s1 + $0x174] sm:$0xf]
    %v170 = vld [vmem:[%s1 + $0x178] sm:$0xf]
    %v171 = vld [vmem:[%s1 + $0x17c] sm:$0xf]
    %v172 = vld [vmem:[%s1 + $0x180] sm:$0xf]
    %v173 = vld [vmem:[%s1 + $0x184] sm:$0xf]
    %v174 = vld [vmem:[%s1 + $0x188] sm:$0xf]
    %v175 = vld [vmem:[%s1 + $0x18c] sm:$0xf]
    %v176 = vld [vmem:[%s1 + $0x190] sm:$0xf]
    %v177 = vld [vmem:[%s1 + $0x194] sm:$0xf]
    %v178 = vld [vmem:[%s1 + $0x198] sm:$0xf]
    %v179 = vld [vmem:[%s1 + $0x19c] sm:$0xf]
    %v180 = vld [vmem:[%s1 + $0x1a0] sm:$0xf]
    %v181 = vld [vmem:[%s1 + $0x1a4] sm:$0xf]
    %v182 = vld [vmem:[%s1 + $0x1a8] sm:$0xf]
    %v183 = vld [vmem:[%s1 + $0x1ac] sm:$0xf]
    %v184 = vld [vmem:[%s1 + $0x1b0] sm:$0xf]
    %v185 = vld [vmem:[%s1 + $0x1b4] sm:$0xf]
    %v186 = vld [vmem:[%s1 + $0x1b8] sm:$0xf]
    %v187 = vld [vmem:[%s1 + $0x1bc] sm:$0xf]
    %v188 = vld [vmem:[%s1 + $0x1c0] sm:$0xf]
    %v189 = vld [vmem:[%s1 + $0x1c4] sm:$0xf]
    %v190 = vld [vmem:[%s1 + $0x1c8] sm:$0xf]
    %v191 = vld [vmem:[%s1 + $0x1cc] sm:$0xf]
    %v192 = vld [vmem:[%s1 + $0x1d0] sm:$0xf]
    %v193 = vld [vmem:[%s1 + $0x1d4] sm:$0xf]
    %v194 = vld [vmem:[%s1 + $0x1d8] sm:$0xf]
    %v195 = vld [vmem:[%s1 + $0x1dc] sm:$0xf]
    %v196 = vld [vmem:[%s1 + $0x1e0] sm:$0xf]
    %v197 = vld [vmem:[%s1 + $0x1e4] sm:$0xf]
    %v198 = vld [vmem:[%s1 + $0x1e8] sm:$0xf]
    %v199 = vld [vmem:[%s1 + $0x1ec] sm:$0xf]
    %v200 = vld [vmem:[%s1 + $0x1f0] sm:$0xf]
    %v201 = vld [vmem:[%s1 + $0x1f4] sm:$0xf]
    %v202 = vld [vmem:[%s1 + $0x1f8] sm:$0xf]
    %v203 = vld [vmem:[%s1 + $0x1fc] sm:$0xf]
    %v204 = vld [vmem:[%s2] sm:$0x1]
    %v206 = vlaneseq
    %v207 = vshrl.u32 %v206, 7
    %v208 = vsub.s32 0, %v207
    %v209 = vrot.slane %v204, %v208
    %v339 = vunpack.c.l.b16 %v76
    %v340 = vunpack.c.l.b16 %v77
    %v341 = vunpack.c.l.b16 %v78
    %v342 = vunpack.c.l.b16 %v79
    %v343 = vunpack.c.l.b16 %v80
    %v344 = vunpack.c.l.b16 %v81
    %v345 = vunpack.c.l.b16 %v82
    %v346 = vunpack.c.l.b16 %v83
    %v347 = vunpack.c.l.b16 %v84
    %v348 = vunpack.c.l.b16 %v85
    %v349 = vunpack.c.l.b16 %v86
    %v350 = vunpack.c.l.b16 %v87
    %v351 = vunpack.c.l.b16 %v88
    %v352 = vunpack.c.l.b16 %v89
    %v353 = vunpack.c.l.b16 %v90
    %v354 = vunpack.c.l.b16 %v91
    %v355 = vunpack.c.l.b16 %v92
    %v356 = vunpack.c.l.b16 %v93
    %v357 = vunpack.c.l.b16 %v94
    %v358 = vunpack.c.l.b16 %v95
    %v359 = vunpack.c.l.b16 %v96
    %v360 = vunpack.c.l.b16 %v97
    %v361 = vunpack.c.l.b16 %v98
    %v362 = vunpack.c.l.b16 %v99
    %v363 = vunpack.c.l.b16 %v100
    %v364 = vunpack.c.l.b16 %v101
    %v365 = vunpack.c.l.b16 %v102
    %v366 = vunpack.c.l.b16 %v103
    %v367 = vunpack.c.l.b16 %v104
    %v368 = vunpack.c.l.b16 %v105
    %v369 = vunpack.c.l.b16 %v106
    %v370 = vunpack.c.l.b16 %v107
    %v371 = vunpack.c.l.b16 %v108
    %v372 = vunpack.c.l.b16 %v109
    %v373 = vunpack.c.l.b16 %v110
    %v374 = vunpack.c.l.b16 %v111
    %v375 = vunpack.c.l.b16 %v112
    %v376 = vunpack.c.l.b16 %v113
    %v377 = vunpack.c.l.b16 %v114
    %v378 = vunpack.c.l.b16 %v115
    %v379 = vunpack.c.l.b16 %v116
    %v380 = vunpack.c.l.b16 %v117
    %v381 = vunpack.c.l.b16 %v118
    %v382 = vunpack.c.l.b16 %v119
    %v383 = vunpack.c.l.b16 %v120
    %v384 = vunpack.c.l.b16 %v121
    %v385 = vunpack.c.l.b16 %v122
    %v386 = vunpack.c.l.b16 %v123
    %v387 = vunpack.c.l.b16 %v124
    %v388 = vunpack.c.l.b16 %v125
    %v389 = vunpack.c.l.b16 %v126
    %v390 = vunpack.c.l.b16 %v127
    %v391 = vunpack.c.l.b16 %v128
    %v392 = vunpack.c.l.b16 %v129
    %v393 = vunpack.c.l.b16 %v130
    %v394 = vunpack.c.l.b16 %v131
    %v395 = vunpack.c.l.b16 %v132
    %v396 = vunpack.c.l.b16 %v133
    %v397 = vunpack.c.l.b16 %v134
    %v398 = vunpack.c.l.b16 %v135
    %v399 = vunpack.c.l.b16 %v136
    %v400 = vunpack.c.l.b16 %v137
    %v401 = vunpack.c.l.b16 %v138
    %v402 = vunpack.c.l.b16 %v139
    %v403 = vunpack.c.l.b16 %v140
    %v404 = vunpack.c.l.b16 %v141
    %v405 = vunpack.c.l.b16 %v142
    %v406 = vunpack.c.l.b16 %v143
    %v407 = vunpack.c.l.b16 %v144
    %v408 = vunpack.c.l.b16 %v145
    %v409 = vunpack.c.l.b16 %v146
    %v410 = vunpack.c.l.b16 %v147
    %v411 = vunpack.c.l.b16 %v148
    %v412 = vunpack.c.l.b16 %v149
    %v413 = vunpack.c.l.b16 %v150
    %v414 = vunpack.c.l.b16 %v151
    %v415 = vunpack.c.l.b16 %v152
    %v416 = vunpack.c.l.b16 %v153
    %v417 = vunpack.c.l.b16 %v154
    %v418 = vunpack.c.l.b16 %v155
    %v419 = vunpack.c.l.b16 %v156
    %v420 = vunpack.c.l.b16 %v157
    %v421 = vunpack.c.l.b16 %v158
    %v422 = vunpack.c.l.b16 %v159
    %v423 = vunpack.c.l.b16 %v160
    %v424 = vunpack.c.l.b16 %v161
    %v425 = vunpack.c.l.b16 %v162
    %v426 = vunpack.c.l.b16 %v163
    %v427 = vunpack.c.l.b16 %v164
    %v428 = vunpack.c.l.b16 %v165
    %v429 = vunpack.c.l.b16 %v166
    %v430 = vunpack.c.l.b16 %v167
    %v431 = vunpack.c.l.b16 %v168
    %v432 = vunpack.c.l.b16 %v169
    %v433 = vunpack.c.l.b16 %v170
    %v434 = vunpack.c.l.b16 %v171
    %v435 = vunpack.c.l.b16 %v172
    %v436 = vunpack.c.l.b16 %v173
    %v437 = vunpack.c.l.b16 %v174
    %v438 = vunpack.c.l.b16 %v175
    %v439 = vunpack.c.l.b16 %v176
    %v440 = vunpack.c.l.b16 %v177
    %v441 = vunpack.c.l.b16 %v178
    %v442 = vunpack.c.l.b16 %v179
    %v443 = vunpack.c.l.b16 %v180
    %v444 = vunpack.c.l.b16 %v181
    %v445 = vunpack.c.l.b16 %v182
    %v446 = vunpack.c.l.b16 %v183
    %v447 = vunpack.c.l.b16 %v184
    %v448 = vunpack.c.l.b16 %v185
    %v449 = vunpack.c.l.b16 %v186
    %v450 = vunpack.c.l.b16 %v187
    %v451 = vunpack.c.l.b16 %v188
    %v452 = vunpack.c.l.b16 %v189
    %v453 = vunpack.c.l.b16 %v190
    %v454 = vunpack.c.l.b16 %v191
    %v455 = vunpack.c.l.b16 %v192
    %v456 = vunpack.c.l.b16 %v193
    %v457 = vunpack.c.l.b16 %v194
    %v458 = vunpack.c.l.b16 %v195
    %v459 = vunpack.c.l.b16 %v196
    %v460 = vunpack.c.l.b16 %v197
    %v461 = vunpack.c.l.b16 %v198
    %v462 = vunpack.c.l.b16 %v199
    %v463 = vunpack.c.l.b16 %v200
    %v464 = vunpack.c.l.b16 %v201
    %v465 = vunpack.c.l.b16 %v202
    %v466 = vunpack.c.l.b16 %v203
    %v467 = vpack.c.b16 %v340, %v339
    %v468 = vpack.c.b16 %v342, %v341
    %v469 = vpack.c.b16 %v344, %v343
    %v470 = vpack.c.b16 %v346, %v345
    %v471 = vpack.c.b16 %v348, %v347
    %v472 = vpack.c.b16 %v350, %v349
    %v473 = vpack.c.b16 %v352, %v351
    %v474 = vpack.c.b16 %v354, %v353
    %v475 = vpack.c.b16 %v356, %v355
    %v476 = vpack.c.b16 %v358, %v357
    %v477 = vpack.c.b16 %v360, %v359
    %v478 = vpack.c.b16 %v362, %v361
    %v479 = vpack.c.b16 %v364, %v363
    %v480 = vpack.c.b16 %v366, %v365
    %v481 = vpack.c.b16 %v368, %v367
    %v482 = vpack.c.b16 %v370, %v369
    %v483 = vpack.c.b16 %v372, %v371
    %v484 = vpack.c.b16 %v374, %v373
    %v485 = vpack.c.b16 %v376, %v375
    %v486 = vpack.c.b16 %v378, %v377
    %v487 = vpack.c.b16 %v380, %v379
    %v488 = vpack.c.b16 %v382, %v381
    %v489 = vpack.c.b16 %v384, %v383
    %v490 = vpack.c.b16 %v386, %v385
    %v491 = vpack.c.b16 %v388, %v387
    %v492 = vpack.c.b16 %v390, %v389
    %v493 = vpack.c.b16 %v392, %v391
    %v494 = vpack.c.b16 %v394, %v393
    %v495 = vpack.c.b16 %v396, %v395
    %v496 = vpack.c.b16 %v398, %v397
    %v497 = vpack.c.b16 %v400, %v399
    %v498 = vpack.c.b16 %v402, %v401
    %v499 = vpack.c.b16 %v404, %v403
    %v500 = vpack.c.b16 %v406, %v405
    %v501 = vpack.c.b16 %v408, %v407
    %v502 = vpack.c.b16 %v410, %v409
    %v503 = vpack.c.b16 %v412, %v411
    %v504 = vpack.c.b16 %v414, %v413
    %v505 = vpack.c.b16 %v416, %v415
    %v506 = vpack.c.b16 %v418, %v417
    %v507 = vpack.c.b16 %v420, %v419
    %v508 = vpack.c.b16 %v422, %v421
    %v509 = vpack.c.b16 %v424, %v423
    %v510 = vpack.c.b16 %v426, %v425
    %v511 = vpack.c.b16 %v428, %v427
    %v512 = vpack.c.b16 %v430, %v429
    %v513 = vpack.c.b16 %v432, %v431
    %v514 = vpack.c.b16 %v434, %v433
    %v515 = vpack.c.b16 %v436, %v435
    %v516 = vpack.c.b16 %v438, %v437
    %v517 = vpack.c.b16 %v440, %v439
    %v518 = vpack.c.b16 %v442, %v441
    %v519 = vpack.c.b16 %v444, %v443
    %v520 = vpack.c.b16 %v446, %v445
    %v521 = vpack.c.b16 %v448, %v447
    %v522 = vpack.c.b16 %v450, %v449
    %v523 = vpack.c.b16 %v452, %v451
    %v524 = vpack.c.b16 %v454, %v453
    %v525 = vpack.c.b16 %v456, %v455
    %v526 = vpack.c.b16 %v458, %v457
    %v527 = vpack.c.b16 %v460, %v459
    %v528 = vpack.c.b16 %v462, %v461
    %v529 = vpack.c.b16 %v464, %v463
    %v530 = vpack.c.b16 %v466, %v465
    %595 = vmatprep.subr.bf16.mxu0 0
    %596 = vmatpush1.bf16.msra.mxu0 %v467
    %597 = vmatprep.subr.bf16.mxu0 0
    %598 = vmatpush1.bf16.msra.mxu0 %v468
    %599 = vmatprep.subr.bf16.mxu0 0
    %600 = vmatpush1.bf16.msra.mxu0 %v469
    %601 = vmatprep.subr.bf16.mxu0 0
    %602 = vmatpush1.bf16.msra.mxu0 %v470
    %603 = vmatprep.subr.bf16.mxu0 0
    %604 = vmatpush1.bf16.msra.mxu0 %v471
    %605 = vmatprep.subr.bf16.mxu0 0
    %606 = vmatpush1.bf16.msra.mxu0 %v472
    %607 = vmatprep.subr.bf16.mxu0 0
    %608 = vmatpush1.bf16.msra.mxu0 %v473
    %609 = vmatprep.subr.bf16.mxu0 0
    %610 = vmatpush1.bf16.msra.mxu0 %v474
    %611 = vmatprep.subr.bf16.mxu0 0
    %612 = vmatpush1.bf16.msra.mxu0 %v475
    %613 = vmatprep.subr.bf16.mxu0 0
    %614 = vmatpush1.bf16.msra.mxu0 %v476
    %615 = vmatprep.subr.bf16.mxu0 0
    %616 = vmatpush1.bf16.msra.mxu0 %v477
    %617 = vmatprep.subr.bf16.mxu0 0
    %618 = vmatpush1.bf16.msra.mxu0 %v478
    %619 = vmatprep.subr.bf16.mxu0 0
    %620 = vmatpush1.bf16.msra.mxu0 %v479
    %621 = vmatprep.subr.bf16.mxu0 0
    %622 = vmatpush1.bf16.msra.mxu0 %v480
    %623 = vmatprep.subr.bf16.mxu0 0
    %624 = vmatpush1.bf16.msra.mxu0 %v481
    %625 = vmatprep.subr.bf16.mxu0 0
    %626 = vmatpush1.bf16.msra.mxu0 %v482
    %627 = vmatprep.mubr.bf16.mxu0 %v69
    %628 = vmatmul.mubr.bf16.gmra.mrb[0].mxu0 %v68
    %v629 = vpop.f32.mrb[0].mxu0
    %v630 = vadd.f32 %v209, %v629
    %v631 = vpop.f32.mrb[0].mxu0
    %v632 = vpop.f32.mrb[0].mxu0
    %v633 = vpop.f32.mrb[0].mxu0
    %634 = vdwg.mxu0
    %635 = vmatprep.subr.bf16.mxu0 0
    %636 = vmatpush1.bf16.msra.mxu0 %v483
    %637 = vmatprep.subr.bf16.mxu0 0
    %638 = vmatpush1.bf16.msra.mxu0 %v484
    %639 = vmatprep.subr.bf16.mxu0 0
    %640 = vmatpush1.bf16.msra.mxu0 %v485
    %641 = vmatprep.subr.bf16.mxu0 0
    %642 = vmatpush1.bf16.msra.mxu0 %v486
    %643 = vmatprep.subr.bf16.mxu0 0
    %644 = vmatpush1.bf16.msra.mxu0 %v487
    %645 = vmatprep.subr.bf16.mxu0 0
    %646 = vmatpush1.bf16.msra.mxu0 %v488
    %647 = vmatprep.subr.bf16.mxu0 0
    %648 = vmatpush1.bf16.msra.mxu0 %v489
    %649 = vmatprep.subr.bf16.mxu0 0
    %650 = vmatpush1.bf16.msra.mxu0 %v490
    %651 = vmatprep.subr.bf16.mxu0 0
    %652 = vmatpush1.bf16.msra.mxu0 %v491
    %653 = vmatprep.subr.bf16.mxu0 0
    %654 = vmatpush1.bf16.msra.mxu0 %v492
    %655 = vmatprep.subr.bf16.mxu0 0
    %656 = vmatpush1.bf16.msra.mxu0 %v493
    %657 = vmatprep.subr.bf16.mxu0 0
    %658 = vmatpush1.bf16.msra.mxu0 %v494
    %659 = vmatprep.subr.bf16.mxu0 0
    %660 = vmatpush1.bf16.msra.mxu0 %v495
    %661 = vmatprep.subr.bf16.mxu0 0
    %662 = vmatpush1.bf16.msra.mxu0 %v496
    %663 = vmatprep.subr.bf16.mxu0 0
    %664 = vmatpush1.bf16.msra.mxu0 %v497
    %665 = vmatprep.subr.bf16.mxu0 0
    %666 = vmatpush1.bf16.msra.mxu0 %v498
    %667 = vmatprep.mubr.bf16.mxu0 %v71
    %668 = vmatmul.mubr.bf16.gmra.mrb[0].mxu0 %v70
    %v669 = vpop.f32.mrb[0].mxu0
    %v670 = vadd.f32 %v630, %v669
    %v671 = vpop.f32.mrb[0].mxu0
    %v672 = vpop.f32.mrb[0].mxu0
    %v673 = vpop.f32.mrb[0].mxu0
    %674 = vdwg.mxu0
    %675 = vmatprep.subr.bf16.mxu0 0
    %676 = vmatpush1.bf16.msra.mxu0 %v499
    %677 = vmatprep.subr.bf16.mxu0 0
    %678 = vmatpush1.bf16.msra.mxu0 %v500
    %679 = vmatprep.subr.bf16.mxu0 0
    %680 = vmatpush1.bf16.msra.mxu0 %v501
    %681 = vmatprep.subr.bf16.mxu0 0
    %682 = vmatpush1.bf16.msra.mxu0 %v502
    %683 = vmatprep.subr.bf16.mxu0 0
    %684 = vmatpush1.bf16.msra.mxu0 %v503
    %685 = vmatprep.subr.bf16.mxu0 0
    %686 = vmatpush1.bf16.msra.mxu0 %v504
    %687 = vmatprep.subr.bf16.mxu0 0
    %688 = vmatpush1.bf16.msra.mxu0 %v505
    %689 = vmatprep.subr.bf16.mxu0 0
    %690 = vmatpush1.bf16.msra.mxu0 %v506
    %691 = vmatprep.subr.bf16.mxu0 0
    %692 = vmatpush1.bf16.msra.mxu0 %v507
    %693 = vmatprep.subr.bf16.mxu0 0
    %694 = vmatpush1.bf16.msra.mxu0 %v508
    %695 = vmatprep.subr.bf16.mxu0 0
    %696 = vmatpush1.bf16.msra.mxu0 %v509
    %697 = vmatprep.subr.bf16.mxu0 0
    %698 = vmatpush1.bf16.msra.mxu0 %v510
    %699 = vmatprep.subr.bf16.mxu0 0
    %700 = vmatpush1.bf16.msra.mxu0 %v511
    %701 = vmatprep.subr.bf16.mxu0 0
    %702 = vmatpush1.bf16.msra.mxu0 %v512
    %703 = vmatprep.subr.bf16.mxu0 0
    %704 = vmatpush1.bf16.msra.mxu0 %v513
    %705 = vmatprep.subr.bf16.mxu0 0
    %706 = vmatpush1.bf16.msra.mxu0 %v514
    %707 = vmatprep.mubr.bf16.mxu0 %v73
    %708 = vmatmul.mubr.bf16.gmra.mrb[0].mxu0 %v72
    %v709 = vpop.f32.mrb[0].mxu0
    %v710 = vadd.f32 %v670, %v709
    %v711 = vpop.f32.mrb[0].mxu0
    %v712 = vpop.f32.mrb[0].mxu0
    %v713 = vpop.f32.mrb[0].mxu0
    %714 = vdwg.mxu0
    %715 = vmatprep.subr.bf16.mxu0 0
    %716 = vmatpush1.bf16.msra.mxu0 %v515
    %717 = vmatprep.subr.bf16.mxu0 0
    %718 = vmatpush1.bf16.msra.mxu0 %v516
    %719 = vmatprep.subr.bf16.mxu0 0
    %720 = vmatpush1.bf16.msra.mxu0 %v517
    %721 = vmatprep.subr.bf16.mxu0 0
    %722 = vmatpush1.bf16.msra.mxu0 %v518
    %723 = vmatprep.subr.bf16.mxu0 0
    %724 = vmatpush1.bf16.msra.mxu0 %v519
    %725 = vmatprep.subr.bf16.mxu0 0
    %726 = vmatpush1.bf16.msra.mxu0 %v520
    %727 = vmatprep.subr.bf16.mxu0 0
    %728 = vmatpush1.bf16.msra.mxu0 %v521
    %729 = vmatprep.subr.bf16.mxu0 0
    %730 = vmatpush1.bf16.msra.mxu0 %v522
    %731 = vmatprep.subr.bf16.mxu0 0
    %732 = vmatpush1.bf16.msra.mxu0 %v523
    %733 = vmatprep.subr.bf16.mxu0 0
    %734 = vmatpush1.bf16.msra.mxu0 %v524
    %735 = vmatprep.subr.bf16.mxu0 0
    %736 = vmatpush1.bf16.msra.mxu0 %v525
    %737 = vmatprep.subr.bf16.mxu0 0
    %738 = vmatpush1.bf16.msra.mxu0 %v526
    %739 = vmatprep.subr.bf16.mxu0 0
    %740 = vmatpush1.bf16.msra.mxu0 %v527
    %741 = vmatprep.subr.bf16.mxu0 0
    %742 = vmatpush1.bf16.msra.mxu0 %v528
    %743 = vmatprep.subr.bf16.mxu0 0
    %744 = vmatpush1.bf16.msra.mxu0 %v529
    %745 = vmatprep.subr.bf16.mxu0 0
    %746 = vmatpush1.bf16.msra.mxu0 %v530
    %747 = vmatprep.mubr.bf16.mxu0 %v75
    %748 = vmatmul.mubr.bf16.gmra.mrb[0].mxu0 %v74
    %v749 = vpop.f32.mrb[0].mxu0
    %v750 = vadd.f32 %v710, %v749
    %v751 = vpop.f32.mrb[0].mxu0
    %v752 = vpop.f32.mrb[0].mxu0
    %v753 = vpop.f32.mrb[0].mxu0
    %754 = vdwg.mxu0
    %v755 = vmul.f32 %v750, 0.01
    %v756 = vmax.f32 %v750, %v755
    %v757 = vpack.c.bf16 %v756, %v756
    %v758 = vld [vmem:[%s3] sm:$0xf]
    %v759 = vld [vmem:[%s3 + $0x4] sm:$0xf]
    %v760 = vld [vmem:[%s3 + $0x8] sm:$0xf]
    %v761 = vld [vmem:[%s3 + $0xc] sm:$0xf]
    %v762 = vld [vmem:[%s3 + $0x10] sm:$0xf]
    %v763 = vld [vmem:[%s3 + $0x14] sm:$0xf]
    %v764 = vld [vmem:[%s3 + $0x18] sm:$0xf]
    %v765 = vld [vmem:[%s3 + $0x1c] sm:$0xf]
    %v766 = vld [vmem:[%s4] sm:$0x1]
    %v768 = vlaneseq
    %v769 = vshrl.u32 %v768, 7
    %v770 = vsub.s32 0, %v769
    %v771 = vrot.slane %v766, %v770
    %v781 = vunpack.c.l.b16 %v758
    %v782 = vunpack.c.l.b16 %v759
    %v783 = vunpack.c.l.b16 %v760
    %v784 = vunpack.c.l.b16 %v761
    %v785 = vunpack.c.l.b16 %v762
    %v786 = vunpack.c.l.b16 %v763
    %v787 = vunpack.c.l.b16 %v764
    %v788 = vunpack.c.l.b16 %v765
    %v789 = vpack.c.b16 %v782, %v781
    %v790 = vpack.c.b16 %v784, %v783
    %v791 = vpack.c.b16 %v786, %v785
    %v792 = vpack.c.b16 %v788, %v787
    %vm797 = vcmask 523264
    %v799 = vsel %vm797, %v757, 0
    %801 = vmatprep.subr.bf16.mxu0 0
    %802 = vmatpush1.bf16.msra.mxu0 %v789
    %803 = vmatprep.subr.bf16.mxu0 0
    %804 = vmatpush1.bf16.msra.mxu0 %v790
    %805 = vmatprep.subr.bf16.mxu0 0
    %806 = vmatpush1.bf16.msra.mxu0 %v791
    %807 = vmatprep.subr.bf16.mxu0 0
    %808 = vmatpush1.bf16.msra.mxu0 %v792
    %809 = vmatprep.subr.bf16.mxu0 0
    %810 = vmatpush1.bf16.msra.mxu0 0
    %811 = vmatprep.subr.bf16.mxu0 0
    %812 = vmatpush1.bf16.msra.mxu0 0
    %813 = vmatprep.subr.bf16.mxu0 0
    %814 = vmatpush1.bf16.msra.mxu0 0
    %815 = vmatprep.subr.bf16.mxu0 0
    %816 = vmatpush1.bf16.msra.mxu0 0
    %817 = vmatprep.subr.bf16.mxu0 0
    %818 = vmatpush1.bf16.msra.mxu0 0
    %819 = vmatprep.subr.bf16.mxu0 0
    %820 = vmatpush1.bf16.msra.mxu0 0
    %821 = vmatprep.subr.bf16.mxu0 0
    %822 = vmatpush1.bf16.msra.mxu0 0
    %823 = vmatprep.subr.bf16.mxu0 0
    %824 = vmatpush1.bf16.msra.mxu0 0
    %825 = vmatprep.subr.bf16.mxu0 0
    %826 = vmatpush1.bf16.msra.mxu0 0
    %827 = vmatprep.subr.bf16.mxu0 0
    %828 = vmatpush1.bf16.msra.mxu0 0
    %829 = vmatprep.subr.bf16.mxu0 0
    %830 = vmatpush1.bf16.msra.mxu0 0
    %831 = vmatprep.subr.bf16.mxu0 0
    %832 = vmatpush1.bf16.msra.mxu0 0
    %833 = vmatprep.mubr.bf16.mxu0 0
    %834 = vmatmul.mubr.bf16.gmra.mrb[0].mxu0 %v799
    %v835 = vpop.f32.mrb[0].mxu0
    %v836 = vadd.f32 %v771, %v835
    %v837 = vpop.f32.mrb[0].mxu0
    %v838 = vpop.f32.mrb[0].mxu0
    %v839 = vpop.f32.mrb[0].mxu0
    %840 = vdwg.mxu0
    %v841 = vsub.f32 0.0, %v836
    %v842 = vmul.f32 %v841, 1.442695
    %v843 = vpow.pop %v842
    %v844 = vadd.f32 %v843, 1.0
    %v845 = vrcp.pop %v844
    %v846 = vmul.f32 1.0, %v845
    %vm847 = vcmask 58368
    %848 = vst.msk [vmem:[#allocation2] sm:$0x3] %vm847, %v846
    // Predicated region
    $region22: #{encoder_forward.5} parent=1 // pred_check
      _
    $region23: #{encoder_forward.5} parent=1 // pred_check_branch
      %850 = sbr.rel (0) target = $region25
    $region24: #{encoder_forward.5} parent=1 // pred_region
      %s852 = ssub.s32 32, 32
      %853 = vsyncadd [#allocation3], %s852
      %s855 = sshll.u32 [#allocation2], 4
      %s856 = int_to_ptr.vmem [resolvable:$true] %s855
      %858 = dma.vmem_to_hbm [thread:$0]  %s856, 32, %s5, [#allocation3]
    $region25: #{encoder_forward.5} parent=1 // pred_fallthru
      _
    // Predicated region
    $region26: #{encoder_forward.5} parent=1 // pred_check
      _
    $region27: #{encoder_forward.5} parent=1 // pred_check_branch
      %860 = sbr.rel (0) target = $region29
    $region28: #{encoder_forward.5} parent=1 // pred_region
      %861 = dma.done [#allocation3], 32
    $region29: #{encoder_forward.5} parent=1 // pred_fallthru
      _
    %862 = vsyncpa [#allocation3], 1

// kernel: encoder_forward.4
$region0: #{encoder_forward.4}
  #allocation0 [shape = 'u32[]', space=smem, size = 0x4, offset = 0x4, fixed_abs, tag = 'smem constant byte address 0x4 - core index']
  #allocation1 [shape = 'u32[144,128]{1,0:T(1,128)}', space=vmem, size = 0x12000, scoped, tag = 'internal scratch']
  #allocation2 [shape = 'f32[6,6,64]{2,1,0:T(8,128)}', space=vmem, size = 0x6000, scoped, tag = 'scratch operand']
  %s0 = inlined_call_operand.vmem [shape: f32[32,288], index: 0, kind: input, shape index: {}]
  %s1 = inlined_call_operand.vmem [shape: bf16[288,128], index: 1, kind: input, shape index: {}]
  %s2 = inlined_call_operand.vmem [shape: f32[1,128], index: 2, kind: input, shape index: {}]
  %s3 = inlined_call_operand.vmem [shape: bf16[9,64,64], index: 3, kind: input, shape index: {}]
  %s4 = inlined_call_operand.vmem [shape: f32[1,64], index: 4, kind: input, shape index: {}]
  %s5 = inlined_call_operand.vmem [shape: f32[32,64], index: 5, kind: output, shape index: {}]
  %s6 = sld [smem:[#allocation0]]
  $region53: #{encoder_forward.4} parent=0
    _
  %s8 = ssub.s32 1, %s6
  %s9 = scalar_select 0, %s8, %s6
  loop: start=0, step=1, limit=4
  $region2: #{encoder_forward.4} parent=0 // loop_pre_header
    _
  $region3: #{encoder_forward.4} parent=0 // loop_header
    %s11 = sphi 0, %s15
    %p12 = scmp.ge.s32.totalorder %s11, 4
    %s21 = sphi 0, %s23
    %s24 = sphi 0, %s21
    %s25 = sphi 0, %s24
    %s41 = sphi 0, %s25
    %s45 = sphi 0, %s45
    %s47 = sphi 0, %s45
    %s48 = sphi 0, %s47
    %s62 = sphi 0, %s48
    %s66 = sphi 0, %s66
    %s68 = sphi 0, %s66
    %s69 = sphi 0, %s68
    %s83 = sphi 0, %s69
    %s87 = sphi 0, %s87
    %s89 = sphi 0, %s87
    %s90 = sphi 0, %s89
    %s104 = sphi 0, %s90
    %s108 = sphi 0, %s108
    %s110 = sphi 0, %s108
    %s111 = sphi 0, %s110
    %s125 = sphi 0, %s111
    %s131 = sphi 0, %s133
    %s134 = sphi 0, %s131
    %s135 = sphi 0, %s134
    %s151 = sphi 0, %s135
  $region4: #{encoder_forward.4} parent=0 // loop_header_branch
    %14 = sbr.rel (%p12) target = $region8
  $region5: #{encoder_forward.4} parent=0 // loop_body
    %s16 = ssub.s32 %s11, 1
    %s17 = ssub.s32 %s11, 2
    %s18 = sadd.s32 %s11, 1
    %s19 = ssub.s32 %s11, %s18
    %p20 = scmp.eq.s32.totalorder %s19, 0
    %s22 = sadd.s32 %s21, 1
    %s23 = scalar_select %p20, %s21, %s22
    %p26 = pneg %p20
    %p27 = scmp.eq.s32.totalorder %s11, 1
    %p28 = por %p26, %p27
    %p29 = scmp.ne.s32.totalorder %s21, %s24
    %p30 = scmp.eq.s32.totalorder %s11, 0
    %p31 = por %p29, %p30
    %p32 = scmp.ne.s32.totalorder %s21, %s24
    %p33 = scmp.eq.s32.totalorder %s16, 1
    %p34 = por %p32, %p33
    %p35 = scmp.ne.s32.totalorder %s24, %s25
    %p36 = scmp.eq.s32.totalorder %s16, 0
    %p37 = por %p35, %p36
    %p38 = scmp.ne.s32.totalorder %s24, %s25
    %p39 = scmp.eq.s32.totalorder %s17, 1
    %p40 = por %p38, %p39
    %p42 = scmp.ne.s32.totalorder %s25, %s41
    %p43 = scmp.eq.s32.totalorder %s17, 0
    %p44 = por %p42, %p43
    %s46 = sadd.s32 %s45, 1
    %p49 = scmp.eq.s32.totalorder %s11, 1
    %p50 = scmp.ne.s32.totalorder %s45, %s47
    %p51 = scmp.eq.s32.totalorder %s11, 0
    %p52 = por %p50, %p51
    %p53 = scmp.ne.s32.totalorder %s45, %s47
    %p54 = scmp.eq.s32.totalorder %s16, 1
    %p55 = por %p53, %p54
    %p56 = scmp.ne.s32.totalorder %s47, %s48
    %p57 = scmp.eq.s32.totalorder %s16, 0
    %p58 = por %p56, %p57
    %p59 = scmp.ne.s32.totalorder %s47, %s48
    %p60 = scmp.eq.s32.totalorder %s17, 1
    %p61 = por %p59, %p60
    %p63 = scmp.ne.s32.totalorder %s48, %s62
    %p64 = scmp.eq.s32.totalorder %s17, 0
    %p65 = por %p63, %p64
    %s67 = sadd.s32 %s66, 1
    %p70 = scmp.eq.s32.totalorder %s11, 1
    %p71 = scmp.ne.s32.totalorder %s66, %s68
    %p72 = scmp.eq.s32.totalorder %s11, 0
    %p73 = por %p71, %p72
    %p74 = scmp.ne.s32.totalorder %s66, %s68
    %p75 = scmp.eq.s32.totalorder %s16, 1
    %p76 = por %p74, %p75
    %p77 = scmp.ne.s32.totalorder %s68, %s69
    %p78 = scmp.eq.s32.totalorder %s16, 0
    %p79 = por %p77, %p78
    %p80 = scmp.ne.s32.totalorder %s68, %s69
    %p81 = scmp.eq.s32.totalorder %s17, 1
    %p82 = por %p80, %p81
    %p84 = scmp.ne.s32.totalorder %s69, %s83
    %p85 = scmp.eq.s32.totalorder %s17, 0
    %p86 = por %p84, %p85
    %s88 = sadd.s32 %s87, 1
    %p91 = scmp.eq.s32.totalorder %s11, 1
    %p92 = scmp.ne.s32.totalorder %s87, %s89
    %p93 = scmp.eq.s32.totalorder %s11, 0
    %p94 = por %p92, %p93
    %p95 = scmp.ne.s32.totalorder %s87, %s89
    %p96 = scmp.eq.s32.totalorder %s16, 1
    %p97 = por %p95, %p96
    %p98 = scmp.ne.s32.totalorder %s89, %s90
    %p99 = scmp.eq.s32.totalorder %s16, 0
    %p100 = por %p98, %p99
    %p101 = scmp.ne.s32.totalorder %s89, %s90
    %p102 = scmp.eq.s32.totalorder %s17, 1
    %p103 = por %p101, %p102
    %p105 = scmp.ne.s32.totalorder %s90, %s104
    %p106 = scmp.eq.s32.totalorder %s17, 0
    %p107 = por %p105, %p106
    %s109 = sadd.s32 %s108, 1
    %p112 = scmp.eq.s32.totalorder %s11, 1
    %p113 = scmp.ne.s32.totalorder %s108, %s110
    %p114 = scmp.eq.s32.totalorder %s11, 0
    %p115 = por %p113, %p114
    %p116 = scmp.ne.s32.totalorder %s108, %s110
    %p117 = scmp.eq.s32.totalorder %s16, 1
    %p118 = por %p116, %p117
    %p119 = scmp.ne.s32.totalorder %s110, %s111
    %p120 = scmp.eq.s32.totalorder %s16, 0
    %p121 = por %p119, %p120
    %p122 = scmp.ne.s32.totalorder %s110, %s111
    %p123 = scmp.eq.s32.totalorder %s17, 1
    %p124 = por %p122, %p123
    %p126 = scmp.ne.s32.totalorder %s111, %s125
    %p127 = scmp.eq.s32.totalorder %s17, 0
    %p128 = por %p126, %p127
    %s129 = ssub.s32 %s11, %s18
    %p130 = scmp.eq.s32.totalorder %s129, 0
    %s132 = sadd.s32 %s131, 1
    %s133 = scalar_select %p130, %s131, %s132
    %p136 = pneg %p130
    %p137 = scmp.eq.s32.totalorder %s11, 1
    %p138 = por %p136, %p137
    %p139 = scmp.ne.s32.totalorder %s131, %s134
    %p140 = scmp.eq.s32.totalorder %s11, 0
    %p141 = por %p139, %p140
    %p142 = scmp.ne.s32.totalorder %s131, %s134
    %p143 = scmp.eq.s32.totalorder %s16, 1
    %p144 = por %p142, %p143
    %p145 = scmp.ne.s32.totalorder %s134, %s135
    %p146 = scmp.eq.s32.totalorder %s16, 0
    %p147 = por %p145, %p146
    %p148 = scmp.ne.s32.totalorder %s134, %s135
    %p149 = scmp.eq.s32.totalorder %s17, 1
    %p150 = por %p148, %p149
    %p152 = scmp.ne.s32.totalorder %s135, %s151
    %p153 = scmp.eq.s32.totalorder %s17, 0
    %p154 = por %p152, %p153
    %p155 = scmp.le.s32.totalorder 1, %s11
    %p156 = scmp.lt.s32.totalorder %s11, 3
    %p157 = pnand %p155, %p156
    %p158 = pneg %p157
    // Predicated region
    $region9: #{encoder_forward.4} parent=5 // pred_check
      _
    $region10: #{encoder_forward.4} parent=5 // pred_check_branch
      %160 = sbr.rel (%p157) target = $region12
    $region11: #{encoder_forward.4} parent=5 // pred_region
      %s161 = ssub.s32 %s11, 1
      // Predicated region
      $region13: #{encoder_forward.4} parent=11 // pred_check
        %p162 = pneg %p58
      $region14: #{encoder_forward.4} parent=11 // pred_check_branch
        %164 = sbr.rel (%p162) target = $region16
      $region15: #{encoder_forward.4} parent=11 // pred_region
        _
      $region16: #{encoder_forward.4} parent=11 // pred_fallthru
        _
      // Predicated region
      $region17: #{encoder_forward.4} parent=11 // pred_check
        %p165 = pneg %p79
      $region18: #{encoder_forward.4} parent=11 // pred_check_branch
        %167 = sbr.rel (%p165) target = $region20
      $region19: #{encoder_forward.4} parent=11 // pred_region
        _
      $region20: #{encoder_forward.4} parent=11 // pred_fallthru
        _
      // Predicated region
      $region21: #{encoder_forward.4} parent=11 // pred_check
        %p168 = pneg %p100
      $region22: #{encoder_forward.4} parent=11 // pred_check_branch
        %170 = sbr.rel (%p168) target = $region24
      $region23: #{encoder_forward.4} parent=11 // pred_region
        _
      $region24: #{encoder_forward.4} parent=11 // pred_fallthru
        _
      // Predicated region
      $region25: #{encoder_forward.4} parent=11 // pred_check
        %p171 = pneg %p121
      $region26: #{encoder_forward.4} parent=11 // pred_check_branch
        %173 = sbr.rel (%p171) target = $region28
      $region27: #{encoder_forward.4} parent=11 // pred_region
        _
      $region28: #{encoder_forward.4} parent=11 // pred_fallthru
        _
    $region12: #{encoder_forward.4} parent=5 // pred_fallthru
      _
    %p174 = scmp.lt.s32.totalorder %s11, 2
    // Predicated region
    $region29: #{encoder_forward.4} parent=5 // pred_check
      %p175 = pneg %p174
    $region30: #{encoder_forward.4} parent=5 // pred_check_branch
      %177 = sbr.rel (%p175) target = $region32
    $region31: #{encoder_forward.4} parent=5 // pred_region
      // Predicated region
      $region33: #{encoder_forward.4} parent=31 // pred_check
        %p178 = pneg %p31
      $region34: #{encoder_forward.4} parent=31 // pred_check_branch
        %180 = sbr.rel (%p178) target = $region36
      $region35: #{encoder_forward.4} parent=31 // pred_region
        %s181 = smul.u32 2, %s11
        %p182 = scmp.lt.s32.totalorder %s181, 3
        %s183 = scalar_select %p182, %s181, 3
        %s184 = smul.addr %s183, 3
        %s185 = smul.addr %s184, 8
        %s186 = scalar_lea.vmem %s0, %s185
        %s187 = smul.u32 2, %s11
      $region36: #{encoder_forward.4} parent=31 // pred_fallthru
        _
    $region32: #{encoder_forward.4} parent=5 // pred_fallthru
      _
    %p188 = scmp.le.s32.totalorder 1, %s11
    %p189 = scmp.lt.s32.totalorder %s11, 3
    %p190 = pnand %p188, %p189
    %p191 = pneg %p190
    // Predicated region
    $region37: #{encoder_forward.4} parent=5 // pred_check
      _
    $region38: #{encoder_forward.4} parent=5 // pred_check_branch
      %193 = sbr.rel (%p190) target = $region40
    $region39: #{encoder_forward.4} parent=5 // pred_region
      %s194 = ssub.s32 %s11, 1
      %s195 = smul.u32 2, %s16
      %p196 = scmp.lt.s32.totalorder %s195, 3
      %s197 = scalar_select %p196, %s195, 3
      %s198 = smul.addr %s197, 3
      %s199 = smul.addr %s198, 8
      %s200 = scalar_lea.vmem %s0, %s199
      %p201 = pneg %p37
      %p202 = pneg %p34
      %p203 = pneg %p58
      %p204 = pneg %p55
      %p205 = pneg %p79
      %p206 = pneg %p76
      %p207 = pneg %p100
      %p208 = pneg %p97
      %p209 = pneg %p121
      %p210 = pneg %p118
      %p211 = pneg %p147
      %p212 = pneg %p144
      %s213 = smul.u32 2, %s16
      %p214 = scmp.lt.s32.totalorder %s213, 3
      %s215 = scalar_select %p214, %s213, 3
      %s216 = smul.addr %s215, 8
      %s217 = scalar_lea.vmem %s5, %s216
      %s218 = smul.u32 2, %s16
      %p219 = scmp.lt.s32.totalorder %s218, 3
      %s220 = scalar_select %p219, %s218, 3
      %s221 = smul.addr %s220, 3
      %s222 = smul.addr %s221, 8
      %s223 = scalar_lea.vmem %s0, %s222
      %s224 = smul.u32 2, %s16
      %s225 = smul.u32 2, %s16
      %p226 = scmp.lt.s32.totalorder %s225, 3
      %s227 = scalar_select %p226, %s225, 3
      %s228 = smul.addr %s227, 8
      %s229 = scalar_lea.vmem %s5, %s228
      %s230 = smul.u32 2, %s16
      %v232 = vld [vmem:[%s223] sm:$0xff]
      %v233 = vld [vmem:[%s223 + $0x8] sm:$0xff]
      %v234 = vld [vmem:[%s223 + $0x10] sm:$0xff]
      %v235 = vld [vmem:[%s223 + $0x18] sm:$0xff]
      %v236 = vld [vmem:[%s223 + $0x20] sm:$0xff]
      %v237 = vld [vmem:[%s223 + $0x28] sm:$0xff]
      %v238 = vpack.c.bf16 %v235, %v232
      %v239 = vpack.c.bf16 %v236, %v233
      %v240 = vpack.c.bf16 %v237, %v234
      %v241 = vld [vmem:[%s1] sm:$0xf]
      %v242 = vld [vmem:[%s1 + $0x4] sm:$0xf]
      %v243 = vld [vmem:[%s1 + $0x8] sm:$0xf]
      %v244 = vld [vmem:[%s1 + $0xc] sm:$0xf]
      %v245 = vld [vmem:[%s1 + $0x10] sm:$0xf]
      %v246 = vld [vmem:[%s1 + $0x14] sm:$0xf]
      %v247 = vld [vmem:[%s1 + $0x18] sm:$0xf]
      %v248 = vld [vmem:[%s1 + $0x1c] sm:$0xf]
      %v249 = vld [vmem:[%s1 + $0x20] sm:$0xf]
      %v250 = vld [vmem:[%s1 + $0x24] sm:$0xf]
      %v251 = vld [vmem:[%s1 + $0x28] sm:$0xf]
      %v252 = vld [vmem:[%s1 + $0x2c] sm:$0xf]
      %v253 = vld [vmem:[%s1 + $0x30] sm:$0xf]
      %v254 = vld [vmem:[%s1 + $0x34] sm:$0xf]
      %v255 = vld [vmem:[%s1 + $0x38] sm:$0xf]
      %v256 = vld [vmem:[%s1 + $0x3c] sm:$0xf]
      %v257 = vld [vmem:[%s1 + $0x40] sm:$0xf]
      %v258 = vld [vmem:[%s1 + $0x44] sm:$0xf]
      %v259 = vld [vmem:[%s1 + $0x48] sm:$0xf]
      %v260 = vld [vmem:[%s1 + $0x4c] sm:$0xf]
      %v261 = vld [vmem:[%s1 + $0x50] sm:$0xf]
      %v262 = vld [vmem:[%s1 + $0x54] sm:$0xf]
      %v263 = vld [vmem:[%s1 + $0x58] sm:$0xf]
      %v264 = vld [vmem:[%s1 + $0x5c] sm:$0xf]
      %v265 = vld [vmem:[%s1 + $0x60] sm:$0xf]
      %v266 = vld [vmem:[%s1 + $0x64] sm:$0xf]
      %v267 = vld [vmem:[%s1 + $0x68] sm:$0xf]
      %v268 = vld [vmem:[%s1 + $0x6c] sm:$0xf]
      %v269 = vld [vmem:[%s1 + $0x70] sm:$0xf]
      %v270 = vld [vmem:[%s1 + $0x74] sm:$0xf]
      %v271 = vld [vmem:[%s1 + $0x78] sm:$0xf]
      %v272 = vld [vmem:[%s1 + $0x7c] sm:$0xf]
      %v273 = vld [vmem:[%s1 + $0x80] sm:$0xf]
      %v274 = vld [vmem:[%s1 + $0x84] sm:$0xf]
      %v275 = vld [vmem:[%s1 + $0x88] sm:$0xf]
      %v276 = vld [vmem:[%s1 + $0x8c] sm:$0xf]
      %v277 = vld [vmem:[%s2] sm:$0x1]
      %v279 = vlaneseq
      %v280 = vshrl.u32 %v279, 7
      %v281 = vsub.s32 0, %v280
      %v282 = vrot.slane %v277, %v281
      %v320 = vunpack.c.l.b16 %v241
      %v321 = vunpack.c.l.b16 %v242
      %v322 = vunpack.c.l.b16 %v243
      %v323 = vunpack.c.l.b16 %v244
      %v324 = vunpack.c.l.b16 %v245
      %v325 = vunpack.c.l.b16 %v246
      %v326 = vunpack.c.l.b16 %v247
      %v327 = vunpack.c.l.b16 %v248
      %v328 = vunpack.c.l.b16 %v249
      %v329 = vunpack.c.l.b16 %v250
      %v330 = vunpack.c.l.b16 %v251
      %v331 = vunpack.c.l.b16 %v252
      %v332 = vunpack.c.l.b16 %v253
      %v333 = vunpack.c.l.b16 %v254
      %v334 = vunpack.c.l.b16 %v255
      %v335 = vunpack.c.l.b16 %v256
      %v336 = vunpack.c.l.b16 %v257
      %v337 = vunpack.c.l.b16 %v258
      %v338 = vunpack.c.l.b16 %v259
      %v339 = vunpack.c.l.b16 %v260
      %v340 = vunpack.c.l.b16 %v261
      %v341 = vunpack.c.l.b16 %v262
      %v342 = vunpack.c.l.b16 %v263
      %v343 = vunpack.c.l.b16 %v264
      %v344 = vunpack.c.l.b16 %v265
      %v345 = vunpack.c.l.b16 %v266
      %v346 = vunpack.c.l.b16 %v267
      %v347 = vunpack.c.l.b16 %v268
      %v348 = vunpack.c.l.b16 %v269
      %v349 = vunpack.c.l.b16 %v270
      %v350 = vunpack.c.l.b16 %v271
      %v351 = vunpack.c.l.b16 %v272
      %v352 = vunpack.c.l.b16 %v273
      %v353 = vunpack.c.l.b16 %v274
      %v354 = vunpack.c.l.b16 %v275
      %v355 = vunpack.c.l.b16 %v276
      %v356 = vpack.c.b16 %v321, %v320
      %v357 = vpack.c.b16 %v323, %v322
      %v358 = vpack.c.b16 %v325, %v324
      %v359 = vpack.c.b16 %v327, %v326
      %v360 = vpack.c.b16 %v329, %v328
      %v361 = vpack.c.b16 %v331, %v330
      %v362 = vpack.c.b16 %v333, %v332
      %v363 = vpack.c.b16 %v335, %v334
      %v364 = vpack.c.b16 %v337, %v336
      %v365 = vpack.c.b16 %v339, %v338
      %v366 = vpack.c.b16 %v341, %v340
      %v367 = vpack.c.b16 %v343, %v342
      %v368 = vpack.c.b16 %v345, %v344
      %v369 = vpack.c.b16 %v347, %v346
      %v370 = vpack.c.b16 %v349, %v348
      %v371 = vpack.c.b16 %v351, %v350
      %v372 = vpack.c.b16 %v353, %v352
      %v373 = vpack.c.b16 %v355, %v354
      %vm392 = vcmask 261120
      %v394 = vsel %vm392, %v240, 0
      %396 = vmatprep.subr.bf16.mxu0 0
      %397 = vmatpush1.bf16.msra.mxu0 %v356
      %398 = vmatprep.subr.bf16.mxu0 0
      %399 = vmatpush1.bf16.msra.mxu0 %v357
      %400 = vmatprep.subr.bf16.mxu0 0
      %401 = vmatpush1.bf16.msra.mxu0 %v358
      %402 = vmatprep.subr.bf16.mxu0 0
      %403 = vmatpush1.bf16.msra.mxu0 %v359
      %404 = vmatprep.subr.bf16.mxu0 0
      %405 = vmatpush1.bf16.msra.mxu0 %v360
      %406 = vmatprep.subr.bf16.mxu0 0
      %407 = vmatpush1.bf16.msra.mxu0 %v361
      %408 = vmatprep.subr.bf16.mxu0 0
      %409 = vmatpush1.bf16.msra.mxu0 %v362
      %410 = vmatprep.subr.bf16.mxu0 0
      %411 = vmatpush1.bf16.msra.mxu0 %v363
      %412 = vmatprep.subr.bf16.mxu0 0
      %413 = vmatpush1.bf16.msra.mxu0 %v364
      %414 = vmatprep.subr.bf16.mxu0 0
      %415 = vmatpush1.bf16.msra.mxu0 %v365
      %416 = vmatprep.subr.bf16.mxu0 0
      %417 = vmatpush1.bf16.msra.mxu0 %v366
      %418 = vmatprep.subr.bf16.mxu0 0
      %419 = vmatpush1.bf16.msra.mxu0 %v367
      %420 = vmatprep.subr.bf16.mxu0 0
      %421 = vmatpush1.bf16.msra.mxu0 %v368
      %422 = vmatprep.subr.bf16.mxu0 0
      %423 = vmatpush1.bf16.msra.mxu0 %v369
      %424 = vmatprep.subr.bf16.mxu0 0
      %425 = vmatpush1.bf16.msra.mxu0 %v370
      %426 = vmatprep.subr.bf16.mxu0 0
      %427 = vmatpush1.bf16.msra.mxu0 %v371
      %428 = vmatprep.mubr.bf16.mxu0 %v239
      %429 = vmatmul.mubr.bf16.gmra.mrb[0].mxu0 %v238
      %v430 = vpop.f32.mrb[0].mxu0
      %v431 = vadd.f32 %v282, %v430
      %v432 = vpop.f32.mrb[0].mxu0
      %v433 = vpop.f32.mrb[0].mxu0
      %v434 = vadd.f32 %v282, %v433
      %v435 = vpop.f32.mrb[0].mxu0
      %436 = vdwg.mxu0
      %437 = vmatprep.subr.bf16.mxu0 0
      %438 = vmatpush1.bf16.msra.mxu0 %v372
      %439 = vmatprep.subr.bf16.mxu0 0
      %440 = vmatpush1.bf16.msra.mxu0 %v373
      %441 = vmatprep.subr.bf16.mxu0 0
      %442 = vmatpush1.bf16.msra.mxu0 0
      %443 = vmatprep.subr.bf16.mxu0 0
      %444 = vmatpush1.bf16.msra.mxu0 0
      %445 = vmatprep.subr.bf16.mxu0 0
      %446 = vmatpush1.bf16.msra.mxu0 0
      %447 = vmatprep.subr.bf16.mxu0 0
      %448 = vmatpush1.bf16.msra.mxu0 0
      %449 = vmatprep.subr.bf16.mxu0 0
      %450 = vmatpush1.bf16.msra.mxu0 0
      %451 = vmatprep.subr.bf16.mxu0 0
      %452 = vmatpush1.bf16.msra.mxu0 0
      %453 = vmatprep.subr.bf16.mxu0 0
      %454 = vmatpush1.bf16.msra.mxu0 0
      %455 = vmatprep.subr.bf16.mxu0 0
      %456 = vmatpush1.bf16.msra.mxu0 0
      %457 = vmatprep.subr.bf16.mxu0 0
      %458 = vmatpush1.bf16.msra.mxu0 0
      %459 = vmatprep.subr.bf16.mxu0 0
      %460 = vmatpush1.bf16.msra.mxu0 0
      %461 = vmatprep.subr.bf16.mxu0 0
      %462 = vmatpush1.bf16.msra.mxu0 0
      %463 = vmatprep.subr.bf16.mxu0 0
      %464 = vmatpush1.bf16.msra.mxu0 0
      %465 = vmatprep.subr.bf16.mxu0 0
      %466 = vmatpush1.bf16.msra.mxu0 0
      %467 = vmatprep.subr.bf16.mxu0 0
      %468 = vmatpush1.bf16.msra.mxu0 0
      %469 = vmatprep.mubr.bf16.mxu0 0
      %470 = vmatmul.mubr.bf16.gmra.mrb[0].mxu0 %v394
      %v471 = vpop.f32.mrb[0].mxu0
      %v472 = vadd.f32 %v431, %v471
      %v473 = vpop.f32.mrb[0].mxu0
      %v474 = vpop.f32.mrb[0].mxu0
      %v475 = vadd.f32 %v434, %v474
      %v476 = vpop.f32.mrb[0].mxu0
      %477 = vdwg.mxu0
      %v478 = vmul.f32 %v472, 0.01
      %v479 = vmul.f32 %v475, 0.01
      %v480 = vmax.f32 %v472, %v478
      %v481 = vmax.f32 %v475, %v479
      %vm482 = vcmask 521216
      %483 = vst.msk [vmem:[#allocation2] sm:$0x3f] %vm482, 0.0
      %484 = vst.msk [vmem:[#allocation2 + $0x8] sm:$0x3f] %vm482, 0.0
      %485 = vst.msk [vmem:[#allocation2 + $0x10] sm:$0x3f] %vm482, 0.0
      %486 = vst.msk [vmem:[#allocation2 + $0x18] sm:$0x3f] %vm482, 0.0
      %487 = vst.msk [vmem:[#allocation2 + $0x20] sm:$0x3f] %vm482, 0.0
      %488 = vst.msk [vmem:[#allocation2 + $0x28] sm:$0x3f] %vm482, 0.0
      %s489 = scalar_lea.vmem [#allocation2], 8
      %vm490 = vcmask 519168
      %491 = vst.msk [vmem:[%s489 + $0x1] sm:$0xf] %vm490, %v480
      %s492 = scalar_lea.vmem [#allocation2], 16
      %vm493 = vcmask 523268
      %494 = vst.msk [vmem:[%s492 - $0x3] sm:$0xf0] %vm493, %v480
      %s495 = scalar_lea.vmem [#allocation2], 24
      %496 = vst.msk [vmem:[%s495 + $0x1] sm:$0xf] %vm490, %v481
      %s497 = scalar_lea.vmem [#allocation2], 32
      %498 = vst.msk [vmem:[%s497 - $0x3] sm:$0xf0] %vm493, %v481
      %v499 = vld [vmem:[%s4] sm:$0x1]
      %v501 = vlaneseq
      %v502 = vshrl.u32 %v501, 7
      %v503 = vsub.s32 0, %v502
      %v504 = vrot.slane %v499, %v503
      %507 = vrot.lane.b32.xlu0 %v472, 64
      %v508 = vpop.permute.xlu0 %507
      %v510 = vadd.f32 %v504, %v508
      %v511 = vld [vmem:[#allocation2] sm:$0xf]
      %v512 = vpack.c.bf16 %v511, %v511
      %v513 = vld [vmem:[%s3] sm:$0xf]
      %v514 = vld [vmem:[%s3 + $0x4] sm:$0xf]
      %v515 = vld [vmem:[%s3 + $0x8] sm:$0xf]
      %v516 = vld [vmem:[%s3 + $0xc] sm:$0xf]
      %v517 = vld [vmem:[%s3 + $0x10] sm:$0xf]
      %v518 = vld [vmem:[%s3 + $0x14] sm:$0xf]
      %v519 = vld [vmem:[%s3 + $0x18] sm:$0xf]
      %v520 = vld [vmem:[%s3 + $0x1c] sm:$0xf]
      %v529 = vunpack.c.l.b16 %v513
      %v530 = vunpack.c.l.b16 %v514
      %v531 = vunpack.c.l.b16 %v515
      %v532 = vunpack.c.l.b16 %v516
      %v533 = vunpack.c.l.b16 %v517
      %v534 = vunpack.c.l.b16 %v518
      %v535 = vunpack.c.l.b16 %v519
      %v536 = vunpack.c.l.b16 %v520
      %v537 = vpack.c.b16 %v530, %v529
      %v538 = vpack.c.b16 %v532, %v531
      %v539 = vpack.c.b16 %v534, %v533
      %v540 = vpack.c.b16 %v536, %v535
      %vm545 = vcmask 523264
      %v547 = vsel %vm545, %v512, 0
      %549 = vmatprep.subr.bf16.mxu0 0
      %550 = vmatpush1.bf16.msra.mxu0 %v537
      %551 = vmatprep.subr.bf16.mxu0 0
      %552 = vmatpush1.bf16.msra.mxu0 %v538
      %553 = vmatprep.subr.bf16.mxu0 0
      %554 = vmatpush1.bf16.msra.mxu0 %v539
      %555 = vmatprep.subr.bf16.mxu0 0
      %556 = vmatpush1.bf16.msra.mxu0 %v540
      %557 = vmatprep.subr.bf16.mxu0 0
      %558 = vmatpush1.bf16.msra.mxu0 0
      %559 = vmatprep.subr.bf16.mxu0 0
      %560 = vmatpush1.bf16.msra.mxu0 0
      %561 = vmatprep.subr.bf16.mxu0 0
      %562 = vmatpush1.bf16.msra.mxu0 0
      %563 = vmatprep.subr.bf16.mxu0 0
      %564 = vmatpush1.bf16.msra.mxu0 0
      %565 = vmatprep.subr.bf16.mxu0 0
      %566 = vmatpush1.bf16.msra.mxu0 0
      %567 = vmatprep.subr.bf16.mxu0 0
      %568 = vmatpush1.bf16.msra.mxu0 0
      %569 = vmatprep.subr.bf16.mxu0 0
      %570 = vmatpush1.bf16.msra.mxu0 0
      %571 = vmatprep.subr.bf16.mxu0 0
      %572 = vmatpush1.bf16.msra.mxu0 0
      %573 = vmatprep.subr.bf16.mxu0 0
      %574 = vmatpush1.bf16.msra.mxu0 0
      %575 = vmatprep.subr.bf16.mxu0 0
      %576 = vmatpush1.bf16.msra.mxu0 0
      %577 = vmatprep.subr.bf16.mxu0 0
      %578 = vmatpush1.bf16.msra.mxu0 0
      %579 = vmatprep.subr.bf16.mxu0 0
      %580 = vmatpush1.bf16.msra.mxu0 0
      %581 = vmatprep.mubr.bf16.mxu0 0
      %582 = vmatmul.mubr.bf16.gmra.mrb[0].mxu0 %v547
      %v583 = vpop.f32.mrb[0].mxu0
      %v584 = vadd.f32 0.0, %v583
      %v585 = vpop.f32.mrb[0].mxu0
      %v586 = vpop.f32.mrb[0].mxu0
      %v587 = vpop.f32.mrb[0].mxu0
      %588 = vdwg.mxu0
      %v589 = vadd.f32 %v510, %v584
      %v590 = vld [vmem:[#allocation2 + $0x1] sm:$0xf]
      %v591 = vpack.c.bf16 %v590, %v590
      %s592 = scalar_lea.vmem %s3, 32
      %v593 = vld [vmem:[%s592] sm:$0xf]
      %v594 = vld [vmem:[%s592 + $0x4] sm:$0xf]
      %v595 = vld [vmem:[%s592 + $0x8] sm:$0xf]
      %v596 = vld [vmem:[%s592 + $0xc] sm:$0xf]
      %v597 = vld [vmem:[%s592 + $0x10] sm:$0xf]
      %v598 = vld [vmem:[%s592 + $0x14] sm:$0xf]
      %v599 = vld [vmem:[%s592 + $0x18] sm:$0xf]
      %v600 = vld [vmem:[%s592 + $0x1c] sm:$0xf]
      %v609 = vunpack.c.l.b16 %v593
      %v610 = vunpack.c.l.b16 %v594
      %v611 = vunpack.c.l.b16 %v595
      %v612 = vunpack.c.l.b16 %v596
      %v613 = vunpack.c.l.b16 %v597
      %v614 = vunpack.c.l.b16 %v598
      %v615 = vunpack.c.l.b16 %v599
      %v616 = vunpack.c.l.b16 %v600
      %v617 = vpack.c.b16 %v610, %v609
      %v618 = vpack.c.b16 %v612, %v611
      %v619 = vpack.c.b16 %v614, %v613
      %v620 = vpack.c.b16 %v616, %v615
      %v626 = vsel %vm545, %v591, 0
      %628 = vmatprep.subr.bf16.mxu0 0
      %629 = vmatpush1.bf16.msra.mxu0 %v617
      %630 = vmatprep.subr.bf16.mxu0 0
      %631 = vmatpush1.bf16.msra.mxu0 %v618
      %632 = vmatprep.subr.bf16.mxu0 0
      %633 = vmatpush1.bf16.msra.mxu0 %v619
      %634 = vmatprep.subr.bf16.mxu0 0
      %635 = vmatpush1.bf16.msra.mxu0 %v620
      %636 = vmatprep.subr.bf16.mxu0 0
      %637 = vmatpush1.bf16.msra.mxu0 0
      %638 = vmatprep.subr.bf16.mxu0 0
      %639 = vmatpush1.bf16.msra.mxu0 0
      %640 = vmatprep.subr.bf16.mxu0 0
      %641 = vmatpush1.bf16.msra.mxu0 0
      %642 = vmatprep.subr.bf16.mxu0 0
      %643 = vmatpush1.bf16.msra.mxu0 0
      %644 = vmatprep.subr.bf16.mxu0 0
      %645 = vmatpush1.bf16.msra.mxu0 0
      %646 = vmatprep.subr.bf16.mxu0 0
      %647 = vmatpush1.bf16.msra.mxu0 0
      %648 = vmatprep.subr.bf16.mxu0 0
      %649 = vmatpush1.bf16.msra.mxu0 0
      %650 = vmatprep.subr.bf16.mxu0 0
      %651 = vmatpush1.bf16.msra.mxu0 0
      %652 = vmatprep.subr.bf16.mxu0 0
      %653 = vmatpush1.bf16.msra.mxu0 0
      %654 = vmatprep.subr.bf16.mxu0 0
      %655 = vmatpush1.bf16.msra.mxu0 0
      %656 = vmatprep.subr.bf16.mxu0 0
      %657 = vmatpush1.bf16.msra.mxu0 0
      %658 = vmatprep.subr.bf16.mxu0 0
      %659 = vmatpush1.bf16.msra.mxu0 0
      %660 = vmatprep.mubr.bf16.mxu0 0
      %661 = vmatmul.mubr.bf16.gmra.mrb[0].mxu0 %v626
      %v662 = vpop.f32.mrb[0].mxu0
      %v663 = vadd.f32 0.0, %v662
      %v664 = vpop.f32.mrb[0].mxu0
      %v665 = vpop.f32.mrb[0].mxu0
      %v666 = vpop.f32.mrb[0].mxu0
      %667 = vdwg.mxu0
      %v668 = vadd.f32 %v589, %v663
      %v669 = vld [vmem:[#allocation2 + $0x2] sm:$0xf]
      %v670 = vpack.c.bf16 %v669, %v669
      %s671 = scalar_lea.vmem %s3, 64
      %v672 = vld [vmem:[%s671] sm:$0xf]
      %v673 = vld [vmem:[%s671 + $0x4] sm:$0xf]
      %v674 = vld [vmem:[%s671 + $0x8] sm:$0xf]
      %v675 = vld [vmem:[%s671 + $0xc] sm:$0xf]
      %v676 = vld [vmem:[%s671 + $0x10] sm:$0xf]
      %v677 = vld [vmem:[%s671 + $0x14] sm:$0xf]
      %v678 = vld [vmem:[%s671 + $0x18] sm:$0xf]
      %v679 = vld [vmem:[%s671 + $0x1c] sm:$0xf]
      %v688 = vunpack.c.l.b16 %v672
      %v689 = vunpack.c.l.b16 %v673
      %v690 = vunpack.c.l.b16 %v674
      %v691 = vunpack.c.l.b16 %v675
      %v692 = vunpack.c.l.b16 %v676
      %v693 = vunpack.c.l.b16 %v677
      %v694 = vunpack.c.l.b16 %v678
      %v695 = vunpack.c.l.b16 %v679
      %v696 = vpack.c.b16 %v689, %v688
      %v697 = vpack.c.b16 %v691, %v690
      %v698 = vpack.c.b16 %v693, %v692
      %v699 = vpack.c.b16 %v695, %v694
      %v705 = vsel %vm545, %v670, 0
      %707 = vmatprep.subr.bf16.mxu0 0
      %708 = vmatpush1.bf16.msra.mxu0 %v696
      %709 = vmatprep.subr.bf16.mxu0 0
      %710 = vmatpush1.bf16.msra.mxu0 %v697
      %711 = vmatprep.subr.bf16.mxu0 0
      %712 = vmatpush1.bf16.msra.mxu0 %v698
      %713 = vmatprep.subr.bf16.mxu0 0
      %714 = vmatpush1.bf16.msra.mxu0 %v699
      %715 = vmatprep.subr.bf16.mxu0 0
      %716 = vmatpush1.bf16.msra.mxu0 0
      %717 = vmatprep.subr.bf16.mxu0 0
      %718 = vmatpush1.bf16.msra.mxu0 0
      %719 = vmatprep.subr.bf16.mxu0 0
      %720 = vmatpush1.bf16.msra.mxu0 0
      %721 = vmatprep.subr.bf16.mxu0 0
      %722 = vmatpush1.bf16.msra.mxu0 0
      %723 = vmatprep.subr.bf16.mxu0 0
      %724 = vmatpush1.bf16.msra.mxu0 0
      %725 = vmatprep.subr.bf16.mxu0 0
      %726 = vmatpush1.bf16.msra.mxu0 0
      %727 = vmatprep.subr.bf16.mxu0 0
      %728 = vmatpush1.bf16.msra.mxu0 0
      %729 = vmatprep.subr.bf16.mxu0 0
      %730 = vmatpush1.bf16.msra.mxu0 0
      %731 = vmatprep.subr.bf16.mxu0 0
      %732 = vmatpush1.bf16.msra.mxu0 0
      %733 = vmatprep.subr.bf16.mxu0 0
      %734 = vmatpush1.bf16.msra.mxu0 0
      %735 = vmatprep.subr.bf16.mxu0 0
      %736 = vmatpush1.bf16.msra.mxu0 0
      %737 = vmatprep.subr.bf16.mxu0 0
      %738 = vmatpush1.bf16.msra.mxu0 0
      %739 = vmatprep.mubr.bf16.mxu0 0
      %740 = vmatmul.mubr.bf16.gmra.mrb[0].mxu0 %v705
      %v741 = vpop.f32.mrb[0].mxu0
      %v742 = vadd.f32 0.0, %v741
      %v743 = vpop.f32.mrb[0].mxu0
      %v744 = vpop.f32.mrb[0].mxu0
      %v745 = vpop.f32.mrb[0].mxu0
      %746 = vdwg.mxu0
      %v747 = vadd.f32 %v668, %v742
      %v748 = vld [vmem:[%s489] sm:$0xf]
      %v749 = vpack.c.bf16 %v748, %v748
      %s750 = scalar_lea.vmem %s3, 96
      %v751 = vld [vmem:[%s750] sm:$0xf]
      %v752 = vld [vmem:[%s750 + $0x4] sm:$0xf]
      %v753 = vld [vmem:[%s750 + $0x8] sm:$0xf]
      %v754 = vld [vmem:[%s750 + $0xc] sm:$0xf]
      %v755 = vld [vmem:[%s750 + $0x10] sm:$0xf]
      %v756 = vld [vmem:[%s750 + $0x14] sm:$0xf]
      %v757 = vld [vmem:[%s750 + $0x18] sm:$0xf]
      %v758 = vld [vmem:[%s750 + $0x1c] sm:$0xf]
      %v767 = vunpack.c.l.b16 %v751
      %v768 = vunpack.c.l.b16 %v752
      %v769 = vunpack.c.l.b16 %v753
      %v770 = vunpack.c.l.b16 %v754
      %v771 = vunpack.c.l.b16 %v755
      %v772 = vunpack.c.l.b16 %v756
      %v773 = vunpack.c.l.b16 %v757
      %v774 = vunpack.c.l.b16 %v758
      %v775 = vpack.c.b16 %v768, %v767
      %v776 = vpack.c.b16 %v770, %v769
      %v777 = vpack.c.b16 %v772, %v771
      %v778 = vpack.c.b16 %v774, %v773
      %v784 = vsel %vm545, %v749, 0
      %786 = vmatprep.subr.bf16.mxu0 0
      %787 = vmatpush1.bf16.msra.mxu0 %v775
      %788 = vmatprep.subr.bf16.mxu0 0
      %789 = vmatpush1.bf16.msra.mxu0 %v776
      %790 = vmatprep.subr.bf16.mxu0 0
      %791 = vmatpush1.bf16.msra.mxu0 %v777
      %792 = vmatprep.subr.bf16.mxu0 0
      %793 = vmatpush1.bf16.msra.mxu0 %v778
      %794 = vmatprep.subr.bf16.mxu0 0
      %795 = vmatpush1.bf16.msra.mxu0 0
      %796 = vmatprep.subr.bf16.mxu0 0
      %797 = vmatpush1.bf16.msra.mxu0 0
      %798 = vmatprep.subr.bf16.mxu0 0
      %799 = vmatpush1.bf16.msra.mxu0 0
      %800 = vmatprep.subr.bf16.mxu0 0
      %801 = vmatpush1.bf16.msra.mxu0 0
      %802 = vmatprep.subr.bf16.mxu0 0
      %803 = vmatpush1.bf16.msra.mxu0 0
      %804 = vmatprep.subr.bf16.mxu0 0
      %805 = vmatpush1.bf16.msra.mxu0 0
      %806 = vmatprep.subr.bf16.mxu0 0
      %807 = vmatpush1.bf16.msra.mxu0 0
      %808 = vmatprep.subr.bf16.mxu0 0
      %809 = vmatpush1.bf16.msra.mxu0 0
      %810 = vmatprep.subr.bf16.mxu0 0
      %811 = vmatpush1.bf16.msra.mxu0 0
      %812 = vmatprep.subr.bf16.mxu0 0
      %813 = vmatpush1.bf16.msra.mxu0 0
      %814 = vmatprep.subr.bf16.mxu0 0
      %815 = vmatpush1.bf16.msra.mxu0 0
      %816 = vmatprep.subr.bf16.mxu0 0
      %817 = vmatpush1.bf16.msra.mxu0 0
      %818 = vmatprep.mubr.bf16.mxu0 0
      %819 = vmatmul.mubr.bf16.gmra.mrb[0].mxu0 %v784
      %v820 = vpop.f32.mrb[0].mxu0
      %v821 = vadd.f32 0.0, %v820
      %v822 = vpop.f32.mrb[0].mxu0
      %v823 = vpop.f32.mrb[0].mxu0
      %v824 = vpop.f32.mrb[0].mxu0
      %825 = vdwg.mxu0
      %v826 = vadd.f32 %v747, %v821
      %v827 = vld [vmem:[%s489 + $0x1] sm:$0xf]
      %v828 = vpack.c.bf16 %v827, %v827
      %s829 = scalar_lea.vmem %s3, 128
      %v830 = vld [vmem:[%s829] sm:$0xf]
      %v831 = vld [vmem:[%s829 + $0x4] sm:$0xf]
      %v832 = vld [vmem:[%s829 + $0x8] sm:$0xf]
      %v833 = vld [vmem:[%s829 + $0xc] sm:$0xf]
      %v834 = vld [vmem:[%s829 + $0x10] sm:$0xf]
      %v835 = vld [vmem:[%s829 + $0x14] sm:$0xf]
      %v836 = vld [vmem:[%s829 + $0x18] sm:$0xf]
      %v837 = vld [vmem:[%s829 + $0x1c] sm:$0xf]
      %v846 = vunpack.c.l.b16 %v830
      %v847 = vunpack.c.l.b16 %v831
      %v848 = vunpack.c.l.b16 %v832
      %v849 = vunpack.c.l.b16 %v833
      %v850 = vunpack.c.l.b16 %v834
      %v851 = vunpack.c.l.b16 %v835
      %v852 = vunpack.c.l.b16 %v836
      %v853 = vunpack.c.l.b16 %v837
      %v854 = vpack.c.b16 %v847, %v846
      %v855 = vpack.c.b16 %v849, %v848
      %v856 = vpack.c.b16 %v851, %v850
      %v857 = vpack.c.b16 %v853, %v852
      %v863 = vsel %vm545, %v828, 0
      %865 = vmatprep.subr.bf16.mxu0 0
      %866 = vmatpush1.bf16.msra.mxu0 %v854
      %867 = vmatprep.subr.bf16.mxu0 0
      %868 = vmatpush1.bf16.msra.mxu0 %v855
      %869 = vmatprep.subr.bf16.mxu0 0
      %870 = vmatpush1.bf16.msra.mxu0 %v856
      %871 = vmatprep.subr.bf16.mxu0 0
      %872 = vmatpush1.bf16.msra.mxu0 %v857
      %873 = vmatprep.subr.bf16.mxu0 0
      %874 = vmatpush1.bf16.msra.mxu0 0
      %875 = vmatprep.subr.bf16.mxu0 0
      %876 = vmatpush1.bf16.msra.mxu0 0
      %877 = vmatprep.subr.bf16.mxu0 0
      %878 = vmatpush1.bf16.msra.mxu0 0
      %879 = vmatprep.subr.bf16.mxu0 0
      %880 = vmatpush1.bf16.msra.mxu0 0
      %881 = vmatprep.subr.bf16.mxu0 0
      %882 = vmatpush1.bf16.msra.mxu0 0
      %883 = vmatprep.subr.bf16.mxu0 0
      %884 = vmatpush1.bf16.msra.mxu0 0
      %885 = vmatprep.subr.bf16.mxu0 0
      %886 = vmatpush1.bf16.msra.mxu0 0
      %887 = vmatprep.subr.bf16.mxu0 0
      %888 = vmatpush1.bf16.msra.mxu0 0
      %889 = vmatprep.subr.bf16.mxu0 0
      %890 = vmatpush1.bf16.msra.mxu0 0
      %891 = vmatprep.subr.bf16.mxu0 0
      %892 = vmatpush1.bf16.msra.mxu0 0
      %893 = vmatprep.subr.bf16.mxu0 0
      %894 = vmatpush1.bf16.msra.mxu0 0
      %895 = vmatprep.subr.bf16.mxu0 0
      %896 = vmatpush1.bf16.msra.mxu0 0
      %897 = vmatprep.mubr.bf16.mxu0 0
      %898 = vmatmul.mubr.bf16.gmra.mrb[0].mxu0 %v863
      %v899 = vpop.f32.mrb[0].mxu0
      %v900 = vadd.f32 0.0, %v899
      %v901 = vpop.f32.mrb[0].mxu0
      %v902 = vpop.f32.mrb[0].mxu0
      %v903 = vpop.f32.mrb[0].mxu0
      %904 = vdwg.mxu0
      %v905 = vadd.f32 %v826, %v900
      %v906 = vld [vmem:[%s489 + $0x2] sm:$0xf]
      %v907 = vpack.c.bf16 %v906, %v906
      %s908 = scalar_lea.vmem %s3, 160
      %v909 = vld [vmem:[%s908] sm:$0xf]
      %v910 = vld [vmem:[%s908 + $0x4] sm:$0xf]
      %v911 = vld [vmem:[%s908 + $0x8] sm:$0xf]
      %v912 = vld [vmem:[%s908 + $0xc] sm:$0xf]
      %v913 = vld [vmem:[%s908 + $0x10] sm:$0xf]
      %v914 = vld [vmem:[%s908 + $0x14] sm:$0xf]
      %v915 = vld [vmem:[%s908 + $0x18] sm:$0xf]
      %v916 = vld [vmem:[%s908 + $0x1c] sm:$0xf]
      %v925 = vunpack.c.l.b16 %v909
      %v926 = vunpack.c.l.b16 %v910
      %v927 = vunpack.c.l.b16 %v911
      %v928 = vunpack.c.l.b16 %v912
      %v929 = vunpack.c.l.b16 %v913
      %v930 = vunpack.c.l.b16 %v914
      %v931 = vunpack.c.l.b16 %v915
      %v932 = vunpack.c.l.b16 %v916
      %v933 = vpack.c.b16 %v926, %v925
      %v934 = vpack.c.b16 %v928, %v927
      %v935 = vpack.c.b16 %v930, %v929
      %v936 = vpack.c.b16 %v932, %v931
      %v942 = vsel %vm545, %v907, 0
      %944 = vmatprep.subr.bf16.mxu0 0
      %945 = vmatpush1.bf16.msra.mxu0 %v933
      %946 = vmatprep.subr.bf16.mxu0 0
      %947 = vmatpush1.bf16.msra.mxu0 %v934
      %948 = vmatprep.subr.bf16.mxu0 0
      %949 = vmatpush1.bf16.msra.mxu0 %v935
      %950 = vmatprep.subr.bf16.mxu0 0
      %951 = vmatpush1.bf16.msra.mxu0 %v936
      %952 = vmatprep.subr.bf16.mxu0 0
      %953 = vmatpush1.bf16.msra.mxu0 0
      %954 = vmatprep.subr.bf16.mxu0 0
      %955 = vmatpush1.bf16.msra.mxu0 0
      %956 = vmatprep.subr.bf16.mxu0 0
      %957 = vmatpush1.bf16.msra.mxu0 0
      %958 = vmatprep.subr.bf16.mxu0 0
      %959 = vmatpush1.bf16.msra.mxu0 0
      %960 = vmatprep.subr.bf16.mxu0 0
      %961 = vmatpush1.bf16.msra.mxu0 0
      %962 = vmatprep.subr.bf16.mxu0 0
      %963 = vmatpush1.bf16.msra.mxu0 0
      %964 = vmatprep.subr.bf16.mxu0 0
      %965 = vmatpush1.bf16.msra.mxu0 0
      %966 = vmatprep.subr.bf16.mxu0 0
      %967 = vmatpush1.bf16.msra.mxu0 0
      %968 = vmatprep.subr.bf16.mxu0 0
      %969 = vmatpush1.bf16.msra.mxu0 0
      %970 = vmatprep.subr.bf16.mxu0 0
      %971 = vmatpush1.bf16.msra.mxu0 0
      %972 = vmatprep.subr.bf16.mxu0 0
      %973 = vmatpush1.bf16.msra.mxu0 0
      %974 = vmatprep.subr.bf16.mxu0 0
      %975 = vmatpush1.bf16.msra.mxu0 0
      %976 = vmatprep.mubr.bf16.mxu0 0
      %977 = vmatmul.mubr.bf16.gmra.mrb[0].mxu0 %v942
      %v978 = vpop.f32.mrb[0].mxu0
      %v979 = vadd.f32 0.0, %v978
      %v980 = vpop.f32.mrb[0].mxu0
      %v981 = vpop.f32.mrb[0].mxu0
      %v982 = vpop.f32.mrb[0].mxu0
      %983 = vdwg.mxu0
      %v984 = vadd.f32 %v905, %v979
      %v985 = vld [vmem:[%s492] sm:$0xf]
      %v986 = vpack.c.bf16 %v985, %v985
      %s987 = scalar_lea.vmem %s3, 192
      %v988 = vld [vmem:[%s987] sm:$0xf]
      %v989 = vld [vmem:[%s987 + $0x4] sm:$0xf]
      %v990 = vld [vmem:[%s987 + $0x8] sm:$0xf]
      %v991 = vld [vmem:[%s987 + $0xc] sm:$0xf]
      %v992 = vld [vmem:[%s987 + $0x10] sm:$0xf]
      %v993 = vld [vmem:[%s987 + $0x14] sm:$0xf]
      %v994 = vld [vmem:[%s987 + $0x18] sm:$0xf]
      %v995 = vld [vmem:[%s987 + $0x1c] sm:$0xf]
      %v1004 = vunpack.c.l.b16 %v988
      %v1005 = vunpack.c.l.b16 %v989
      %v1006 = vunpack.c.l.b16 %v990
      %v1007 = vunpack.c.l.b16 %v991
      %v1008 = vunpack.c.l.b16 %v992
      %v1009 = vunpack.c.l.b16 %v993
      %v1010 = vunpack.c.l.b16 %v994
      %v1011 = vunpack.c.l.b16 %v995
      %v1012 = vpack.c.b16 %v1005, %v1004
      %v1013 = vpack.c.b16 %v1007, %v1006
      %v1014 = vpack.c.b16 %v1009, %v1008
      %v1015 = vpack.c.b16 %v1011, %v1010
      %v1021 = vsel %vm545, %v986, 0
      %1023 = vmatprep.subr.bf16.mxu0 0
      %1024 = vmatpush1.bf16.msra.mxu0 %v1012
      %1025 = vmatprep.subr.bf16.mxu0 0
      %1026 = vmatpush1.bf16.msra.mxu0 %v1013
      %1027 = vmatprep.subr.bf16.mxu0 0
      %1028 = vmatpush1.bf16.msra.mxu0 %v1014
      %1029 = vmatprep.subr.bf16.mxu0 0
      %1030 = vmatpush1.bf16.msra.mxu0 %v1015
      %1031 = vmatprep.subr.bf16.mxu0 0
      %1032 = vmatpush1.bf16.msra.mxu0 0
      %1033 = vmatprep.subr.bf16.mxu0 0
      %1034 = vmatpush1.bf16.msra.mxu0 0
      %1035 = vmatprep.subr.bf16.mxu0 0
      %1036 = vmatpush1.bf16.msra.mxu0 0
      %1037 = vmatprep.subr.bf16.mxu0 0
      %1038 = vmatpush1.bf16.msra.mxu0 0
      %1039 = vmatprep.subr.bf16.mxu0 0
      %1040 = vmatpush1.bf16.msra.mxu0 0
      %1041 = vmatprep.subr.bf16.mxu0 0
      %1042 = vmatpush1.bf16.msra.mxu0 0
      %1043 = vmatprep.subr.bf16.mxu0 0
      %1044 = vmatpush1.bf16.msra.mxu0 0
      %1045 = vmatprep.subr.bf16.mxu0 0
      %1046 = vmatpush1.bf16.msra.mxu0 0
      %1047 = vmatprep.subr.bf16.mxu0 0
      %1048 = vmatpush1.bf16.msra.mxu0 0
      %1049 = vmatprep.subr.bf16.mxu0 0
      %1050 = vmatpush1.bf16.msra.mxu0 0
      %1051 = vmatprep.subr.bf16.mxu0 0
      %1052 = vmatpush1.bf16.msra.mxu0 0
      %1053 = vmatprep.subr.bf16.mxu0 0
      %1054 = vmatpush1.bf16.msra.mxu0 0
      %1055 = vmatprep.mubr.bf16.mxu0 0
      %1056 = vmatmul.mubr.bf16.gmra.mrb[0].mxu0 %v1021
      %v1057 = vpop.f32.mrb[0].mxu0
      %v1058 = vadd.f32 0.0, %v1057
      %v1059 = vpop.f32.mrb[0].mxu0
      %v1060 = vpop.f32.mrb[0].mxu0
      %v1061 = vpop.f32.mrb[0].mxu0
      %1062 = vdwg.mxu0
      %v1063 = vadd.f32 %v984, %v1058
      %v1064 = vld [vmem:[%s492 + $0x1] sm:$0xf]
      %v1065 = vpack.c.bf16 %v1064, %v1064
      %s1066 = scalar_lea.vmem %s3, 224
      %v1067 = vld [vmem:[%s1066] sm:$0xf]
      %v1068 = vld [vmem:[%s1066 + $0x4] sm:$0xf]
      %v1069 = vld [vmem:[%s1066 + $0x8] sm:$0xf]
      %v1070 = vld [vmem:[%s1066 + $0xc] sm:$0xf]
      %v1071 = vld [vmem:[%s1066 + $0x10] sm:$0xf]
      %v1072 = vld [vmem:[%s1066 + $0x14] sm:$0xf]
      %v1073 = vld [vmem:[%s1066 + $0x18] sm:$0xf]
      %v1074 = vld [vmem:[%s1066 + $0x1c] sm:$0xf]
      %v1083 = vunpack.c.l.b16 %v1067
      %v1084 = vunpack.c.l.b16 %v1068
      %v1085 = vunpack.c.l.b16 %v1069
      %v1086 = vunpack.c.l.b16 %v1070
      %v1087 = vunpack.c.l.b16 %v1071
      %v1088 = vunpack.c.l.b16 %v1072
      %v1089 = vunpack.c.l.b16 %v1073
      %v1090 = vunpack.c.l.b16 %v1074
      %v1091 = vpack.c.b16 %v1084, %v1083
      %v1092 = vpack.c.b16 %v1086, %v1085
      %v1093 = vpack.c.b16 %v1088, %v1087
      %v1094 = vpack.c.b16 %v1090, %v1089
      %v1100 = vsel %vm545, %v1065, 0
      %1102 = vmatprep.subr.bf16.mxu0 0
      %1103 = vmatpush1.bf16.msra.mxu0 %v1091
      %1104 = vmatprep.subr.bf16.mxu0 0
      %1105 = vmatpush1.bf16.msra.mxu0 %v1092
      %1106 = vmatprep.subr.bf16.mxu0 0
      %1107 = vmatpush1.bf16.msra.mxu0 %v1093
      %1108 = vmatprep.subr.bf16.mxu0 0
      %1109 = vmatpush1.bf16.msra.mxu0 %v1094
      %1110 = vmatprep.subr.bf16.mxu0 0
      %1111 = vmatpush1.bf16.msra.mxu0 0
      %1112 = vmatprep.subr.bf16.mxu0 0
      %1113 = vmatpush1.bf16.msra.mxu0 0
      %1114 = vmatprep.subr.bf16.mxu0 0
      %1115 = vmatpush1.bf16.msra.mxu0 0
      %1116 = vmatprep.subr.bf16.mxu0 0
      %1117 = vmatpush1.bf16.msra.mxu0 0
      %1118 = vmatprep.subr.bf16.mxu0 0
      %1119 = vmatpush1.bf16.msra.mxu0 0
      %1120 = vmatprep.subr.bf16.mxu0 0
      %1121 = vmatpush1.bf16.msra.mxu0 0
      %1122 = vmatprep.subr.bf16.mxu0 0
      %1123 = vmatpush1.bf16.msra.mxu0 0
      %1124 = vmatprep.subr.bf16.mxu0 0
      %1125 = vmatpush1.bf16.msra.mxu0 0
      %1126 = vmatprep.subr.bf16.mxu0 0
      %1127 = vmatpush1.bf16.msra.mxu0 0
      %1128 = vmatprep.subr.bf16.mxu0 0
      %1129 = vmatpush1.bf16.msra.mxu0 0
      %1130 = vmatprep.subr.bf16.mxu0 0
      %1131 = vmatpush1.bf16.msra.mxu0 0
      %1132 = vmatprep.subr.bf16.mxu0 0
      %1133 = vmatpush1.bf16.msra.mxu0 0
      %1134 = vmatprep.mubr.bf16.mxu0 0
      %1135 = vmatmul.mubr.bf16.gmra.mrb[0].mxu0 %v1100
      %v1136 = vpop.f32.mrb[0].mxu0
      %v1137 = vadd.f32 0.0, %v1136
      %v1138 = vpop.f32.mrb[0].mxu0
      %v1139 = vpop.f32.mrb[0].mxu0
      %v1140 = vpop.f32.mrb[0].mxu0
      %1141 = vdwg.mxu0
      %v1142 = vadd.f32 %v1063, %v1137
      %v1143 = vld [vmem:[%s492 + $0x2] sm:$0xf]
      %v1144 = vpack.c.bf16 %v1143, %v1143
      %s1145 = scalar_lea.vmem %s3, 256
      %v1146 = vld [vmem:[%s1145] sm:$0xf]
      %v1147 = vld [vmem:[%s1145 + $0x4] sm:$0xf]
      %v1148 = vld [vmem:[%s1145 + $0x8] sm:$0xf]
      %v1149 = vld [vmem:[%s1145 + $0xc] sm:$0xf]
      %v1150 = vld [vmem:[%s1145 + $0x10] sm:$0xf]
      %v1151 = vld [vmem:[%s1145 + $0x14] sm:$0xf]
      %v1152 = vld [vmem:[%s1145 + $0x18] sm:$0xf]
      %v1153 = vld [vmem:[%s1145 + $0x1c] sm:$0xf]
      %v1162 = vunpack.c.l.b16 %v1146
      %v1163 = vunpack.c.l.b16 %v1147
      %v1164 = vunpack.c.l.b16 %v1148
      %v1165 = vunpack.c.l.b16 %v1149
      %v1166 = vunpack.c.l.b16 %v1150
      %v1167 = vunpack.c.l.b16 %v1151
      %v1168 = vunpack.c.l.b16 %v1152
      %v1169 = vunpack.c.l.b16 %v1153
      %v1170 = vpack.c.b16 %v1163, %v1162
      %v1171 = vpack.c.b16 %v1165, %v1164
      %v1172 = vpack.c.b16 %v1167, %v1166
      %v1173 = vpack.c.b16 %v1169, %v1168
      %v1179 = vsel %vm545, %v1144, 0
      %1181 = vmatprep.subr.bf16.mxu0 0
      %1182 = vmatpush1.bf16.msra.mxu0 %v1170
      %1183 = vmatprep.subr.bf16.mxu0 0
      %1184 = vmatpush1.bf16.msra.mxu0 %v1171
      %1185 = vmatprep.subr.bf16.mxu0 0
      %1186 = vmatpush1.bf16.msra.mxu0 %v1172
      %1187 = vmatprep.subr.bf16.mxu0 0
      %1188 = vmatpush1.bf16.msra.mxu0 %v1173
      %1189 = vmatprep.subr.bf16.mxu0 0
      %1190 = vmatpush1.bf16.msra.mxu0 0
      %1191 = vmatprep.subr.bf16.mxu0 0
      %1192 = vmatpush1.bf16.msra.mxu0 0
      %1193 = vmatprep.subr.bf16.mxu0 0
      %1194 = vmatpush1.bf16.msra.mxu0 0
      %1195 = vmatprep.subr.bf16.mxu0 0
      %1196 = vmatpush1.bf16.msra.mxu0 0
      %1197 = vmatprep.subr.bf16.mxu0 0
      %1198 = vmatpush1.bf16.msra.mxu0 0
      %1199 = vmatprep.subr.bf16.mxu0 0
      %1200 = vmatpush1.bf16.msra.mxu0 0
      %1201 = vmatprep.subr.bf16.mxu0 0
      %1202 = vmatpush1.bf16.msra.mxu0 0
      %1203 = vmatprep.subr.bf16.mxu0 0
      %1204 = vmatpush1.bf16.msra.mxu0 0
      %1205 = vmatprep.subr.bf16.mxu0 0
      %1206 = vmatpush1.bf16.msra.mxu0 0
      %1207 = vmatprep.subr.bf16.mxu0 0
      %1208 = vmatpush1.bf16.msra.mxu0 0
      %1209 = vmatprep.subr.bf16.mxu0 0
      %1210 = vmatpush1.bf16.msra.mxu0 0
      %1211 = vmatprep.subr.bf16.mxu0 0
      %1212 = vmatpush1.bf16.msra.mxu0 0
      %1213 = vmatprep.mubr.bf16.mxu0 0
      %1214 = vmatmul.mubr.bf16.gmra.mrb[0].mxu0 %v1179
      %v1215 = vpop.f32.mrb[0].mxu0
      %v1216 = vadd.f32 0.0, %v1215
      %v1217 = vpop.f32.mrb[0].mxu0
      %v1218 = vpop.f32.mrb[0].mxu0
      %v1219 = vpop.f32.mrb[0].mxu0
      %1220 = vdwg.mxu0
      %v1221 = vadd.f32 %v1142, %v1216
      %v1222 = vmul.f32 %v1221, 0.01
      %v1223 = vmax.f32 %v1221, %v1222
      %1224 = vst.msk [vmem:[%s229] sm:$0xf] %vm490, %v1223
      %v1225 = vld [vmem:[%s4] sm:$0x1]
      %v1227 = vlaneseq
      %v1228 = vshrl.u32 %v1227, 7
      %v1229 = vsub.s32 0, %v1228
      %v1230 = vrot.slane %v1225, %v1229
      %v1232 = vrot.slane %v472, 4
      %1233 = vrot.lane.b32.xlu0 %v1232, 64
      %v1234 = vpop.permute.xlu0 %1233
      %v1236 = vadd.f32 %v1230, %v1234
      %v1237 = vld [vmem:[%s489] sm:$0xf]
      %v1238 = vpack.c.bf16 %v1237, %v1237
      %v1239 = vld [vmem:[%s3] sm:$0xf]
      %v1240 = vld [vmem:[%s3 + $0x4] sm:$0xf]
      %v1241 = vld [vmem:[%s3 + $0x8] sm:$0xf]
      %v1242 = vld [vmem:[%s3 + $0xc] sm:$0xf]
      %v1243 = vld [vmem:[%s3 + $0x10] sm:$0xf]
      %v1244 = vld [vmem:[%s3 + $0x14] sm:$0xf]
      %v1245 = vld [vmem:[%s3 + $0x18] sm:$0xf]
      %v1246 = vld [vmem:[%s3 + $0x1c] sm:$0xf]
      %v1255 = vunpack.c.l.b16 %v1239
      %v1256 = vunpack.c.l.b16 %v1240
      %v1257 = vunpack.c.l.b16 %v1241
      %v1258 = vunpack.c.l.b16 %v1242
      %v1259 = vunpack.c.l.b16 %v1243
      %v1260 = vunpack.c.l.b16 %v1244
      %v1261 = vunpack.c.l.b16 %v1245
      %v1262 = vunpack.c.l.b16 %v1246
      %v1263 = vpack.c.b16 %v1256, %v1255
      %v1264 = vpack.c.b16 %v1258, %v1257
      %v1265 = vpack.c.b16 %v1260, %v1259
      %v1266 = vpack.c.b16 %v1262, %v1261
      %v1272 = vsel %vm545, %v1238, 0
      %1274 = vmatprep.subr.bf16.mxu0 0
      %1275 = vmatpush1.bf16.msra.mxu0 %v1263
      %1276 = vmatprep.subr.bf16.mxu0 0
      %1277 = vmatpush1.bf16.msra.mxu0 %v1264
      %1278 = vmatprep.subr.bf16.mxu0 0
      %1279 = vmatpush1.bf16.msra.mxu0 %v1265
      %1280 = vmatprep.subr.bf16.mxu0 0
      %1281 = vmatpush1.bf16.msra.mxu0 %v1266
      %1282 = vmatprep.subr.bf16.mxu0 0
      %1283 = vmatpush1.bf16.msra.mxu0 0
      %1284 = vmatprep.subr.bf16.mxu0 0
      %1285 = vmatpush1.bf16.msra.mxu0 0
      %1286 = vmatprep.subr.bf16.mxu0 0
      %1287 = vmatpush1.bf16.msra.mxu0 0
      %1288 = vmatprep.subr.bf16.mxu0 0
      %1289 = vmatpush1.bf16.msra.mxu0 0
      %1290 = vmatprep.subr.bf16.mxu0 0
      %1291 = vmatpush1.bf16.msra.mxu0 0
      %1292 = vmatprep.subr.bf16.mxu0 0
      %1293 = vmatpush1.bf16.msra.mxu0 0
      %1294 = vmatprep.subr.bf16.mxu0 0
      %1295 = vmatpush1.bf16.msra.mxu0 0
      %1296 = vmatprep.subr.bf16.mxu0 0
      %1297 = vmatpush1.bf16.msra.mxu0 0
      %1298 = vmatprep.subr.bf16.mxu0 0
      %1299 = vmatpush1.bf16.msra.mxu0 0
      %1300 = vmatprep.subr.bf16.mxu0 0
      %1301 = vmatpush1.bf16.msra.mxu0 0
      %1302 = vmatprep.subr.bf16.mxu0 0
      %1303 = vmatpush1.bf16.msra.mxu0 0
      %1304 = vmatprep.subr.bf16.mxu0 0
      %1305 = vmatpush1.bf16.msra.mxu0 0
      %1306 = vmatprep.mubr.bf16.mxu0 0
      %1307 = vmatmul.mubr.bf16.gmra.mrb[0].mxu0 %v1272
      %v1308 = vpop.f32.mrb[0].mxu0
      %v1309 = vadd.f32 0.0, %v1308
      %v1310 = vpop.f32.mrb[0].mxu0
      %v1311 = vpop.f32.mrb[0].mxu0
      %v1312 = vpop.f32.mrb[0].mxu0
      %1313 = vdwg.mxu0
      %v1314 = vadd.f32 %v1236, %v1309
      %v1315 = vld [vmem:[%s489 + $0x1] sm:$0xf]
      %v1316 = vpack.c.bf16 %v1315, %v1315
      %v1317 = vld [vmem:[%s592] sm:$0xf]
      %v1318 = vld [vmem:[%s592 + $0x4] sm:$0xf]
      %v1319 = vld [vmem:[%s592 + $0x8] sm:$0xf]
      %v1320 = vld [vmem:[%s592 + $0xc] sm:$0xf]
      %v1321 = vld [vmem:[%s592 + $0x10] sm:$0xf]
      %v1322 = vld [vmem:[%s592 + $0x14] sm:$0xf]
      %v1323 = vld [vmem:[%s592 + $0x18] sm:$0xf]
      %v1324 = vld [vmem:[%s592 + $0x1c] sm:$0xf]
      %v1333 = vunpack.c.l.b16 %v1317
      %v1334 = vunpack.c.l.b16 %v1318
      %v1335 = vunpack.c.l.b16 %v1319
      %v1336 = vunpack.c.l.b16 %v1320
      %v1337 = vunpack.c.l.b16 %v1321
      %v1338 = vunpack.c.l.b16 %v1322
      %v1339 = vunpack.c.l.b16 %v1323
      %v1340 = vunpack.c.l.b16 %v1324
      %v1341 = vpack.c.b16 %v1334, %v1333
      %v1342 = vpack.c.b16 %v1336, %v1335
      %v1343 = vpack.c.b16 %v1338, %v1337
      %v1344 = vpack.c.b16 %v1340, %v1339
      %v1350 = vsel %vm545, %v1316, 0
      %1352 = vmatprep.subr.bf16.mxu0 0
      %1353 = vmatpush1.bf16.msra.mxu0 %v1341
      %1354 = vmatprep.subr.bf16.mxu0 0
      %1355 = vmatpush1.bf16.msra.mxu0 %v1342
      %1356 = vmatprep.subr.bf16.mxu0 0
      %1357 = vmatpush1.bf16.msra.mxu0 %v1343
      %1358 = vmatprep.subr.bf16.mxu0 0
      %1359 = vmatpush1.bf16.msra.mxu0 %v1344
      %1360 = vmatprep.subr.bf16.mxu0 0
      %1361 = vmatpush1.bf16.msra.mxu0 0
      %1362 = vmatprep.subr.bf16.mxu0 0
      %1363 = vmatpush1.bf16.msra.mxu0 0
      %1364 = vmatprep.subr.bf16.mxu0 0
      %1365 = vmatpush1.bf16.msra.mxu0 0
      %1366 = vmatprep.subr.bf16.mxu0 0
      %1367 = vmatpush1.bf16.msra.mxu0 0
      %1368 = vmatprep.subr.bf16.mxu0 0
      %1369 = vmatpush1.bf16.msra.mxu0 0
      %1370 = vmatprep.subr.bf16.mxu0 0
      %1371 = vmatpush1.bf16.msra.mxu0 0
      %1372 = vmatprep.subr.bf16.mxu0 0
      %1373 = vmatpush1.bf16.msra.mxu0 0
      %1374 = vmatprep.subr.bf16.mxu0 0
      %1375 = vmatpush1.bf16.msra.mxu0 0
      %1376 = vmatprep.subr.bf16.mxu0 0
      %1377 = vmatpush1.bf16.msra.mxu0 0
      %1378 = vmatprep.subr.bf16.mxu0 0
      %1379 = vmatpush1.bf16.msra.mxu0 0
      %1380 = vmatprep.subr.bf16.mxu0 0
      %1381 = vmatpush1.bf16.msra.mxu0 0
      %1382 = vmatprep.subr.bf16.mxu0 0
      %1383 = vmatpush1.bf16.msra.mxu0 0
      %1384 = vmatprep.mubr.bf16.mxu0 0
      %1385 = vmatmul.mubr.bf16.gmra.mrb[0].mxu0 %v1350
      %v1386 = vpop.f32.mrb[0].mxu0
      %v1387 = vadd.f32 0.0, %v1386
      %v1388 = vpop.f32.mrb[0].mxu0
      %v1389 = vpop.f32.mrb[0].mxu0
      %v1390 = vpop.f32.mrb[0].mxu0
      %1391 = vdwg.mxu0
      %v1392 = vadd.f32 %v1314, %v1387
      %v1393 = vld [vmem:[%s489 + $0x2] sm:$0xf]
      %v1394 = vpack.c.bf16 %v1393, %v1393
      %v1395 = vld [vmem:[%s671] sm:$0xf]
      %v1396 = vld [vmem:[%s671 + $0x4] sm:$0xf]
      %v1397 = vld [vmem:[%s671 + $0x8] sm:$0xf]
      %v1398 = vld [vmem:[%s671 + $0xc] sm:$0xf]
      %v1399 = vld [vmem:[%s671 + $0x10] sm:$0xf]
      %v1400 = vld [vmem:[%s671 + $0x14] sm:$0xf]
      %v1401 = vld [vmem:[%s671 + $0x18] sm:$0xf]
      %v1402 = vld [vmem:[%s671 + $0x1c] sm:$0xf]
      %v1411 = vunpack.c.l.b16 %v1395
      %v1412 = vunpack.c.l.b16 %v1396
      %v1413 = vunpack.c.l.b16 %v1397
      %v1414 = vunpack.c.l.b16 %v1398
      %v1415 = vunpack.c.l.b16 %v1399
      %v1416 = vunpack.c.l.b16 %v1400
      %v1417 = vunpack.c.l.b16 %v1401
      %v1418 = vunpack.c.l.b16 %v1402
      %v1419 = vpack.c.b16 %v1412, %v1411
      %v1420 = vpack.c.b16 %v1414, %v1413
      %v1421 = vpack.c.b16 %v1416, %v1415
      %v1422 = vpack.c.b16 %v1418, %v1417
      %v1428 = vsel %vm545, %v1394, 0
      %1430 = vmatprep.subr.bf16.mxu0 0
      %1431 = vmatpush1.bf16.msra.mxu0 %v1419
      %1432 = vmatprep.subr.bf16.mxu0 0
      %1433 = vmatpush1.bf16.msra.mxu0 %v1420
      %1434 = vmatprep.subr.bf16.mxu0 0
      %1435 = vmatpush1.bf16.msra.mxu0 %v1421
      %1436 = vmatprep.subr.bf16.mxu0 0
      %1437 = vmatpush1.bf16.msra.mxu0 %v1422
      %1438 = vmatprep.subr.bf16.mxu0 0
      %1439 = vmatpush1.bf16.msra.mxu0 0
      %1440 = vmatprep.subr.bf16.mxu0 0
      %1441 = vmatpush1.bf16.msra.mxu0 0
      %1442 = vmatprep.subr.bf16.mxu0 0
      %1443 = vmatpush1.bf16.msra.mxu0 0
      %1444 = vmatprep.subr.bf16.mxu0 0
      %1445 = vmatpush1.bf16.msra.mxu0 0
      %1446 = vmatprep.subr.bf16.mxu0 0
      %1447 = vmatpush1.bf16.msra.mxu0 0
      %1448 = vmatprep.subr.bf16.mxu0 0
      %1449 = vmatpush1.bf16.msra.mxu0 0
      %1450 = vmatprep.subr.bf16.mxu0 0
      %1451 = vmatpush1.bf16.msra.mxu0 0
      %1452 = vmatprep.subr.bf16.mxu0 0
      %1453 = vmatpush1.bf16.msra.mxu0 0
      %1454 = vmatprep.subr.bf16.mxu0 0
      %1455 = vmatpush1.bf16.msra.mxu0 0
      %1456 = vmatprep.subr.bf16.mxu0 0
      %1457 = vmatpush1.bf16.msra.mxu0 0
      %1458 = vmatprep.subr.bf16.mxu0 0
      %1459 = vmatpush1.bf16.msra.mxu0 0
      %1460 = vmatprep.subr.bf16.mxu0 0
      %1461 = vmatpush1.bf16.msra.mxu0 0
      %1462 = vmatprep.mubr.bf16.mxu0 0
      %1463 = vmatmul.mubr.bf16.gmra.mrb[0].mxu0 %v1428
      %v1464 = vpop.f32.mrb[0].mxu0
      %v1465 = vadd.f32 0.0, %v1464
      %v1466 = vpop.f32.mrb[0].mxu0
      %v1467 = vpop.f32.mrb[0].mxu0
      %v1468 = vpop.f32.mrb[0].mxu0
      %1469 = vdwg.mxu0
      %v1470 = vadd.f32 %v1392, %v1465
      %v1471 = vld [vmem:[%s492] sm:$0xf]
      %v1472 = vpack.c.bf16 %v1471, %v1471
      %v1473 = vld [vmem:[%s750] sm:$0xf]
      %v1474 = vld [vmem:[%s750 + $0x4] sm:$0xf]
      %v1475 = vld [vmem:[%s750 + $0x8] sm:$0xf]
      %v1476 = vld [vmem:[%s750 + $0xc] sm:$0xf]
      %v1477 = vld [vmem:[%s750 + $0x10] sm:$0xf]
      %v1478 = vld [vmem:[%s750 + $0x14] sm:$0xf]
      %v1479 = vld [vmem:[%s750 + $0x18] sm:$0xf]
      %v1480 = vld [vmem:[%s750 + $0x1c] sm:$0xf]
      %v1489 = vunpack.c.l.b16 %v1473
      %v1490 = vunpack.c.l.b16 %v1474
      %v1491 = vunpack.c.l.b16 %v1475
      %v1492 = vunpack.c.l.b16 %v1476
      %v1493 = vunpack.c.l.b16 %v1477
      %v1494 = vunpack.c.l.b16 %v1478
      %v1495 = vunpack.c.l.b16 %v1479
      %v1496 = vunpack.c.l.b16 %v1480
      %v1497 = vpack.c.b16 %v1490, %v1489
      %v1498 = vpack.c.b16 %v1492, %v1491
      %v1499 = vpack.c.b16 %v1494, %v1493
      %v1500 = vpack.c.b16 %v1496, %v1495
      %v1506 = vsel %vm545, %v1472, 0
      %1508 = vmatprep.subr.bf16.mxu0 0
      %1509 = vmatpush1.bf16.msra.mxu0 %v1497
      %1510 = vmatprep.subr.bf16.mxu0 0
      %1511 = vmatpush1.bf16.msra.mxu0 %v1498
      %1512 = vmatprep.subr.bf16.mxu0 0
      %1513 = vmatpush1.bf16.msra.mxu0 %v1499
      %1514 = vmatprep.subr.bf16.mxu0 0
      %1515 = vmatpush1.bf16.msra.mxu0 %v1500
      %1516 = vmatprep.subr.bf16.mxu0 0
      %1517 = vmatpush1.bf16.msra.mxu0 0
      %1518 = vmatprep.subr.bf16.mxu0 0
      %1519 = vmatpush1.bf16.msra.mxu0 0
      %1520 = vmatprep.subr.bf16.mxu0 0
      %1521 = vmatpush1.bf16.msra.mxu0 0
      %1522 = vmatprep.subr.bf16.mxu0 0
      %1523 = vmatpush1.bf16.msra.mxu0 0
      %1524 = vmatprep.subr.bf16.mxu0 0
      %1525 = vmatpush1.bf16.msra.mxu0 0
      %1526 = vmatprep.subr.bf16.mxu0 0
      %1527 = vmatpush1.bf16.msra.mxu0 0
      %1528 = vmatprep.subr.bf16.mxu0 0
      %1529 = vmatpush1.bf16.msra.mxu0 0
      %1530 = vmatprep.subr.bf16.mxu0 0
      %1531 = vmatpush1.bf16.msra.mxu0 0
      %1532 = vmatprep.subr.bf16.mxu0 0
      %1533 = vmatpush1.bf16.msra.mxu0 0
      %1534 = vmatprep.subr.bf16.mxu0 0
      %1535 = vmatpush1.bf16.msra.mxu0 0
      %1536 = vmatprep.subr.bf16.mxu0 0
      %1537 = vmatpush1.bf16.msra.mxu0 0
      %1538 = vmatprep.subr.bf16.mxu0 0
      %1539 = vmatpush1.bf16.msra.mxu0 0
      %1540 = vmatprep.mubr.bf16.mxu0 0
      %1541 = vmatmul.mubr.bf16.gmra.mrb[0].mxu0 %v1506
      %v1542 = vpop.f32.mrb[0].mxu0
      %v1543 = vadd.f32 0.0, %v1542
      %v1544 = vpop.f32.mrb[0].mxu0
      %v1545 = vpop.f32.mrb[0].mxu0
      %v1546 = vpop.f32.mrb[0].mxu0
      %1547 = vdwg.mxu0
      %v1548 = vadd.f32 %v1470, %v1543
      %v1549 = vld [vmem:[%s492 + $0x1] sm:$0xf]
      %v1550 = vpack.c.bf16 %v1549, %v1549
      %v1551 = vld [vmem:[%s829] sm:$0xf]
      %v1552 = vld [vmem:[%s829 + $0x4] sm:$0xf]
      %v1553 = vld [vmem:[%s829 + $0x8] sm:$0xf]
      %v1554 = vld [vmem:[%s829 + $0xc] sm:$0xf]
      %v1555 = vld [vmem:[%s829 + $0x10] sm:$0xf]
      %v1556 = vld [vmem:[%s829 + $0x14] sm:$0xf]
      %v1557 = vld [vmem:[%s829 + $0x18] sm:$0xf]
      %v1558 = vld [vmem:[%s829 + $0x1c] sm:$0xf]
      %v1567 = vunpack.c.l.b16 %v1551
      %v1568 = vunpack.c.l.b16 %v1552
      %v1569 = vunpack.c.l.b16 %v1553
      %v1570 = vunpack.c.l.b16 %v1554
      %v1571 = vunpack.c.l.b16 %v1555
      %v1572 = vunpack.c.l.b16 %v1556
      %v1573 = vunpack.c.l.b16 %v1557
      %v1574 = vunpack.c.l.b16 %v1558
      %v1575 = vpack.c.b16 %v1568, %v1567
      %v1576 = vpack.c.b16 %v1570, %v1569
      %v1577 = vpack.c.b16 %v1572, %v1571
      %v1578 = vpack.c.b16 %v1574, %v1573
      %v1584 = vsel %vm545, %v1550, 0
      %1586 = vmatprep.subr.bf16.mxu0 0
      %1587 = vmatpush1.bf16.msra.mxu0 %v1575
      %1588 = vmatprep.subr.bf16.mxu0 0
      %1589 = vmatpush1.bf16.msra.mxu0 %v1576
      %1590 = vmatprep.subr.bf16.mxu0 0
      %1591 = vmatpush1.bf16.msra.mxu0 %v1577
      %1592 = vmatprep.subr.bf16.mxu0 0
      %1593 = vmatpush1.bf16.msra.mxu0 %v1578
      %1594 = vmatprep.subr.bf16.mxu0 0
      %1595 = vmatpush1.bf16.msra.mxu0 0
      %1596 = vmatprep.subr.bf16.mxu0 0
      %1597 = vmatpush1.bf16.msra.mxu0 0
      %1598 = vmatprep.subr.bf16.mxu0 0
      %1599 = vmatpush1.bf16.msra.mxu0 0
      %1600 = vmatprep.subr.bf16.mxu0 0
      %1601 = vmatpush1.bf16.msra.mxu0 0
      %1602 = vmatprep.subr.bf16.mxu0 0
      %1603 = vmatpush1.bf16.msra.mxu0 0
      %1604 = vmatprep.subr.bf16.mxu0 0
      %1605 = vmatpush1.bf16.msra.mxu0 0
      %1606 = vmatprep.subr.bf16.mxu0 0
      %1607 = vmatpush1.bf16.msra.mxu0 0
      %1608 = vmatprep.subr.bf16.mxu0 0
      %1609 = vmatpush1.bf16.msra.mxu0 0
      %1610 = vmatprep.subr.bf16.mxu0 0
      %1611 = vmatpush1.bf16.msra.mxu0 0
      %1612 = vmatprep.subr.bf16.mxu0 0
      %1613 = vmatpush1.bf16.msra.mxu0 0
      %1614 = vmatprep.subr.bf16.mxu0 0
      %1615 = vmatpush1.bf16.msra.mxu0 0
      %1616 = vmatprep.subr.bf16.mxu0 0
      %1617 = vmatpush1.bf16.msra.mxu0 0
      %1618 = vmatprep.mubr.bf16.mxu0 0
      %1619 = vmatmul.mubr.bf16.gmra.mrb[0].mxu0 %v1584
      %v1620 = vpop.f32.mrb[0].mxu0
      %v1621 = vadd.f32 0.0, %v1620
      %v1622 = vpop.f32.mrb[0].mxu0
      %v1623 = vpop.f32.mrb[0].mxu0
      %v1624 = vpop.f32.mrb[0].mxu0
      %1625 = vdwg.mxu0
      %v1626 = vadd.f32 %v1548, %v1621
      %v1627 = vld [vmem:[%s492 + $0x2] sm:$0xf]
      %v1628 = vpack.c.bf16 %v1627, %v1627
      %v1629 = vld [vmem:[%s908] sm:$0xf]
      %v1630 = vld [vmem:[%s908 + $0x4] sm:$0xf]
      %v1631 = vld [vmem:[%s908 + $0x8] sm:$0xf]
      %v1632 = vld [vmem:[%s908 + $0xc] sm:$0xf]
      %v1633 = vld [vmem:[%s908 + $0x10] sm:$0xf]
      %v1634 = vld [vmem:[%s908 + $0x14] sm:$0xf]
      %v1635 = vld [vmem:[%s908 + $0x18] sm:$0xf]
      %v1636 = vld [vmem:[%s908 + $0x1c] sm:$0xf]
      %v1645 = vunpack.c.l.b16 %v1629
      %v1646 = vunpack.c.l.b16 %v1630
      %v1647 = vunpack.c.l.b16 %v1631
      %v1648 = vunpack.c.l.b16 %v1632
      %v1649 = vunpack.c.l.b16 %v1633
      %v1650 = vunpack.c.l.b16 %v1634
      %v1651 = vunpack.c.l.b16 %v1635
      %v1652 = vunpack.c.l.b16 %v1636
      %v1653 = vpack.c.b16 %v1646, %v1645
      %v1654 = vpack.c.b16 %v1648, %v1647
      %v1655 = vpack.c.b16 %v1650, %v1649
      %v1656 = vpack.c.b16 %v1652, %v1651
      %v1662 = vsel %vm545, %v1628, 0
      %1664 = vmatprep.subr.bf16.mxu0 0
      %1665 = vmatpush1.bf16.msra.mxu0 %v1653
      %1666 = vmatprep.subr.bf16.mxu0 0
      %1667 = vmatpush1.bf16.msra.mxu0 %v1654
      %1668 = vmatprep.subr.bf16.mxu0 0
      %1669 = vmatpush1.bf16.msra.mxu0 %v1655
      %1670 = vmatprep.subr.bf16.mxu0 0
      %1671 = vmatpush1.bf16.msra.mxu0 %v1656
      %1672 = vmatprep.subr.bf16.mxu0 0
      %1673 = vmatpush1.bf16.msra.mxu0 0
      %1674 = vmatprep.subr.bf16.mxu0 0
      %1675 = vmatpush1.bf16.msra.mxu0 0
      %1676 = vmatprep.subr.bf16.mxu0 0
      %1677 = vmatpush1.bf16.msra.mxu0 0
      %1678 = vmatprep.subr.bf16.mxu0 0
      %1679 = vmatpush1.bf16.msra.mxu0 0
      %1680 = vmatprep.subr.bf16.mxu0 0
      %1681 = vmatpush1.bf16.msra.mxu0 0
      %1682 = vmatprep.subr.bf16.mxu0 0
      %1683 = vmatpush1.bf16.msra.mxu0 0
      %1684 = vmatprep.subr.bf16.mxu0 0
      %1685 = vmatpush1.bf16.msra.mxu0 0
      %1686 = vmatprep.subr.bf16.mxu0 0
      %1687 = vmatpush1.bf16.msra.mxu0 0
      %1688 = vmatprep.subr.bf16.mxu0 0
      %1689 = vmatpush1.bf16.msra.mxu0 0
      %1690 = vmatprep.subr.bf16.mxu0 0
      %1691 = vmatpush1.bf16.msra.mxu0 0
      %1692 = vmatprep.subr.bf16.mxu0 0
      %1693 = vmatpush1.bf16.msra.mxu0 0
      %1694 = vmatprep.subr.bf16.mxu0 0
      %1695 = vmatpush1.bf16.msra.mxu0 0
      %1696 = vmatprep.mubr.bf16.mxu0 0
      %1697 = vmatmul.mubr.bf16.gmra.mrb[0].mxu0 %v1662
      %v1698 = vpop.f32.mrb[0].mxu0
      %v1699 = vadd.f32 0.0, %v1698
      %v1700 = vpop.f32.mrb[0].mxu0
      %v1701 = vpop.f32.mrb[0].mxu0
      %v1702 = vpop.f32.mrb[0].mxu0
      %1703 = vdwg.mxu0
      %v1704 = vadd.f32 %v1626, %v1699
      %v1705 = vld [vmem:[%s495] sm:$0xf]
      %v1706 = vpack.c.bf16 %v1705, %v1705
      %v1707 = vld [vmem:[%s987] sm:$0xf]
      %v1708 = vld [vmem:[%s987 + $0x4] sm:$0xf]
      %v1709 = vld [vmem:[%s987 + $0x8] sm:$0xf]
      %v1710 = vld [vmem:[%s987 + $0xc] sm:$0xf]
      %v1711 = vld [vmem:[%s987 + $0x10] sm:$0xf]
      %v1712 = vld [vmem:[%s987 + $0x14] sm:$0xf]
      %v1713 = vld [vmem:[%s987 + $0x18] sm:$0xf]
      %v1714 = vld [vmem:[%s987 + $0x1c] sm:$0xf]
      %v1723 = vunpack.c.l.b16 %v1707
      %v1724 = vunpack.c.l.b16 %v1708
      %v1725 = vunpack.c.l.b16 %v1709
      %v1726 = vunpack.c.l.b16 %v1710
      %v1727 = vunpack.c.l.b16 %v1711
      %v1728 = vunpack.c.l.b16 %v1712
      %v1729 = vunpack.c.l.b16 %v1713
      %v1730 = vunpack.c.l.b16 %v1714
      %v1731 = vpack.c.b16 %v1724, %v1723
      %v1732 = vpack.c.b16 %v1726, %v1725
      %v1733 = vpack.c.b16 %v1728, %v1727
      %v1734 = vpack.c.b16 %v1730, %v1729
      %v1740 = vsel %vm545, %v1706, 0
      %1742 = vmatprep.subr.bf16.mxu0 0
      %1743 = vmatpush1.bf16.msra.mxu0 %v1731
      %1744 = vmatprep.subr.bf16.mxu0 0
      %1745 = vmatpush1.bf16.msra.mxu0 %v1732
      %1746 = vmatprep.subr.bf16.mxu0 0
      %1747 = vmatpush1.bf16.msra.mxu0 %v1733
      %1748 = vmatprep.subr.bf16.mxu0 0
      %1749 = vmatpush1.bf16.msra.mxu0 %v1734
      %1750 = vmatprep.subr.bf16.mxu0 0
      %1751 = vmatpush1.bf16.msra.mxu0 0
      %1752 = vmatprep.subr.bf16.mxu0 0
      %1753 = vmatpush1.bf16.msra.mxu0 0
      %1754 = vmatprep.subr.bf16.mxu0 0
      %1755 = vmatpush1.bf16.msra.mxu0 0
      %1756 = vmatprep.subr.bf16.mxu0 0
      %1757 = vmatpush1.bf16.msra.mxu0 0
      %1758 = vmatprep.subr.bf16.mxu0 0
      %1759 = vmatpush1.bf16.msra.mxu0 0
      %1760 = vmatprep.subr.bf16.mxu0 0
      %1761 = vmatpush1.bf16.msra.mxu0 0
      %1762 = vmatprep.subr.bf16.mxu0 0
      %1763 = vmatpush1.bf16.msra.mxu0 0
      %1764 = vmatprep.subr.bf16.mxu0 0
      %1765 = vmatpush1.bf16.msra.mxu0 0
      %1766 = vmatprep.subr.bf16.mxu0 0
      %1767 = vmatpush1.bf16.msra.mxu0 0
      %1768 = vmatprep.subr.bf16.mxu0 0
      %1769 = vmatpush1.bf16.msra.mxu0 0
      %1770 = vmatprep.subr.bf16.mxu0 0
      %1771 = vmatpush1.bf16.msra.mxu0 0
      %1772 = vmatprep.subr.bf16.mxu0 0
      %1773 = vmatpush1.bf16.msra.mxu0 0
      %1774 = vmatprep.mubr.bf16.mxu0 0
      %1775 = vmatmul.mubr.bf16.gmra.mrb[0].mxu0 %v1740
      %v1776 = vpop.f32.mrb[0].mxu0
      %v1777 = vadd.f32 0.0, %v1776
      %v1778 = vpop.f32.mrb[0].mxu0
      %v1779 = vpop.f32.mrb[0].mxu0
      %v1780 = vpop.f32.mrb[0].mxu0
      %1781 = vdwg.mxu0
      %v1782 = vadd.f32 %v1704, %v1777
      %v1783 = vld [vmem:[%s495 + $0x1] sm:$0xf]
      %v1784 = vpack.c.bf16 %v1783, %v1783
      %v1785 = vld [vmem:[%s1066] sm:$0xf]
      %v1786 = vld [vmem:[%s1066 + $0x4] sm:$0xf]
      %v1787 = vld [vmem:[%s1066 + $0x8] sm:$0xf]
      %v1788 = vld [vmem:[%s1066 + $0xc] sm:$0xf]
      %v1789 = vld [vmem:[%s1066 + $0x10] sm:$0xf]
      %v1790 = vld [vmem:[%s1066 + $0x14] sm:$0xf]
      %v1791 = vld [vmem:[%s1066 + $0x18] sm:$0xf]
      %v1792 = vld [vmem:[%s1066 + $0x1c] sm:$0xf]
      %v1801 = vunpack.c.l.b16 %v1785
      %v1802 = vunpack.c.l.b16 %v1786
      %v1803 = vunpack.c.l.b16 %v1787
      %v1804 = vunpack.c.l.b16 %v1788
      %v1805 = vunpack.c.l.b16 %v1789
      %v1806 = vunpack.c.l.b16 %v1790
      %v1807 = vunpack.c.l.b16 %v1791
      %v1808 = vunpack.c.l.b16 %v1792
      %v1809 = vpack.c.b16 %v1802, %v1801
      %v1810 = vpack.c.b16 %v1804, %v1803
      %v1811 = vpack.c.b16 %v1806, %v1805
      %v1812 = vpack.c.b16 %v1808, %v1807
      %v1818 = vsel %vm545, %v1784, 0
      %1820 = vmatprep.subr.bf16.mxu0 0
      %1821 = vmatpush1.bf16.msra.mxu0 %v1809
      %1822 = vmatprep.subr.bf16.mxu0 0
      %1823 = vmatpush1.bf16.msra.mxu0 %v1810
      %1824 = vmatprep.subr.bf16.mxu0 0
      %1825 = vmatpush1.bf16.msra.mxu0 %v1811
      %1826 = vmatprep.subr.bf16.mxu0 0
      %1827 = vmatpush1.bf16.msra.mxu0 %v1812
      %1828 = vmatprep.subr.bf16.mxu0 0
      %1829 = vmatpush1.bf16.msra.mxu0 0
      %1830 = vmatprep.subr.bf16.mxu0 0
      %1831 = vmatpush1.bf16.msra.mxu0 0
      %1832 = vmatprep.subr.bf16.mxu0 0
      %1833 = vmatpush1.bf16.msra.mxu0 0
      %1834 = vmatprep.subr.bf16.mxu0 0
      %1835 = vmatpush1.bf16.msra.mxu0 0
      %1836 = vmatprep.subr.bf16.mxu0 0
      %1837 = vmatpush1.bf16.msra.mxu0 0
      %1838 = vmatprep.subr.bf16.mxu0 0
      %1839 = vmatpush1.bf16.msra.mxu0 0
      %1840 = vmatprep.subr.bf16.mxu0 0
      %1841 = vmatpush1.bf16.msra.mxu0 0
      %1842 = vmatprep.subr.bf16.mxu0 0
      %1843 = vmatpush1.bf16.msra.mxu0 0
      %1844 = vmatprep.subr.bf16.mxu0 0
      %1845 = vmatpush1.bf16.msra.mxu0 0
      %1846 = vmatprep.subr.bf16.mxu0 0
      %1847 = vmatpush1.bf16.msra.mxu0 0
      %1848 = vmatprep.subr.bf16.mxu0 0
      %1849 = vmatpush1.bf16.msra.mxu0 0
      %1850 = vmatprep.subr.bf16.mxu0 0
      %1851 = vmatpush1.bf16.msra.mxu0 0
      %1852 = vmatprep.mubr.bf16.mxu0 0
      %1853 = vmatmul.mubr.bf16.gmra.mrb[0].mxu0 %v1818
      %v1854 = vpop.f32.mrb[0].mxu0
      %v1855 = vadd.f32 0.0, %v1854
      %v1856 = vpop.f32.mrb[0].mxu0
      %v1857 = vpop.f32.mrb[0].mxu0
      %v1858 = vpop.f32.mrb[0].mxu0
      %1859 = vdwg.mxu0
      %v1860 = vadd.f32 %v1782, %v1855
      %v1861 = vld [vmem:[%s495 + $0x2] sm:$0xf]
      %v1862 = vpack.c.bf16 %v1861, %v1861
      %v1863 = vld [vmem:[%s1145] sm:$0xf]
      %v1864 = vld [vmem:[%s1145 + $0x4] sm:$0xf]
      %v1865 = vld [vmem:[%s1145 + $0x8] sm:$0xf]
      %v1866 = vld [vmem:[%s1145 + $0xc] sm:$0xf]
      %v1867 = vld [vmem:[%s1145 + $0x10] sm:$0xf]
      %v1868 = vld [vmem:[%s1145 + $0x14] sm:$0xf]
      %v1869 = vld [vmem:[%s1145 + $0x18] sm:$0xf]
      %v1870 = vld [vmem:[%s1145 + $0x1c] sm:$0xf]
      %v1879 = vunpack.c.l.b16 %v1863
      %v1880 = vunpack.c.l.b16 %v1864
      %v1881 = vunpack.c.l.b16 %v1865
      %v1882 = vunpack.c.l.b16 %v1866
      %v1883 = vunpack.c.l.b16 %v1867
      %v1884 = vunpack.c.l.b16 %v1868
      %v1885 = vunpack.c.l.b16 %v1869
      %v1886 = vunpack.c.l.b16 %v1870
      %v1887 = vpack.c.b16 %v1880, %v1879
      %v1888 = vpack.c.b16 %v1882, %v1881
      %v1889 = vpack.c.b16 %v1884, %v1883
      %v1890 = vpack.c.b16 %v1886, %v1885
      %v1896 = vsel %vm545, %v1862, 0
      %1898 = vmatprep.subr.bf16.mxu0 0
      %1899 = vmatpush1.bf16.msra.mxu0 %v1887
      %1900 = vmatprep.subr.bf16.mxu0 0
      %1901 = vmatpush1.bf16.msra.mxu0 %v1888
      %1902 = vmatprep.subr.bf16.mxu0 0
      %1903 = vmatpush1.bf16.msra.mxu0 %v1889
      %1904 = vmatprep.subr.bf16.mxu0 0
      %1905 = vmatpush1.bf16.msra.mxu0 %v1890
      %1906 = vmatprep.subr.bf16.mxu0 0
      %1907 = vmatpush1.bf16.msra.mxu0 0
      %1908 = vmatprep.subr.bf16.mxu0 0
      %1909 = vmatpush1.bf16.msra.mxu0 0
      %1910 = vmatprep.subr.bf16.mxu0 0
      %1911 = vmatpush1.bf16.msra.mxu0 0
      %1912 = vmatprep.subr.bf16.mxu0 0
      %1913 = vmatpush1.bf16.msra.mxu0 0
      %1914 = vmatprep.subr.bf16.mxu0 0
      %1915 = vmatpush1.bf16.msra.mxu0 0
      %1916 = vmatprep.subr.bf16.mxu0 0
      %1917 = vmatpush1.bf16.msra.mxu0 0
      %1918 = vmatprep.subr.bf16.mxu0 0
      %1919 = vmatpush1.bf16.msra.mxu0 0
      %1920 = vmatprep.subr.bf16.mxu0 0
      %1921 = vmatpush1.bf16.msra.mxu0 0
      %1922 = vmatprep.subr.bf16.mxu0 0
      %1923 = vmatpush1.bf16.msra.mxu0 0
      %1924 = vmatprep.subr.bf16.mxu0 0
      %1925 = vmatpush1.bf16.msra.mxu0 0
      %1926 = vmatprep.subr.bf16.mxu0 0
      %1927 = vmatpush1.bf16.msra.mxu0 0
      %1928 = vmatprep.subr.bf16.mxu0 0
      %1929 = vmatpush1.bf16.msra.mxu0 0
      %1930 = vmatprep.mubr.bf16.mxu0 0
      %1931 = vmatmul.mubr.bf16.gmra.mrb[0].mxu0 %v1896
      %v1932 = vpop.f32.mrb[0].mxu0
      %v1933 = vadd.f32 0.0, %v1932
      %v1934 = vpop.f32.mrb[0].mxu0
      %v1935 = vpop.f32.mrb[0].mxu0
      %v1936 = vpop.f32.mrb[0].mxu0
      %1937 = vdwg.mxu0
      %v1938 = vadd.f32 %v1860, %v1933
      %v1939 = vmul.f32 %v1938, 0.01
      %v1940 = vmax.f32 %v1938, %v1939
      %1941 = vst.msk [vmem:[%s229 + $0x4] sm:$0xf] %vm490, %v1940
      %v1942 = vld [vmem:[%s4] sm:$0x1]
      %v1944 = vlaneseq
      %v1945 = vshrl.u32 %v1944, 7
      %v1946 = vsub.s32 0, %v1945
      %v1947 = vrot.slane %v1942, %v1946
      %1950 = vrot.lane.b32.xlu0 %v475, 64
      %v1951 = vpop.permute.xlu0 %1950
      %v1953 = vadd.f32 %v1947, %v1951
      %v1954 = vld [vmem:[%s492] sm:$0xf]
      %v1955 = vpack.c.bf16 %v1954, %v1954
      %v1956 = vld [vmem:[%s3] sm:$0xf]
      %v1957 = vld [vmem:[%s3 + $0x4] sm:$0xf]
      %v1958 = vld [vmem:[%s3 + $0x8] sm:$0xf]
      %v1959 = vld [vmem:[%s3 + $0xc] sm:$0xf]
      %v1960 = vld [vmem:[%s3 + $0x10] sm:$0xf]
      %v1961 = vld [vmem:[%s3 + $0x14] sm:$0xf]
      %v1962 = vld [vmem:[%s3 + $0x18] sm:$0xf]
      %v1963 = vld [vmem:[%s3 + $0x1c] sm:$0xf]
      %v1972 = vunpack.c.l.b16 %v1956
      %v1973 = vunpack.c.l.b16 %v1957
      %v1974 = vunpack.c.l.b16 %v1958
      %v1975 = vunpack.c.l.b16 %v1959
      %v1976 = vunpack.c.l.b16 %v1960
      %v1977 = vunpack.c.l.b16 %v1961
      %v1978 = vunpack.c.l.b16 %v1962
      %v1979 = vunpack.c.l.b16 %v1963
      %v1980 = vpack.c.b16 %v1973, %v1972
      %v1981 = vpack.c.b16 %v1975, %v1974
      %v1982 = vpack.c.b16 %v1977, %v1976
      %v1983 = vpack.c.b16 %v1979, %v1978
      %v1989 = vsel %vm545, %v1955, 0
      %1991 = vmatprep.subr.bf16.mxu0 0
      %1992 = vmatpush1.bf16.msra.mxu0 %v1980
      %1993 = vmatprep.subr.bf16.mxu0 0
      %1994 = vmatpush1.bf16.msra.mxu0 %v1981
      %1995 = vmatprep.subr.bf16.mxu0 0
      %1996 = vmatpush1.bf16.msra.mxu0 %v1982
      %1997 = vmatprep.subr.bf16.mxu0 0
      %1998 = vmatpush1.bf16.msra.mxu0 %v1983
      %1999 = vmatprep.subr.bf16.mxu0 0
      %2000 = vmatpush1.bf16.msra.mxu0 0
      %2001 = vmatprep.subr.bf16.mxu0 0
      %2002 = vmatpush1.bf16.msra.mxu0 0
      %2003 = vmatprep.subr.bf16.mxu0 0
      %2004 = vmatpush1.bf16.msra.mxu0 0
      %2005 = vmatprep.subr.bf16.mxu0 0
      %2006 = vmatpush1.bf16.msra.mxu0 0
      %2007 = vmatprep.subr.bf16.mxu0 0
      %2008 = vmatpush1.bf16.msra.mxu0 0
      %2009 = vmatprep.subr.bf16.mxu0 0
      %2010 = vmatpush1.bf16.msra.mxu0 0
      %2011 = vmatprep.subr.bf16.mxu0 0
      %2012 = vmatpush1.bf16.msra.mxu0 0
      %2013 = vmatprep.subr.bf16.mxu0 0
      %2014 = vmatpush1.bf16.msra.mxu0 0
      %2015 = vmatprep.subr.bf16.mxu0 0
      %2016 = vmatpush1.bf16.msra.mxu0 0
      %2017 = vmatprep.subr.bf16.mxu0 0
      %2018 = vmatpush1.bf16.msra.mxu0 0
      %2019 = vmatprep.subr.bf16.mxu0 0
      %2020 = vmatpush1.bf16.msra.mxu0 0
      %2021 = vmatprep.subr.bf16.mxu0 0
      %2022 = vmatpush1.bf16.msra.mxu0 0
      %2023 = vmatprep.mubr.bf16.mxu0 0
      %2024 = vmatmul.mubr.bf16.gmra.mrb[0].mxu0 %v1989
      %v2025 = vpop.f32.mrb[0].mxu0
      %v2026 = vadd.f32 0.0, %v2025
      %v2027 = vpop.f32.mrb[0].mxu0
      %v2028 = vpop.f32.mrb[0].mxu0
      %v2029 = vpop.f32.mrb[0].mxu0
      %2030 = vdwg.mxu0
      %v2031 = vadd.f32 %v1953, %v2026
      %v2032 = vld [vmem:[%s492 + $0x1] sm:$0xf]
      %v2033 = vpack.c.bf16 %v2032, %v2032
      %v2034 = vld [vmem:[%s592] sm:$0xf]
      %v2035 = vld [vmem:[%s592 + $0x4] sm:$0xf]
      %v2036 = vld [vmem:[%s592 + $0x8] sm:$0xf]
      %v2037 = vld [vmem:[%s592 + $0xc] sm:$0xf]
      %v2038 = vld [vmem:[%s592 + $0x10] sm:$0xf]
      %v2039 = vld [vmem:[%s592 + $0x14] sm:$0xf]
      %v2040 = vld [vmem:[%s592 + $0x18] sm:$0xf]
      %v2041 = vld [vmem:[%s592 + $0x1c] sm:$0xf]
      %v2050 = vunpack.c.l.b16 %v2034
      %v2051 = vunpack.c.l.b16 %v2035
      %v2052 = vunpack.c.l.b16 %v2036
      %v2053 = vunpack.c.l.b16 %v2037
      %v2054 = vunpack.c.l.b16 %v2038
      %v2055 = vunpack.c.l.b16 %v2039
      %v2056 = vunpack.c.l.b16 %v2040
      %v2057 = vunpack.c.l.b16 %v2041
      %v2058 = vpack.c.b16 %v2051, %v2050
      %v2059 = vpack.c.b16 %v2053, %v2052
      %v2060 = vpack.c.b16 %v2055, %v2054
      %v2061 = vpack.c.b16 %v2057, %v2056
      %v2067 = vsel %vm545, %v2033, 0
      %2069 = vmatprep.subr.bf16.mxu0 0
      %2070 = vmatpush1.bf16.msra.mxu0 %v2058
      %2071 = vmatprep.subr.bf16.mxu0 0
      %2072 = vmatpush1.bf16.msra.mxu0 %v2059
      %2073 = vmatprep.subr.bf16.mxu0 0
      %2074 = vmatpush1.bf16.msra.mxu0 %v2060
      %2075 = vmatprep.subr.bf16.mxu0 0
      %2076 = vmatpush1.bf16.msra.mxu0 %v2061
      %2077 = vmatprep.subr.bf16.mxu0 0
      %2078 = vmatpush1.bf16.msra.mxu0 0
      %2079 = vmatprep.subr.bf16.mxu0 0
      %2080 = vmatpush1.bf16.msra.mxu0 0
      %2081 = vmatprep.subr.bf16.mxu0 0
      %2082 = vmatpush1.bf16.msra.mxu0 0
      %2083 = vmatprep.subr.bf16.mxu0 0
      %2084 = vmatpush1.bf16.msra.mxu0 0
      %2085 = vmatprep.subr.bf16.mxu0 0
      %2086 = vmatpush1.bf16.msra.mxu0 0
      %2087 = vmatprep.subr.bf16.mxu0 0
      %2088 = vmatpush1.bf16.msra.mxu0 0
      %2089 = vmatprep.subr.bf16.mxu0 0
      %2090 = vmatpush1.bf16.msra.mxu0 0
      %2091 = vmatprep.subr.bf16.mxu0 0
      %2092 = vmatpush1.bf16.msra.mxu0 0
      %2093 = vmatprep.subr.bf16.mxu0 0
      %2094 = vmatpush1.bf16.msra.mxu0 0
      %2095 = vmatprep.subr.bf16.mxu0 0
      %2096 = vmatpush1.bf16.msra.mxu0 0
      %2097 = vmatprep.subr.bf16.mxu0 0
      %2098 = vmatpush1.bf16.msra.mxu0 0
      %2099 = vmatprep.subr.bf16.mxu0 0
      %2100 = vmatpush1.bf16.msra.mxu0 0
      %2101 = vmatprep.mubr.bf16.mxu0 0
      %2102 = vmatmul.mubr.bf16.gmra.mrb[0].mxu0 %v2067
      %v2103 = vpop.f32.mrb[0].mxu0
      %v2104 = vadd.f32 0.0, %v2103
      %v2105 = vpop.f32.mrb[0].mxu0
      %v2106 = vpop.f32.mrb[0].mxu0
      %v2107 = vpop.f32.mrb[0].mxu0
      %2108 = vdwg.mxu0
      %v2109 = vadd.f32 %v2031, %v2104
      %v2110 = vld [vmem:[%s492 + $0x2] sm:$0xf]
      %v2111 = vpack.c.bf16 %v2110, %v2110
      %v2112 = vld [vmem:[%s671] sm:$0xf]
      %v2113 = vld [vmem:[%s671 + $0x4] sm:$0xf]
      %v2114 = vld [vmem:[%s671 + $0x8] sm:$0xf]
      %v2115 = vld [vmem:[%s671 + $0xc] sm:$0xf]
      %v2116 = vld [vmem:[%s671 + $0x10] sm:$0xf]
      %v2117 = vld [vmem:[%s671 + $0x14] sm:$0xf]
      %v2118 = vld [vmem:[%s671 + $0x18] sm:$0xf]
      %v2119 = vld [vmem:[%s671 + $0x1c] sm:$0xf]
      %v2128 = vunpack.c.l.b16 %v2112
      %v2129 = vunpack.c.l.b16 %v2113
      %v2130 = vunpack.c.l.b16 %v2114
      %v2131 = vunpack.c.l.b16 %v2115
      %v2132 = vunpack.c.l.b16 %v2116
      %v2133 = vunpack.c.l.b16 %v2117
      %v2134 = vunpack.c.l.b16 %v2118
      %v2135 = vunpack.c.l.b16 %v2119
      %v2136 = vpack.c.b16 %v2129, %v2128
      %v2137 = vpack.c.b16 %v2131, %v2130
      %v2138 = vpack.c.b16 %v2133, %v2132
      %v2139 = vpack.c.b16 %v2135, %v2134
      %v2145 = vsel %vm545, %v2111, 0
      %2147 = vmatprep.subr.bf16.mxu0 0
      %2148 = vmatpush1.bf16.msra.mxu0 %v2136
      %2149 = vmatprep.subr.bf16.mxu0 0
      %2150 = vmatpush1.bf16.msra.mxu0 %v2137
      %2151 = vmatprep.subr.bf16.mxu0 0
      %2152 = vmatpush1.bf16.msra.mxu0 %v2138
      %2153 = vmatprep.subr.bf16.mxu0 0
      %2154 = vmatpush1.bf16.msra.mxu0 %v2139
      %2155 = vmatprep.subr.bf16.mxu0 0
      %2156 = vmatpush1.bf16.msra.mxu0 0
      %2157 = vmatprep.subr.bf16.mxu0 0
      %2158 = vmatpush1.bf16.msra.mxu0 0
      %2159 = vmatprep.subr.bf16.mxu0 0
      %2160 = vmatpush1.bf16.msra.mxu0 0
      %2161 = vmatprep.subr.bf16.mxu0 0
      %2162 = vmatpush1.bf16.msra.mxu0 0
      %2163 = vmatprep.subr.bf16.mxu0 0
      %2164 = vmatpush1.bf16.msra.mxu0 0
      %2165 = vmatprep.subr.bf16.mxu0 0
      %2166 = vmatpush1.bf16.msra.mxu0 0
      %2167 = vmatprep.subr.bf16.mxu0 0
      %2168 = vmatpush1.bf16.msra.mxu0 0
      %2169 = vmatprep.subr.bf16.mxu0 0
      %2170 = vmatpush1.bf16.msra.mxu0 0
      %2171 = vmatprep.subr.bf16.mxu0 0
      %2172 = vmatpush1.bf16.msra.mxu0 0
      %2173 = vmatprep.subr.bf16.mxu0 0
      %2174 = vmatpush1.bf16.msra.mxu0 0
      %2175 = vmatprep.subr.bf16.mxu0 0
      %2176 = vmatpush1.bf16.msra.mxu0 0
      %2177 = vmatprep.subr.bf16.mxu0 0
      %2178 = vmatpush1.bf16.msra.mxu0 0
      %2179 = vmatprep.mubr.bf16.mxu0 0
      %2180 = vmatmul.mubr.bf16.gmra.mrb[0].mxu0 %v2145
      %v2181 = vpop.f32.mrb[0].mxu0
      %v2182 = vadd.f32 0.0, %v2181
      %v2183 = vpop.f32.mrb[0].mxu0
      %v2184 = vpop.f32.mrb[0].mxu0
      %v2185 = vpop.f32.mrb[0].mxu0
      %2186 = vdwg.mxu0
      %v2187 = vadd.f32 %v2109, %v2182
      %v2188 = vld [vmem:[%s495] sm:$0xf]
      %v2189 = vpack.c.bf16 %v2188, %v2188
      %v2190 = vld [vmem:[%s750] sm:$0xf]
      %v2191 = vld [vmem:[%s750 + $0x4] sm:$0xf]
      %v2192 = vld [vmem:[%s750 + $0x8] sm:$0xf]
      %v2193 = vld [vmem:[%s750 + $0xc] sm:$0xf]
      %v2194 = vld [vmem:[%s750 + $0x10] sm:$0xf]
      %v2195 = vld [vmem:[%s750 + $0x14] sm:$0xf]
      %v2196 = vld [vmem:[%s750 + $0x18] sm:$0xf]
      %v2197 = vld [vmem:[%s750 + $0x1c] sm:$0xf]
      %v2206 = vunpack.c.l.b16 %v2190
      %v2207 = vunpack.c.l.b16 %v2191
      %v2208 = vunpack.c.l.b16 %v2192
      %v2209 = vunpack.c.l.b16 %v2193
      %v2210 = vunpack.c.l.b16 %v2194
      %v2211 = vunpack.c.l.b16 %v2195
      %v2212 = vunpack.c.l.b16 %v2196
      %v2213 = vunpack.c.l.b16 %v2197
      %v2214 = vpack.c.b16 %v2207, %v2206
      %v2215 = vpack.c.b16 %v2209, %v2208
      %v2216 = vpack.c.b16 %v2211, %v2210
      %v2217 = vpack.c.b16 %v2213, %v2212
      %v2223 = vsel %vm545, %v2189, 0
      %2225 = vmatprep.subr.bf16.mxu0 0
      %2226 = vmatpush1.bf16.msra.mxu0 %v2214
      %2227 = vmatprep.subr.bf16.mxu0 0
      %2228 = vmatpush1.bf16.msra.mxu0 %v2215
      %2229 = vmatprep.subr.bf16.mxu0 0
      %2230 = vmatpush1.bf16.msra.mxu0 %v2216
      %2231 = vmatprep.subr.bf16.mxu0 0
      %2232 = vmatpush1.bf16.msra.mxu0 %v2217
      %2233 = vmatprep.subr.bf16.mxu0 0
      %2234 = vmatpush1.bf16.msra.mxu0 0
      %2235 = vmatprep.subr.bf16.mxu0 0
      %2236 = vmatpush1.bf16.msra.mxu0 0
      %2237 = vmatprep.subr.bf16.mxu0 0
      %2238 = vmatpush1.bf16.msra.mxu0 0
      %2239 = vmatprep.subr.bf16.mxu0 0
      %2240 = vmatpush1.bf16.msra.mxu0 0
      %2241 = vmatprep.subr.bf16.mxu0 0
      %2242 = vmatpush1.bf16.msra.mxu0 0
      %2243 = vmatprep.subr.bf16.mxu0 0
      %2244 = vmatpush1.bf16.msra.mxu0 0
      %2245 = vmatprep.subr.bf16.mxu0 0
      %2246 = vmatpush1.bf16.msra.mxu0 0
      %2247 = vmatprep.subr.bf16.mxu0 0
      %2248 = vmatpush1.bf16.msra.mxu0 0
      %2249 = vmatprep.subr.bf16.mxu0 0
      %2250 = vmatpush1.bf16.msra.mxu0 0
      %2251 = vmatprep.subr.bf16.mxu0 0
      %2252 = vmatpush1.bf16.msra.mxu0 0
      %2253 = vmatprep.subr.bf16.mxu0 0
      %2254 = vmatpush1.bf16.msra.mxu0 0
      %2255 = vmatprep.subr.bf16.mxu0 0
      %2256 = vmatpush1.bf16.msra.mxu0 0
      %2257 = vmatprep.mubr.bf16.mxu0 0
      %2258 = vmatmul.mubr.bf16.gmra.mrb[0].mxu0 %v2223
      %v2259 = vpop.f32.mrb[0].mxu0
      %v2260 = vadd.f32 0.0, %v2259
      %v2261 = vpop.f32.mrb[0].mxu0
      %v2262 = vpop.f32.mrb[0].mxu0
      %v2263 = vpop.f32.mrb[0].mxu0
      %2264 = vdwg.mxu0
      %v2265 = vadd.f32 %v2187, %v2260
      %v2266 = vld [vmem:[%s495 + $0x1] sm:$0xf]
      %v2267 = vpack.c.bf16 %v2266, %v2266
      %v2268 = vld [vmem:[%s829] sm:$0xf]
      %v2269 = vld [vmem:[%s829 + $0x4] sm:$0xf]
      %v2270 = vld [vmem:[%s829 + $0x8] sm:$0xf]
      %v2271 = vld [vmem:[%s829 + $0xc] sm:$0xf]
      %v2272 = vld [vmem:[%s829 + $0x10] sm:$0xf]
      %v2273 = vld [vmem:[%s829 + $0x14] sm:$0xf]
      %v2274 = vld [vmem:[%s829 + $0x18] sm:$0xf]
      %v2275 = vld [vmem:[%s829 + $0x1c] sm:$0xf]
      %v2284 = vunpack.c.l.b16 %v2268
      %v2285 = vunpack.c.l.b16 %v2269
      %v2286 = vunpack.c.l.b16 %v2270
      %v2287 = vunpack.c.l.b16 %v2271
      %v2288 = vunpack.c.l.b16 %v2272
      %v2289 = vunpack.c.l.b16 %v2273
      %v2290 = vunpack.c.l.b16 %v2274
      %v2291 = vunpack.c.l.b16 %v2275
      %v2292 = vpack.c.b16 %v2285, %v2284
      %v2293 = vpack.c.b16 %v2287, %v2286
      %v2294 = vpack.c.b16 %v2289, %v2288
      %v2295 = vpack.c.b16 %v2291, %v2290
      %v2301 = vsel %vm545, %v2267, 0
      %2303 = vmatprep.subr.bf16.mxu0 0
      %2304 = vmatpush1.bf16.msra.mxu0 %v2292
      %2305 = vmatprep.subr.bf16.mxu0 0
      %2306 = vmatpush1.bf16.msra.mxu0 %v2293
      %2307 = vmatprep.subr.bf16.mxu0 0
      %2308 = vmatpush1.bf16.msra.mxu0 %v2294
      %2309 = vmatprep.subr.bf16.mxu0 0
      %2310 = vmatpush1.bf16.msra.mxu0 %v2295
      %2311 = vmatprep.subr.bf16.mxu0 0
      %2312 = vmatpush1.bf16.msra.mxu0 0
      %2313 = vmatprep.subr.bf16.mxu0 0
      %2314 = vmatpush1.bf16.msra.mxu0 0
      %2315 = vmatprep.subr.bf16.mxu0 0
      %2316 = vmatpush1.bf16.msra.mxu0 0
      %2317 = vmatprep.subr.bf16.mxu0 0
      %2318 = vmatpush1.bf16.msra.mxu0 0
      %2319 = vmatprep.subr.bf16.mxu0 0
      %2320 = vmatpush1.bf16.msra.mxu0 0
      %2321 = vmatprep.subr.bf16.mxu0 0
      %2322 = vmatpush1.bf16.msra.mxu0 0
      %2323 = vmatprep.subr.bf16.mxu0 0
      %2324 = vmatpush1.bf16.msra.mxu0 0
      %2325 = vmatprep.subr.bf16.mxu0 0
      %2326 = vmatpush1.bf16.msra.mxu0 0
      %2327 = vmatprep.subr.bf16.mxu0 0
      %2328 = vmatpush1.bf16.msra.mxu0 0
      %2329 = vmatprep.subr.bf16.mxu0 0
      %2330 = vmatpush1.bf16.msra.mxu0 0
      %2331 = vmatprep.subr.bf16.mxu0 0
      %2332 = vmatpush1.bf16.msra.mxu0 0
      %2333 = vmatprep.subr.bf16.mxu0 0
      %2334 = vmatpush1.bf16.msra.mxu0 0
      %2335 = vmatprep.mubr.bf16.mxu0 0
      %2336 = vmatmul.mubr.bf16.gmra.mrb[0].mxu0 %v2301
      %v2337 = vpop.f32.mrb[0].mxu0
      %v2338 = vadd.f32 0.0, %v2337
      %v2339 = vpop.f32.mrb[0].mxu0
      %v2340 = vpop.f32.mrb[0].mxu0
      %v2341 = vpop.f32.mrb[0].mxu0
      %2342 = vdwg.mxu0
      %v2343 = vadd.f32 %v2265, %v2338
      %v2344 = vld [vmem:[%s495 + $0x2] sm:$0xf]
      %v2345 = vpack.c.bf16 %v2344, %v2344
      %v2346 = vld [vmem:[%s908] sm:$0xf]
      %v2347 = vld [vmem:[%s908 + $0x4] sm:$0xf]
      %v2348 = vld [vmem:[%s908 + $0x8] sm:$0xf]
      %v2349 = vld [vmem:[%s908 + $0xc] sm:$0xf]
      %v2350 = vld [vmem:[%s908 + $0x10] sm:$0xf]
      %v2351 = vld [vmem:[%s908 + $0x14] sm:$0xf]
      %v2352 = vld [vmem:[%s908 + $0x18] sm:$0xf]
      %v2353 = vld [vmem:[%s908 + $0x1c] sm:$0xf]
      %v2362 = vunpack.c.l.b16 %v2346
      %v2363 = vunpack.c.l.b16 %v2347
      %v2364 = vunpack.c.l.b16 %v2348
      %v2365 = vunpack.c.l.b16 %v2349
      %v2366 = vunpack.c.l.b16 %v2350
      %v2367 = vunpack.c.l.b16 %v2351
      %v2368 = vunpack.c.l.b16 %v2352
      %v2369 = vunpack.c.l.b16 %v2353
      %v2370 = vpack.c.b16 %v2363, %v2362
      %v2371 = vpack.c.b16 %v2365, %v2364
      %v2372 = vpack.c.b16 %v2367, %v2366
      %v2373 = vpack.c.b16 %v2369, %v2368
      %v2379 = vsel %vm545, %v2345, 0
      %2381 = vmatprep.subr.bf16.mxu0 0
      %2382 = vmatpush1.bf16.msra.mxu0 %v2370
      %2383 = vmatprep.subr.bf16.mxu0 0
      %2384 = vmatpush1.bf16.msra.mxu0 %v2371
      %2385 = vmatprep.subr.bf16.mxu0 0
      %2386 = vmatpush1.bf16.msra.mxu0 %v2372
      %2387 = vmatprep.subr.bf16.mxu0 0
      %2388 = vmatpush1.bf16.msra.mxu0 %v2373
      %2389 = vmatprep.subr.bf16.mxu0 0
      %2390 = vmatpush1.bf16.msra.mxu0 0
      %2391 = vmatprep.subr.bf16.mxu0 0
      %2392 = vmatpush1.bf16.msra.mxu0 0
      %2393 = vmatprep.subr.bf16.mxu0 0
      %2394 = vmatpush1.bf16.msra.mxu0 0
      %2395 = vmatprep.subr.bf16.mxu0 0
      %2396 = vmatpush1.bf16.msra.mxu0 0
      %2397 = vmatprep.subr.bf16.mxu0 0
      %2398 = vmatpush1.bf16.msra.mxu0 0
      %2399 = vmatprep.subr.bf16.mxu0 0
      %2400 = vmatpush1.bf16.msra.mxu0 0
      %2401 = vmatprep.subr.bf16.mxu0 0
      %2402 = vmatpush1.bf16.msra.mxu0 0
      %2403 = vmatprep.subr.bf16.mxu0 0
      %2404 = vmatpush1.bf16.msra.mxu0 0
      %2405 = vmatprep.subr.bf16.mxu0 0
      %2406 = vmatpush1.bf16.msra.mxu0 0
      %2407 = vmatprep.subr.bf16.mxu0 0
      %2408 = vmatpush1.bf16.msra.mxu0 0
      %2409 = vmatprep.subr.bf16.mxu0 0
      %2410 = vmatpush1.bf16.msra.mxu0 0
      %2411 = vmatprep.subr.bf16.mxu0 0
      %2412 = vmatpush1.bf16.msra.mxu0 0
      %2413 = vmatprep.mubr.bf16.mxu0 0
      %2414 = vmatmul.mubr.bf16.gmra.mrb[0].mxu0 %v2379
      %v2415 = vpop.f32.mrb[0].mxu0
      %v2416 = vadd.f32 0.0, %v2415
      %v2417 = vpop.f32.mrb[0].mxu0
      %v2418 = vpop.f32.mrb[0].mxu0
      %v2419 = vpop.f32.mrb[0].mxu0
      %2420 = vdwg.mxu0
      %v2421 = vadd.f32 %v2343, %v2416
      %v2422 = vld [vmem:[%s497] sm:$0xf]
      %v2423 = vpack.c.bf16 %v2422, %v2422
      %v2424 = vld [vmem:[%s987] sm:$0xf]
      %v2425 = vld [vmem:[%s987 + $0x4] sm:$0xf]
      %v2426 = vld [vmem:[%s987 + $0x8] sm:$0xf]
      %v2427 = vld [vmem:[%s987 + $0xc] sm:$0xf]
      %v2428 = vld [vmem:[%s987 + $0x10] sm:$0xf]
      %v2429 = vld [vmem:[%s987 + $0x14] sm:$0xf]
      %v2430 = vld [vmem:[%s987 + $0x18] sm:$0xf]
      %v2431 = vld [vmem:[%s987 + $0x1c] sm:$0xf]
      %v2440 = vunpack.c.l.b16 %v2424
      %v2441 = vunpack.c.l.b16 %v2425
      %v2442 = vunpack.c.l.b16 %v2426
      %v2443 = vunpack.c.l.b16 %v2427
      %v2444 = vunpack.c.l.b16 %v2428
      %v2445 = vunpack.c.l.b16 %v2429
      %v2446 = vunpack.c.l.b16 %v2430
      %v2447 = vunpack.c.l.b16 %v2431
      %v2448 = vpack.c.b16 %v2441, %v2440
      %v2449 = vpack.c.b16 %v2443, %v2442
      %v2450 = vpack.c.b16 %v2445, %v2444
      %v2451 = vpack.c.b16 %v2447, %v2446
      %v2457 = vsel %vm545, %v2423, 0
      %2459 = vmatprep.subr.bf16.mxu0 0
      %2460 = vmatpush1.bf16.msra.mxu0 %v2448
      %2461 = vmatprep.subr.bf16.mxu0 0
      %2462 = vmatpush1.bf16.msra.mxu0 %v2449
      %2463 = vmatprep.subr.bf16.mxu0 0
      %2464 = vmatpush1.bf16.msra.mxu0 %v2450
      %2465 = vmatprep.subr.bf16.mxu0 0
      %2466 = vmatpush1.bf16.msra.mxu0 %v2451
      %2467 = vmatprep.subr.bf16.mxu0 0
      %2468 = vmatpush1.bf16.msra.mxu0 0
      %2469 = vmatprep.subr.bf16.mxu0 0
      %2470 = vmatpush1.bf16.msra.mxu0 0
      %2471 = vmatprep.subr.bf16.mxu0 0
      %2472 = vmatpush1.bf16.msra.mxu0 0
      %2473 = vmatprep.subr.bf16.mxu0 0
      %2474 = vmatpush1.bf16.msra.mxu0 0
      %2475 = vmatprep.subr.bf16.mxu0 0
      %2476 = vmatpush1.bf16.msra.mxu0 0
      %2477 = vmatprep.subr.bf16.mxu0 0
      %2478 = vmatpush1.bf16.msra.mxu0 0
      %2479 = vmatprep.subr.bf16.mxu0 0
      %2480 = vmatpush1.bf16.msra.mxu0 0
      %2481 = vmatprep.subr.bf16.mxu0 0
      %2482 = vmatpush1.bf16.msra.mxu0 0
      %2483 = vmatprep.subr.bf16.mxu0 0
      %2484 = vmatpush1.bf16.msra.mxu0 0
      %2485 = vmatprep.subr.bf16.mxu0 0
      %2486 = vmatpush1.bf16.msra.mxu0 0
      %2487 = vmatprep.subr.bf16.mxu0 0
      %2488 = vmatpush1.bf16.msra.mxu0 0
      %2489 = vmatprep.subr.bf16.mxu0 0
      %2490 = vmatpush1.bf16.msra.mxu0 0
      %2491 = vmatprep.mubr.bf16.mxu0 0
      %2492 = vmatmul.mubr.bf16.gmra.mrb[0].mxu0 %v2457
      %v2493 = vpop.f32.mrb[0].mxu0
      %v2494 = vadd.f32 0.0, %v2493
      %v2495 = vpop.f32.mrb[0].mxu0
      %v2496 = vpop.f32.mrb[0].mxu0
      %v2497 = vpop.f32.mrb[0].mxu0
      %2498 = vdwg.mxu0
      %v2499 = vadd.f32 %v2421, %v2494
      %v2500 = vld [vmem:[%s497 + $0x1] sm:$0xf]
      %v2501 = vpack.c.bf16 %v2500, %v2500
      %v2502 = vld [vmem:[%s1066] sm:$0xf]
      %v2503 = vld [vmem:[%s1066 + $0x4] sm:$0xf]
      %v2504 = vld [vmem:[%s1066 + $0x8] sm:$0xf]
      %v2505 = vld [vmem:[%s1066 + $0xc] sm:$0xf]
      %v2506 = vld [vmem:[%s1066 + $0x10] sm:$0xf]
      %v2507 = vld [vmem:[%s1066 + $0x14] sm:$0xf]
      %v2508 = vld [vmem:[%s1066 + $0x18] sm:$0xf]
      %v2509 = vld [vmem:[%s1066 + $0x1c] sm:$0xf]
      %v2518 = vunpack.c.l.b16 %v2502
      %v2519 = vunpack.c.l.b16 %v2503
      %v2520 = vunpack.c.l.b16 %v2504
      %v2521 = vunpack.c.l.b16 %v2505
      %v2522 = vunpack.c.l.b16 %v2506
      %v2523 = vunpack.c.l.b16 %v2507
      %v2524 = vunpack.c.l.b16 %v2508
      %v2525 = vunpack.c.l.b16 %v2509
      %v2526 = vpack.c.b16 %v2519, %v2518
      %v2527 = vpack.c.b16 %v2521, %v2520
      %v2528 = vpack.c.b16 %v2523, %v2522
      %v2529 = vpack.c.b16 %v2525, %v2524
      %v2535 = vsel %vm545, %v2501, 0
      %2537 = vmatprep.subr.bf16.mxu0 0
      %2538 = vmatpush1.bf16.msra.mxu0 %v2526
      %2539 = vmatprep.subr.bf16.mxu0 0
      %2540 = vmatpush1.bf16.msra.mxu0 %v2527
      %2541 = vmatprep.subr.bf16.mxu0 0
      %2542 = vmatpush1.bf16.msra.mxu0 %v2528
      %2543 = vmatprep.subr.bf16.mxu0 0
      %2544 = vmatpush1.bf16.msra.mxu0 %v2529
      %2545 = vmatprep.subr.bf16.mxu0 0
      %2546 = vmatpush1.bf16.msra.mxu0 0
      %2547 = vmatprep.subr.bf16.mxu0 0
      %2548 = vmatpush1.bf16.msra.mxu0 0
      %2549 = vmatprep.subr.bf16.mxu0 0
      %2550 = vmatpush1.bf16.msra.mxu0 0
      %2551 = vmatprep.subr.bf16.mxu0 0
      %2552 = vmatpush1.bf16.msra.mxu0 0
      %2553 = vmatprep.subr.bf16.mxu0 0
      %2554 = vmatpush1.bf16.msra.mxu0 0
      %2555 = vmatprep.subr.bf16.mxu0 0
      %2556 = vmatpush1.bf16.msra.mxu0 0
      %2557 = vmatprep.subr.bf16.mxu0 0
      %2558 = vmatpush1.bf16.msra.mxu0 0
      %2559 = vmatprep.subr.bf16.mxu0 0
      %2560 = vmatpush1.bf16.msra.mxu0 0
      %2561 = vmatprep.subr.bf16.mxu0 0
      %2562 = vmatpush1.bf16.msra.mxu0 0
      %2563 = vmatprep.subr.bf16.mxu0 0
      %2564 = vmatpush1.bf16.msra.mxu0 0
      %2565 = vmatprep.subr.bf16.mxu0 0
      %2566 = vmatpush1.bf16.msra.mxu0 0
      %2567 = vmatprep.subr.bf16.mxu0 0
      %2568 = vmatpush1.bf16.msra.mxu0 0
      %2569 = vmatprep.mubr.bf16.mxu0 0
      %2570 = vmatmul.mubr.bf16.gmra.mrb[0].mxu0 %v2535
      %v2571 = vpop.f32.mrb[0].mxu0
      %v2572 = vadd.f32 0.0, %v2571
      %v2573 = vpop.f32.mrb[0].mxu0
      %v2574 = vpop.f32.mrb[0].mxu0
      %v2575 = vpop.f32.mrb[0].mxu0
      %2576 = vdwg.mxu0
      %v2577 = vadd.f32 %v2499, %v2572
      %v2578 = vld [vmem:[%s497 + $0x2] sm:$0xf]
      %v2579 = vpack.c.bf16 %v2578, %v2578
      %v2580 = vld [vmem:[%s1145] sm:$0xf]
      %v2581 = vld [vmem:[%s1145 + $0x4] sm:$0xf]
      %v2582 = vld [vmem:[%s1145 + $0x8] sm:$0xf]
      %v2583 = vld [vmem:[%s1145 + $0xc] sm:$0xf]
      %v2584 = vld [vmem:[%s1145 + $0x10] sm:$0xf]
      %v2585 = vld [vmem:[%s1145 + $0x14] sm:$0xf]
      %v2586 = vld [vmem:[%s1145 + $0x18] sm:$0xf]
      %v2587 = vld [vmem:[%s1145 + $0x1c] sm:$0xf]
      %v2596 = vunpack.c.l.b16 %v2580
      %v2597 = vunpack.c.l.b16 %v2581
      %v2598 = vunpack.c.l.b16 %v2582
      %v2599 = vunpack.c.l.b16 %v2583
      %v2600 = vunpack.c.l.b16 %v2584
      %v2601 = vunpack.c.l.b16 %v2585
      %v2602 = vunpack.c.l.b16 %v2586
      %v2603 = vunpack.c.l.b16 %v2587
      %v2604 = vpack.c.b16 %v2597, %v2596
      %v2605 = vpack.c.b16 %v2599, %v2598
      %v2606 = vpack.c.b16 %v2601, %v2600
      %v2607 = vpack.c.b16 %v2603, %v2602
      %v2613 = vsel %vm545, %v2579, 0
      %2615 = vmatprep.subr.bf16.mxu0 0
      %2616 = vmatpush1.bf16.msra.mxu0 %v2604
      %2617 = vmatprep.subr.bf16.mxu0 0
      %2618 = vmatpush1.bf16.msra.mxu0 %v2605
      %2619 = vmatprep.subr.bf16.mxu0 0
      %2620 = vmatpush1.bf16.msra.mxu0 %v2606
      %2621 = vmatprep.subr.bf16.mxu0 0
      %2622 = vmatpush1.bf16.msra.mxu0 %v2607
      %2623 = vmatprep.subr.bf16.mxu0 0
      %2624 = vmatpush1.bf16.msra.mxu0 0
      %2625 = vmatprep.subr.bf16.mxu0 0
      %2626 = vmatpush1.bf16.msra.mxu0 0
      %2627 = vmatprep.subr.bf16.mxu0 0
      %2628 = vmatpush1.bf16.msra.mxu0 0
      %2629 = vmatprep.subr.bf16.mxu0 0
      %2630 = vmatpush1.bf16.msra.mxu0 0
      %2631 = vmatprep.subr.bf16.mxu0 0
      %2632 = vmatpush1.bf16.msra.mxu0 0
      %2633 = vmatprep.subr.bf16.mxu0 0
      %2634 = vmatpush1.bf16.msra.mxu0 0
      %2635 = vmatprep.subr.bf16.mxu0 0
      %2636 = vmatpush1.bf16.msra.mxu0 0
      %2637 = vmatprep.subr.bf16.mxu0 0
      %2638 = vmatpush1.bf16.msra.mxu0 0
      %2639 = vmatprep.subr.bf16.mxu0 0
      %2640 = vmatpush1.bf16.msra.mxu0 0
      %2641 = vmatprep.subr.bf16.mxu0 0
      %2642 = vmatpush1.bf16.msra.mxu0 0
      %2643 = vmatprep.subr.bf16.mxu0 0
      %2644 = vmatpush1.bf16.msra.mxu0 0
      %2645 = vmatprep.subr.bf16.mxu0 0
      %2646 = vmatpush1.bf16.msra.mxu0 0
      %2647 = vmatprep.mubr.bf16.mxu0 0
      %2648 = vmatmul.mubr.bf16.gmra.mrb[0].mxu0 %v2613
      %v2649 = vpop.f32.mrb[0].mxu0
      %v2650 = vadd.f32 0.0, %v2649
      %v2651 = vpop.f32.mrb[0].mxu0
      %v2652 = vpop.f32.mrb[0].mxu0
      %v2653 = vpop.f32.mrb[0].mxu0
      %2654 = vdwg.mxu0
      %v2655 = vadd.f32 %v2577, %v2650
      %v2656 = vmul.f32 %v2655, 0.01
      %v2657 = vmax.f32 %v2655, %v2656
      %2658 = vst.msk [vmem:[%s229 + $0x8] sm:$0xf] %vm490, %v2657
      %v2659 = vld [vmem:[%s4] sm:$0x1]
      %v2661 = vlaneseq
      %v2662 = vshrl.u32 %v2661, 7
      %v2663 = vsub.s32 0, %v2662
      %v2664 = vrot.slane %v2659, %v2663
      %v2666 = vrot.slane %v475, 4
      %2667 = vrot.lane.b32.xlu0 %v2666, 64
      %v2668 = vpop.permute.xlu0 %2667
      %v2670 = vadd.f32 %v2664, %v2668
      %v2671 = vld [vmem:[%s495] sm:$0xf]
      %v2672 = vpack.c.bf16 %v2671, %v2671
      %v2673 = vld [vmem:[%s3] sm:$0xf]
      %v2674 = vld [vmem:[%s3 + $0x4] sm:$0xf]
      %v2675 = vld [vmem:[%s3 + $0x8] sm:$0xf]
      %v2676 = vld [vmem:[%s3 + $0xc] sm:$0xf]
      %v2677 = vld [vmem:[%s3 + $0x10] sm:$0xf]
      %v2678 = vld [vmem:[%s3 + $0x14] sm:$0xf]
      %v2679 = vld [vmem:[%s3 + $0x18] sm:$0xf]
      %v2680 = vld [vmem:[%s3 + $0x1c] sm:$0xf]
      %v2689 = vunpack.c.l.b16 %v2673
      %v2690 = vunpack.c.l.b16 %v2674
      %v2691 = vunpack.c.l.b16 %v2675
      %v2692 = vunpack.c.l.b16 %v2676
      %v2693 = vunpack.c.l.b16 %v2677
      %v2694 = vunpack.c.l.b16 %v2678
      %v2695 = vunpack.c.l.b16 %v2679
      %v2696 = vunpack.c.l.b16 %v2680
      %v2697 = vpack.c.b16 %v2690, %v2689
      %v2698 = vpack.c.b16 %v2692, %v2691
      %v2699 = vpack.c.b16 %v2694, %v2693
      %v2700 = vpack.c.b16 %v2696, %v2695
      %v2706 = vsel %vm545, %v2672, 0
      %2708 = vmatprep.subr.bf16.mxu0 0
      %2709 = vmatpush1.bf16.msra.mxu0 %v2697
      %2710 = vmatprep.subr.bf16.mxu0 0
      %2711 = vmatpush1.bf16.msra.mxu0 %v2698
      %2712 = vmatprep.subr.bf16.mxu0 0
      %2713 = vmatpush1.bf16.msra.mxu0 %v2699
      %2714 = vmatprep.subr.bf16.mxu0 0
      %2715 = vmatpush1.bf16.msra.mxu0 %v2700
      %2716 = vmatprep.subr.bf16.mxu0 0
      %2717 = vmatpush1.bf16.msra.mxu0 0
      %2718 = vmatprep.subr.bf16.mxu0 0
      %2719 = vmatpush1.bf16.msra.mxu0 0
      %2720 = vmatprep.subr.bf16.mxu0 0
      %2721 = vmatpush1.bf16.msra.mxu0 0
      %2722 = vmatprep.subr.bf16.mxu0 0
      %2723 = vmatpush1.bf16.msra.mxu0 0
      %2724 = vmatprep.subr.bf16.mxu0 0
      %2725 = vmatpush1.bf16.msra.mxu0 0
      %2726 = vmatprep.subr.bf16.mxu0 0
      %2727 = vmatpush1.bf16.msra.mxu0 0
      %2728 = vmatprep.subr.bf16.mxu0 0
      %2729 = vmatpush1.bf16.msra.mxu0 0
      %2730 = vmatprep.subr.bf16.mxu0 0
      %2731 = vmatpush1.bf16.msra.mxu0 0
      %2732 = vmatprep.subr.bf16.mxu0 0
      %2733 = vmatpush1.bf16.msra.mxu0 0
      %2734 = vmatprep.subr.bf16.mxu0 0
      %2735 = vmatpush1.bf16.msra.mxu0 0
      %2736 = vmatprep.subr.bf16.mxu0 0
      %2737 = vmatpush1.bf16.msra.mxu0 0
      %2738 = vmatprep.subr.bf16.mxu0 0
      %2739 = vmatpush1.bf16.msra.mxu0 0
      %2740 = vmatprep.mubr.bf16.mxu0 0
      %2741 = vmatmul.mubr.bf16.gmra.mrb[0].mxu0 %v2706
      %v2742 = vpop.f32.mrb[0].mxu0
      %v2743 = vadd.f32 0.0, %v2742
      %v2744 = vpop.f32.mrb[0].mxu0
      %v2745 = vpop.f32.mrb[0].mxu0
      %v2746 = vpop.f32.mrb[0].mxu0
      %2747 = vdwg.mxu0
      %v2748 = vadd.f32 %v2670, %v2743
      %v2749 = vld [vmem:[%s495 + $0x1] sm:$0xf]
      %v2750 = vpack.c.bf16 %v2749, %v2749
      %v2751 = vld [vmem:[%s592] sm:$0xf]
      %v2752 = vld [vmem:[%s592 + $0x4] sm:$0xf]
      %v2753 = vld [vmem:[%s592 + $0x8] sm:$0xf]
      %v2754 = vld [vmem:[%s592 + $0xc] sm:$0xf]
      %v2755 = vld [vmem:[%s592 + $0x10] sm:$0xf]
      %v2756 = vld [vmem:[%s592 + $0x14] sm:$0xf]
      %v2757 = vld [vmem:[%s592 + $0x18] sm:$0xf]
      %v2758 = vld [vmem:[%s592 + $0x1c] sm:$0xf]
      %v2767 = vunpack.c.l.b16 %v2751
      %v2768 = vunpack.c.l.b16 %v2752
      %v2769 = vunpack.c.l.b16 %v2753
      %v2770 = vunpack.c.l.b16 %v2754
      %v2771 = vunpack.c.l.b16 %v2755
      %v2772 = vunpack.c.l.b16 %v2756
      %v2773 = vunpack.c.l.b16 %v2757
      %v2774 = vunpack.c.l.b16 %v2758
      %v2775 = vpack.c.b16 %v2768, %v2767
      %v2776 = vpack.c.b16 %v2770, %v2769
      %v2777 = vpack.c.b16 %v2772, %v2771
      %v2778 = vpack.c.b16 %v2774, %v2773
      %v2784 = vsel %vm545, %v2750, 0
      %2786 = vmatprep.subr.bf16.mxu0 0
      %2787 = vmatpush1.bf16.msra.mxu0 %v2775
      %2788 = vmatprep.subr.bf16.mxu0 0
      %2789 = vmatpush1.bf16.msra.mxu0 %v2776
      %2790 = vmatprep.subr.bf16.mxu0 0
      %2791 = vmatpush1.bf16.msra.mxu0 %v2777
      %2792 = vmatprep.subr.bf16.mxu0 0
      %2793 = vmatpush1.bf16.msra.mxu0 %v2778
      %2794 = vmatprep.subr.bf16.mxu0 0
      %2795 = vmatpush1.bf16.msra.mxu0 0
      %2796 = vmatprep.subr.bf16.mxu0 0
      %2797 = vmatpush1.bf16.msra.mxu0 0
      %2798 = vmatprep.subr.bf16.mxu0 0
      %2799 = vmatpush1.bf16.msra.mxu0 0
      %2800 = vmatprep.subr.bf16.mxu0 0
      %2801 = vmatpush1.bf16.msra.mxu0 0
      %2802 = vmatprep.subr.bf16.mxu0 0
      %2803 = vmatpush1.bf16.msra.mxu0 0
      %2804 = vmatprep.subr.bf16.mxu0 0
      %2805 = vmatpush1.bf16.msra.mxu0 0
      %2806 = vmatprep.subr.bf16.mxu0 0
      %2807 = vmatpush1.bf16.msra.mxu0 0
      %2808 = vmatprep.subr.bf16.mxu0 0
      %2809 = vmatpush1.bf16.msra.mxu0 0
      %2810 = vmatprep.subr.bf16.mxu0 0
      %2811 = vmatpush1.bf16.msra.mxu0 0
      %2812 = vmatprep.subr.bf16.mxu0 0
      %2813 = vmatpush1.bf16.msra.mxu0 0
      %2814 = vmatprep.subr.bf16.mxu0 0
      %2815 = vmatpush1.bf16.msra.mxu0 0
      %2816 = vmatprep.subr.bf16.mxu0 0
      %2817 = vmatpush1.bf16.msra.mxu0 0
      %2818 = vmatprep.mubr.bf16.mxu0 0
      %2819 = vmatmul.mubr.bf16.gmra.mrb[0].mxu0 %v2784
      %v2820 = vpop.f32.mrb[0].mxu0
      %v2821 = vadd.f32 0.0, %v2820
      %v2822 = vpop.f32.mrb[0].mxu0
      %v2823 = vpop.f32.mrb[0].mxu0
      %v2824 = vpop.f32.mrb[0].mxu0
      %2825 = vdwg.mxu0
      %v2826 = vadd.f32 %v2748, %v2821
      %v2827 = vld [vmem:[%s495 + $0x2] sm:$0xf]
      %v2828 = vpack.c.bf16 %v2827, %v2827
      %v2829 = vld [vmem:[%s671] sm:$0xf]
      %v2830 = vld [vmem:[%s671 + $0x4] sm:$0xf]
      %v2831 = vld [vmem:[%s671 + $0x8] sm:$0xf]
      %v2832 = vld [vmem:[%s671 + $0xc] sm:$0xf]
      %v2833 = vld [vmem:[%s671 + $0x10] sm:$0xf]
      %v2834 = vld [vmem:[%s671 + $0x14] sm:$0xf]
      %v2835 = vld [vmem:[%s671 + $0x18] sm:$0xf]
      %v2836 = vld [vmem:[%s671 + $0x1c] sm:$0xf]
      %v2845 = vunpack.c.l.b16 %v2829
      %v2846 = vunpack.c.l.b16 %v2830
      %v2847 = vunpack.c.l.b16 %v2831
      %v2848 = vunpack.c.l.b16 %v2832
      %v2849 = vunpack.c.l.b16 %v2833
      %v2850 = vunpack.c.l.b16 %v2834
      %v2851 = vunpack.c.l.b16 %v2835
      %v2852 = vunpack.c.l.b16 %v2836
      %v2853 = vpack.c.b16 %v2846, %v2845
      %v2854 = vpack.c.b16 %v2848, %v2847
      %v2855 = vpack.c.b16 %v2850, %v2849
      %v2856 = vpack.c.b16 %v2852, %v2851
      %v2862 = vsel %vm545, %v2828, 0
      %2864 = vmatprep.subr.bf16.mxu0 0
      %2865 = vmatpush1.bf16.msra.mxu0 %v2853
      %2866 = vmatprep.subr.bf16.mxu0 0
      %2867 = vmatpush1.bf16.msra.mxu0 %v2854
      %2868 = vmatprep.subr.bf16.mxu0 0
      %2869 = vmatpush1.bf16.msra.mxu0 %v2855
      %2870 = vmatprep.subr.bf16.mxu0 0
      %2871 = vmatpush1.bf16.msra.mxu0 %v2856
      %2872 = vmatprep.subr.bf16.mxu0 0
      %2873 = vmatpush1.bf16.msra.mxu0 0
      %2874 = vmatprep.subr.bf16.mxu0 0
      %2875 = vmatpush1.bf16.msra.mxu0 0
      %2876 = vmatprep.subr.bf16.mxu0 0
      %2877 = vmatpush1.bf16.msra.mxu0 0
      %2878 = vmatprep.subr.bf16.mxu0 0
      %2879 = vmatpush1.bf16.msra.mxu0 0
      %2880 = vmatprep.subr.bf16.mxu0 0
      %2881 = vmatpush1.bf16.msra.mxu0 0
      %2882 = vmatprep.subr.bf16.mxu0 0
      %2883 = vmatpush1.bf16.msra.mxu0 0
      %2884 = vmatprep.subr.bf16.mxu0 0
      %2885 = vmatpush1.bf16.msra.mxu0 0
      %2886 = vmatprep.subr.bf16.mxu0 0
      %2887 = vmatpush1.bf16.msra.mxu0 0
      %2888 = vmatprep.subr.bf16.mxu0 0
      %2889 = vmatpush1.bf16.msra.mxu0 0
      %2890 = vmatprep.subr.bf16.mxu0 0
      %2891 = vmatpush1.bf16.msra.mxu0 0
      %2892 = vmatprep.subr.bf16.mxu0 0
      %2893 = vmatpush1.bf16.msra.mxu0 0
      %2894 = vmatprep.subr.bf16.mxu0 0
      %2895 = vmatpush1.bf16.msra.mxu0 0
      %2896 = vmatprep.mubr.bf16.mxu0 0
      %2897 = vmatmul.mubr.bf16.gmra.mrb[0].mxu0 %v2862
      %v2898 = vpop.f32.mrb[0].mxu0
      %v2899 = vadd.f32 0.0, %v2898
      %v2900 = vpop.f32.mrb[0].mxu0
      %v2901 = vpop.f32.mrb[0].mxu0
      %v2902 = vpop.f32.mrb[0].mxu0
      %2903 = vdwg.mxu0
      %v2904 = vadd.f32 %v2826, %v2899
      %v2905 = vld [vmem:[%s497] sm:$0xf]
      %v2906 = vpack.c.bf16 %v2905, %v2905
      %v2907 = vld [vmem:[%s750] sm:$0xf]
      %v2908 = vld [vmem:[%s750 + $0x4] sm:$0xf]
      %v2909 = vld [vmem:[%s750 + $0x8] sm:$0xf]
      %v2910 = vld [vmem:[%s750 + $0xc] sm:$0xf]
      %v2911 = vld [vmem:[%s750 + $0x10] sm:$0xf]
      %v2912 = vld [vmem:[%s750 + $0x14] sm:$0xf]
      %v2913 = vld [vmem:[%s750 + $0x18] sm:$0xf]
      %v2914 = vld [vmem:[%s750 + $0x1c] sm:$0xf]
      %v2923 = vunpack.c.l.b16 %v2907
      %v2924 = vunpack.c.l.b16 %v2908
      %v2925 = vunpack.c.l.b16 %v2909
      %v2926 = vunpack.c.l.b16 %v2910
      %v2927 = vunpack.c.l.b16 %v2911
      %v2928 = vunpack.c.l.b16 %v2912
      %v2929 = vunpack.c.l.b16 %v2913
      %v2930 = vunpack.c.l.b16 %v2914
      %v2931 = vpack.c.b16 %v2924, %v2923
      %v2932 = vpack.c.b16 %v2926, %v2925
      %v2933 = vpack.c.b16 %v2928, %v2927
      %v2934 = vpack.c.b16 %v2930, %v2929
      %v2940 = vsel %vm545, %v2906, 0
      %2942 = vmatprep.subr.bf16.mxu0 0
      %2943 = vmatpush1.bf16.msra.mxu0 %v2931
      %2944 = vmatprep.subr.bf16.mxu0 0
      %2945 = vmatpush1.bf16.msra.mxu0 %v2932
      %2946 = vmatprep.subr.bf16.mxu0 0
      %2947 = vmatpush1.bf16.msra.mxu0 %v2933
      %2948 = vmatprep.subr.bf16.mxu0 0
      %2949 = vmatpush1.bf16.msra.mxu0 %v2934
      %2950 = vmatprep.subr.bf16.mxu0 0
      %2951 = vmatpush1.bf16.msra.mxu0 0
      %2952 = vmatprep.subr.bf16.mxu0 0
      %2953 = vmatpush1.bf16.msra.mxu0 0
      %2954 = vmatprep.subr.bf16.mxu0 0
      %2955 = vmatpush1.bf16.msra.mxu0 0
      %2956 = vmatprep.subr.bf16.mxu0 0
      %2957 = vmatpush1.bf16.msra.mxu0 0
      %2958 = vmatprep.subr.bf16.mxu0 0
      %2959 = vmatpush1.bf16.msra.mxu0 0
      %2960 = vmatprep.subr.bf16.mxu0 0
      %2961 = vmatpush1.bf16.msra.mxu0 0
      %2962 = vmatprep.subr.bf16.mxu0 0
      %2963 = vmatpush1.bf16.msra.mxu0 0
      %2964 = vmatprep.subr.bf16.mxu0 0
      %2965 = vmatpush1.bf16.msra.mxu0 0
      %2966 = vmatprep.subr.bf16.mxu0 0
      %2967 = vmatpush1.bf16.msra.mxu0 0
      %2968 = vmatprep.subr.bf16.mxu0 0
      %2969 = vmatpush1.bf16.msra.mxu0 0
      %2970 = vmatprep.subr.bf16.mxu0 0
      %2971 = vmatpush1.bf16.msra.mxu0 0
      %2972 = vmatprep.subr.bf16.mxu0 0
      %2973 = vmatpush1.bf16.msra.mxu0 0
      %2974 = vmatprep.mubr.bf16.mxu0 0
      %2975 = vmatmul.mubr.bf16.gmra.mrb[0].mxu0 %v2940
      %v2976 = vpop.f32.mrb[0].mxu0
      %v2977 = vadd.f32 0.0, %v2976
      %v2978 = vpop.f32.mrb[0].mxu0
      %v2979 = vpop.f32.mrb[0].mxu0
      %v2980 = vpop.f32.mrb[0].mxu0
      %2981 = vdwg.mxu0
      %v2982 = vadd.f32 %v2904, %v2977
      %v2983 = vld [vmem:[%s497 + $0x1] sm:$0xf]
      %v2984 = vpack.c.bf16 %v2983, %v2983
      %v2985 = vld [vmem:[%s829] sm:$0xf]
      %v2986 = vld [vmem:[%s829 + $0x4] sm:$0xf]
      %v2987 = vld [vmem:[%s829 + $0x8] sm:$0xf]
      %v2988 = vld [vmem:[%s829 + $0xc] sm:$0xf]
      %v2989 = vld [vmem:[%s829 + $0x10] sm:$0xf]
      %v2990 = vld [vmem:[%s829 + $0x14] sm:$0xf]
      %v2991 = vld [vmem:[%s829 + $0x18] sm:$0xf]
      %v2992 = vld [vmem:[%s829 + $0x1c] sm:$0xf]
      %v3001 = vunpack.c.l.b16 %v2985
      %v3002 = vunpack.c.l.b16 %v2986
      %v3003 = vunpack.c.l.b16 %v2987
      %v3004 = vunpack.c.l.b16 %v2988
      %v3005 = vunpack.c.l.b16 %v2989
      %v3006 = vunpack.c.l.b16 %v2990
      %v3007 = vunpack.c.l.b16 %v2991
      %v3008 = vunpack.c.l.b16 %v2992
      %v3009 = vpack.c.b16 %v3002, %v3001
      %v3010 = vpack.c.b16 %v3004, %v3003
      %v3011 = vpack.c.b16 %v3006, %v3005
      %v3012 = vpack.c.b16 %v3008, %v3007
      %v3018 = vsel %vm545, %v2984, 0
      %3020 = vmatprep.subr.bf16.mxu0 0
      %3021 = vmatpush1.bf16.msra.mxu0 %v3009
      %3022 = vmatprep.subr.bf16.mxu0 0
      %3023 = vmatpush1.bf16.msra.mxu0 %v3010
      %3024 = vmatprep.subr.bf16.mxu0 0
      %3025 = vmatpush1.bf16.msra.mxu0 %v3011
      %3026 = vmatprep.subr.bf16.mxu0 0
      %3027 = vmatpush1.bf16.msra.mxu0 %v3012
      %3028 = vmatprep.subr.bf16.mxu0 0
      %3029 = vmatpush1.bf16.msra.mxu0 0
      %3030 = vmatprep.subr.bf16.mxu0 0
      %3031 = vmatpush1.bf16.msra.mxu0 0
      %3032 = vmatprep.subr.bf16.mxu0 0
      %3033 = vmatpush1.bf16.msra.mxu0 0
      %3034 = vmatprep.subr.bf16.mxu0 0
      %3035 = vmatpush1.bf16.msra.mxu0 0
      %3036 = vmatprep.subr.bf16.mxu0 0
      %3037 = vmatpush1.bf16.msra.mxu0 0
      %3038 = vmatprep.subr.bf16.mxu0 0
      %3039 = vmatpush1.bf16.msra.mxu0 0
      %3040 = vmatprep.subr.bf16.mxu0 0
      %3041 = vmatpush1.bf16.msra.mxu0 0
      %3042 = vmatprep.subr.bf16.mxu0 0
      %3043 = vmatpush1.bf16.msra.mxu0 0
      %3044 = vmatprep.subr.bf16.mxu0 0
      %3045 = vmatpush1.bf16.msra.mxu0 0
      %3046 = vmatprep.subr.bf16.mxu0 0
      %3047 = vmatpush1.bf16.msra.mxu0 0
      %3048 = vmatprep.subr.bf16.mxu0 0
      %3049 = vmatpush1.bf16.msra.mxu0 0
      %3050 = vmatprep.subr.bf16.mxu0 0
      %3051 = vmatpush1.bf16.msra.mxu0 0
      %3052 = vmatprep.mubr.bf16.mxu0 0
      %3053 = vmatmul.mubr.bf16.gmra.mrb[0].mxu0 %v3018
      %v3054 = vpop.f32.mrb[0].mxu0
      %v3055 = vadd.f32 0.0, %v3054
      %v3056 = vpop.f32.mrb[0].mxu0
      %v3057 = vpop.f32.mrb[0].mxu0
      %v3058 = vpop.f32.mrb[0].mxu0
      %3059 = vdwg.mxu0
      %v3060 = vadd.f32 %v2982, %v3055
      %v3061 = vld [vmem:[%s497 + $0x2] sm:$0xf]
      %v3062 = vpack.c.bf16 %v3061, %v3061
      %v3063 = vld [vmem:[%s908] sm:$0xf]
      %v3064 = vld [vmem:[%s908 + $0x4] sm:$0xf]
      %v3065 = vld [vmem:[%s908 + $0x8] sm:$0xf]
      %v3066 = vld [vmem:[%s908 + $0xc] sm:$0xf]
      %v3067 = vld [vmem:[%s908 + $0x10] sm:$0xf]
      %v3068 = vld [vmem:[%s908 + $0x14] sm:$0xf]
      %v3069 = vld [vmem:[%s908 + $0x18] sm:$0xf]
      %v3070 = vld [vmem:[%s908 + $0x1c] sm:$0xf]
      %v3079 = vunpack.c.l.b16 %v3063
      %v3080 = vunpack.c.l.b16 %v3064
      %v3081 = vunpack.c.l.b16 %v3065
      %v3082 = vunpack.c.l.b16 %v3066
      %v3083 = vunpack.c.l.b16 %v3067
      %v3084 = vunpack.c.l.b16 %v3068
      %v3085 = vunpack.c.l.b16 %v3069
      %v3086 = vunpack.c.l.b16 %v3070
      %v3087 = vpack.c.b16 %v3080, %v3079
      %v3088 = vpack.c.b16 %v3082, %v3081
      %v3089 = vpack.c.b16 %v3084, %v3083
      %v3090 = vpack.c.b16 %v3086, %v3085
      %v3096 = vsel %vm545, %v3062, 0
      %3098 = vmatprep.subr.bf16.mxu0 0
      %3099 = vmatpush1.bf16.msra.mxu0 %v3087
      %3100 = vmatprep.subr.bf16.mxu0 0
      %3101 = vmatpush1.bf16.msra.mxu0 %v3088
      %3102 = vmatprep.subr.bf16.mxu0 0
      %3103 = vmatpush1.bf16.msra.mxu0 %v3089
      %3104 = vmatprep.subr.bf16.mxu0 0
      %3105 = vmatpush1.bf16.msra.mxu0 %v3090
      %3106 = vmatprep.subr.bf16.mxu0 0
      %3107 = vmatpush1.bf16.msra.mxu0 0
      %3108 = vmatprep.subr.bf16.mxu0 0
      %3109 = vmatpush1.bf16.msra.mxu0 0
      %3110 = vmatprep.subr.bf16.mxu0 0
      %3111 = vmatpush1.bf16.msra.mxu0 0
      %3112 = vmatprep.subr.bf16.mxu0 0
      %3113 = vmatpush1.bf16.msra.mxu0 0
      %3114 = vmatprep.subr.bf16.mxu0 0
      %3115 = vmatpush1.bf16.msra.mxu0 0
      %3116 = vmatprep.subr.bf16.mxu0 0
      %3117 = vmatpush1.bf16.msra.mxu0 0
      %3118 = vmatprep.subr.bf16.mxu0 0
      %3119 = vmatpush1.bf16.msra.mxu0 0
      %3120 = vmatprep.subr.bf16.mxu0 0
      %3121 = vmatpush1.bf16.msra.mxu0 0
      %3122 = vmatprep.subr.bf16.mxu0 0
      %3123 = vmatpush1.bf16.msra.mxu0 0
      %3124 = vmatprep.subr.bf16.mxu0 0
      %3125 = vmatpush1.bf16.msra.mxu0 0
      %3126 = vmatprep.subr.bf16.mxu0 0
      %3127 = vmatpush1.bf16.msra.mxu0 0
      %3128 = vmatprep.subr.bf16.mxu0 0
      %3129 = vmatpush1.bf16.msra.mxu0 0
      %3130 = vmatprep.mubr.bf16.mxu0 0
      %3131 = vmatmul.mubr.bf16.gmra.mrb[0].mxu0 %v3096
      %v3132 = vpop.f32.mrb[0].mxu0
      %v3133 = vadd.f32 0.0, %v3132
      %v3134 = vpop.f32.mrb[0].mxu0
      %v3135 = vpop.f32.mrb[0].mxu0
      %v3136 = vpop.f32.mrb[0].mxu0
      %3137 = vdwg.mxu0
      %v3138 = vadd.f32 %v3060, %v3133
      %s3139 = scalar_lea.vmem [#allocation2], 40
      %v3140 = vld [vmem:[%s3139] sm:$0xf]
      %v3141 = vpack.c.bf16 %v3140, %v3140
      %v3142 = vld [vmem:[%s987] sm:$0xf]
      %v3143 = vld [vmem:[%s987 + $0x4] sm:$0xf]
      %v3144 = vld [vmem:[%s987 + $0x8] sm:$0xf]
      %v3145 = vld [vmem:[%s987 + $0xc] sm:$0xf]
      %v3146 = vld [vmem:[%s987 + $0x10] sm:$0xf]
      %v3147 = vld [vmem:[%s987 + $0x14] sm:$0xf]
      %v3148 = vld [vmem:[%s987 + $0x18] sm:$0xf]
      %v3149 = vld [vmem:[%s987 + $0x1c] sm:$0xf]
      %v3158 = vunpack.c.l.b16 %v3142
      %v3159 = vunpack.c.l.b16 %v3143
      %v3160 = vunpack.c.l.b16 %v3144
      %v3161 = vunpack.c.l.b16 %v3145
      %v3162 = vunpack.c.l.b16 %v3146
      %v3163 = vunpack.c.l.b16 %v3147
      %v3164 = vunpack.c.l.b16 %v3148
      %v3165 = vunpack.c.l.b16 %v3149
      %v3166 = vpack.c.b16 %v3159, %v3158
      %v3167 = vpack.c.b16 %v3161, %v3160
      %v3168 = vpack.c.b16 %v3163, %v3162
      %v3169 = vpack.c.b16 %v3165, %v3164
      %v3175 = vsel %vm545, %v3141, 0
      %3177 = vmatprep.subr.bf16.mxu0 0
      %3178 = vmatpush1.bf16.msra.mxu0 %v3166
      %3179 = vmatprep.subr.bf16.mxu0 0
      %3180 = vmatpush1.bf16.msra.mxu0 %v3167
      %3181 = vmatprep.subr.bf16.mxu0 0
      %3182 = vmatpush1.bf16.msra.mxu0 %v3168
      %3183 = vmatprep.subr.bf16.mxu0 0
      %3184 = vmatpush1.bf16.msra.mxu0 %v3169
      %3185 = vmatprep.subr.bf16.mxu0 0
      %3186 = vmatpush1.bf16.msra.mxu0 0
      %3187 = vmatprep.subr.bf16.mxu0 0
      %3188 = vmatpush1.bf16.msra.mxu0 0
      %3189 = vmatprep.subr.bf16.mxu0 0
      %3190 = vmatpush1.bf16.msra.mxu0 0
      %3191 = vmatprep.subr.bf16.mxu0 0
      %3192 = vmatpush1.bf16.msra.mxu0 0
      %3193 = vmatprep.subr.bf16.mxu0 0
      %3194 = vmatpush1.bf16.msra.mxu0 0
      %3195 = vmatprep.subr.bf16.mxu0 0
      %3196 = vmatpush1.bf16.msra.mxu0 0
      %3197 = vmatprep.subr.bf16.mxu0 0
      %3198 = vmatpush1.bf16.msra.mxu0 0
      %3199 = vmatprep.subr.bf16.mxu0 0
      %3200 = vmatpush1.bf16.msra.mxu0 0
      %3201 = vmatprep.subr.bf16.mxu0 0
      %3202 = vmatpush1.bf16.msra.mxu0 0
      %3203 = vmatprep.subr.bf16.mxu0 0
      %3204 = vmatpush1.bf16.msra.mxu0 0
      %3205 = vmatprep.subr.bf16.mxu0 0
      %3206 = vmatpush1.bf16.msra.mxu0 0
      %3207 = vmatprep.subr.bf16.mxu0 0
      %3208 = vmatpush1.bf16.msra.mxu0 0
      %3209 = vmatprep.mubr.bf16.mxu0 0
      %3210 = vmatmul.mubr.bf16.gmra.mrb[0].mxu0 %v3175
      %v3211 = vpop.f32.mrb[0].mxu0
      %v3212 = vadd.f32 0.0, %v3211
      %v3213 = vpop.f32.mrb[0].mxu0
      %v3214 = vpop.f32.mrb[0].mxu0
      %v3215 = vpop.f32.mrb[0].mxu0
      %3216 = vdwg.mxu0
      %v3217 = vadd.f32 %v3138, %v3212
      %v3218 = vld [vmem:[%s3139 + $0x1] sm:$0xf]
      %v3219 = vpack.c.bf16 %v3218, %v3218
      %v3220 = vld [vmem:[%s1066] sm:$0xf]
      %v3221 = vld [vmem:[%s1066 + $0x4] sm:$0xf]
      %v3222 = vld [vmem:[%s1066 + $0x8] sm:$0xf]
      %v3223 = vld [vmem:[%s1066 + $0xc] sm:$0xf]
      %v3224 = vld [vmem:[%s1066 + $0x10] sm:$0xf]
      %v3225 = vld [vmem:[%s1066 + $0x14] sm:$0xf]
      %v3226 = vld [vmem:[%s1066 + $0x18] sm:$0xf]
      %v3227 = vld [vmem:[%s1066 + $0x1c] sm:$0xf]
      %v3236 = vunpack.c.l.b16 %v3220
      %v3237 = vunpack.c.l.b16 %v3221
      %v3238 = vunpack.c.l.b16 %v3222
      %v3239 = vunpack.c.l.b16 %v3223
      %v3240 = vunpack.c.l.b16 %v3224
      %v3241 = vunpack.c.l.b16 %v3225
      %v3242 = vunpack.c.l.b16 %v3226
      %v3243 = vunpack.c.l.b16 %v3227
      %v3244 = vpack.c.b16 %v3237, %v3236
      %v3245 = vpack.c.b16 %v3239, %v3238
      %v3246 = vpack.c.b16 %v3241, %v3240
      %v3247 = vpack.c.b16 %v3243, %v3242
      %v3253 = vsel %vm545, %v3219, 0
      %3255 = vmatprep.subr.bf16.mxu0 0
      %3256 = vmatpush1.bf16.msra.mxu0 %v3244
      %3257 = vmatprep.subr.bf16.mxu0 0
      %3258 = vmatpush1.bf16.msra.mxu0 %v3245
      %3259 = vmatprep.subr.bf16.mxu0 0
      %3260 = vmatpush1.bf16.msra.mxu0 %v3246
      %3261 = vmatprep.subr.bf16.mxu0 0
      %3262 = vmatpush1.bf16.msra.mxu0 %v3247
      %3263 = vmatprep.subr.bf16.mxu0 0
      %3264 = vmatpush1.bf16.msra.mxu0 0
      %3265 = vmatprep.subr.bf16.mxu0 0
      %3266 = vmatpush1.bf16.msra.mxu0 0
      %3267 = vmatprep.subr.bf16.mxu0 0
      %3268 = vmatpush1.bf16.msra.mxu0 0
      %3269 = vmatprep.subr.bf16.mxu0 0
      %3270 = vmatpush1.bf16.msra.mxu0 0
      %3271 = vmatprep.subr.bf16.mxu0 0
      %3272 = vmatpush1.bf16.msra.mxu0 0
      %3273 = vmatprep.subr.bf16.mxu0 0
      %3274 = vmatpush1.bf16.msra.mxu0 0
      %3275 = vmatprep.subr.bf16.mxu0 0
      %3276 = vmatpush1.bf16.msra.mxu0 0
      %3277 = vmatprep.subr.bf16.mxu0 0
      %3278 = vmatpush1.bf16.msra.mxu0 0
      %3279 = vmatprep.subr.bf16.mxu0 0
      %3280 = vmatpush1.bf16.msra.mxu0 0
      %3281 = vmatprep.subr.bf16.mxu0 0
      %3282 = vmatpush1.bf16.msra.mxu0 0
      %3283 = vmatprep.subr.bf16.mxu0 0
      %3284 = vmatpush1.bf16.msra.mxu0 0
      %3285 = vmatprep.subr.bf16.mxu0 0
      %3286 = vmatpush1.bf16.msra.mxu0 0
      %3287 = vmatprep.mubr.bf16.mxu0 0
      %3288 = vmatmul.mubr.bf16.gmra.mrb[0].mxu0 %v3253
      %v3289 = vpop.f32.mrb[0].mxu0
      %v3290 = vadd.f32 0.0, %v3289
      %v3291 = vpop.f32.mrb[0].mxu0
      %v3292 = vpop.f32.mrb[0].mxu0
      %v3293 = vpop.f32.mrb[0].mxu0
      %3294 = vdwg.mxu0
      %v3295 = vadd.f32 %v3217, %v3290
      %v3296 = vld [vmem:[%s3139 + $0x2] sm:$0xf]
      %v3297 = vpack.c.bf16 %v3296, %v3296
      %v3298 = vld [vmem:[%s1145] sm:$0xf]
      %v3299 = vld [vmem:[%s1145 + $0x4] sm:$0xf]
      %v3300 = vld [vmem:[%s1145 + $0x8] sm:$0xf]
      %v3301 = vld [vmem:[%s1145 + $0xc] sm:$0xf]
      %v3302 = vld [vmem:[%s1145 + $0x10] sm:$0xf]
      %v3303 = vld [vmem:[%s1145 + $0x14] sm:$0xf]
      %v3304 = vld [vmem:[%s1145 + $0x18] sm:$0xf]
      %v3305 = vld [vmem:[%s1145 + $0x1c] sm:$0xf]
      %v3314 = vunpack.c.l.b16 %v3298
      %v3315 = vunpack.c.l.b16 %v3299
      %v3316 = vunpack.c.l.b16 %v3300
      %v3317 = vunpack.c.l.b16 %v3301
      %v3318 = vunpack.c.l.b16 %v3302
      %v3319 = vunpack.c.l.b16 %v3303
      %v3320 = vunpack.c.l.b16 %v3304
      %v3321 = vunpack.c.l.b16 %v3305
      %v3322 = vpack.c.b16 %v3315, %v3314
      %v3323 = vpack.c.b16 %v3317, %v3316
      %v3324 = vpack.c.b16 %v3319, %v3318
      %v3325 = vpack.c.b16 %v3321, %v3320
      %v3331 = vsel %vm545, %v3297, 0
      %3333 = vmatprep.subr.bf16.mxu0 0
      %3334 = vmatpush1.bf16.msra.mxu0 %v3322
      %3335 = vmatprep.subr.bf16.mxu0 0
      %3336 = vmatpush1.bf16.msra.mxu0 %v3323
      %3337 = vmatprep.subr.bf16.mxu0 0
      %3338 = vmatpush1.bf16.msra.mxu0 %v3324
      %3339 = vmatprep.subr.bf16.mxu0 0
      %3340 = vmatpush1.bf16.msra.mxu0 %v3325
      %3341 = vmatprep.subr.bf16.mxu0 0
      %3342 = vmatpush1.bf16.msra.mxu0 0
      %3343 = vmatprep.subr.bf16.mxu0 0
      %3344 = vmatpush1.bf16.msra.mxu0 0
      %3345 = vmatprep.subr.bf16.mxu0 0
      %3346 = vmatpush1.bf16.msra.mxu0 0
      %3347 = vmatprep.subr.bf16.mxu0 0
      %3348 = vmatpush1.bf16.msra.mxu0 0
      %3349 = vmatprep.subr.bf16.mxu0 0
      %3350 = vmatpush1.bf16.msra.mxu0 0
      %3351 = vmatprep.subr.bf16.mxu0 0
      %3352 = vmatpush1.bf16.msra.mxu0 0
      %3353 = vmatprep.subr.bf16.mxu0 0
      %3354 = vmatpush1.bf16.msra.mxu0 0
      %3355 = vmatprep.subr.bf16.mxu0 0
      %3356 = vmatpush1.bf16.msra.mxu0 0
      %3357 = vmatprep.subr.bf16.mxu0 0
      %3358 = vmatpush1.bf16.msra.mxu0 0
      %3359 = vmatprep.subr.bf16.mxu0 0
      %3360 = vmatpush1.bf16.msra.mxu0 0
      %3361 = vmatprep.subr.bf16.mxu0 0
      %3362 = vmatpush1.bf16.msra.mxu0 0
      %3363 = vmatprep.subr.bf16.mxu0 0
      %3364 = vmatpush1.bf16.msra.mxu0 0
      %3365 = vmatprep.mubr.bf16.mxu0 0
      %3366 = vmatmul.mubr.bf16.gmra.mrb[0].mxu0 %v3331
      %v3367 = vpop.f32.mrb[0].mxu0
      %v3368 = vadd.f32 0.0, %v3367
      %v3369 = vpop.f32.mrb[0].mxu0
      %v3370 = vpop.f32.mrb[0].mxu0
      %v3371 = vpop.f32.mrb[0].mxu0
      %3372 = vdwg.mxu0
      %v3373 = vadd.f32 %v3295, %v3368
      %v3374 = vmul.f32 %v3373, 0.01
      %v3375 = vmax.f32 %v3373, %v3374
      %3376 = vst.msk [vmem:[%s229 + $0xc] sm:$0xf] %vm490, %v3375
      %s3377 = smul.u32 2, %s16
      %p3378 = scmp.lt.s32.totalorder %s3377, 3
      %s3379 = scalar_select %p3378, %s3377, 3
      %s3380 = smul.addr %s3379, 8
      %s3381 = scalar_lea.vmem %s5, %s3380
      // Predicated region
      $region41: #{encoder_forward.4} parent=39 // pred_check
        %p3382 = pneg %p144
      $region42: #{encoder_forward.4} parent=39 // pred_check_branch
        %3384 = sbr.rel (%p3382) target = $region44
      $region43: #{encoder_forward.4} parent=39 // pred_region
        %s3385 = smul.u32 2, %s16
      $region44: #{encoder_forward.4} parent=39 // pred_fallthru
        _
    $region40: #{encoder_forward.4} parent=5 // pred_fallthru
      _
    %p3386 = scmp.le.s32.totalorder 2, %s11
    // Predicated region
    $region45: #{encoder_forward.4} parent=5 // pred_check
      %p3387 = pneg %p3386
    $region46: #{encoder_forward.4} parent=5 // pred_check_branch
      %3389 = sbr.rel (%p3387) target = $region48
    $region47: #{encoder_forward.4} parent=5 // pred_region
      %s3390 = ssub.s32 %s11, 2
      // Predicated region
      $region49: #{encoder_forward.4} parent=47 // pred_check
        %p3391 = pneg %p150
      $region50: #{encoder_forward.4} parent=47 // pred_check_branch
        %3393 = sbr.rel (%p3391) target = $region52
      $region51: #{encoder_forward.4} parent=47 // pred_region
        %s3394 = smul.u32 2, %s17
        %p3395 = scmp.lt.s32.totalorder %s3394, 3
        %s3396 = scalar_select %p3395, %s3394, 3
        %s3397 = smul.addr %s3396, 8
        %s3398 = scalar_lea.vmem %s5, %s3397
      $region52: #{encoder_forward.4} parent=47 // pred_fallthru
        _
    $region48: #{encoder_forward.4} parent=5 // pred_fallthru
      _
  $region6: #{encoder_forward.4} parent=0 // loop_footer
    %s15 = sadd.s32 1, %s11
  $region7: #{encoder_forward.4} parent=0 // loop_footer_branch
    %10 = sbr.rel target = $region3
  $region8: #{encoder_forward.4} parent=0 // loop_exit
    _

// kernel: encoder_forward.3
$region0: #{encoder_forward.3}
  #allocation0 [shape = 'u32[]', space=smem, size = 0x4, offset = 0x4, fixed_abs, tag = 'smem constant byte address 0x4 - core index']
  #allocation1 [shape = 'u32[144,128]{1,0:T(1,128)}', space=vmem, size = 0x12000, scoped, tag = 'internal scratch']
  #allocation2 [shape = 'f32[10,10,32]{2,1,0:T(8,128)}', space=vmem, size = 0x14000, scoped, tag = 'scratch operand']
  %s0 = inlined_call_operand.vmem [shape: f32[128,9], index: 0, kind: input, shape index: {}]
  %s1 = inlined_call_operand.vmem [shape: bf16[9,64], index: 1, kind: input, shape index: {}]
  %s2 = inlined_call_operand.vmem [shape: f32[1,64], index: 2, kind: input, shape index: {}]
  %s3 = inlined_call_operand.vmem [shape: bf16[9,32,32], index: 3, kind: input, shape index: {}]
  %s4 = inlined_call_operand.vmem [shape: f32[1,32], index: 4, kind: input, shape index: {}]
  %s5 = inlined_call_operand.vmem [shape: f32[128,32], index: 5, kind: output, shape index: {}]
  %s6 = sld [smem:[#allocation0]]
  $region53: #{encoder_forward.3} parent=0
    _
  %s8 = ssub.s32 1, %s6
  %s9 = scalar_select 0, %s8, %s6
  loop: start=0, step=1, limit=4
  $region2: #{encoder_forward.3} parent=0 // loop_pre_header
    _
  $region3: #{encoder_forward.3} parent=0 // loop_header
    %s11 = sphi 0, %s15
    %p12 = scmp.ge.s32.totalorder %s11, 4
    %s21 = sphi 0, %s23
    %s24 = sphi 0, %s21
    %s25 = sphi 0, %s24
    %s41 = sphi 0, %s25
    %s45 = sphi 0, %s45
    %s47 = sphi 0, %s45
    %s48 = sphi 0, %s47
    %s62 = sphi 0, %s48
    %s66 = sphi 0, %s66
    %s68 = sphi 0, %s66
    %s69 = sphi 0, %s68
    %s83 = sphi 0, %s69
    %s87 = sphi 0, %s87
    %s89 = sphi 0, %s87
    %s90 = sphi 0, %s89
    %s104 = sphi 0, %s90
    %s108 = sphi 0, %s108
    %s110 = sphi 0, %s108
    %s111 = sphi 0, %s110
    %s125 = sphi 0, %s111
    %s131 = sphi 0, %s133
    %s134 = sphi 0, %s131
    %s135 = sphi 0, %s134
    %s151 = sphi 0, %s135
  $region4: #{encoder_forward.3} parent=0 // loop_header_branch
    %14 = sbr.rel (%p12) target = $region8
  $region5: #{encoder_forward.3} parent=0 // loop_body
    %s16 = ssub.s32 %s11, 1
    %s17 = ssub.s32 %s11, 2
    %s18 = sadd.s32 %s11, 1
    %s19 = ssub.s32 %s11, %s18
    %p20 = scmp.eq.s32.totalorder %s19, 0
    %s22 = sadd.s32 %s21, 1
    %s23 = scalar_select %p20, %s21, %s22
    %p26 = pneg %p20
    %p27 = scmp.eq.s32.totalorder %s11, 1
    %p28 = por %p26, %p27
    %p29 = scmp.ne.s32.totalorder %s21, %s24
    %p30 = scmp.eq.s32.totalorder %s11, 0
    %p31 = por %p29, %p30
    %p32 = scmp.ne.s32.totalorder %s21, %s24
    %p33 = scmp.eq.s32.totalorder %s16, 1
    %p34 = por %p32, %p33
    %p35 = scmp.ne.s32.totalorder %s24, %s25
    %p36 = scmp.eq.s32.totalorder %s16, 0
    %p37 = por %p35, %p36
    %p38 = scmp.ne.s32.totalorder %s24, %s25
    %p39 = scmp.eq.s32.totalorder %s17, 1
    %p40 = por %p38, %p39
    %p42 = scmp.ne.s32.totalorder %s25, %s41
    %p43 = scmp.eq.s32.totalorder %s17, 0
    %p44 = por %p42, %p43
    %s46 = sadd.s32 %s45, 1
    %p49 = scmp.eq.s32.totalorder %s11, 1
    %p50 = scmp.ne.s32.totalorder %s45, %s47
    %p51 = scmp.eq.s32.totalorder %s11, 0
    %p52 = por %p50, %p51
    %p53 = scmp.ne.s32.totalorder %s45, %s47
    %p54 = scmp.eq.s32.totalorder %s16, 1
    %p55 = por %p53, %p54
    %p56 = scmp.ne.s32.totalorder %s47, %s48
    %p57 = scmp.eq.s32.totalorder %s16, 0
    %p58 = por %p56, %p57
    %p59 = scmp.ne.s32.totalorder %s47, %s48
    %p60 = scmp.eq.s32.totalorder %s17, 1
    %p61 = por %p59, %p60
    %p63 = scmp.ne.s32.totalorder %s48, %s62
    %p64 = scmp.eq.s32.totalorder %s17, 0
    %p65 = por %p63, %p64
    %s67 = sadd.s32 %s66, 1
    %p70 = scmp.eq.s32.totalorder %s11, 1
    %p71 = scmp.ne.s32.totalorder %s66, %s68
    %p72 = scmp.eq.s32.totalorder %s11, 0
    %p73 = por %p71, %p72
    %p74 = scmp.ne.s32.totalorder %s66, %s68
    %p75 = scmp.eq.s32.totalorder %s16, 1
    %p76 = por %p74, %p75
    %p77 = scmp.ne.s32.totalorder %s68, %s69
    %p78 = scmp.eq.s32.totalorder %s16, 0
    %p79 = por %p77, %p78
    %p80 = scmp.ne.s32.totalorder %s68, %s69
    %p81 = scmp.eq.s32.totalorder %s17, 1
    %p82 = por %p80, %p81
    %p84 = scmp.ne.s32.totalorder %s69, %s83
    %p85 = scmp.eq.s32.totalorder %s17, 0
    %p86 = por %p84, %p85
    %s88 = sadd.s32 %s87, 1
    %p91 = scmp.eq.s32.totalorder %s11, 1
    %p92 = scmp.ne.s32.totalorder %s87, %s89
    %p93 = scmp.eq.s32.totalorder %s11, 0
    %p94 = por %p92, %p93
    %p95 = scmp.ne.s32.totalorder %s87, %s89
    %p96 = scmp.eq.s32.totalorder %s16, 1
    %p97 = por %p95, %p96
    %p98 = scmp.ne.s32.totalorder %s89, %s90
    %p99 = scmp.eq.s32.totalorder %s16, 0
    %p100 = por %p98, %p99
    %p101 = scmp.ne.s32.totalorder %s89, %s90
    %p102 = scmp.eq.s32.totalorder %s17, 1
    %p103 = por %p101, %p102
    %p105 = scmp.ne.s32.totalorder %s90, %s104
    %p106 = scmp.eq.s32.totalorder %s17, 0
    %p107 = por %p105, %p106
    %s109 = sadd.s32 %s108, 1
    %p112 = scmp.eq.s32.totalorder %s11, 1
    %p113 = scmp.ne.s32.totalorder %s108, %s110
    %p114 = scmp.eq.s32.totalorder %s11, 0
    %p115 = por %p113, %p114
    %p116 = scmp.ne.s32.totalorder %s108, %s110
    %p117 = scmp.eq.s32.totalorder %s16, 1
    %p118 = por %p116, %p117
    %p119 = scmp.ne.s32.totalorder %s110, %s111
    %p120 = scmp.eq.s32.totalorder %s16, 0
    %p121 = por %p119, %p120
    %p122 = scmp.ne.s32.totalorder %s110, %s111
    %p123 = scmp.eq.s32.totalorder %s17, 1
    %p124 = por %p122, %p123
    %p126 = scmp.ne.s32.totalorder %s111, %s125
    %p127 = scmp.eq.s32.totalorder %s17, 0
    %p128 = por %p126, %p127
    %s129 = ssub.s32 %s11, %s18
    %p130 = scmp.eq.s32.totalorder %s129, 0
    %s132 = sadd.s32 %s131, 1
    %s133 = scalar_select %p130, %s131, %s132
    %p136 = pneg %p130
    %p137 = scmp.eq.s32.totalorder %s11, 1
    %p138 = por %p136, %p137
    %p139 = scmp.ne.s32.totalorder %s131, %s134
    %p140 = scmp.eq.s32.totalorder %s11, 0
    %p141 = por %p139, %p140
    %p142 = scmp.ne.s32.totalorder %s131, %s134
    %p143 = scmp.eq.s32.totalorder %s16, 1
    %p144 = por %p142, %p143
    %p145 = scmp.ne.s32.totalorder %s134, %s135
    %p146 = scmp.eq.s32.totalorder %s16, 0
    %p147 = por %p145, %p146
    %p148 = scmp.ne.s32.totalorder %s134, %s135
    %p149 = scmp.eq.s32.totalorder %s17, 1
    %p150 = por %p148, %p149
    %p152 = scmp.ne.s32.totalorder %s135, %s151
    %p153 = scmp.eq.s32.totalorder %s17, 0
    %p154 = por %p152, %p153
    %p155 = scmp.le.s32.totalorder 1, %s11
    %p156 = scmp.lt.s32.totalorder %s11, 3
    %p157 = pnand %p155, %p156
    %p158 = pneg %p157
    // Predicated region
    $region9: #{encoder_forward.3} parent=5 // pred_check
      _
    $region10: #{encoder_forward.3} parent=5 // pred_check_branch
      %160 = sbr.rel (%p157) target = $region12
    $region11: #{encoder_forward.3} parent=5 // pred_region
      %s161 = ssub.s32 %s11, 1
      // Predicated region
      $region13: #{encoder_forward.3} parent=11 // pred_check
        %p162 = pneg %p58
      $region14: #{encoder_forward.3} parent=11 // pred_check_branch
        %164 = sbr.rel (%p162) target = $region16
      $region15: #{encoder_forward.3} parent=11 // pred_region
        _
      $region16: #{encoder_forward.3} parent=11 // pred_fallthru
        _
      // Predicated region
      $region17: #{encoder_forward.3} parent=11 // pred_check
        %p165 = pneg %p79
      $region18: #{encoder_forward.3} parent=11 // pred_check_branch
        %167 = sbr.rel (%p165) target = $region20
      $region19: #{encoder_forward.3} parent=11 // pred_region
        _
      $region20: #{encoder_forward.3} parent=11 // pred_fallthru
        _
      // Predicated region
      $region21: #{encoder_forward.3} parent=11 // pred_check
        %p168 = pneg %p100
      $region22: #{encoder_forward.3} parent=11 // pred_check_branch
        %170 = sbr.rel (%p168) target = $region24
      $region23: #{encoder_forward.3} parent=11 // pred_region
        _
      $region24: #{encoder_forward.3} parent=11 // pred_fallthru
        _
      // Predicated region
      $region25: #{encoder_forward.3} parent=11 // pred_check
        %p171 = pneg %p121
      $region26: #{encoder_forward.3} parent=11 // pred_check_branch
        %173 = sbr.rel (%p171) target = $region28
      $region27: #{encoder_forward.3} parent=11 // pred_region
        _
      $region28: #{encoder_forward.3} parent=11 // pred_fallthru
        _
    $region12: #{encoder_forward.3} parent=5 // pred_fallthru
      _
    %p174 = scmp.lt.s32.totalorder %s11, 2
    // Predicated region
    $region29: #{encoder_forward.3} parent=5 // pred_check
      %p175 = pneg %p174
    $region30: #{encoder_forward.3} parent=5 // pred_check_branch
      %177 = sbr.rel (%p175) target = $region32
    $region31: #{encoder_forward.3} parent=5 // pred_region
      // Predicated region
      $region33: #{encoder_forward.3} parent=31 // pred_check
        %p178 = pneg %p31
      $region34: #{encoder_forward.3} parent=31 // pred_check_branch
        %180 = sbr.rel (%p178) target = $region36
      $region35: #{encoder_forward.3} parent=31 // pred_region
        %s181 = smul.u32 8, %s11
        %p182 = scmp.lt.s32.totalorder %s181, 15
        %s183 = scalar_select %p182, %s181, 15
        %s184 = smul.addr %s183, 8
        %s185 = scalar_lea.vmem %s0, %s184
        %s186 = smul.u32 8, %s11
      $region36: #{encoder_forward.3} parent=31 // pred_fallthru
        _
    $region32: #{encoder_forward.3} parent=5 // pred_fallthru
      _
    %p187 = scmp.le.s32.totalorder 1, %s11
    %p188 = scmp.lt.s32.totalorder %s11, 3
    %p189 = pnand %p187, %p188
    %p190 = pneg %p189
    // Predicated region
    $region37: #{encoder_forward.3} parent=5 // pred_check
      _
    $region38: #{encoder_forward.3} parent=5 // pred_check_branch
      %192 = sbr.rel (%p189) target = $region40
    $region39: #{encoder_forward.3} parent=5 // pred_region
      %s193 = ssub.s32 %s11, 1
      %s194 = smul.u32 8, %s16
      %p195 = scmp.lt.s32.totalorder %s194, 15
      %s196 = scalar_select %p195, %s194, 15
      %s197 = smul.addr %s196, 8
      %s198 = scalar_lea.vmem %s0, %s197
      %p199 = pneg %p37
      %p200 = pneg %p34
      %p201 = pneg %p58
      %p202 = pneg %p55
      %p203 = pneg %p79
      %p204 = pneg %p76
      %p205 = pneg %p100
      %p206 = pneg %p97
      %p207 = pneg %p121
      %p208 = pneg %p118
      %p209 = pneg %p147
      %p210 = pneg %p144
      %s211 = smul.u32 8, %s16
      %p212 = scmp.lt.s32.totalorder %s211, 15
      %s213 = scalar_select %p212, %s211, 15
      %s214 = smul.addr %s213, 8
      %s215 = scalar_lea.vmem %s5, %s214
      %s216 = smul.u32 8, %s16
      %p217 = scmp.lt.s32.totalorder %s216, 15
      %s218 = scalar_select %p217, %s216, 15
      %s219 = smul.addr %s218, 8
      %s220 = scalar_lea.vmem %s0, %s219
      %s221 = smul.u32 8, %s16
      %s222 = smul.u32 8, %s16
      %p223 = scmp.lt.s32.totalorder %s222, 15
      %s224 = scalar_select %p223, %s222, 15
      %s225 = smul.addr %s224, 8
      %s226 = scalar_lea.vmem %s5, %s225
      %s227 = smul.u32 8, %s16
      %v229 = vld [vmem:[%s220] sm:$0xff]
      %v230 = vld [vmem:[%s220 + $0x8] sm:$0xff]
      %v231 = vld [vmem:[%s220 + $0x10] sm:$0xff]
      %v232 = vld [vmem:[%s220 + $0x18] sm:$0xff]
      %v233 = vld [vmem:[%s220 + $0x20] sm:$0xff]
      %v234 = vld [vmem:[%s220 + $0x28] sm:$0xff]
      %v235 = vld [vmem:[%s220 + $0x30] sm:$0xff]
      %v236 = vld [vmem:[%s220 + $0x38] sm:$0xff]
      %v237 = vpack.c.bf16 %v230, %v229
      %v238 = vpack.c.bf16 %v232, %v231
      %v239 = vpack.c.bf16 %v234, %v233
      %v240 = vpack.c.bf16 %v236, %v235
      %v241 = vld [vmem:[%s1] sm:$0xf]
      %v242 = vld [vmem:[%s1 + $0x4] sm:$0x1]
      %v243 = vld [vmem:[%s2] sm:$0x1]
      %v245 = vlaneseq
      %v246 = vshrl.u32 %v245, 7
      %v247 = vsub.s32 0, %v246
      %v248 = vrot.slane %v243, %v247
      %v252 = vunpack.c.l.b16 %v241
      %v253 = vunpack.c.l.b16 %v242
      %v254 = vpack.c.b16 %v253, %v252
      %vm255 = vcmask 72704
      %v257 = vsel %vm255, %v237, 0
      %v260 = vsel %vm255, %v238, 0
      %v263 = vsel %vm255, %v239, 0
      %v266 = vsel %vm255, %v240, 0
      %vm268 = vcmask 1043456
      %vm269 = vcmask 1044480
      %v270 = vsel %vm268, 4294967295, 65535
      %v271 = vsel %vm269, %v270, 0
      %v273 = vand.u32 %v254, %v271
      %275 = vmatprep.subr.bf16.mxu0 0
      %276 = vmatpush1.bf16.msra.mxu0 %v273
      %277 = vmatprep.subr.bf16.mxu0 0
      %278 = vmatpush1.bf16.msra.mxu0 0
      %279 = vmatprep.subr.bf16.mxu0 0
      %280 = vmatpush1.bf16.msra.mxu0 0
      %281 = vmatprep.subr.bf16.mxu0 0
      %282 = vmatpush1.bf16.msra.mxu0 0
      %283 = vmatprep.subr.bf16.mxu0 0
      %284 = vmatpush1.bf16.msra.mxu0 0
      %285 = vmatprep.subr.bf16.mxu0 0
      %286 = vmatpush1.bf16.msra.mxu0 0
      %287 = vmatprep.subr.bf16.mxu0 0
      %288 = vmatpush1.bf16.msra.mxu0 0
      %289 = vmatprep.subr.bf16.mxu0 0
      %290 = vmatpush1.bf16.msra.mxu0 0
      %291 = vmatprep.subr.bf16.mxu0 0
      %292 = vmatpush1.bf16.msra.mxu0 0
      %293 = vmatprep.subr.bf16.mxu0 0
      %294 = vmatpush1.bf16.msra.mxu0 0
      %295 = vmatprep.subr.bf16.mxu0 0
      %296 = vmatpush1.bf16.msra.mxu0 0
      %297 = vmatprep.subr.bf16.mxu0 0
      %298 = vmatpush1.bf16.msra.mxu0 0
      %299 = vmatprep.subr.bf16.mxu0 0
      %300 = vmatpush1.bf16.msra.mxu0 0
      %301 = vmatprep.subr.bf16.mxu0 0
      %302 = vmatpush1.bf16.msra.mxu0 0
      %303 = vmatprep.subr.bf16.mxu0 0
      %304 = vmatpush1.bf16.msra.mxu0 0
      %305 = vmatprep.subr.bf16.mxu0 0
      %306 = vmatpush1.bf16.msra.mxu0 0
      %307 = vmatprep.mubr.bf16.mxu0 0
      %308 = vmatmul.mubr.bf16.gmra.mrb[0].mxu0 %v257
      %v309 = vpop.f32.mrb[0].mxu0
      %v310 = vadd.f32 %v248, %v309
      %v311 = vpop.f32.mrb[0].mxu0
      %v312 = vpop.f32.mrb[0].mxu0
      %v313 = vadd.f32 %v248, %v312
      %v314 = vpop.f32.mrb[0].mxu0
      %315 = vmatprep.mubr.bf16.mxu0 0
      %316 = vmatmul.mubr.bf16.gmra.mrb[0].mxu0 %v260
      %v317 = vpop.f32.mrb[0].mxu0
      %v318 = vadd.f32 %v248, %v317
      %v319 = vpop.f32.mrb[0].mxu0
      %v320 = vpop.f32.mrb[0].mxu0
      %v321 = vadd.f32 %v248, %v320
      %v322 = vpop.f32.mrb[0].mxu0
      %323 = vmatprep.mubr.bf16.mxu0 0
      %324 = vmatmul.mubr.bf16.gmra.mrb[0].mxu0 %v263
      %v325 = vpop.f32.mrb[0].mxu0
      %v326 = vadd.f32 %v248, %v325
      %v327 = vpop.f32.mrb[0].mxu0
      %v328 = vpop.f32.mrb[0].mxu0
      %v329 = vadd.f32 %v248, %v328
      %v330 = vpop.f32.mrb[0].mxu0
      %331 = vmatprep.mubr.bf16.mxu0 0
      %332 = vmatmul.mubr.bf16.gmra.mrb[0].mxu0 %v266
      %v333 = vpop.f32.mrb[0].mxu0
      %v334 = vadd.f32 %v248, %v333
      %v335 = vpop.f32.mrb[0].mxu0
      %v336 = vpop.f32.mrb[0].mxu0
      %v337 = vadd.f32 %v248, %v336
      %v338 = vpop.f32.mrb[0].mxu0
      %339 = vdwg.mxu0
      %v340 = vmul.f32 %v310, 0.01
      %v341 = vmul.f32 %v313, 0.01
      %v342 = vmul.f32 %v318, 0.01
      %v343 = vmul.f32 %v321, 0.01
      %v344 = vmul.f32 %v326, 0.01
      %v345 = vmul.f32 %v329, 0.01
      %v346 = vmul.f32 %v334, 0.01
      %v347 = vmul.f32 %v337, 0.01
      %v348 = vmax.f32 %v310, %v340
      %v349 = vmax.f32 %v313, %v341
      %v350 = vmax.f32 %v318, %v342
      %v351 = vmax.f32 %v321, %v343
      %v352 = vmax.f32 %v326, %v344
      %v353 = vmax.f32 %v329, %v345
      %v354 = vmax.f32 %v334, %v346
      %v355 = vmax.f32 %v337, %v347
      %vm356 = vcmask 261120
      %357 = vst.msk [vmem:[#allocation2] sm:$0xff] %vm356, 0.0
      %vm358 = vcmask 254976
      %359 = vst.msk [vmem:[#allocation2 + $0x8] sm:$0x3] %vm358, 0.0
      %360 = vst.msk [vmem:[#allocation2 + $0x10] sm:$0xff] %vm356, 0.0
      %361 = vst.msk [vmem:[#allocation2 + $0x18] sm:$0x3] %vm358, 0.0
      %362 = vst.msk [vmem:[#allocation2 + $0x20] sm:$0xff] %vm356, 0.0
      %363 = vst.msk [vmem:[#allocation2 + $0x28] sm:$0x3] %vm358, 0.0
      %364 = vst.msk [vmem:[#allocation2 + $0x30] sm:$0xff] %vm356, 0.0
      %365 = vst.msk [vmem:[#allocation2 + $0x38] sm:$0x3] %vm358, 0.0
      %366 = vst.msk [vmem:[#allocation2 + $0x40] sm:$0xff] %vm356, 0.0
      %367 = vst.msk [vmem:[#allocation2 + $0x48] sm:$0x3] %vm358, 0.0
      %368 = vst.msk [vmem:[#allocation2 + $0x50] sm:$0xff] %vm356, 0.0
      %369 = vst.msk [vmem:[#allocation2 + $0x58] sm:$0x3] %vm358, 0.0
      %370 = vst.msk [vmem:[#allocation2 + $0x60] sm:$0xff] %vm356, 0.0
      %371 = vst.msk [vmem:[#allocation2 + $0x68] sm:$0x3] %vm358, 0.0
      %372 = vst.msk [vmem:[#allocation2 + $0x70] sm:$0xff] %vm356, 0.0
      %373 = vst.msk [vmem:[#allocation2 + $0x78] sm:$0x3] %vm358, 0.0
      %374 = vst.msk [vmem:[#allocation2 + $0x80] sm:$0xff] %vm356, 0.0
      %375 = vst.msk [vmem:[#allocation2 + $0x88] sm:$0x3] %vm358, 0.0
      %376 = vst.msk [vmem:[#allocation2 + $0x90] sm:$0xff] %vm356, 0.0
      %377 = vst.msk [vmem:[#allocation2 + $0x98] sm:$0x3] %vm358, 0.0
      %s378 = scalar_lea.vmem [#allocation2], 16
      %379 = vst.msk [vmem:[%s378 + $0x1] sm:$0xff] %vm356, %v348
      %s380 = scalar_lea.vmem [#allocation2], 32
      %381 = vst.msk [vmem:[%s380 + $0x1] sm:$0xff] %vm356, %v349
      %s382 = scalar_lea.vmem [#allocation2], 48
      %383 = vst.msk [vmem:[%s382 + $0x1] sm:$0xff] %vm356, %v350
      %s384 = scalar_lea.vmem [#allocation2], 64
      %385 = vst.msk [vmem:[%s384 + $0x1] sm:$0xff] %vm356, %v351
      %s386 = scalar_lea.vmem [#allocation2], 80
      %387 = vst.msk [vmem:[%s386 + $0x1] sm:$0xff] %vm356, %v352
      %s388 = scalar_lea.vmem [#allocation2], 96
      %389 = vst.msk [vmem:[%s388 + $0x1] sm:$0xff] %vm356, %v353
      %s390 = scalar_lea.vmem [#allocation2], 112
      %391 = vst.msk [vmem:[%s390 + $0x1] sm:$0xff] %vm356, %v354
      %s392 = scalar_lea.vmem [#allocation2], 128
      %393 = vst.msk [vmem:[%s392 + $0x1] sm:$0xff] %vm356, %v355
      %v394 = vld [vmem:[%s4] sm:$0x1]
      %v396 = vlaneseq
      %v397 = vshrl.u32 %v396, 7
      %v398 = vsub.s32 0, %v397
      %v399 = vrot.slane %v394, %v398
      %402 = vrot.lane.b32.xlu0 %v310, 96
      %v403 = vpop.permute.xlu0 %402
      %v405 = vadd.f32 %v399, %v403
      %v406 = vld [vmem:[#allocation2] sm:$0xff]
      %v407 = vpack.c.bf16 %v406, %v406
      %v408 = vld [vmem:[%s3] sm:$0xf]
      %v409 = vld [vmem:[%s3 + $0x4] sm:$0xf]
      %v410 = vld [vmem:[%s3 + $0x8] sm:$0xf]
      %v411 = vld [vmem:[%s3 + $0xc] sm:$0xf]
      %v416 = vunpack.c.l.b16 %v408
      %v417 = vunpack.c.l.b16 %v409
      %v418 = vunpack.c.l.b16 %v410
      %v419 = vunpack.c.l.b16 %v411
      %v420 = vpack.c.b16 %v417, %v416
      %v421 = vpack.c.b16 %v419, %v418
      %v425 = vsel %vm356, %v407, 0
      %427 = vmatprep.subr.bf16.mxu0 0
      %428 = vmatpush1.bf16.msra.mxu0 %v420
      %429 = vmatprep.subr.bf16.mxu0 0
      %430 = vmatpush1.bf16.msra.mxu0 %v421
      %431 = vmatprep.subr.bf16.mxu0 0
      %432 = vmatpush1.bf16.msra.mxu0 0
      %433 = vmatprep.subr.bf16.mxu0 0
      %434 = vmatpush1.bf16.msra.mxu0 0
      %435 = vmatprep.subr.bf16.mxu0 0
      %436 = vmatpush1.bf16.msra.mxu0 0
      %437 = vmatprep.subr.bf16.mxu0 0
      %438 = vmatpush1.bf16.msra.mxu0 0
      %439 = vmatprep.subr.bf16.mxu0 0
      %440 = vmatpush1.bf16.msra.mxu0 0
      %441 = vmatprep.subr.bf16.mxu0 0
      %442 = vmatpush1.bf16.msra.mxu0 0
      %443 = vmatprep.subr.bf16.mxu0 0
      %444 = vmatpush1.bf16.msra.mxu0 0
      %445 = vmatprep.subr.bf16.mxu0 0
      %446 = vmatpush1.bf16.msra.mxu0 0
      %447 = vmatprep.subr.bf16.mxu0 0
      %448 = vmatpush1.bf16.msra.mxu0 0
      %449 = vmatprep.subr.bf16.mxu0 0
      %450 = vmatpush1.bf16.msra.mxu0 0
      %451 = vmatprep.subr.bf16.mxu0 0
      %452 = vmatpush1.bf16.msra.mxu0 0
      %453 = vmatprep.subr.bf16.mxu0 0
      %454 = vmatpush1.bf16.msra.mxu0 0
      %455 = vmatprep.subr.bf16.mxu0 0
      %456 = vmatpush1.bf16.msra.mxu0 0
      %457 = vmatprep.subr.bf16.mxu0 0
      %458 = vmatpush1.bf16.msra.mxu0 0
      %459 = vmatprep.mubr.bf16.mxu0 0
      %460 = vmatmul.mubr.bf16.gmra.mrb[0].mxu0 %v425
      %v461 = vpop.f32.mrb[0].mxu0
      %v462 = vadd.f32 0.0, %v461
      %v463 = vpop.f32.mrb[0].mxu0
      %v464 = vpop.f32.mrb[0].mxu0
      %v465 = vpop.f32.mrb[0].mxu0
      %466 = vdwg.mxu0
      %v467 = vadd.f32 %v405, %v462
      %v468 = vld [vmem:[#allocation2 + $0x1] sm:$0xff]
      %v469 = vpack.c.bf16 %v468, %v468
      %s470 = scalar_lea.vmem %s3, 16
      %v471 = vld [vmem:[%s470] sm:$0xf]
      %v472 = vld [vmem:[%s470 + $0x4] sm:$0xf]
      %v473 = vld [vmem:[%s470 + $0x8] sm:$0xf]
      %v474 = vld [vmem:[%s470 + $0xc] sm:$0xf]
      %v479 = vunpack.c.l.b16 %v471
      %v480 = vunpack.c.l.b16 %v472
      %v481 = vunpack.c.l.b16 %v473
      %v482 = vunpack.c.l.b16 %v474
      %v483 = vpack.c.b16 %v480, %v479
      %v484 = vpack.c.b16 %v482, %v481
      %v488 = vsel %vm356, %v469, 0
      %490 = vmatprep.subr.bf16.mxu0 0
      %491 = vmatpush1.bf16.msra.mxu0 %v483
      %492 = vmatprep.subr.bf16.mxu0 0
      %493 = vmatpush1.bf16.msra.mxu0 %v484
      %494 = vmatprep.subr.bf16.mxu0 0
      %495 = vmatpush1.bf16.msra.mxu0 0
      %496 = vmatprep.subr.bf16.mxu0 0
      %497 = vmatpush1.bf16.msra.mxu0 0
      %498 = vmatprep.subr.bf16.mxu0 0
      %499 = vmatpush1.bf16.msra.mxu0 0
      %500 = vmatprep.subr.bf16.mxu0 0
      %501 = vmatpush1.bf16.msra.mxu0 0
      %502 = vmatprep.subr.bf16.mxu0 0
      %503 = vmatpush1.bf16.msra.mxu0 0
      %504 = vmatprep.subr.bf16.mxu0 0
      %505 = vmatpush1.bf16.msra.mxu0 0
      %506 = vmatprep.subr.bf16.mxu0 0
      %507 = vmatpush1.bf16.msra.mxu0 0
      %508 = vmatprep.subr.bf16.mxu0 0
      %509 = vmatpush1.bf16.msra.mxu0 0
      %510 = vmatprep.subr.bf16.mxu0 0
      %511 = vmatpush1.bf16.msra.mxu0 0
      %512 = vmatprep.subr.bf16.mxu0 0
      %513 = vmatpush1.bf16.msra.mxu0 0
      %514 = vmatprep.subr.bf16.mxu0 0
      %515 = vmatpush1.bf16.msra.mxu0 0
      %516 = vmatprep.subr.bf16.mxu0 0
      %517 = vmatpush1.bf16.msra.mxu0 0
      %518 = vmatprep.subr.bf16.mxu0 0
      %519 = vmatpush1.bf16.msra.mxu0 0
      %520 = vmatprep.subr.bf16.mxu0 0
      %521 = vmatpush1.bf16.msra.mxu0 0
      %522 = vmatprep.mubr.bf16.mxu0 0
      %523 = vmatmul.mubr.bf16.gmra.mrb[0].mxu0 %v488
      %v524 = vpop.f32.mrb[0].mxu0
      %v525 = vadd.f32 0.0, %v524
      %v526 = vpop.f32.mrb[0].mxu0
      %v527 = vpop.f32.mrb[0].mxu0
      %v528 = vpop.f32.mrb[0].mxu0
      %529 = vdwg.mxu0
      %v530 = vadd.f32 %v467, %v525
      %v531 = vld [vmem:[#allocation2 + $0x2] sm:$0xff]
      %v532 = vpack.c.bf16 %v531, %v531
      %s533 = scalar_lea.vmem %s3, 32
      %v534 = vld [vmem:[%s533] sm:$0xf]
      %v535 = vld [vmem:[%s533 + $0x4] sm:$0xf]
      %v536 = vld [vmem:[%s533 + $0x8] sm:$0xf]
      %v537 = vld [vmem:[%s533 + $0xc] sm:$0xf]
      %v542 = vunpack.c.l.b16 %v534
      %v543 = vunpack.c.l.b16 %v535
      %v544 = vunpack.c.l.b16 %v536
      %v545 = vunpack.c.l.b16 %v537
      %v546 = vpack.c.b16 %v543, %v542
      %v547 = vpack.c.b16 %v545, %v544
      %v551 = vsel %vm356, %v532, 0
      %553 = vmatprep.subr.bf16.mxu0 0
      %554 = vmatpush1.bf16.msra.mxu0 %v546
      %555 = vmatprep.subr.bf16.mxu0 0
      %556 = vmatpush1.bf16.msra.mxu0 %v547
      %557 = vmatprep.subr.bf16.mxu0 0
      %558 = vmatpush1.bf16.msra.mxu0 0
      %559 = vmatprep.subr.bf16.mxu0 0
      %560 = vmatpush1.bf16.msra.mxu0 0
      %561 = vmatprep.subr.bf16.mxu0 0
      %562 = vmatpush1.bf16.msra.mxu0 0
      %563 = vmatprep.subr.bf16.mxu0 0
      %564 = vmatpush1.bf16.msra.mxu0 0
      %565 = vmatprep.subr.bf16.mxu0 0
      %566 = vmatpush1.bf16.msra.mxu0 0
      %567 = vmatprep.subr.bf16.mxu0 0
      %568 = vmatpush1.bf16.msra.mxu0 0
      %569 = vmatprep.subr.bf16.mxu0 0
      %570 = vmatpush1.bf16.msra.mxu0 0
      %571 = vmatprep.subr.bf16.mxu0 0
      %572 = vmatpush1.bf16.msra.mxu0 0
      %573 = vmatprep.subr.bf16.mxu0 0
      %574 = vmatpush1.bf16.msra.mxu0 0
      %575 = vmatprep.subr.bf16.mxu0 0
      %576 = vmatpush1.bf16.msra.mxu0 0
      %577 = vmatprep.subr.bf16.mxu0 0
      %578 = vmatpush1.bf16.msra.mxu0 0
      %579 = vmatprep.subr.bf16.mxu0 0
      %580 = vmatpush1.bf16.msra.mxu0 0
      %581 = vmatprep.subr.bf16.mxu0 0
      %582 = vmatpush1.bf16.msra.mxu0 0
      %583 = vmatprep.subr.bf16.mxu0 0
      %584 = vmatpush1.bf16.msra.mxu0 0
      %585 = vmatprep.mubr.bf16.mxu0 0
      %586 = vmatmul.mubr.bf16.gmra.mrb[0].mxu0 %v551
      %v587 = vpop.f32.mrb[0].mxu0
      %v588 = vadd.f32 0.0, %v587
      %v589 = vpop.f32.mrb[0].mxu0
      %v590 = vpop.f32.mrb[0].mxu0
      %v591 = vpop.f32.mrb[0].mxu0
      %592 = vdwg.mxu0
      %v593 = vadd.f32 %v530, %v588
      %v594 = vld [vmem:[%s378] sm:$0xff]
      %v595 = vpack.c.bf16 %v594, %v594
      %s596 = scalar_lea.vmem %s3, 48
      %v597 = vld [vmem:[%s596] sm:$0xf]
      %v598 = vld [vmem:[%s596 + $0x4] sm:$0xf]
      %v599 = vld [vmem:[%s596 + $0x8] sm:$0xf]
      %v600 = vld [vmem:[%s596 + $0xc] sm:$0xf]
      %v605 = vunpack.c.l.b16 %v597
      %v606 = vunpack.c.l.b16 %v598
      %v607 = vunpack.c.l.b16 %v599
      %v608 = vunpack.c.l.b16 %v600
      %v609 = vpack.c.b16 %v606, %v605
      %v610 = vpack.c.b16 %v608, %v607
      %v614 = vsel %vm356, %v595, 0
      %616 = vmatprep.subr.bf16.mxu0 0
      %617 = vmatpush1.bf16.msra.mxu0 %v609
      %618 = vmatprep.subr.bf16.mxu0 0
      %619 = vmatpush1.bf16.msra.mxu0 %v610
      %620 = vmatprep.subr.bf16.mxu0 0
      %621 = vmatpush1.bf16.msra.mxu0 0
      %622 = vmatprep.subr.bf16.mxu0 0
      %623 = vmatpush1.bf16.msra.mxu0 0
      %624 = vmatprep.subr.bf16.mxu0 0
      %625 = vmatpush1.bf16.msra.mxu0 0
      %626 = vmatprep.subr.bf16.mxu0 0
      %627 = vmatpush1.bf16.msra.mxu0 0
      %628 = vmatprep.subr.bf16.mxu0 0
      %629 = vmatpush1.bf16.msra.mxu0 0
      %630 = vmatprep.subr.bf16.mxu0 0
      %631 = vmatpush1.bf16.msra.mxu0 0
      %632 = vmatprep.subr.bf16.mxu0 0
      %633 = vmatpush1.bf16.msra.mxu0 0
      %634 = vmatprep.subr.bf16.mxu0 0
      %635 = vmatpush1.bf16.msra.mxu0 0
      %636 = vmatprep.subr.bf16.mxu0 0
      %637 = vmatpush1.bf16.msra.mxu0 0
      %638 = vmatprep.subr.bf16.mxu0 0
      %639 = vmatpush1.bf16.msra.mxu0 0
      %640 = vmatprep.subr.bf16.mxu0 0
      %641 = vmatpush1.bf16.msra.mxu0 0
      %642 = vmatprep.subr.bf16.mxu0 0
      %643 = vmatpush1.bf16.msra.mxu0 0
      %644 = vmatprep.subr.bf16.mxu0 0
      %645 = vmatpush1.bf16.msra.mxu0 0
      %646 = vmatprep.subr.bf16.mxu0 0
      %647 = vmatpush1.bf16.msra.mxu0 0
      %648 = vmatprep.mubr.bf16.mxu0 0
      %649 = vmatmul.mubr.bf16.gmra.mrb[0].mxu0 %v614
      %v650 = vpop.f32.mrb[0].mxu0
      %v651 = vadd.f32 0.0, %v650
      %v652 = vpop.f32.mrb[0].mxu0
      %v653 = vpop.f32.mrb[0].mxu0
      %v654 = vpop.f32.mrb[0].mxu0
      %655 = vdwg.mxu0
      %v656 = vadd.f32 %v593, %v651
      %v657 = vld [vmem:[%s378 + $0x1] sm:$0xff]
      %v658 = vpack.c.bf16 %v657, %v657
      %s659 = scalar_lea.vmem %s3, 64
      %v660 = vld [vmem:[%s659] sm:$0xf]
      %v661 = vld [vmem:[%s659 + $0x4] sm:$0xf]
      %v662 = vld [vmem:[%s659 + $0x8] sm:$0xf]
      %v663 = vld [vmem:[%s659 + $0xc] sm:$0xf]
      %v668 = vunpack.c.l.b16 %v660
      %v669 = vunpack.c.l.b16 %v661
      %v670 = vunpack.c.l.b16 %v662
      %v671 = vunpack.c.l.b16 %v663
      %v672 = vpack.c.b16 %v669, %v668
      %v673 = vpack.c.b16 %v671, %v670
      %v677 = vsel %vm356, %v658, 0
      %679 = vmatprep.subr.bf16.mxu0 0
      %680 = vmatpush1.bf16.msra.mxu0 %v672
      %681 = vmatprep.subr.bf16.mxu0 0
      %682 = vmatpush1.bf16.msra.mxu0 %v673
      %683 = vmatprep.subr.bf16.mxu0 0
      %684 = vmatpush1.bf16.msra.mxu0 0
      %685 = vmatprep.subr.bf16.mxu0 0
      %686 = vmatpush1.bf16.msra.mxu0 0
      %687 = vmatprep.subr.bf16.mxu0 0
      %688 = vmatpush1.bf16.msra.mxu0 0
      %689 = vmatprep.subr.bf16.mxu0 0
      %690 = vmatpush1.bf16.msra.mxu0 0
      %691 = vmatprep.subr.bf16.mxu0 0
      %692 = vmatpush1.bf16.msra.mxu0 0
      %693 = vmatprep.subr.bf16.mxu0 0
      %694 = vmatpush1.bf16.msra.mxu0 0
      %695 = vmatprep.subr.bf16.mxu0 0
      %696 = vmatpush1.bf16.msra.mxu0 0
      %697 = vmatprep.subr.bf16.mxu0 0
      %698 = vmatpush1.bf16.msra.mxu0 0
      %699 = vmatprep.subr.bf16.mxu0 0
      %700 = vmatpush1.bf16.msra.mxu0 0
      %701 = vmatprep.subr.bf16.mxu0 0
      %702 = vmatpush1.bf16.msra.mxu0 0
      %703 = vmatprep.subr.bf16.mxu0 0
      %704 = vmatpush1.bf16.msra.mxu0 0
      %705 = vmatprep.subr.bf16.mxu0 0
      %706 = vmatpush1.bf16.msra.mxu0 0
      %707 = vmatprep.subr.bf16.mxu0 0
      %708 = vmatpush1.bf16.msra.mxu0 0
      %709 = vmatprep.subr.bf16.mxu0 0
      %710 = vmatpush1.bf16.msra.mxu0 0
      %711 = vmatprep.mubr.bf16.mxu0 0
      %712 = vmatmul.mubr.bf16.gmra.mrb[0].mxu0 %v677
      %v713 = vpop.f32.mrb[0].mxu0
      %v714 = vadd.f32 0.0, %v713
      %v715 = vpop.f32.mrb[0].mxu0
      %v716 = vpop.f32.mrb[0].mxu0
      %v717 = vpop.f32.mrb[0].mxu0
      %718 = vdwg.mxu0
      %v719 = vadd.f32 %v656, %v714
      %v720 = vld [vmem:[%s378 + $0x2] sm:$0xff]
      %v721 = vpack.c.bf16 %v720, %v720
      %s722 = scalar_lea.vmem %s3, 80
      %v723 = vld [vmem:[%s722] sm:$0xf]
      %v724 = vld [vmem:[%s722 + $0x4] sm:$0xf]
      %v725 = vld [vmem:[%s722 + $0x8] sm:$0xf]
      %v726 = vld [vmem:[%s722 + $0xc] sm:$0xf]
      %v731 = vunpack.c.l.b16 %v723
      %v732 = vunpack.c.l.b16 %v724
      %v733 = vunpack.c.l.b16 %v725
      %v734 = vunpack.c.l.b16 %v726
      %v735 = vpack.c.b16 %v732, %v731
      %v736 = vpack.c.b16 %v734, %v733
      %v740 = vsel %vm356, %v721, 0
      %742 = vmatprep.subr.bf16.mxu0 0
      %743 = vmatpush1.bf16.msra.mxu0 %v735
      %744 = vmatprep.subr.bf16.mxu0 0
      %745 = vmatpush1.bf16.msra.mxu0 %v736
      %746 = vmatprep.subr.bf16.mxu0 0
      %747 = vmatpush1.bf16.msra.mxu0 0
      %748 = vmatprep.subr.bf16.mxu0 0
      %749 = vmatpush1.bf16.msra.mxu0 0
      %750 = vmatprep.subr.bf16.mxu0 0
      %751 = vmatpush1.bf16.msra.mxu0 0
      %752 = vmatprep.subr.bf16.mxu0 0
      %753 = vmatpush1.bf16.msra.mxu0 0
      %754 = vmatprep.subr.bf16.mxu0 0
      %755 = vmatpush1.bf16.msra.mxu0 0
      %756 = vmatprep.subr.bf16.mxu0 0
      %757 = vmatpush1.bf16.msra.mxu0 0
      %758 = vmatprep.subr.bf16.mxu0 0
      %759 = vmatpush1.bf16.msra.mxu0 0
      %760 = vmatprep.subr.bf16.mxu0 0
      %761 = vmatpush1.bf16.msra.mxu0 0
      %762 = vmatprep.subr.bf16.mxu0 0
      %763 = vmatpush1.bf16.msra.mxu0 0
      %764 = vmatprep.subr.bf16.mxu0 0
      %765 = vmatpush1.bf16.msra.mxu0 0
      %766 = vmatprep.subr.bf16.mxu0 0
      %767 = vmatpush1.bf16.msra.mxu0 0
      %768 = vmatprep.subr.bf16.mxu0 0
      %769 = vmatpush1.bf16.msra.mxu0 0
      %770 = vmatprep.subr.bf16.mxu0 0
      %771 = vmatpush1.bf16.msra.mxu0 0
      %772 = vmatprep.subr.bf16.mxu0 0
      %773 = vmatpush1.bf16.msra.mxu0 0
      %774 = vmatprep.mubr.bf16.mxu0 0
      %775 = vmatmul.mubr.bf16.gmra.mrb[0].mxu0 %v740
      %v776 = vpop.f32.mrb[0].mxu0
      %v777 = vadd.f32 0.0, %v776
      %v778 = vpop.f32.mrb[0].mxu0
      %v779 = vpop.f32.mrb[0].mxu0
      %v780 = vpop.f32.mrb[0].mxu0
      %781 = vdwg.mxu0
      %v782 = vadd.f32 %v719, %v777
      %v783 = vld [vmem:[%s380] sm:$0xff]
      %v784 = vpack.c.bf16 %v783, %v783
      %s785 = scalar_lea.vmem %s3, 96
      %v786 = vld [vmem:[%s785] sm:$0xf]
      %v787 = vld [vmem:[%s785 + $0x4] sm:$0xf]
      %v788 = vld [vmem:[%s785 + $0x8] sm:$0xf]
      %v789 = vld [vmem:[%s785 + $0xc] sm:$0xf]
      %v794 = vunpack.c.l.b16 %v786
      %v795 = vunpack.c.l.b16 %v787
      %v796 = vunpack.c.l.b16 %v788
      %v797 = vunpack.c.l.b16 %v789
      %v798 = vpack.c.b16 %v795, %v794
      %v799 = vpack.c.b16 %v797, %v796
      %v803 = vsel %vm356, %v784, 0
      %805 = vmatprep.subr.bf16.mxu0 0
      %806 = vmatpush1.bf16.msra.mxu0 %v798
      %807 = vmatprep.subr.bf16.mxu0 0
      %808 = vmatpush1.bf16.msra.mxu0 %v799
      %809 = vmatprep.subr.bf16.mxu0 0
      %810 = vmatpush1.bf16.msra.mxu0 0
      %811 = vmatprep.subr.bf16.mxu0 0
      %812 = vmatpush1.bf16.msra.mxu0 0
      %813 = vmatprep.subr.bf16.mxu0 0
      %814 = vmatpush1.bf16.msra.mxu0 0
      %815 = vmatprep.subr.bf16.mxu0 0
      %816 = vmatpush1.bf16.msra.mxu0 0
      %817 = vmatprep.subr.bf16.mxu0 0
      %818 = vmatpush1.bf16.msra.mxu0 0
      %819 = vmatprep.subr.bf16.mxu0 0
      %820 = vmatpush1.bf16.msra.mxu0 0
      %821 = vmatprep.subr.bf16.mxu0 0
      %822 = vmatpush1.bf16.msra.mxu0 0
      %823 = vmatprep.subr.bf16.mxu0 0
      %824 = vmatpush1.bf16.msra.mxu0 0
      %825 = vmatprep.subr.bf16.mxu0 0
      %826 = vmatpush1.bf16.msra.mxu0 0
      %827 = vmatprep.subr.bf16.mxu0 0
      %828 = vmatpush1.bf16.msra.mxu0 0
      %829 = vmatprep.subr.bf16.mxu0 0
      %830 = vmatpush1.bf16.msra.mxu0 0
      %831 = vmatprep.subr.bf16.mxu0 0
      %832 = vmatpush1.bf16.msra.mxu0 0
      %833 = vmatprep.subr.bf16.mxu0 0
      %834 = vmatpush1.bf16.msra.mxu0 0
      %835 = vmatprep.subr.bf16.mxu0 0
      %836 = vmatpush1.bf16.msra.mxu0 0
      %837 = vmatprep.mubr.bf16.mxu0 0
      %838 = vmatmul.mubr.bf16.gmra.mrb[0].mxu0 %v803
      %v839 = vpop.f32.mrb[0].mxu0
      %v840 = vadd.f32 0.0, %v839
      %v841 = vpop.f32.mrb[0].mxu0
      %v842 = vpop.f32.mrb[0].mxu0
      %v843 = vpop.f32.mrb[0].mxu0
      %844 = vdwg.mxu0
      %v845 = vadd.f32 %v782, %v840
      %v846 = vld [vmem:[%s380 + $0x1] sm:$0xff]
      %v847 = vpack.c.bf16 %v846, %v846
      %s848 = scalar_lea.vmem %s3, 112
      %v849 = vld [vmem:[%s848] sm:$0xf]
      %v850 = vld [vmem:[%s848 + $0x4] sm:$0xf]
      %v851 = vld [vmem:[%s848 + $0x8] sm:$0xf]
      %v852 = vld [vmem:[%s848 + $0xc] sm:$0xf]
      %v857 = vunpack.c.l.b16 %v849
      %v858 = vunpack.c.l.b16 %v850
      %v859 = vunpack.c.l.b16 %v851
      %v860 = vunpack.c.l.b16 %v852
      %v861 = vpack.c.b16 %v858, %v857
      %v862 = vpack.c.b16 %v860, %v859
      %v866 = vsel %vm356, %v847, 0
      %868 = vmatprep.subr.bf16.mxu0 0
      %869 = vmatpush1.bf16.msra.mxu0 %v861
      %870 = vmatprep.subr.bf16.mxu0 0
      %871 = vmatpush1.bf16.msra.mxu0 %v862
      %872 = vmatprep.subr.bf16.mxu0 0
      %873 = vmatpush1.bf16.msra.mxu0 0
      %874 = vmatprep.subr.bf16.mxu0 0
      %875 = vmatpush1.bf16.msra.mxu0 0
      %876 = vmatprep.subr.bf16.mxu0 0
      %877 = vmatpush1.bf16.msra.mxu0 0
      %878 = vmatprep.subr.bf16.mxu0 0
      %879 = vmatpush1.bf16.msra.mxu0 0
      %880 = vmatprep.subr.bf16.mxu0 0
      %881 = vmatpush1.bf16.msra.mxu0 0
      %882 = vmatprep.subr.bf16.mxu0 0
      %883 = vmatpush1.bf16.msra.mxu0 0
      %884 = vmatprep.subr.bf16.mxu0 0
      %885 = vmatpush1.bf16.msra.mxu0 0
      %886 = vmatprep.subr.bf16.mxu0 0
      %887 = vmatpush1.bf16.msra.mxu0 0
      %888 = vmatprep.subr.bf16.mxu0 0
      %889 = vmatpush1.bf16.msra.mxu0 0
      %890 = vmatprep.subr.bf16.mxu0 0
      %891 = vmatpush1.bf16.msra.mxu0 0
      %892 = vmatprep.subr.bf16.mxu0 0
      %893 = vmatpush1.bf16.msra.mxu0 0
      %894 = vmatprep.subr.bf16.mxu0 0
      %895 = vmatpush1.bf16.msra.mxu0 0
      %896 = vmatprep.subr.bf16.mxu0 0
      %897 = vmatpush1.bf16.msra.mxu0 0
      %898 = vmatprep.subr.bf16.mxu0 0
      %899 = vmatpush1.bf16.msra.mxu0 0
      %900 = vmatprep.mubr.bf16.mxu0 0
      %901 = vmatmul.mubr.bf16.gmra.mrb[0].mxu0 %v866
      %v902 = vpop.f32.mrb[0].mxu0
      %v903 = vadd.f32 0.0, %v902
      %v904 = vpop.f32.mrb[0].mxu0
      %v905 = vpop.f32.mrb[0].mxu0
      %v906 = vpop.f32.mrb[0].mxu0
      %907 = vdwg.mxu0
      %v908 = vadd.f32 %v845, %v903
      %v909 = vld [vmem:[%s380 + $0x2] sm:$0xff]
      %v910 = vpack.c.bf16 %v909, %v909
      %s911 = scalar_lea.vmem %s3, 128
      %v912 = vld [vmem:[%s911] sm:$0xf]
      %v913 = vld [vmem:[%s911 + $0x4] sm:$0xf]
      %v914 = vld [vmem:[%s911 + $0x8] sm:$0xf]
      %v915 = vld [vmem:[%s911 + $0xc] sm:$0xf]
      %v920 = vunpack.c.l.b16 %v912
      %v921 = vunpack.c.l.b16 %v913
      %v922 = vunpack.c.l.b16 %v914
      %v923 = vunpack.c.l.b16 %v915
      %v924 = vpack.c.b16 %v921, %v920
      %v925 = vpack.c.b16 %v923, %v922
      %v929 = vsel %vm356, %v910, 0
      %931 = vmatprep.subr.bf16.mxu0 0
      %932 = vmatpush1.bf16.msra.mxu0 %v924
      %933 = vmatprep.subr.bf16.mxu0 0
      %934 = vmatpush1.bf16.msra.mxu0 %v925
      %935 = vmatprep.subr.bf16.mxu0 0
      %936 = vmatpush1.bf16.msra.mxu0 0
      %937 = vmatprep.subr.bf16.mxu0 0
      %938 = vmatpush1.bf16.msra.mxu0 0
      %939 = vmatprep.subr.bf16.mxu0 0
      %940 = vmatpush1.bf16.msra.mxu0 0
      %941 = vmatprep.subr.bf16.mxu0 0
      %942 = vmatpush1.bf16.msra.mxu0 0
      %943 = vmatprep.subr.bf16.mxu0 0
      %944 = vmatpush1.bf16.msra.mxu0 0
      %945 = vmatprep.subr.bf16.mxu0 0
      %946 = vmatpush1.bf16.msra.mxu0 0
      %947 = vmatprep.subr.bf16.mxu0 0
      %948 = vmatpush1.bf16.msra.mxu0 0
      %949 = vmatprep.subr.bf16.mxu0 0
      %950 = vmatpush1.bf16.msra.mxu0 0
      %951 = vmatprep.subr.bf16.mxu0 0
      %952 = vmatpush1.bf16.msra.mxu0 0
      %953 = vmatprep.subr.bf16.mxu0 0
      %954 = vmatpush1.bf16.msra.mxu0 0
      %955 = vmatprep.subr.bf16.mxu0 0
      %956 = vmatpush1.bf16.msra.mxu0 0
      %957 = vmatprep.subr.bf16.mxu0 0
      %958 = vmatpush1.bf16.msra.mxu0 0
      %959 = vmatprep.subr.bf16.mxu0 0
      %960 = vmatpush1.bf16.msra.mxu0 0
      %961 = vmatprep.subr.bf16.mxu0 0
      %962 = vmatpush1.bf16.msra.mxu0 0
      %963 = vmatprep.mubr.bf16.mxu0 0
      %964 = vmatmul.mubr.bf16.gmra.mrb[0].mxu0 %v929
      %v965 = vpop.f32.mrb[0].mxu0
      %v966 = vadd.f32 0.0, %v965
      %v967 = vpop.f32.mrb[0].mxu0
      %v968 = vpop.f32.mrb[0].mxu0
      %v969 = vpop.f32.mrb[0].mxu0
      %970 = vdwg.mxu0
      %v971 = vadd.f32 %v908, %v966
      %v972 = vmul.f32 %v971, 0.01
      %v973 = vmax.f32 %v971, %v972
      %974 = vst.msk [vmem:[%s226] sm:$0xff] %vm356, %v973
      %v975 = vld [vmem:[%s4] sm:$0x1]
      %v977 = vlaneseq
      %v978 = vshrl.u32 %v977, 7
      %v979 = vsub.s32 0, %v978
      %v980 = vrot.slane %v975, %v979
      %983 = vrot.lane.b32.xlu0 %v313, 96
      %v984 = vpop.permute.xlu0 %983
      %v986 = vadd.f32 %v980, %v984
      %v987 = vld [vmem:[%s378] sm:$0xff]
      %v988 = vpack.c.bf16 %v987, %v987
      %v989 = vld [vmem:[%s3] sm:$0xf]
      %v990 = vld [vmem:[%s3 + $0x4] sm:$0xf]
      %v991 = vld [vmem:[%s3 + $0x8] sm:$0xf]
      %v992 = vld [vmem:[%s3 + $0xc] sm:$0xf]
      %v997 = vunpack.c.l.b16 %v989
      %v998 = vunpack.c.l.b16 %v990
      %v999 = vunpack.c.l.b16 %v991
      %v1000 = vunpack.c.l.b16 %v992
      %v1001 = vpack.c.b16 %v998, %v997
      %v1002 = vpack.c.b16 %v1000, %v999
      %v1006 = vsel %vm356, %v988, 0
      %1008 = vmatprep.subr.bf16.mxu0 0
      %1009 = vmatpush1.bf16.msra.mxu0 %v1001
      %1010 = vmatprep.subr.bf16.mxu0 0
      %1011 = vmatpush1.bf16.msra.mxu0 %v1002
      %1012 = vmatprep.subr.bf16.mxu0 0
      %1013 = vmatpush1.bf16.msra.mxu0 0
      %1014 = vmatprep.subr.bf16.mxu0 0
      %1015 = vmatpush1.bf16.msra.mxu0 0
      %1016 = vmatprep.subr.bf16.mxu0 0
      %1017 = vmatpush1.bf16.msra.mxu0 0
      %1018 = vmatprep.subr.bf16.mxu0 0
      %1019 = vmatpush1.bf16.msra.mxu0 0
      %1020 = vmatprep.subr.bf16.mxu0 0
      %1021 = vmatpush1.bf16.msra.mxu0 0
      %1022 = vmatprep.subr.bf16.mxu0 0
      %1023 = vmatpush1.bf16.msra.mxu0 0
      %1024 = vmatprep.subr.bf16.mxu0 0
      %1025 = vmatpush1.bf16.msra.mxu0 0
      %1026 = vmatprep.subr.bf16.mxu0 0
      %1027 = vmatpush1.bf16.msra.mxu0 0
      %1028 = vmatprep.subr.bf16.mxu0 0
      %1029 = vmatpush1.bf16.msra.mxu0 0
      %1030 = vmatprep.subr.bf16.mxu0 0
      %1031 = vmatpush1.bf16.msra.mxu0 0
      %1032 = vmatprep.subr.bf16.mxu0 0
      %1033 = vmatpush1.bf16.msra.mxu0 0
      %1034 = vmatprep.subr.bf16.mxu0 0
      %1035 = vmatpush1.bf16.msra.mxu0 0
      %1036 = vmatprep.subr.bf16.mxu0 0
      %1037 = vmatpush1.bf16.msra.mxu0 0
      %1038 = vmatprep.subr.bf16.mxu0 0
      %1039 = vmatpush1.bf16.msra.mxu0 0
      %1040 = vmatprep.mubr.bf16.mxu0 0
      %1041 = vmatmul.mubr.bf16.gmra.mrb[0].mxu0 %v1006
      %v1042 = vpop.f32.mrb[0].mxu0
      %v1043 = vadd.f32 0.0, %v1042
      %v1044 = vpop.f32.mrb[0].mxu0
      %v1045 = vpop.f32.mrb[0].mxu0
      %v1046 = vpop.f32.mrb[0].mxu0
      %1047 = vdwg.mxu0
      %v1048 = vadd.f32 %v986, %v1043
      %v1049 = vld [vmem:[%s378 + $0x1] sm:$0xff]
      %v1050 = vpack.c.bf16 %v1049, %v1049
      %v1051 = vld [vmem:[%s470] sm:$0xf]
      %v1052 = vld [vmem:[%s470 + $0x4] sm:$0xf]
      %v1053 = vld [vmem:[%s470 + $0x8] sm:$0xf]
      %v1054 = vld [vmem:[%s470 + $0xc] sm:$0xf]
      %v1059 = vunpack.c.l.b16 %v1051
      %v1060 = vunpack.c.l.b16 %v1052
      %v1061 = vunpack.c.l.b16 %v1053
      %v1062 = vunpack.c.l.b16 %v1054
      %v1063 = vpack.c.b16 %v1060, %v1059
      %v1064 = vpack.c.b16 %v1062, %v1061
      %v1068 = vsel %vm356, %v1050, 0
      %1070 = vmatprep.subr.bf16.mxu0 0
      %1071 = vmatpush1.bf16.msra.mxu0 %v1063
      %1072 = vmatprep.subr.bf16.mxu0 0
      %1073 = vmatpush1.bf16.msra.mxu0 %v1064
      %1074 = vmatprep.subr.bf16.mxu0 0
      %1075 = vmatpush1.bf16.msra.mxu0 0
      %1076 = vmatprep.subr.bf16.mxu0 0
      %1077 = vmatpush1.bf16.msra.mxu0 0
      %1078 = vmatprep.subr.bf16.mxu0 0
      %1079 = vmatpush1.bf16.msra.mxu0 0
      %1080 = vmatprep.subr.bf16.mxu0 0
      %1081 = vmatpush1.bf16.msra.mxu0 0
      %1082 = vmatprep.subr.bf16.mxu0 0
      %1083 = vmatpush1.bf16.msra.mxu0 0
      %1084 = vmatprep.subr.bf16.mxu0 0
      %1085 = vmatpush1.bf16.msra.mxu0 0
      %1086 = vmatprep.subr.bf16.mxu0 0
      %1087 = vmatpush1.bf16.msra.mxu0 0
      %1088 = vmatprep.subr.bf16.mxu0 0
      %1089 = vmatpush1.bf16.msra.mxu0 0
      %1090 = vmatprep.subr.bf16.mxu0 0
      %1091 = vmatpush1.bf16.msra.mxu0 0
      %1092 = vmatprep.subr.bf16.mxu0 0
      %1093 = vmatpush1.bf16.msra.mxu0 0
      %1094 = vmatprep.subr.bf16.mxu0 0
      %1095 = vmatpush1.bf16.msra.mxu0 0
      %1096 = vmatprep.subr.bf16.mxu0 0
      %1097 = vmatpush1.bf16.msra.mxu0 0
      %1098 = vmatprep.subr.bf16.mxu0 0
      %1099 = vmatpush1.bf16.msra.mxu0 0
      %1100 = vmatprep.subr.bf16.mxu0 0
      %1101 = vmatpush1.bf16.msra.mxu0 0
      %1102 = vmatprep.mubr.bf16.mxu0 0
      %1103 = vmatmul.mubr.bf16.gmra.mrb[0].mxu0 %v1068
      %v1104 = vpop.f32.mrb[0].mxu0
      %v1105 = vadd.f32 0.0, %v1104
      %v1106 = vpop.f32.mrb[0].mxu0
      %v1107 = vpop.f32.mrb[0].mxu0
      %v1108 = vpop.f32.mrb[0].mxu0
      %1109 = vdwg.mxu0
      %v1110 = vadd.f32 %v1048, %v1105
      %v1111 = vld [vmem:[%s378 + $0x2] sm:$0xff]
      %v1112 = vpack.c.bf16 %v1111, %v1111
      %v1113 = vld [vmem:[%s533] sm:$0xf]
      %v1114 = vld [vmem:[%s533 + $0x4] sm:$0xf]
      %v1115 = vld [vmem:[%s533 + $0x8] sm:$0xf]
      %v1116 = vld [vmem:[%s533 + $0xc] sm:$0xf]
      %v1121 = vunpack.c.l.b16 %v1113
      %v1122 = vunpack.c.l.b16 %v1114
      %v1123 = vunpack.c.l.b16 %v1115
      %v1124 = vunpack.c.l.b16 %v1116
      %v1125 = vpack.c.b16 %v1122, %v1121
      %v1126 = vpack.c.b16 %v1124, %v1123
      %v1130 = vsel %vm356, %v1112, 0
      %1132 = vmatprep.subr.bf16.mxu0 0
      %1133 = vmatpush1.bf16.msra.mxu0 %v1125
      %1134 = vmatprep.subr.bf16.mxu0 0
      %1135 = vmatpush1.bf16.msra.mxu0 %v1126
      %1136 = vmatprep.subr.bf16.mxu0 0
      %1137 = vmatpush1.bf16.msra.mxu0 0
      %1138 = vmatprep.subr.bf16.mxu0 0
      %1139 = vmatpush1.bf16.msra.mxu0 0
      %1140 = vmatprep.subr.bf16.mxu0 0
      %1141 = vmatpush1.bf16.msra.mxu0 0
      %1142 = vmatprep.subr.bf16.mxu0 0
      %1143 = vmatpush1.bf16.msra.mxu0 0
      %1144 = vmatprep.subr.bf16.mxu0 0
      %1145 = vmatpush1.bf16.msra.mxu0 0
      %1146 = vmatprep.subr.bf16.mxu0 0
      %1147 = vmatpush1.bf16.msra.mxu0 0
      %1148 = vmatprep.subr.bf16.mxu0 0
      %1149 = vmatpush1.bf16.msra.mxu0 0
      %1150 = vmatprep.subr.bf16.mxu0 0
      %1151 = vmatpush1.bf16.msra.mxu0 0
      %1152 = vmatprep.subr.bf16.mxu0 0
      %1153 = vmatpush1.bf16.msra.mxu0 0
      %1154 = vmatprep.subr.bf16.mxu0 0
      %1155 = vmatpush1.bf16.msra.mxu0 0
      %1156 = vmatprep.subr.bf16.mxu0 0
      %1157 = vmatpush1.bf16.msra.mxu0 0
      %1158 = vmatprep.subr.bf16.mxu0 0
      %1159 = vmatpush1.bf16.msra.mxu0 0
      %1160 = vmatprep.subr.bf16.mxu0 0
      %1161 = vmatpush1.bf16.msra.mxu0 0
      %1162 = vmatprep.subr.bf16.mxu0 0
      %1163 = vmatpush1.bf16.msra.mxu0 0
      %1164 = vmatprep.mubr.bf16.mxu0 0
      %1165 = vmatmul.mubr.bf16.gmra.mrb[0].mxu0 %v1130
      %v1166 = vpop.f32.mrb[0].mxu0
      %v1167 = vadd.f32 0.0, %v1166
      %v1168 = vpop.f32.mrb[0].mxu0
      %v1169 = vpop.f32.mrb[0].mxu0
      %v1170 = vpop.f32.mrb[0].mxu0
      %1171 = vdwg.mxu0
      %v1172 = vadd.f32 %v1110, %v1167
      %v1173 = vld [vmem:[%s380] sm:$0xff]
      %v1174 = vpack.c.bf16 %v1173, %v1173
      %v1175 = vld [vmem:[%s596] sm:$0xf]
      %v1176 = vld [vmem:[%s596 + $0x4] sm:$0xf]
      %v1177 = vld [vmem:[%s596 + $0x8] sm:$0xf]
      %v1178 = vld [vmem:[%s596 + $0xc] sm:$0xf]
      %v1183 = vunpack.c.l.b16 %v1175
      %v1184 = vunpack.c.l.b16 %v1176
      %v1185 = vunpack.c.l.b16 %v1177
      %v1186 = vunpack.c.l.b16 %v1178
      %v1187 = vpack.c.b16 %v1184, %v1183
      %v1188 = vpack.c.b16 %v1186, %v1185
      %v1192 = vsel %vm356, %v1174, 0
      %1194 = vmatprep.subr.bf16.mxu0 0
      %1195 = vmatpush1.bf16.msra.mxu0 %v1187
      %1196 = vmatprep.subr.bf16.mxu0 0
      %1197 = vmatpush1.bf16.msra.mxu0 %v1188
      %1198 = vmatprep.subr.bf16.mxu0 0
      %1199 = vmatpush1.bf16.msra.mxu0 0
      %1200 = vmatprep.subr.bf16.mxu0 0
      %1201 = vmatpush1.bf16.msra.mxu0 0
      %1202 = vmatprep.subr.bf16.mxu0 0
      %1203 = vmatpush1.bf16.msra.mxu0 0
      %1204 = vmatprep.subr.bf16.mxu0 0
      %1205 = vmatpush1.bf16.msra.mxu0 0
      %1206 = vmatprep.subr.bf16.mxu0 0
      %1207 = vmatpush1.bf16.msra.mxu0 0
      %1208 = vmatprep.subr.bf16.mxu0 0
      %1209 = vmatpush1.bf16.msra.mxu0 0
      %1210 = vmatprep.subr.bf16.mxu0 0
      %1211 = vmatpush1.bf16.msra.mxu0 0
      %1212 = vmatprep.subr.bf16.mxu0 0
      %1213 = vmatpush1.bf16.msra.mxu0 0
      %1214 = vmatprep.subr.bf16.mxu0 0
      %1215 = vmatpush1.bf16.msra.mxu0 0
      %1216 = vmatprep.subr.bf16.mxu0 0
      %1217 = vmatpush1.bf16.msra.mxu0 0
      %1218 = vmatprep.subr.bf16.mxu0 0
      %1219 = vmatpush1.bf16.msra.mxu0 0
      %1220 = vmatprep.subr.bf16.mxu0 0
      %1221 = vmatpush1.bf16.msra.mxu0 0
      %1222 = vmatprep.subr.bf16.mxu0 0
      %1223 = vmatpush1.bf16.msra.mxu0 0
      %1224 = vmatprep.subr.bf16.mxu0 0
      %1225 = vmatpush1.bf16.msra.mxu0 0
      %1226 = vmatprep.mubr.bf16.mxu0 0
      %1227 = vmatmul.mubr.bf16.gmra.mrb[0].mxu0 %v1192
      %v1228 = vpop.f32.mrb[0].mxu0
      %v1229 = vadd.f32 0.0, %v1228
      %v1230 = vpop.f32.mrb[0].mxu0
      %v1231 = vpop.f32.mrb[0].mxu0
      %v1232 = vpop.f32.mrb[0].mxu0
      %1233 = vdwg.mxu0
      %v1234 = vadd.f32 %v1172, %v1229
      %v1235 = vld [vmem:[%s380 + $0x1] sm:$0xff]
      %v1236 = vpack.c.bf16 %v1235, %v1235
      %v1237 = vld [vmem:[%s659] sm:$0xf]
      %v1238 = vld [vmem:[%s659 + $0x4] sm:$0xf]
      %v1239 = vld [vmem:[%s659 + $0x8] sm:$0xf]
      %v1240 = vld [vmem:[%s659 + $0xc] sm:$0xf]
      %v1245 = vunpack.c.l.b16 %v1237
      %v1246 = vunpack.c.l.b16 %v1238
      %v1247 = vunpack.c.l.b16 %v1239
      %v1248 = vunpack.c.l.b16 %v1240
      %v1249 = vpack.c.b16 %v1246, %v1245
      %v1250 = vpack.c.b16 %v1248, %v1247
      %v1254 = vsel %vm356, %v1236, 0
      %1256 = vmatprep.subr.bf16.mxu0 0
      %1257 = vmatpush1.bf16.msra.mxu0 %v1249
      %1258 = vmatprep.subr.bf16.mxu0 0
      %1259 = vmatpush1.bf16.msra.mxu0 %v1250
      %1260 = vmatprep.subr.bf16.mxu0 0
      %1261 = vmatpush1.bf16.msra.mxu0 0
      %1262 = vmatprep.subr.bf16.mxu0 0
      %1263 = vmatpush1.bf16.msra.mxu0 0
      %1264 = vmatprep.subr.bf16.mxu0 0
      %1265 = vmatpush1.bf16.msra.mxu0 0
      %1266 = vmatprep.subr.bf16.mxu0 0
      %1267 = vmatpush1.bf16.msra.mxu0 0
      %1268 = vmatprep.subr.bf16.mxu0 0
      %1269 = vmatpush1.bf16.msra.mxu0 0
      %1270 = vmatprep.subr.bf16.mxu0 0
      %1271 = vmatpush1.bf16.msra.mxu0 0
      %1272 = vmatprep.subr.bf16.mxu0 0
      %1273 = vmatpush1.bf16.msra.mxu0 0
      %1274 = vmatprep.subr.bf16.mxu0 0
      %1275 = vmatpush1.bf16.msra.mxu0 0
      %1276 = vmatprep.subr.bf16.mxu0 0
      %1277 = vmatpush1.bf16.msra.mxu0 0
      %1278 = vmatprep.subr.bf16.mxu0 0
      %1279 = vmatpush1.bf16.msra.mxu0 0
      %1280 = vmatprep.subr.bf16.mxu0 0
      %1281 = vmatpush1.bf16.msra.mxu0 0
      %1282 = vmatprep.subr.bf16.mxu0 0
      %1283 = vmatpush1.bf16.msra.mxu0 0
      %1284 = vmatprep.subr.bf16.mxu0 0
      %1285 = vmatpush1.bf16.msra.mxu0 0
      %1286 = vmatprep.subr.bf16.mxu0 0
      %1287 = vmatpush1.bf16.msra.mxu0 0
      %1288 = vmatprep.mubr.bf16.mxu0 0
      %1289 = vmatmul.mubr.bf16.gmra.mrb[0].mxu0 %v1254
      %v1290 = vpop.f32.mrb[0].mxu0
      %v1291 = vadd.f32 0.0, %v1290
      %v1292 = vpop.f32.mrb[0].mxu0
      %v1293 = vpop.f32.mrb[0].mxu0
      %v1294 = vpop.f32.mrb[0].mxu0
      %1295 = vdwg.mxu0
      %v1296 = vadd.f32 %v1234, %v1291
      %v1297 = vld [vmem:[%s380 + $0x2] sm:$0xff]
      %v1298 = vpack.c.bf16 %v1297, %v1297
      %v1299 = vld [vmem:[%s722] sm:$0xf]
      %v1300 = vld [vmem:[%s722 + $0x4] sm:$0xf]
      %v1301 = vld [vmem:[%s722 + $0x8] sm:$0xf]
      %v1302 = vld [vmem:[%s722 + $0xc] sm:$0xf]
      %v1307 = vunpack.c.l.b16 %v1299
      %v1308 = vunpack.c.l.b16 %v1300
      %v1309 = vunpack.c.l.b16 %v1301
      %v1310 = vunpack.c.l.b16 %v1302
      %v1311 = vpack.c.b16 %v1308, %v1307
      %v1312 = vpack.c.b16 %v1310, %v1309
      %v1316 = vsel %vm356, %v1298, 0
      %1318 = vmatprep.subr.bf16.mxu0 0
      %1319 = vmatpush1.bf16.msra.mxu0 %v1311
      %1320 = vmatprep.subr.bf16.mxu0 0
      %1321 = vmatpush1.bf16.msra.mxu0 %v1312
      %1322 = vmatprep.subr.bf16.mxu0 0
      %1323 = vmatpush1.bf16.msra.mxu0 0
      %1324 = vmatprep.subr.bf16.mxu0 0
      %1325 = vmatpush1.bf16.msra.mxu0 0
      %1326 = vmatprep.subr.bf16.mxu0 0
      %1327 = vmatpush1.bf16.msra.mxu0 0
      %1328 = vmatprep.subr.bf16.mxu0 0
      %1329 = vmatpush1.bf16.msra.mxu0 0
      %1330 = vmatprep.subr.bf16.mxu0 0
      %1331 = vmatpush1.bf16.msra.mxu0 0
      %1332 = vmatprep.subr.bf16.mxu0 0
      %1333 = vmatpush1.bf16.msra.mxu0 0
      %1334 = vmatprep.subr.bf16.mxu0 0
      %1335 = vmatpush1.bf16.msra.mxu0 0
      %1336 = vmatprep.subr.bf16.mxu0 0
      %1337 = vmatpush1.bf16.msra.mxu0 0
      %1338 = vmatprep.subr.bf16.mxu0 0
      %1339 = vmatpush1.bf16.msra.mxu0 0
      %1340 = vmatprep.subr.bf16.mxu0 0
      %1341 = vmatpush1.bf16.msra.mxu0 0
      %1342 = vmatprep.subr.bf16.mxu0 0
      %1343 = vmatpush1.bf16.msra.mxu0 0
      %1344 = vmatprep.subr.bf16.mxu0 0
      %1345 = vmatpush1.bf16.msra.mxu0 0
      %1346 = vmatprep.subr.bf16.mxu0 0
      %1347 = vmatpush1.bf16.msra.mxu0 0
      %1348 = vmatprep.subr.bf16.mxu0 0
      %1349 = vmatpush1.bf16.msra.mxu0 0
      %1350 = vmatprep.mubr.bf16.mxu0 0
      %1351 = vmatmul.mubr.bf16.gmra.mrb[0].mxu0 %v1316
      %v1352 = vpop.f32.mrb[0].mxu0
      %v1353 = vadd.f32 0.0, %v1352
      %v1354 = vpop.f32.mrb[0].mxu0
      %v1355 = vpop.f32.mrb[0].mxu0
      %v1356 = vpop.f32.mrb[0].mxu0
      %1357 = vdwg.mxu0
      %v1358 = vadd.f32 %v1296, %v1353
      %v1359 = vld [vmem:[%s382] sm:$0xff]
      %v1360 = vpack.c.bf16 %v1359, %v1359
      %v1361 = vld [vmem:[%s785] sm:$0xf]
      %v1362 = vld [vmem:[%s785 + $0x4] sm:$0xf]
      %v1363 = vld [vmem:[%s785 + $0x8] sm:$0xf]
      %v1364 = vld [vmem:[%s785 + $0xc] sm:$0xf]
      %v1369 = vunpack.c.l.b16 %v1361
      %v1370 = vunpack.c.l.b16 %v1362
      %v1371 = vunpack.c.l.b16 %v1363
      %v1372 = vunpack.c.l.b16 %v1364
      %v1373 = vpack.c.b16 %v1370, %v1369
      %v1374 = vpack.c.b16 %v1372, %v1371
      %v1378 = vsel %vm356, %v1360, 0
      %1380 = vmatprep.subr.bf16.mxu0 0
      %1381 = vmatpush1.bf16.msra.mxu0 %v1373
      %1382 = vmatprep.subr.bf16.mxu0 0
      %1383 = vmatpush1.bf16.msra.mxu0 %v1374
      %1384 = vmatprep.subr.bf16.mxu0 0
      %1385 = vmatpush1.bf16.msra.mxu0 0
      %1386 = vmatprep.subr.bf16.mxu0 0
      %1387 = vmatpush1.bf16.msra.mxu0 0
      %1388 = vmatprep.subr.bf16.mxu0 0
      %1389 = vmatpush1.bf16.msra.mxu0 0
      %1390 = vmatprep.subr.bf16.mxu0 0
      %1391 = vmatpush1.bf16.msra.mxu0 0
      %1392 = vmatprep.subr.bf16.mxu0 0
      %1393 = vmatpush1.bf16.msra.mxu0 0
      %1394 = vmatprep.subr.bf16.mxu0 0
      %1395 = vmatpush1.bf16.msra.mxu0 0
      %1396 = vmatprep.subr.bf16.mxu0 0
      %1397 = vmatpush1.bf16.msra.mxu0 0
      %1398 = vmatprep.subr.bf16.mxu0 0
      %1399 = vmatpush1.bf16.msra.mxu0 0
      %1400 = vmatprep.subr.bf16.mxu0 0
      %1401 = vmatpush1.bf16.msra.mxu0 0
      %1402 = vmatprep.subr.bf16.mxu0 0
      %1403 = vmatpush1.bf16.msra.mxu0 0
      %1404 = vmatprep.subr.bf16.mxu0 0
      %1405 = vmatpush1.bf16.msra.mxu0 0
      %1406 = vmatprep.subr.bf16.mxu0 0
      %1407 = vmatpush1.bf16.msra.mxu0 0
      %1408 = vmatprep.subr.bf16.mxu0 0
      %1409 = vmatpush1.bf16.msra.mxu0 0
      %1410 = vmatprep.subr.bf16.mxu0 0
      %1411 = vmatpush1.bf16.msra.mxu0 0
      %1412 = vmatprep.mubr.bf16.mxu0 0
      %1413 = vmatmul.mubr.bf16.gmra.mrb[0].mxu0 %v1378
      %v1414 = vpop.f32.mrb[0].mxu0
      %v1415 = vadd.f32 0.0, %v1414
      %v1416 = vpop.f32.mrb[0].mxu0
      %v1417 = vpop.f32.mrb[0].mxu0
      %v1418 = vpop.f32.mrb[0].mxu0
      %1419 = vdwg.mxu0
      %v1420 = vadd.f32 %v1358, %v1415
      %v1421 = vld [vmem:[%s382 + $0x1] sm:$0xff]
      %v1422 = vpack.c.bf16 %v1421, %v1421
      %v1423 = vld [vmem:[%s848] sm:$0xf]
      %v1424 = vld [vmem:[%s848 + $0x4] sm:$0xf]
      %v1425 = vld [vmem:[%s848 + $0x8] sm:$0xf]
      %v1426 = vld [vmem:[%s848 + $0xc] sm:$0xf]
      %v1431 = vunpack.c.l.b16 %v1423
      %v1432 = vunpack.c.l.b16 %v1424
      %v1433 = vunpack.c.l.b16 %v1425
      %v1434 = vunpack.c.l.b16 %v1426
      %v1435 = vpack.c.b16 %v1432, %v1431
      %v1436 = vpack.c.b16 %v1434, %v1433
      %v1440 = vsel %vm356, %v1422, 0
      %1442 = vmatprep.subr.bf16.mxu0 0
      %1443 = vmatpush1.bf16.msra.mxu0 %v1435
      %1444 = vmatprep.subr.bf16.mxu0 0
      %1445 = vmatpush1.bf16.msra.mxu0 %v1436
      %1446 = vmatprep.subr.bf16.mxu0 0
      %1447 = vmatpush1.bf16.msra.mxu0 0
      %1448 = vmatprep.subr.bf16.mxu0 0
      %1449 = vmatpush1.bf16.msra.mxu0 0
      %1450 = vmatprep.subr.bf16.mxu0 0
      %1451 = vmatpush1.bf16.msra.mxu0 0
      %1452 = vmatprep.subr.bf16.mxu0 0
      %1453 = vmatpush1.bf16.msra.mxu0 0
      %1454 = vmatprep.subr.bf16.mxu0 0
      %1455 = vmatpush1.bf16.msra.mxu0 0
      %1456 = vmatprep.subr.bf16.mxu0 0
      %1457 = vmatpush1.bf16.msra.mxu0 0
      %1458 = vmatprep.subr.bf16.mxu0 0
      %1459 = vmatpush1.bf16.msra.mxu0 0
      %1460 = vmatprep.subr.bf16.mxu0 0
      %1461 = vmatpush1.bf16.msra.mxu0 0
      %1462 = vmatprep.subr.bf16.mxu0 0
      %1463 = vmatpush1.bf16.msra.mxu0 0
      %1464 = vmatprep.subr.bf16.mxu0 0
      %1465 = vmatpush1.bf16.msra.mxu0 0
      %1466 = vmatprep.subr.bf16.mxu0 0
      %1467 = vmatpush1.bf16.msra.mxu0 0
      %1468 = vmatprep.subr.bf16.mxu0 0
      %1469 = vmatpush1.bf16.msra.mxu0 0
      %1470 = vmatprep.subr.bf16.mxu0 0
      %1471 = vmatpush1.bf16.msra.mxu0 0
      %1472 = vmatprep.subr.bf16.mxu0 0
      %1473 = vmatpush1.bf16.msra.mxu0 0
      %1474 = vmatprep.mubr.bf16.mxu0 0
      %1475 = vmatmul.mubr.bf16.gmra.mrb[0].mxu0 %v1440
      %v1476 = vpop.f32.mrb[0].mxu0
      %v1477 = vadd.f32 0.0, %v1476
      %v1478 = vpop.f32.mrb[0].mxu0
      %v1479 = vpop.f32.mrb[0].mxu0
      %v1480 = vpop.f32.mrb[0].mxu0
      %1481 = vdwg.mxu0
      %v1482 = vadd.f32 %v1420, %v1477
      %v1483 = vld [vmem:[%s382 + $0x2] sm:$0xff]
      %v1484 = vpack.c.bf16 %v1483, %v1483
      %v1485 = vld [vmem:[%s911] sm:$0xf]
      %v1486 = vld [vmem:[%s911 + $0x4] sm:$0xf]
      %v1487 = vld [vmem:[%s911 + $0x8] sm:$0xf]
      %v1488 = vld [vmem:[%s911 + $0xc] sm:$0xf]
      %v1493 = vunpack.c.l.b16 %v1485
      %v1494 = vunpack.c.l.b16 %v1486
      %v1495 = vunpack.c.l.b16 %v1487
      %v1496 = vunpack.c.l.b16 %v1488
      %v1497 = vpack.c.b16 %v1494, %v1493
      %v1498 = vpack.c.b16 %v1496, %v1495
      %v1502 = vsel %vm356, %v1484, 0
      %1504 = vmatprep.subr.bf16.mxu0 0
      %1505 = vmatpush1.bf16.msra.mxu0 %v1497
      %1506 = vmatprep.subr.bf16.mxu0 0
      %1507 = vmatpush1.bf16.msra.mxu0 %v1498
      %1508 = vmatprep.subr.bf16.mxu0 0
      %1509 = vmatpush1.bf16.msra.mxu0 0
      %1510 = vmatprep.subr.bf16.mxu0 0
      %1511 = vmatpush1.bf16.msra.mxu0 0
      %1512 = vmatprep.subr.bf16.mxu0 0
      %1513 = vmatpush1.bf16.msra.mxu0 0
      %1514 = vmatprep.subr.bf16.mxu0 0
      %1515 = vmatpush1.bf16.msra.mxu0 0
      %1516 = vmatprep.subr.bf16.mxu0 0
      %1517 = vmatpush1.bf16.msra.mxu0 0
      %1518 = vmatprep.subr.bf16.mxu0 0
      %1519 = vmatpush1.bf16.msra.mxu0 0
      %1520 = vmatprep.subr.bf16.mxu0 0
      %1521 = vmatpush1.bf16.msra.mxu0 0
      %1522 = vmatprep.subr.bf16.mxu0 0
      %1523 = vmatpush1.bf16.msra.mxu0 0
      %1524 = vmatprep.subr.bf16.mxu0 0
      %1525 = vmatpush1.bf16.msra.mxu0 0
      %1526 = vmatprep.subr.bf16.mxu0 0
      %1527 = vmatpush1.bf16.msra.mxu0 0
      %1528 = vmatprep.subr.bf16.mxu0 0
      %1529 = vmatpush1.bf16.msra.mxu0 0
      %1530 = vmatprep.subr.bf16.mxu0 0
      %1531 = vmatpush1.bf16.msra.mxu0 0
      %1532 = vmatprep.subr.bf16.mxu0 0
      %1533 = vmatpush1.bf16.msra.mxu0 0
      %1534 = vmatprep.subr.bf16.mxu0 0
      %1535 = vmatpush1.bf16.msra.mxu0 0
      %1536 = vmatprep.mubr.bf16.mxu0 0
      %1537 = vmatmul.mubr.bf16.gmra.mrb[0].mxu0 %v1502
      %v1538 = vpop.f32.mrb[0].mxu0
      %v1539 = vadd.f32 0.0, %v1538
      %v1540 = vpop.f32.mrb[0].mxu0
      %v1541 = vpop.f32.mrb[0].mxu0
      %v1542 = vpop.f32.mrb[0].mxu0
      %1543 = vdwg.mxu0
      %v1544 = vadd.f32 %v1482, %v1539
      %v1545 = vmul.f32 %v1544, 0.01
      %v1546 = vmax.f32 %v1544, %v1545
      %1547 = vst.msk [vmem:[%s226 + $0x8] sm:$0xff] %vm356, %v1546
      %v1548 = vld [vmem:[%s4] sm:$0x1]
      %v1550 = vlaneseq
      %v1551 = vshrl.u32 %v1550, 7
      %v1552 = vsub.s32 0, %v1551
      %v1553 = vrot.slane %v1548, %v1552
      %1556 = vrot.lane.b32.xlu0 %v318, 96
      %v1557 = vpop.permute.xlu0 %1556
      %v1559 = vadd.f32 %v1553, %v1557
      %v1560 = vld [vmem:[%s380] sm:$0xff]
      %v1561 = vpack.c.bf16 %v1560, %v1560
      %v1562 = vld [vmem:[%s3] sm:$0xf]
      %v1563 = vld [vmem:[%s3 + $0x4] sm:$0xf]
      %v1564 = vld [vmem:[%s3 + $0x8] sm:$0xf]
      %v1565 = vld [vmem:[%s3 + $0xc] sm:$0xf]
      %v1570 = vunpack.c.l.b16 %v1562
      %v1571 = vunpack.c.l.b16 %v1563
      %v1572 = vunpack.c.l.b16 %v1564
      %v1573 = vunpack.c.l.b16 %v1565
      %v1574 = vpack.c.b16 %v1571, %v1570
      %v1575 = vpack.c.b16 %v1573, %v1572
      %v1579 = vsel %vm356, %v1561, 0
      %1581 = vmatprep.subr.bf16.mxu0 0
      %1582 = vmatpush1.bf16.msra.mxu0 %v1574
      %1583 = vmatprep.subr.bf16.mxu0 0
      %1584 = vmatpush1.bf16.msra.mxu0 %v1575
      %1585 = vmatprep.subr.bf16.mxu0 0
      %1586 = vmatpush1.bf16.msra.mxu0 0
      %1587 = vmatprep.subr.bf16.mxu0 0
      %1588 = vmatpush1.bf16.msra.mxu0 0
      %1589 = vmatprep.subr.bf16.mxu0 0
      %1590 = vmatpush1.bf16.msra.mxu0 0
      %1591 = vmatprep.subr.bf16.mxu0 0
      %1592 = vmatpush1.bf16.msra.mxu0 0
      %1593 = vmatprep.subr.bf16.mxu0 0
      %1594 = vmatpush1.bf16.msra.mxu0 0
      %1595 = vmatprep.subr.bf16.mxu0 0
      %1596 = vmatpush1.bf16.msra.mxu0 0
      %1597 = vmatprep.subr.bf16.mxu0 0
      %1598 = vmatpush1.bf16.msra.mxu0 0
      %1599 = vmatprep.subr.bf16.mxu0 0
      %1600 = vmatpush1.bf16.msra.mxu0 0
      %1601 = vmatprep.subr.bf16.mxu0 0
      %1602 = vmatpush1.bf16.msra.mxu0 0
      %1603 = vmatprep.subr.bf16.mxu0 0
      %1604 = vmatpush1.bf16.msra.mxu0 0
      %1605 = vmatprep.subr.bf16.mxu0 0
      %1606 = vmatpush1.bf16.msra.mxu0 0
      %1607 = vmatprep.subr.bf16.mxu0 0
      %1608 = vmatpush1.bf16.msra.mxu0 0
      %1609 = vmatprep.subr.bf16.mxu0 0
      %1610 = vmatpush1.bf16.msra.mxu0 0
      %1611 = vmatprep.subr.bf16.mxu0 0
      %1612 = vmatpush1.bf16.msra.mxu0 0
      %1613 = vmatprep.mubr.bf16.mxu0 0
      %1614 = vmatmul.mubr.bf16.gmra.mrb[0].mxu0 %v1579
      %v1615 = vpop.f32.mrb[0].mxu0
      %v1616 = vadd.f32 0.0, %v1615
      %v1617 = vpop.f32.mrb[0].mxu0
      %v1618 = vpop.f32.mrb[0].mxu0
      %v1619 = vpop.f32.mrb[0].mxu0
      %1620 = vdwg.mxu0
      %v1621 = vadd.f32 %v1559, %v1616
      %v1622 = vld [vmem:[%s380 + $0x1] sm:$0xff]
      %v1623 = vpack.c.bf16 %v1622, %v1622
      %v1624 = vld [vmem:[%s470] sm:$0xf]
      %v1625 = vld [vmem:[%s470 + $0x4] sm:$0xf]
      %v1626 = vld [vmem:[%s470 + $0x8] sm:$0xf]
      %v1627 = vld [vmem:[%s470 + $0xc] sm:$0xf]
      %v1632 = vunpack.c.l.b16 %v1624
      %v1633 = vunpack.c.l.b16 %v1625
      %v1634 = vunpack.c.l.b16 %v1626
      %v1635 = vunpack.c.l.b16 %v1627
      %v1636 = vpack.c.b16 %v1633, %v1632
      %v1637 = vpack.c.b16 %v1635, %v1634
      %v1641 = vsel %vm356, %v1623, 0
      %1643 = vmatprep.subr.bf16.mxu0 0
      %1644 = vmatpush1.bf16.msra.mxu0 %v1636
      %1645 = vmatprep.subr.bf16.mxu0 0
      %1646 = vmatpush1.bf16.msra.mxu0 %v1637
      %1647 = vmatprep.subr.bf16.mxu0 0
      %1648 = vmatpush1.bf16.msra.mxu0 0
      %1649 = vmatprep.subr.bf16.mxu0 0
      %1650 = vmatpush1.bf16.msra.mxu0 0
      %1651 = vmatprep.subr.bf16.mxu0 0
      %1652 = vmatpush1.bf16.msra.mxu0 0
      %1653 = vmatprep.subr.bf16.mxu0 0
      %1654 = vmatpush1.bf16.msra.mxu0 0
      %1655 = vmatprep.subr.bf16.mxu0 0
      %1656 = vmatpush1.bf16.msra.mxu0 0
      %1657 = vmatprep.subr.bf16.mxu0 0
      %1658 = vmatpush1.bf16.msra.mxu0 0
      %1659 = vmatprep.subr.bf16.mxu0 0
      %1660 = vmatpush1.bf16.msra.mxu0 0
      %1661 = vmatprep.subr.bf16.mxu0 0
      %1662 = vmatpush1.bf16.msra.mxu0 0
      %1663 = vmatprep.subr.bf16.mxu0 0
      %1664 = vmatpush1.bf16.msra.mxu0 0
      %1665 = vmatprep.subr.bf16.mxu0 0
      %1666 = vmatpush1.bf16.msra.mxu0 0
      %1667 = vmatprep.subr.bf16.mxu0 0
      %1668 = vmatpush1.bf16.msra.mxu0 0
      %1669 = vmatprep.subr.bf16.mxu0 0
      %1670 = vmatpush1.bf16.msra.mxu0 0
      %1671 = vmatprep.subr.bf16.mxu0 0
      %1672 = vmatpush1.bf16.msra.mxu0 0
      %1673 = vmatprep.subr.bf16.mxu0 0
      %1674 = vmatpush1.bf16.msra.mxu0 0
      %1675 = vmatprep.mubr.bf16.mxu0 0
      %1676 = vmatmul.mubr.bf16.gmra.mrb[0].mxu0 %v1641
      %v1677 = vpop.f32.mrb[0].mxu0
      %v1678 = vadd.f32 0.0, %v1677
      %v1679 = vpop.f32.mrb[0].mxu0
      %v1680 = vpop.f32.mrb[0].mxu0
      %v1681 = vpop.f32.mrb[0].mxu0
      %1682 = vdwg.mxu0
      %v1683 = vadd.f32 %v1621, %v1678
      %v1684 = vld [vmem:[%s380 + $0x2] sm:$0xff]
      %v1685 = vpack.c.bf16 %v1684, %v1684
      %v1686 = vld [vmem:[%s533] sm:$0xf]
      %v1687 = vld [vmem:[%s533 + $0x4] sm:$0xf]
      %v1688 = vld [vmem:[%s533 + $0x8] sm:$0xf]
      %v1689 = vld [vmem:[%s533 + $0xc] sm:$0xf]
      %v1694 = vunpack.c.l.b16 %v1686
      %v1695 = vunpack.c.l.b16 %v1687
      %v1696 = vunpack.c.l.b16 %v1688
      %v1697 = vunpack.c.l.b16 %v1689
      %v1698 = vpack.c.b16 %v1695, %v1694
      %v1699 = vpack.c.b16 %v1697, %v1696
      %v1703 = vsel %vm356, %v1685, 0
      %1705 = vmatprep.subr.bf16.mxu0 0
      %1706 = vmatpush1.bf16.msra.mxu0 %v1698
      %1707 = vmatprep.subr.bf16.mxu0 0
      %1708 = vmatpush1.bf16.msra.mxu0 %v1699
      %1709 = vmatprep.subr.bf16.mxu0 0
      %1710 = vmatpush1.bf16.msra.mxu0 0
      %1711 = vmatprep.subr.bf16.mxu0 0
      %1712 = vmatpush1.bf16.msra.mxu0 0
      %1713 = vmatprep.subr.bf16.mxu0 0
      %1714 = vmatpush1.bf16.msra.mxu0 0
      %1715 = vmatprep.subr.bf16.mxu0 0
      %1716 = vmatpush1.bf16.msra.mxu0 0
      %1717 = vmatprep.subr.bf16.mxu0 0
      %1718 = vmatpush1.bf16.msra.mxu0 0
      %1719 = vmatprep.subr.bf16.mxu0 0
      %1720 = vmatpush1.bf16.msra.mxu0 0
      %1721 = vmatprep.subr.bf16.mxu0 0
      %1722 = vmatpush1.bf16.msra.mxu0 0
      %1723 = vmatprep.subr.bf16.mxu0 0
      %1724 = vmatpush1.bf16.msra.mxu0 0
      %1725 = vmatprep.subr.bf16.mxu0 0
      %1726 = vmatpush1.bf16.msra.mxu0 0
      %1727 = vmatprep.subr.bf16.mxu0 0
      %1728 = vmatpush1.bf16.msra.mxu0 0
      %1729 = vmatprep.subr.bf16.mxu0 0
      %1730 = vmatpush1.bf16.msra.mxu0 0
      %1731 = vmatprep.subr.bf16.mxu0 0
      %1732 = vmatpush1.bf16.msra.mxu0 0
      %1733 = vmatprep.subr.bf16.mxu0 0
      %1734 = vmatpush1.bf16.msra.mxu0 0
      %1735 = vmatprep.subr.bf16.mxu0 0
      %1736 = vmatpush1.bf16.msra.mxu0 0
      %1737 = vmatprep.mubr.bf16.mxu0 0
      %1738 = vmatmul.mubr.bf16.gmra.mrb[0].mxu0 %v1703
      %v1739 = vpop.f32.mrb[0].mxu0
      %v1740 = vadd.f32 0.0, %v1739
      %v1741 = vpop.f32.mrb[0].mxu0
      %v1742 = vpop.f32.mrb[0].mxu0
      %v1743 = vpop.f32.mrb[0].mxu0
      %1744 = vdwg.mxu0
      %v1745 = vadd.f32 %v1683, %v1740
      %v1746 = vld [vmem:[%s382] sm:$0xff]
      %v1747 = vpack.c.bf16 %v1746, %v1746
      %v1748 = vld [vmem:[%s596] sm:$0xf]
      %v1749 = vld [vmem:[%s596 + $0x4] sm:$0xf]
      %v1750 = vld [vmem:[%s596 + $0x8] sm:$0xf]
      %v1751 = vld [vmem:[%s596 + $0xc] sm:$0xf]
      %v1756 = vunpack.c.l.b16 %v1748
      %v1757 = vunpack.c.l.b16 %v1749
      %v1758 = vunpack.c.l.b16 %v1750
      %v1759 = vunpack.c.l.b16 %v1751
      %v1760 = vpack.c.b16 %v1757, %v1756
      %v1761 = vpack.c.b16 %v1759, %v1758
      %v1765 = vsel %vm356, %v1747, 0
      %1767 = vmatprep.subr.bf16.mxu0 0
      %1768 = vmatpush1.bf16.msra.mxu0 %v1760
      %1769 = vmatprep.subr.bf16.mxu0 0
      %1770 = vmatpush1.bf16.msra.mxu0 %v1761
      %1771 = vmatprep.subr.bf16.mxu0 0
      %1772 = vmatpush1.bf16.msra.mxu0 0
      %1773 = vmatprep.subr.bf16.mxu0 0
      %1774 = vmatpush1.bf16.msra.mxu0 0
      %1775 = vmatprep.subr.bf16.mxu0 0
      %1776 = vmatpush1.bf16.msra.mxu0 0
      %1777 = vmatprep.subr.bf16.mxu0 0
      %1778 = vmatpush1.bf16.msra.mxu0 0
      %1779 = vmatprep.subr.bf16.mxu0 0
      %1780 = vmatpush1.bf16.msra.mxu0 0
      %1781 = vmatprep.subr.bf16.mxu0 0
      %1782 = vmatpush1.bf16.msra.mxu0 0
      %1783 = vmatprep.subr.bf16.mxu0 0
      %1784 = vmatpush1.bf16.msra.mxu0 0
      %1785 = vmatprep.subr.bf16.mxu0 0
      %1786 = vmatpush1.bf16.msra.mxu0 0
      %1787 = vmatprep.subr.bf16.mxu0 0
      %1788 = vmatpush1.bf16.msra.mxu0 0
      %1789 = vmatprep.subr.bf16.mxu0 0
      %1790 = vmatpush1.bf16.msra.mxu0 0
      %1791 = vmatprep.subr.bf16.mxu0 0
      %1792 = vmatpush1.bf16.msra.mxu0 0
      %1793 = vmatprep.subr.bf16.mxu0 0
      %1794 = vmatpush1.bf16.msra.mxu0 0
      %1795 = vmatprep.subr.bf16.mxu0 0
      %1796 = vmatpush1.bf16.msra.mxu0 0
      %1797 = vmatprep.subr.bf16.mxu0 0
      %1798 = vmatpush1.bf16.msra.mxu0 0
      %1799 = vmatprep.mubr.bf16.mxu0 0
      %1800 = vmatmul.mubr.bf16.gmra.mrb[0].mxu0 %v1765
      %v1801 = vpop.f32.mrb[0].mxu0
      %v1802 = vadd.f32 0.0, %v1801
      %v1803 = vpop.f32.mrb[0].mxu0
      %v1804 = vpop.f32.mrb[0].mxu0
      %v1805 = vpop.f32.mrb[0].mxu0
      %1806 = vdwg.mxu0
      %v1807 = vadd.f32 %v1745, %v1802
      %v1808 = vld [vmem:[%s382 + $0x1] sm:$0xff]
      %v1809 = vpack.c.bf16 %v1808, %v1808
      %v1810 = vld [vmem:[%s659] sm:$0xf]
      %v1811 = vld [vmem:[%s659 + $0x4] sm:$0xf]
      %v1812 = vld [vmem:[%s659 + $0x8] sm:$0xf]
      %v1813 = vld [vmem:[%s659 + $0xc] sm:$0xf]
      %v1818 = vunpack.c.l.b16 %v1810
      %v1819 = vunpack.c.l.b16 %v1811
      %v1820 = vunpack.c.l.b16 %v1812
      %v1821 = vunpack.c.l.b16 %v1813
      %v1822 = vpack.c.b16 %v1819, %v1818
      %v1823 = vpack.c.b16 %v1821, %v1820
      %v1827 = vsel %vm356, %v1809, 0
      %1829 = vmatprep.subr.bf16.mxu0 0
      %1830 = vmatpush1.bf16.msra.mxu0 %v1822
      %1831 = vmatprep.subr.bf16.mxu0 0
      %1832 = vmatpush1.bf16.msra.mxu0 %v1823
      %1833 = vmatprep.subr.bf16.mxu0 0
      %1834 = vmatpush1.bf16.msra.mxu0 0
      %1835 = vmatprep.subr.bf16.mxu0 0
      %1836 = vmatpush1.bf16.msra.mxu0 0
      %1837 = vmatprep.subr.bf16.mxu0 0
      %1838 = vmatpush1.bf16.msra.mxu0 0
      %1839 = vmatprep.subr.bf16.mxu0 0
      %1840 = vmatpush1.bf16.msra.mxu0 0
      %1841 = vmatprep.subr.bf16.mxu0 0
      %1842 = vmatpush1.bf16.msra.mxu0 0
      %1843 = vmatprep.subr.bf16.mxu0 0
      %1844 = vmatpush1.bf16.msra.mxu0 0
      %1845 = vmatprep.subr.bf16.mxu0 0
      %1846 = vmatpush1.bf16.msra.mxu0 0
      %1847 = vmatprep.subr.bf16.mxu0 0
      %1848 = vmatpush1.bf16.msra.mxu0 0
      %1849 = vmatprep.subr.bf16.mxu0 0
      %1850 = vmatpush1.bf16.msra.mxu0 0
      %1851 = vmatprep.subr.bf16.mxu0 0
      %1852 = vmatpush1.bf16.msra.mxu0 0
      %1853 = vmatprep.subr.bf16.mxu0 0
      %1854 = vmatpush1.bf16.msra.mxu0 0
      %1855 = vmatprep.subr.bf16.mxu0 0
      %1856 = vmatpush1.bf16.msra.mxu0 0
      %1857 = vmatprep.subr.bf16.mxu0 0
      %1858 = vmatpush1.bf16.msra.mxu0 0
      %1859 = vmatprep.subr.bf16.mxu0 0
      %1860 = vmatpush1.bf16.msra.mxu0 0
      %1861 = vmatprep.mubr.bf16.mxu0 0
      %1862 = vmatmul.mubr.bf16.gmra.mrb[0].mxu0 %v1827
      %v1863 = vpop.f32.mrb[0].mxu0
      %v1864 = vadd.f32 0.0, %v1863
      %v1865 = vpop.f32.mrb[0].mxu0
      %v1866 = vpop.f32.mrb[0].mxu0
      %v1867 = vpop.f32.mrb[0].mxu0
      %1868 = vdwg.mxu0
      %v1869 = vadd.f32 %v1807, %v1864
      %v1870 = vld [vmem:[%s382 + $0x2] sm:$0xff]
      %v1871 = vpack.c.bf16 %v1870, %v1870
      %v1872 = vld [vmem:[%s722] sm:$0xf]
      %v1873 = vld [vmem:[%s722 + $0x4] sm:$0xf]
      %v1874 = vld [vmem:[%s722 + $0x8] sm:$0xf]
      %v1875 = vld [vmem:[%s722 + $0xc] sm:$0xf]
      %v1880 = vunpack.c.l.b16 %v1872
      %v1881 = vunpack.c.l.b16 %v1873
      %v1882 = vunpack.c.l.b16 %v1874
      %v1883 = vunpack.c.l.b16 %v1875
      %v1884 = vpack.c.b16 %v1881, %v1880
      %v1885 = vpack.c.b16 %v1883, %v1882
      %v1889 = vsel %vm356, %v1871, 0
      %1891 = vmatprep.subr.bf16.mxu0 0
      %1892 = vmatpush1.bf16.msra.mxu0 %v1884
      %1893 = vmatprep.subr.bf16.mxu0 0
      %1894 = vmatpush1.bf16.msra.mxu0 %v1885
      %1895 = vmatprep.subr.bf16.mxu0 0
      %1896 = vmatpush1.bf16.msra.mxu0 0
      %1897 = vmatprep.subr.bf16.mxu0 0
      %1898 = vmatpush1.bf16.msra.mxu0 0
      %1899 = vmatprep.subr.bf16.mxu0 0
      %1900 = vmatpush1.bf16.msra.mxu0 0
      %1901 = vmatprep.subr.bf16.mxu0 0
      %1902 = vmatpush1.bf16.msra.mxu0 0
      %1903 = vmatprep.subr.bf16.mxu0 0
      %1904 = vmatpush1.bf16.msra.mxu0 0
      %1905 = vmatprep.subr.bf16.mxu0 0
      %1906 = vmatpush1.bf16.msra.mxu0 0
      %1907 = vmatprep.subr.bf16.mxu0 0
      %1908 = vmatpush1.bf16.msra.mxu0 0
      %1909 = vmatprep.subr.bf16.mxu0 0
      %1910 = vmatpush1.bf16.msra.mxu0 0
      %1911 = vmatprep.subr.bf16.mxu0 0
      %1912 = vmatpush1.bf16.msra.mxu0 0
      %1913 = vmatprep.subr.bf16.mxu0 0
      %1914 = vmatpush1.bf16.msra.mxu0 0
      %1915 = vmatprep.subr.bf16.mxu0 0
      %1916 = vmatpush1.bf16.msra.mxu0 0
      %1917 = vmatprep.subr.bf16.mxu0 0
      %1918 = vmatpush1.bf16.msra.mxu0 0
      %1919 = vmatprep.subr.bf16.mxu0 0
      %1920 = vmatpush1.bf16.msra.mxu0 0
      %1921 = vmatprep.subr.bf16.mxu0 0
      %1922 = vmatpush1.bf16.msra.mxu0 0
      %1923 = vmatprep.mubr.bf16.mxu0 0
      %1924 = vmatmul.mubr.bf16.gmra.mrb[0].mxu0 %v1889
      %v1925 = vpop.f32.mrb[0].mxu0
      %v1926 = vadd.f32 0.0, %v1925
      %v1927 = vpop.f32.mrb[0].mxu0
      %v1928 = vpop.f32.mrb[0].mxu0
      %v1929 = vpop.f32.mrb[0].mxu0
      %1930 = vdwg.mxu0
      %v1931 = vadd.f32 %v1869, %v1926
      %v1932 = vld [vmem:[%s384] sm:$0xff]
      %v1933 = vpack.c.bf16 %v1932, %v1932
      %v1934 = vld [vmem:[%s785] sm:$0xf]
      %v1935 = vld [vmem:[%s785 + $0x4] sm:$0xf]
      %v1936 = vld [vmem:[%s785 + $0x8] sm:$0xf]
      %v1937 = vld [vmem:[%s785 + $0xc] sm:$0xf]
      %v1942 = vunpack.c.l.b16 %v1934
      %v1943 = vunpack.c.l.b16 %v1935
      %v1944 = vunpack.c.l.b16 %v1936
      %v1945 = vunpack.c.l.b16 %v1937
      %v1946 = vpack.c.b16 %v1943, %v1942
      %v1947 = vpack.c.b16 %v1945, %v1944
      %v1951 = vsel %vm356, %v1933, 0
      %1953 = vmatprep.subr.bf16.mxu0 0
      %1954 = vmatpush1.bf16.msra.mxu0 %v1946
      %1955 = vmatprep.subr.bf16.mxu0 0
      %1956 = vmatpush1.bf16.msra.mxu0 %v1947
      %1957 = vmatprep.subr.bf16.mxu0 0
      %1958 = vmatpush1.bf16.msra.mxu0 0
      %1959 = vmatprep.subr.bf16.mxu0 0
      %1960 = vmatpush1.bf16.msra.mxu0 0
      %1961 = vmatprep.subr.bf16.mxu0 0
      %1962 = vmatpush1.bf16.msra.mxu0 0
      %1963 = vmatprep.subr.bf16.mxu0 0
      %1964 = vmatpush1.bf16.msra.mxu0 0
      %1965 = vmatprep.subr.bf16.mxu0 0
      %1966 = vmatpush1.bf16.msra.mxu0 0
      %1967 = vmatprep.subr.bf16.mxu0 0
      %1968 = vmatpush1.bf16.msra.mxu0 0
      %1969 = vmatprep.subr.bf16.mxu0 0
      %1970 = vmatpush1.bf16.msra.mxu0 0
      %1971 = vmatprep.subr.bf16.mxu0 0
      %1972 = vmatpush1.bf16.msra.mxu0 0
      %1973 = vmatprep.subr.bf16.mxu0 0
      %1974 = vmatpush1.bf16.msra.mxu0 0
      %1975 = vmatprep.subr.bf16.mxu0 0
      %1976 = vmatpush1.bf16.msra.mxu0 0
      %1977 = vmatprep.subr.bf16.mxu0 0
      %1978 = vmatpush1.bf16.msra.mxu0 0
      %1979 = vmatprep.subr.bf16.mxu0 0
      %1980 = vmatpush1.bf16.msra.mxu0 0
      %1981 = vmatprep.subr.bf16.mxu0 0
      %1982 = vmatpush1.bf16.msra.mxu0 0
      %1983 = vmatprep.subr.bf16.mxu0 0
      %1984 = vmatpush1.bf16.msra.mxu0 0
      %1985 = vmatprep.mubr.bf16.mxu0 0
      %1986 = vmatmul.mubr.bf16.gmra.mrb[0].mxu0 %v1951
      %v1987 = vpop.f32.mrb[0].mxu0
      %v1988 = vadd.f32 0.0, %v1987
      %v1989 = vpop.f32.mrb[0].mxu0
      %v1990 = vpop.f32.mrb[0].mxu0
      %v1991 = vpop.f32.mrb[0].mxu0
      %1992 = vdwg.mxu0
      %v1993 = vadd.f32 %v1931, %v1988
      %v1994 = vld [vmem:[%s384 + $0x1] sm:$0xff]
      %v1995 = vpack.c.bf16 %v1994, %v1994
      %v1996 = vld [vmem:[%s848] sm:$0xf]
      %v1997 = vld [vmem:[%s848 + $0x4] sm:$0xf]
      %v1998 = vld [vmem:[%s848 + $0x8] sm:$0xf]
      %v1999 = vld [vmem:[%s848 + $0xc] sm:$0xf]
      %v2004 = vunpack.c.l.b16 %v1996
      %v2005 = vunpack.c.l.b16 %v1997
      %v2006 = vunpack.c.l.b16 %v1998
      %v2007 = vunpack.c.l.b16 %v1999
      %v2008 = vpack.c.b16 %v2005, %v2004
      %v2009 = vpack.c.b16 %v2007, %v2006
      %v2013 = vsel %vm356, %v1995, 0
      %2015 = vmatprep.subr.bf16.mxu0 0
      %2016 = vmatpush1.bf16.msra.mxu0 %v2008
      %2017 = vmatprep.subr.bf16.mxu0 0
      %2018 = vmatpush1.bf16.msra.mxu0 %v2009
      %2019 = vmatprep.subr.bf16.mxu0 0
      %2020 = vmatpush1.bf16.msra.mxu0 0
      %2021 = vmatprep.subr.bf16.mxu0 0
      %2022 = vmatpush1.bf16.msra.mxu0 0
      %2023 = vmatprep.subr.bf16.mxu0 0
      %2024 = vmatpush1.bf16.msra.mxu0 0
      %2025 = vmatprep.subr.bf16.mxu0 0
      %2026 = vmatpush1.bf16.msra.mxu0 0
      %2027 = vmatprep.subr.bf16.mxu0 0
      %2028 = vmatpush1.bf16.msra.mxu0 0
      %2029 = vmatprep.subr.bf16.mxu0 0
      %2030 = vmatpush1.bf16.msra.mxu0 0
      %2031 = vmatprep.subr.bf16.mxu0 0
      %2032 = vmatpush1.bf16.msra.mxu0 0
      %2033 = vmatprep.subr.bf16.mxu0 0
      %2034 = vmatpush1.bf16.msra.mxu0 0
      %2035 = vmatprep.subr.bf16.mxu0 0
      %2036 = vmatpush1.bf16.msra.mxu0 0
      %2037 = vmatprep.subr.bf16.mxu0 0
      %2038 = vmatpush1.bf16.msra.mxu0 0
      %2039 = vmatprep.subr.bf16.mxu0 0
      %2040 = vmatpush1.bf16.msra.mxu0 0
      %2041 = vmatprep.subr.bf16.mxu0 0
      %2042 = vmatpush1.bf16.msra.mxu0 0
      %2043 = vmatprep.subr.bf16.mxu0 0
      %2044 = vmatpush1.bf16.msra.mxu0 0
      %2045 = vmatprep.subr.bf16.mxu0 0
      %2046 = vmatpush1.bf16.msra.mxu0 0
      %2047 = vmatprep.mubr.bf16.mxu0 0
      %2048 = vmatmul.mubr.bf16.gmra.mrb[0].mxu0 %v2013
      %v2049 = vpop.f32.mrb[0].mxu0
      %v2050 = vadd.f32 0.0, %v2049
      %v2051 = vpop.f32.mrb[0].mxu0
      %v2052 = vpop.f32.mrb[0].mxu0
      %v2053 = vpop.f32.mrb[0].mxu0
      %2054 = vdwg.mxu0
      %v2055 = vadd.f32 %v1993, %v2050
      %v2056 = vld [vmem:[%s384 + $0x2] sm:$0xff]
      %v2057 = vpack.c.bf16 %v2056, %v2056
      %v2058 = vld [vmem:[%s911] sm:$0xf]
      %v2059 = vld [vmem:[%s911 + $0x4] sm:$0xf]
      %v2060 = vld [vmem:[%s911 + $0x8] sm:$0xf]
      %v2061 = vld [vmem:[%s911 + $0xc] sm:$0xf]
      %v2066 = vunpack.c.l.b16 %v2058
      %v2067 = vunpack.c.l.b16 %v2059
      %v2068 = vunpack.c.l.b16 %v2060
      %v2069 = vunpack.c.l.b16 %v2061
      %v2070 = vpack.c.b16 %v2067, %v2066
      %v2071 = vpack.c.b16 %v2069, %v2068
      %v2075 = vsel %vm356, %v2057, 0
      %2077 = vmatprep.subr.bf16.mxu0 0
      %2078 = vmatpush1.bf16.msra.mxu0 %v2070
      %2079 = vmatprep.subr.bf16.mxu0 0
      %2080 = vmatpush1.bf16.msra.mxu0 %v2071
      %2081 = vmatprep.subr.bf16.mxu0 0
      %2082 = vmatpush1.bf16.msra.mxu0 0
      %2083 = vmatprep.subr.bf16.mxu0 0
      %2084 = vmatpush1.bf16.msra.mxu0 0
      %2085 = vmatprep.subr.bf16.mxu0 0
      %2086 = vmatpush1.bf16.msra.mxu0 0
      %2087 = vmatprep.subr.bf16.mxu0 0
      %2088 = vmatpush1.bf16.msra.mxu0 0
      %2089 = vmatprep.subr.bf16.mxu0 0
      %2090 = vmatpush1.bf16.msra.mxu0 0
      %2091 = vmatprep.subr.bf16.mxu0 0
      %2092 = vmatpush1.bf16.msra.mxu0 0
      %2093 = vmatprep.subr.bf16.mxu0 0
      %2094 = vmatpush1.bf16.msra.mxu0 0
      %2095 = vmatprep.subr.bf16.mxu0 0
      %2096 = vmatpush1.bf16.msra.mxu0 0
      %2097 = vmatprep.subr.bf16.mxu0 0
      %2098 = vmatpush1.bf16.msra.mxu0 0
      %2099 = vmatprep.subr.bf16.mxu0 0
      %2100 = vmatpush1.bf16.msra.mxu0 0
      %2101 = vmatprep.subr.bf16.mxu0 0
      %2102 = vmatpush1.bf16.msra.mxu0 0
      %2103 = vmatprep.subr.bf16.mxu0 0
      %2104 = vmatpush1.bf16.msra.mxu0 0
      %2105 = vmatprep.subr.bf16.mxu0 0
      %2106 = vmatpush1.bf16.msra.mxu0 0
      %2107 = vmatprep.subr.bf16.mxu0 0
      %2108 = vmatpush1.bf16.msra.mxu0 0
      %2109 = vmatprep.mubr.bf16.mxu0 0
      %2110 = vmatmul.mubr.bf16.gmra.mrb[0].mxu0 %v2075
      %v2111 = vpop.f32.mrb[0].mxu0
      %v2112 = vadd.f32 0.0, %v2111
      %v2113 = vpop.f32.mrb[0].mxu0
      %v2114 = vpop.f32.mrb[0].mxu0
      %v2115 = vpop.f32.mrb[0].mxu0
      %2116 = vdwg.mxu0
      %v2117 = vadd.f32 %v2055, %v2112
      %v2118 = vmul.f32 %v2117, 0.01
      %v2119 = vmax.f32 %v2117, %v2118
      %2120 = vst.msk [vmem:[%s226 + $0x10] sm:$0xff] %vm356, %v2119
      %v2121 = vld [vmem:[%s4] sm:$0x1]
      %v2123 = vlaneseq
      %v2124 = vshrl.u32 %v2123, 7
      %v2125 = vsub.s32 0, %v2124
      %v2126 = vrot.slane %v2121, %v2125
      %2129 = vrot.lane.b32.xlu0 %v321, 96
      %v2130 = vpop.permute.xlu0 %2129
      %v2132 = vadd.f32 %v2126, %v2130
      %v2133 = vld [vmem:[%s382] sm:$0xff]
      %v2134 = vpack.c.bf16 %v2133, %v2133
      %v2135 = vld [vmem:[%s3] sm:$0xf]
      %v2136 = vld [vmem:[%s3 + $0x4] sm:$0xf]
      %v2137 = vld [vmem:[%s3 + $0x8] sm:$0xf]
      %v2138 = vld [vmem:[%s3 + $0xc] sm:$0xf]
      %v2143 = vunpack.c.l.b16 %v2135
      %v2144 = vunpack.c.l.b16 %v2136
      %v2145 = vunpack.c.l.b16 %v2137
      %v2146 = vunpack.c.l.b16 %v2138
      %v2147 = vpack.c.b16 %v2144, %v2143
      %v2148 = vpack.c.b16 %v2146, %v2145
      %v2152 = vsel %vm356, %v2134, 0
      %2154 = vmatprep.subr.bf16.mxu0 0
      %2155 = vmatpush1.bf16.msra.mxu0 %v2147
      %2156 = vmatprep.subr.bf16.mxu0 0
      %2157 = vmatpush1.bf16.msra.mxu0 %v2148
      %2158 = vmatprep.subr.bf16.mxu0 0
      %2159 = vmatpush1.bf16.msra.mxu0 0
      %2160 = vmatprep.subr.bf16.mxu0 0
      %2161 = vmatpush1.bf16.msra.mxu0 0
      %2162 = vmatprep.subr.bf16.mxu0 0
      %2163 = vmatpush1.bf16.msra.mxu0 0
      %2164 = vmatprep.subr.bf16.mxu0 0
      %2165 = vmatpush1.bf16.msra.mxu0 0
      %2166 = vmatprep.subr.bf16.mxu0 0
      %2167 = vmatpush1.bf16.msra.mxu0 0
      %2168 = vmatprep.subr.bf16.mxu0 0
      %2169 = vmatpush1.bf16.msra.mxu0 0
      %2170 = vmatprep.subr.bf16.mxu0 0
      %2171 = vmatpush1.bf16.msra.mxu0 0
      %2172 = vmatprep.subr.bf16.mxu0 0
      %2173 = vmatpush1.bf16.msra.mxu0 0
      %2174 = vmatprep.subr.bf16.mxu0 0
      %2175 = vmatpush1.bf16.msra.mxu0 0
      %2176 = vmatprep.subr.bf16.mxu0 0
      %2177 = vmatpush1.bf16.msra.mxu0 0
      %2178 = vmatprep.subr.bf16.mxu0 0
      %2179 = vmatpush1.bf16.msra.mxu0 0
      %2180 = vmatprep.subr.bf16.mxu0 0
      %2181 = vmatpush1.bf16.msra.mxu0 0
      %2182 = vmatprep.subr.bf16.mxu0 0
      %2183 = vmatpush1.bf16.msra.mxu0 0
      %2184 = vmatprep.subr.bf16.mxu0 0
      %2185 = vmatpush1.bf16.msra.mxu0 0
      %2186 = vmatprep.mubr.bf16.mxu0 0
      %2187 = vmatmul.mubr.bf16.gmra.mrb[0].mxu0 %v2152
      %v2188 = vpop.f32.mrb[0].mxu0
      %v2189 = vadd.f32 0.0, %v2188
      %v2190 = vpop.f32.mrb[0].mxu0
      %v2191 = vpop.f32.mrb[0].mxu0
      %v2192 = vpop.f32.mrb[0].mxu0
      %2193 = vdwg.mxu0
      %v2194 = vadd.f32 %v2132, %v2189
      %v2195 = vld [vmem:[%s382 + $0x1] sm:$0xff]
      %v2196 = vpack.c.bf16 %v2195, %v2195
      %v2197 = vld [vmem:[%s470] sm:$0xf]
      %v2198 = vld [vmem:[%s470 + $0x4] sm:$0xf]
      %v2199 = vld [vmem:[%s470 + $0x8] sm:$0xf]
      %v2200 = vld [vmem:[%s470 + $0xc] sm:$0xf]
      %v2205 = vunpack.c.l.b16 %v2197
      %v2206 = vunpack.c.l.b16 %v2198
      %v2207 = vunpack.c.l.b16 %v2199
      %v2208 = vunpack.c.l.b16 %v2200
      %v2209 = vpack.c.b16 %v2206, %v2205
      %v2210 = vpack.c.b16 %v2208, %v2207
      %v2214 = vsel %vm356, %v2196, 0
      %2216 = vmatprep.subr.bf16.mxu0 0
      %2217 = vmatpush1.bf16.msra.mxu0 %v2209
      %2218 = vmatprep.subr.bf16.mxu0 0
      %2219 = vmatpush1.bf16.msra.mxu0 %v2210
      %2220 = vmatprep.subr.bf16.mxu0 0
      %2221 = vmatpush1.bf16.msra.mxu0 0
      %2222 = vmatprep.subr.bf16.mxu0 0
      %2223 = vmatpush1.bf16.msra.mxu0 0
      %2224 = vmatprep.subr.bf16.mxu0 0
      %2225 = vmatpush1.bf16.msra.mxu0 0
      %2226 = vmatprep.subr.bf16.mxu0 0
      %2227 = vmatpush1.bf16.msra.mxu0 0
      %2228 = vmatprep.subr.bf16.mxu0 0
      %2229 = vmatpush1.bf16.msra.mxu0 0
      %2230 = vmatprep.subr.bf16.mxu0 0
      %2231 = vmatpush1.bf16.msra.mxu0 0
      %2232 = vmatprep.subr.bf16.mxu0 0
      %2233 = vmatpush1.bf16.msra.mxu0 0
      %2234 = vmatprep.subr.bf16.mxu0 0
      %2235 = vmatpush1.bf16.msra.mxu0 0
      %2236 = vmatprep.subr.bf16.mxu0 0
      %2237 = vmatpush1.bf16.msra.mxu0 0
      %2238 = vmatprep.subr.bf16.mxu0 0
      %2239 = vmatpush1.bf16.msra.mxu0 0
      %2240 = vmatprep.subr.bf16.mxu0 0
      %2241 = vmatpush1.bf16.msra.mxu0 0
      %2242 = vmatprep.subr.bf16.mxu0 0
      %2243 = vmatpush1.bf16.msra.mxu0 0
      %2244 = vmatprep.subr.bf16.mxu0 0
      %2245 = vmatpush1.bf16.msra.mxu0 0
      %2246 = vmatprep.subr.bf16.mxu0 0
      %2247 = vmatpush1.bf16.msra.mxu0 0
      %2248 = vmatprep.mubr.bf16.mxu0 0
      %2249 = vmatmul.mubr.bf16.gmra.mrb[0].mxu0 %v2214
      %v2250 = vpop.f32.mrb[0].mxu0
      %v2251 = vadd.f32 0.0, %v2250
      %v2252 = vpop.f32.mrb[0].mxu0
      %v2253 = vpop.f32.mrb[0].mxu0
      %v2254 = vpop.f32.mrb[0].mxu0
      %2255 = vdwg.mxu0
      %v2256 = vadd.f32 %v2194, %v2251
      %v2257 = vld [vmem:[%s382 + $0x2] sm:$0xff]
      %v2258 = vpack.c.bf16 %v2257, %v2257
      %v2259 = vld [vmem:[%s533] sm:$0xf]
      %v2260 = vld [vmem:[%s533 + $0x4] sm:$0xf]
      %v2261 = vld [vmem:[%s533 + $0x8] sm:$0xf]
      %v2262 = vld [vmem:[%s533 + $0xc] sm:$0xf]
      %v2267 = vunpack.c.l.b16 %v2259
      %v2268 = vunpack.c.l.b16 %v2260
      %v2269 = vunpack.c.l.b16 %v2261
      %v2270 = vunpack.c.l.b16 %v2262
      %v2271 = vpack.c.b16 %v2268, %v2267
      %v2272 = vpack.c.b16 %v2270, %v2269
      %v2276 = vsel %vm356, %v2258, 0
      %2278 = vmatprep.subr.bf16.mxu0 0
      %2279 = vmatpush1.bf16.msra.mxu0 %v2271
      %2280 = vmatprep.subr.bf16.mxu0 0
      %2281 = vmatpush1.bf16.msra.mxu0 %v2272
      %2282 = vmatprep.subr.bf16.mxu0 0
      %2283 = vmatpush1.bf16.msra.mxu0 0
      %2284 = vmatprep.subr.bf16.mxu0 0
      %2285 = vmatpush1.bf16.msra.mxu0 0
      %2286 = vmatprep.subr.bf16.mxu0 0
      %2287 = vmatpush1.bf16.msra.mxu0 0
      %2288 = vmatprep.subr.bf16.mxu0 0
      %2289 = vmatpush1.bf16.msra.mxu0 0
      %2290 = vmatprep.subr.bf16.mxu0 0
      %2291 = vmatpush1.bf16.msra.mxu0 0
      %2292 = vmatprep.subr.bf16.mxu0 0
      %2293 = vmatpush1.bf16.msra.mxu0 0
      %2294 = vmatprep.subr.bf16.mxu0 0
      %2295 = vmatpush1.bf16.msra.mxu0 0
      %2296 = vmatprep.subr.bf16.mxu0 0
      %2297 = vmatpush1.bf16.msra.mxu0 0
      %2298 = vmatprep.subr.bf16.mxu0 0
      %2299 = vmatpush1.bf16.msra.mxu0 0
      %2300 = vmatprep.subr.bf16.mxu0 0
      %2301 = vmatpush1.bf16.msra.mxu0 0
      %2302 = vmatprep.subr.bf16.mxu0 0
      %2303 = vmatpush1.bf16.msra.mxu0 0
      %2304 = vmatprep.subr.bf16.mxu0 0
      %2305 = vmatpush1.bf16.msra.mxu0 0
      %2306 = vmatprep.subr.bf16.mxu0 0
      %2307 = vmatpush1.bf16.msra.mxu0 0
      %2308 = vmatprep.subr.bf16.mxu0 0
      %2309 = vmatpush1.bf16.msra.mxu0 0
      %2310 = vmatprep.mubr.bf16.mxu0 0
      %2311 = vmatmul.mubr.bf16.gmra.mrb[0].mxu0 %v2276
      %v2312 = vpop.f32.mrb[0].mxu0
      %v2313 = vadd.f32 0.0, %v2312
      %v2314 = vpop.f32.mrb[0].mxu0
      %v2315 = vpop.f32.mrb[0].mxu0
      %v2316 = vpop.f32.mrb[0].mxu0
      %2317 = vdwg.mxu0
      %v2318 = vadd.f32 %v2256, %v2313
      %v2319 = vld [vmem:[%s384] sm:$0xff]
      %v2320 = vpack.c.bf16 %v2319, %v2319
      %v2321 = vld [vmem:[%s596] sm:$0xf]
      %v2322 = vld [vmem:[%s596 + $0x4] sm:$0xf]
      %v2323 = vld [vmem:[%s596 + $0x8] sm:$0xf]
      %v2324 = vld [vmem:[%s596 + $0xc] sm:$0xf]
      %v2329 = vunpack.c.l.b16 %v2321
      %v2330 = vunpack.c.l.b16 %v2322
      %v2331 = vunpack.c.l.b16 %v2323
      %v2332 = vunpack.c.l.b16 %v2324
      %v2333 = vpack.c.b16 %v2330, %v2329
      %v2334 = vpack.c.b16 %v2332, %v2331
      %v2338 = vsel %vm356, %v2320, 0
      %2340 = vmatprep.subr.bf16.mxu0 0
      %2341 = vmatpush1.bf16.msra.mxu0 %v2333
      %2342 = vmatprep.subr.bf16.mxu0 0
      %2343 = vmatpush1.bf16.msra.mxu0 %v2334
      %2344 = vmatprep.subr.bf16.mxu0 0
      %2345 = vmatpush1.bf16.msra.mxu0 0
      %2346 = vmatprep.subr.bf16.mxu0 0
      %2347 = vmatpush1.bf16.msra.mxu0 0
      %2348 = vmatprep.subr.bf16.mxu0 0
      %2349 = vmatpush1.bf16.msra.mxu0 0
      %2350 = vmatprep.subr.bf16.mxu0 0
      %2351 = vmatpush1.bf16.msra.mxu0 0
      %2352 = vmatprep.subr.bf16.mxu0 0
      %2353 = vmatpush1.bf16.msra.mxu0 0
      %2354 = vmatprep.subr.bf16.mxu0 0
      %2355 = vmatpush1.bf16.msra.mxu0 0
      %2356 = vmatprep.subr.bf16.mxu0 0
      %2357 = vmatpush1.bf16.msra.mxu0 0
      %2358 = vmatprep.subr.bf16.mxu0 0
      %2359 = vmatpush1.bf16.msra.mxu0 0
      %2360 = vmatprep.subr.bf16.mxu0 0
      %2361 = vmatpush1.bf16.msra.mxu0 0
      %2362 = vmatprep.subr.bf16.mxu0 0
      %2363 = vmatpush1.bf16.msra.mxu0 0
      %2364 = vmatprep.subr.bf16.mxu0 0
      %2365 = vmatpush1.bf16.msra.mxu0 0
      %2366 = vmatprep.subr.bf16.mxu0 0
      %2367 = vmatpush1.bf16.msra.mxu0 0
      %2368 = vmatprep.subr.bf16.mxu0 0
      %2369 = vmatpush1.bf16.msra.mxu0 0
      %2370 = vmatprep.subr.bf16.mxu0 0
      %2371 = vmatpush1.bf16.msra.mxu0 0
      %2372 = vmatprep.mubr.bf16.mxu0 0
      %2373 = vmatmul.mubr.bf16.gmra.mrb[0].mxu0 %v2338
      %v2374 = vpop.f32.mrb[0].mxu0
      %v2375 = vadd.f32 0.0, %v2374
      %v2376 = vpop.f32.mrb[0].mxu0
      %v2377 = vpop.f32.mrb[0].mxu0
      %v2378 = vpop.f32.mrb[0].mxu0
      %2379 = vdwg.mxu0
      %v2380 = vadd.f32 %v2318, %v2375
      %v2381 = vld [vmem:[%s384 + $0x1] sm:$0xff]
      %v2382 = vpack.c.bf16 %v2381, %v2381
      %v2383 = vld [vmem:[%s659] sm:$0xf]
      %v2384 = vld [vmem:[%s659 + $0x4] sm:$0xf]
      %v2385 = vld [vmem:[%s659 + $0x8] sm:$0xf]
      %v2386 = vld [vmem:[%s659 + $0xc] sm:$0xf]
      %v2391 = vunpack.c.l.b16 %v2383
      %v2392 = vunpack.c.l.b16 %v2384
      %v2393 = vunpack.c.l.b16 %v2385
      %v2394 = vunpack.c.l.b16 %v2386
      %v2395 = vpack.c.b16 %v2392, %v2391
      %v2396 = vpack.c.b16 %v2394, %v2393
      %v2400 = vsel %vm356, %v2382, 0
      %2402 = vmatprep.subr.bf16.mxu0 0
      %2403 = vmatpush1.bf16.msra.mxu0 %v2395
      %2404 = vmatprep.subr.bf16.mxu0 0
      %2405 = vmatpush1.bf16.msra.mxu0 %v2396
      %2406 = vmatprep.subr.bf16.mxu0 0
      %2407 = vmatpush1.bf16.msra.mxu0 0
      %2408 = vmatprep.subr.bf16.mxu0 0
      %2409 = vmatpush1.bf16.msra.mxu0 0
      %2410 = vmatprep.subr.bf16.mxu0 0
      %2411 = vmatpush1.bf16.msra.mxu0 0
      %2412 = vmatprep.subr.bf16.mxu0 0
      %2413 = vmatpush1.bf16.msra.mxu0 0
      %2414 = vmatprep.subr.bf16.mxu0 0
      %2415 = vmatpush1.bf16.msra.mxu0 0
      %2416 = vmatprep.subr.bf16.mxu0 0
      %2417 = vmatpush1.bf16.msra.mxu0 0
      %2418 = vmatprep.subr.bf16.mxu0 0
      %2419 = vmatpush1.bf16.msra.mxu0 0
      %2420 = vmatprep.subr.bf16.mxu0 0
      %2421 = vmatpush1.bf16.msra.mxu0 0
      %2422 = vmatprep.subr.bf16.mxu0 0
      %2423 = vmatpush1.bf16.msra.mxu0 0
      %2424 = vmatprep.subr.bf16.mxu0 0
      %2425 = vmatpush1.bf16.msra.mxu0 0
      %2426 = vmatprep.subr.bf16.mxu0 0
      %2427 = vmatpush1.bf16.msra.mxu0 0
      %2428 = vmatprep.subr.bf16.mxu0 0
      %2429 = vmatpush1.bf16.msra.mxu0 0
      %2430 = vmatprep.subr.bf16.mxu0 0
      %2431 = vmatpush1.bf16.msra.mxu0 0
      %2432 = vmatprep.subr.bf16.mxu0 0
      %2433 = vmatpush1.bf16.msra.mxu0 0
      %2434 = vmatprep.mubr.bf16.mxu0 0
      %2435 = vmatmul.mubr.bf16.gmra.mrb[0].mxu0 %v2400
      %v2436 = vpop.f32.mrb[0].mxu0
      %v2437 = vadd.f32 0.0, %v2436
      %v2438 = vpop.f32.mrb[0].mxu0
      %v2439 = vpop.f32.mrb[0].mxu0
      %v2440 = vpop.f32.mrb[0].mxu0
      %2441 = vdwg.mxu0
      %v2442 = vadd.f32 %v2380, %v2437
      %v2443 = vld [vmem:[%s384 + $0x2] sm:$0xff]
      %v2444 = vpack.c.bf16 %v2443, %v2443
      %v2445 = vld [vmem:[%s722] sm:$0xf]
      %v2446 = vld [vmem:[%s722 + $0x4] sm:$0xf]
      %v2447 = vld [vmem:[%s722 + $0x8] sm:$0xf]
      %v2448 = vld [vmem:[%s722 + $0xc] sm:$0xf]
      %v2453 = vunpack.c.l.b16 %v2445
      %v2454 = vunpack.c.l.b16 %v2446
      %v2455 = vunpack.c.l.b16 %v2447
      %v2456 = vunpack.c.l.b16 %v2448
      %v2457 = vpack.c.b16 %v2454, %v2453
      %v2458 = vpack.c.b16 %v2456, %v2455
      %v2462 = vsel %vm356, %v2444, 0
      %2464 = vmatprep.subr.bf16.mxu0 0
      %2465 = vmatpush1.bf16.msra.mxu0 %v2457
      %2466 = vmatprep.subr.bf16.mxu0 0
      %2467 = vmatpush1.bf16.msra.mxu0 %v2458
      %2468 = vmatprep.subr.bf16.mxu0 0
      %2469 = vmatpush1.bf16.msra.mxu0 0
      %2470 = vmatprep.subr.bf16.mxu0 0
      %2471 = vmatpush1.bf16.msra.mxu0 0
      %2472 = vmatprep.subr.bf16.mxu0 0
      %2473 = vmatpush1.bf16.msra.mxu0 0
      %2474 = vmatprep.subr.bf16.mxu0 0
      %2475 = vmatpush1.bf16.msra.mxu0 0
      %2476 = vmatprep.subr.bf16.mxu0 0
      %2477 = vmatpush1.bf16.msra.mxu0 0
      %2478 = vmatprep.subr.bf16.mxu0 0
      %2479 = vmatpush1.bf16.msra.mxu0 0
      %2480 = vmatprep.subr.bf16.mxu0 0
      %2481 = vmatpush1.bf16.msra.mxu0 0
      %2482 = vmatprep.subr.bf16.mxu0 0
      %2483 = vmatpush1.bf16.msra.mxu0 0
      %2484 = vmatprep.subr.bf16.mxu0 0
      %2485 = vmatpush1.bf16.msra.mxu0 0
      %2486 = vmatprep.subr.bf16.mxu0 0
      %2487 = vmatpush1.bf16.msra.mxu0 0
      %2488 = vmatprep.subr.bf16.mxu0 0
      %2489 = vmatpush1.bf16.msra.mxu0 0
      %2490 = vmatprep.subr.bf16.mxu0 0
      %2491 = vmatpush1.bf16.msra.mxu0 0
      %2492 = vmatprep.subr.bf16.mxu0 0
      %2493 = vmatpush1.bf16.msra.mxu0 0
      %2494 = vmatprep.subr.bf16.mxu0 0
      %2495 = vmatpush1.bf16.msra.mxu0 0
      %2496 = vmatprep.mubr.bf16.mxu0 0
      %2497 = vmatmul.mubr.bf16.gmra.mrb[0].mxu0 %v2462
      %v2498 = vpop.f32.mrb[0].mxu0
      %v2499 = vadd.f32 0.0, %v2498
      %v2500 = vpop.f32.mrb[0].mxu0
      %v2501 = vpop.f32.mrb[0].mxu0
      %v2502 = vpop.f32.mrb[0].mxu0
      %2503 = vdwg.mxu0
      %v2504 = vadd.f32 %v2442, %v2499
      %v2505 = vld [vmem:[%s386] sm:$0xff]
      %v2506 = vpack.c.bf16 %v2505, %v2505
      %v2507 = vld [vmem:[%s785] sm:$0xf]
      %v2508 = vld [vmem:[%s785 + $0x4] sm:$0xf]
      %v2509 = vld [vmem:[%s785 + $0x8] sm:$0xf]
      %v2510 = vld [vmem:[%s785 + $0xc] sm:$0xf]
      %v2515 = vunpack.c.l.b16 %v2507
      %v2516 = vunpack.c.l.b16 %v2508
      %v2517 = vunpack.c.l.b16 %v2509
      %v2518 = vunpack.c.l.b16 %v2510
      %v2519 = vpack.c.b16 %v2516, %v2515
      %v2520 = vpack.c.b16 %v2518, %v2517
      %v2524 = vsel %vm356, %v2506, 0
      %2526 = vmatprep.subr.bf16.mxu0 0
      %2527 = vmatpush1.bf16.msra.mxu0 %v2519
      %2528 = vmatprep.subr.bf16.mxu0 0
      %2529 = vmatpush1.bf16.msra.mxu0 %v2520
      %2530 = vmatprep.subr.bf16.mxu0 0
      %2531 = vmatpush1.bf16.msra.mxu0 0
      %2532 = vmatprep.subr.bf16.mxu0 0
      %2533 = vmatpush1.bf16.msra.mxu0 0
      %2534 = vmatprep.subr.bf16.mxu0 0
      %2535 = vmatpush1.bf16.msra.mxu0 0
      %2536 = vmatprep.subr.bf16.mxu0 0
      %2537 = vmatpush1.bf16.msra.mxu0 0
      %2538 = vmatprep.subr.bf16.mxu0 0
      %2539 = vmatpush1.bf16.msra.mxu0 0
      %2540 = vmatprep.subr.bf16.mxu0 0
      %2541 = vmatpush1.bf16.msra.mxu0 0
      %2542 = vmatprep.subr.bf16.mxu0 0
      %2543 = vmatpush1.bf16.msra.mxu0 0
      %2544 = vmatprep.subr.bf16.mxu0 0
      %2545 = vmatpush1.bf16.msra.mxu0 0
      %2546 = vmatprep.subr.bf16.mxu0 0
      %2547 = vmatpush1.bf16.msra.mxu0 0
      %2548 = vmatprep.subr.bf16.mxu0 0
      %2549 = vmatpush1.bf16.msra.mxu0 0
      %2550 = vmatprep.subr.bf16.mxu0 0
      %2551 = vmatpush1.bf16.msra.mxu0 0
      %2552 = vmatprep.subr.bf16.mxu0 0
      %2553 = vmatpush1.bf16.msra.mxu0 0
      %2554 = vmatprep.subr.bf16.mxu0 0
      %2555 = vmatpush1.bf16.msra.mxu0 0
      %2556 = vmatprep.subr.bf16.mxu0 0
      %2557 = vmatpush1.bf16.msra.mxu0 0
      %2558 = vmatprep.mubr.bf16.mxu0 0
      %2559 = vmatmul.mubr.bf16.gmra.mrb[0].mxu0 %v2524
      %v2560 = vpop.f32.mrb[0].mxu0
      %v2561 = vadd.f32 0.0, %v2560
      %v2562 = vpop.f32.mrb[0].mxu0
      %v2563 = vpop.f32.mrb[0].mxu0
      %v2564 = vpop.f32.mrb[0].mxu0
      %2565 = vdwg.mxu0
      %v2566 = vadd.f32 %v2504, %v2561
      %v2567 = vld [vmem:[%s386 + $0x1] sm:$0xff]
      %v2568 = vpack.c.bf16 %v2567, %v2567
      %v2569 = vld [vmem:[%s848] sm:$0xf]
      %v2570 = vld [vmem:[%s848 + $0x4] sm:$0xf]
      %v2571 = vld [vmem:[%s848 + $0x8] sm:$0xf]
      %v2572 = vld [vmem:[%s848 + $0xc] sm:$0xf]
      %v2577 = vunpack.c.l.b16 %v2569
      %v2578 = vunpack.c.l.b16 %v2570
      %v2579 = vunpack.c.l.b16 %v2571
      %v2580 = vunpack.c.l.b16 %v2572
      %v2581 = vpack.c.b16 %v2578, %v2577
      %v2582 = vpack.c.b16 %v2580, %v2579
      %v2586 = vsel %vm356, %v2568, 0
      %2588 = vmatprep.subr.bf16.mxu0 0
      %2589 = vmatpush1.bf16.msra.mxu0 %v2581
      %2590 = vmatprep.subr.bf16.mxu0 0
      %2591 = vmatpush1.bf16.msra.mxu0 %v2582
      %2592 = vmatprep.subr.bf16.mxu0 0
      %2593 = vmatpush1.bf16.msra.mxu0 0
      %2594 = vmatprep.subr.bf16.mxu0 0
      %2595 = vmatpush1.bf16.msra.mxu0 0
      %2596 = vmatprep.subr.bf16.mxu0 0
      %2597 = vmatpush1.bf16.msra.mxu0 0
      %2598 = vmatprep.subr.bf16.mxu0 0
      %2599 = vmatpush1.bf16.msra.mxu0 0
      %2600 = vmatprep.subr.bf16.mxu0 0
      %2601 = vmatpush1.bf16.msra.mxu0 0
      %2602 = vmatprep.subr.bf16.mxu0 0
      %2603 = vmatpush1.bf16.msra.mxu0 0
      %2604 = vmatprep.subr.bf16.mxu0 0
      %2605 = vmatpush1.bf16.msra.mxu0 0
      %2606 = vmatprep.subr.bf16.mxu0 0
      %2607 = vmatpush1.bf16.msra.mxu0 0
      %2608 = vmatprep.subr.bf16.mxu0 0
      %2609 = vmatpush1.bf16.msra.mxu0 0
      %2610 = vmatprep.subr.bf16.mxu0 0
      %2611 = vmatpush1.bf16.msra.mxu0 0
      %2612 = vmatprep.subr.bf16.mxu0 0
      %2613 = vmatpush1.bf16.msra.mxu0 0
      %2614 = vmatprep.subr.bf16.mxu0 0
      %2615 = vmatpush1.bf16.msra.mxu0 0
      %2616 = vmatprep.subr.bf16.mxu0 0
      %2617 = vmatpush1.bf16.msra.mxu0 0
      %2618 = vmatprep.subr.bf16.mxu0 0
      %2619 = vmatpush1.bf16.msra.mxu0 0
      %2620 = vmatprep.mubr.bf16.mxu0 0
      %2621 = vmatmul.mubr.bf16.gmra.mrb[0].mxu0 %v2586
      %v2622 = vpop.f32.mrb[0].mxu0
      %v2623 = vadd.f32 0.0, %v2622
      %v2624 = vpop.f32.mrb[0].mxu0
      %v2625 = vpop.f32.mrb[0].mxu0
      %v2626 = vpop.f32.mrb[0].mxu0
      %2627 = vdwg.mxu0
      %v2628 = vadd.f32 %v2566, %v2623
      %v2629 = vld [vmem:[%s386 + $0x2] sm:$0xff]
      %v2630 = vpack.c.bf16 %v2629, %v2629
      %v2631 = vld [vmem:[%s911] sm:$0xf]
      %v2632 = vld [vmem:[%s911 + $0x4] sm:$0xf]
      %v2633 = vld [vmem:[%s911 + $0x8] sm:$0xf]
      %v2634 = vld [vmem:[%s911 + $0xc] sm:$0xf]
      %v2639 = vunpack.c.l.b16 %v2631
      %v2640 = vunpack.c.l.b16 %v2632
      %v2641 = vunpack.c.l.b16 %v2633
      %v2642 = vunpack.c.l.b16 %v2634
      %v2643 = vpack.c.b16 %v2640, %v2639
      %v2644 = vpack.c.b16 %v2642, %v2641
      %v2648 = vsel %vm356, %v2630, 0
      %2650 = vmatprep.subr.bf16.mxu0 0
      %2651 = vmatpush1.bf16.msra.mxu0 %v2643
      %2652 = vmatprep.subr.bf16.mxu0 0
      %2653 = vmatpush1.bf16.msra.mxu0 %v2644
      %2654 = vmatprep.subr.bf16.mxu0 0
      %2655 = vmatpush1.bf16.msra.mxu0 0
      %2656 = vmatprep.subr.bf16.mxu0 0
      %2657 = vmatpush1.bf16.msra.mxu0 0
      %2658 = vmatprep.subr.bf16.mxu0 0
      %2659 = vmatpush1.bf16.msra.mxu0 0
      %2660 = vmatprep.subr.bf16.mxu0 0
      %2661 = vmatpush1.bf16.msra.mxu0 0
      %2662 = vmatprep.subr.bf16.mxu0 0
      %2663 = vmatpush1.bf16.msra.mxu0 0
      %2664 = vmatprep.subr.bf16.mxu0 0
      %2665 = vmatpush1.bf16.msra.mxu0 0
      %2666 = vmatprep.subr.bf16.mxu0 0
      %2667 = vmatpush1.bf16.msra.mxu0 0
      %2668 = vmatprep.subr.bf16.mxu0 0
      %2669 = vmatpush1.bf16.msra.mxu0 0
      %2670 = vmatprep.subr.bf16.mxu0 0
      %2671 = vmatpush1.bf16.msra.mxu0 0
      %2672 = vmatprep.subr.bf16.mxu0 0
      %2673 = vmatpush1.bf16.msra.mxu0 0
      %2674 = vmatprep.subr.bf16.mxu0 0
      %2675 = vmatpush1.bf16.msra.mxu0 0
      %2676 = vmatprep.subr.bf16.mxu0 0
      %2677 = vmatpush1.bf16.msra.mxu0 0
      %2678 = vmatprep.subr.bf16.mxu0 0
      %2679 = vmatpush1.bf16.msra.mxu0 0
      %2680 = vmatprep.subr.bf16.mxu0 0
      %2681 = vmatpush1.bf16.msra.mxu0 0
      %2682 = vmatprep.mubr.bf16.mxu0 0
      %2683 = vmatmul.mubr.bf16.gmra.mrb[0].mxu0 %v2648
      %v2684 = vpop.f32.mrb[0].mxu0
      %v2685 = vadd.f32 0.0, %v2684
      %v2686 = vpop.f32.mrb[0].mxu0
      %v2687 = vpop.f32.mrb[0].mxu0
      %v2688 = vpop.f32.mrb[0].mxu0
      %2689 = vdwg.mxu0
      %v2690 = vadd.f32 %v2628, %v2685
      %v2691 = vmul.f32 %v2690, 0.01
      %v2692 = vmax.f32 %v2690, %v2691
      %2693 = vst.msk [vmem:[%s226 + $0x18] sm:$0xff] %vm356, %v2692
      %v2694 = vld [vmem:[%s4] sm:$0x1]
      %v2696 = vlaneseq
      %v2697 = vshrl.u32 %v2696, 7
      %v2698 = vsub.s32 0, %v2697
      %v2699 = vrot.slane %v2694, %v2698
      %2702 = vrot.lane.b32.xlu0 %v326, 96
      %v2703 = vpop.permute.xlu0 %2702
      %v2705 = vadd.f32 %v2699, %v2703
      %v2706 = vld [vmem:[%s384] sm:$0xff]
      %v2707 = vpack.c.bf16 %v2706, %v2706
      %v2708 = vld [vmem:[%s3] sm:$0xf]
      %v2709 = vld [vmem:[%s3 + $0x4] sm:$0xf]
      %v2710 = vld [vmem:[%s3 + $0x8] sm:$0xf]
      %v2711 = vld [vmem:[%s3 + $0xc] sm:$0xf]
      %v2716 = vunpack.c.l.b16 %v2708
      %v2717 = vunpack.c.l.b16 %v2709
      %v2718 = vunpack.c.l.b16 %v2710
      %v2719 = vunpack.c.l.b16 %v2711
      %v2720 = vpack.c.b16 %v2717, %v2716
      %v2721 = vpack.c.b16 %v2719, %v2718
      %v2725 = vsel %vm356, %v2707, 0
      %2727 = vmatprep.subr.bf16.mxu0 0
      %2728 = vmatpush1.bf16.msra.mxu0 %v2720
      %2729 = vmatprep.subr.bf16.mxu0 0
      %2730 = vmatpush1.bf16.msra.mxu0 %v2721
      %2731 = vmatprep.subr.bf16.mxu0 0
      %2732 = vmatpush1.bf16.msra.mxu0 0
      %2733 = vmatprep.subr.bf16.mxu0 0
      %2734 = vmatpush1.bf16.msra.mxu0 0
      %2735 = vmatprep.subr.bf16.mxu0 0
      %2736 = vmatpush1.bf16.msra.mxu0 0
      %2737 = vmatprep.subr.bf16.mxu0 0
      %2738 = vmatpush1.bf16.msra.mxu0 0
      %2739 = vmatprep.subr.bf16.mxu0 0
      %2740 = vmatpush1.bf16.msra.mxu0 0
      %2741 = vmatprep.subr.bf16.mxu0 0
      %2742 = vmatpush1.bf16.msra.mxu0 0
      %2743 = vmatprep.subr.bf16.mxu0 0
      %2744 = vmatpush1.bf16.msra.mxu0 0
      %2745 = vmatprep.subr.bf16.mxu0 0
      %2746 = vmatpush1.bf16.msra.mxu0 0
      %2747 = vmatprep.subr.bf16.mxu0 0
      %2748 = vmatpush1.bf16.msra.mxu0 0
      %2749 = vmatprep.subr.bf16.mxu0 0
      %2750 = vmatpush1.bf16.msra.mxu0 0
      %2751 = vmatprep.subr.bf16.mxu0 0
      %2752 = vmatpush1.bf16.msra.mxu0 0
      %2753 = vmatprep.subr.bf16.mxu0 0
      %2754 = vmatpush1.bf16.msra.mxu0 0
      %2755 = vmatprep.subr.bf16.mxu0 0
      %2756 = vmatpush1.bf16.msra.mxu0 0
      %2757 = vmatprep.subr.bf16.mxu0 0
      %2758 = vmatpush1.bf16.msra.mxu0 0
      %2759 = vmatprep.mubr.bf16.mxu0 0
      %2760 = vmatmul.mubr.bf16.gmra.mrb[0].mxu0 %v2725
      %v2761 = vpop.f32.mrb[0].mxu0
      %v2762 = vadd.f32 0.0, %v2761
      %v2763 = vpop.f32.mrb[0].mxu0
      %v2764 = vpop.f32.mrb[0].mxu0
      %v2765 = vpop.f32.mrb[0].mxu0
      %2766 = vdwg.mxu0
      %v2767 = vadd.f32 %v2705, %v2762
      %v2768 = vld [vmem:[%s384 + $0x1] sm:$0xff]
      %v2769 = vpack.c.bf16 %v2768, %v2768
      %v2770 = vld [vmem:[%s470] sm:$0xf]
      %v2771 = vld [vmem:[%s470 + $0x4] sm:$0xf]
      %v2772 = vld [vmem:[%s470 + $0x8] sm:$0xf]
      %v2773 = vld [vmem:[%s470 + $0xc] sm:$0xf]
      %v2778 = vunpack.c.l.b16 %v2770
      %v2779 = vunpack.c.l.b16 %v2771
      %v2780 = vunpack.c.l.b16 %v2772
      %v2781 = vunpack.c.l.b16 %v2773
      %v2782 = vpack.c.b16 %v2779, %v2778
      %v2783 = vpack.c.b16 %v2781, %v2780
      %v2787 = vsel %vm356, %v2769, 0
      %2789 = vmatprep.subr.bf16.mxu0 0
      %2790 = vmatpush1.bf16.msra.mxu0 %v2782
      %2791 = vmatprep.subr.bf16.mxu0 0
      %2792 = vmatpush1.bf16.msra.mxu0 %v2783
      %2793 = vmatprep.subr.bf16.mxu0 0
      %2794 = vmatpush1.bf16.msra.mxu0 0
      %2795 = vmatprep.subr.bf16.mxu0 0
      %2796 = vmatpush1.bf16.msra.mxu0 0
      %2797 = vmatprep.subr.bf16.mxu0 0
      %2798 = vmatpush1.bf16.msra.mxu0 0
      %2799 = vmatprep.subr.bf16.mxu0 0
      %2800 = vmatpush1.bf16.msra.mxu0 0
      %2801 = vmatprep.subr.bf16.mxu0 0
      %2802 = vmatpush1.bf16.msra.mxu0 0
      %2803 = vmatprep.subr.bf16.mxu0 0
      %2804 = vmatpush1.bf16.msra.mxu0 0
      %2805 = vmatprep.subr.bf16.mxu0 0
      %2806 = vmatpush1.bf16.msra.mxu0 0
      %2807 = vmatprep.subr.bf16.mxu0 0
      %2808 = vmatpush1.bf16.msra.mxu0 0
      %2809 = vmatprep.subr.bf16.mxu0 0
      %2810 = vmatpush1.bf16.msra.mxu0 0
      %2811 = vmatprep.subr.bf16.mxu0 0
      %2812 = vmatpush1.bf16.msra.mxu0 0
      %2813 = vmatprep.subr.bf16.mxu0 0
      %2814 = vmatpush1.bf16.msra.mxu0 0
      %2815 = vmatprep.subr.bf16.mxu0 0
      %2816 = vmatpush1.bf16.msra.mxu0 0
      %2817 = vmatprep.subr.bf16.mxu0 0
      %2818 = vmatpush1.bf16.msra.mxu0 0
      %2819 = vmatprep.subr.bf16.mxu0 0
      %2820 = vmatpush1.bf16.msra.mxu0 0
      %2821 = vmatprep.mubr.bf16.mxu0 0
      %2822 = vmatmul.mubr.bf16.gmra.mrb[0].mxu0 %v2787
      %v2823 = vpop.f32.mrb[0].mxu0
      %v2824 = vadd.f32 0.0, %v2823
      %v2825 = vpop.f32.mrb[0].mxu0
      %v2826 = vpop.f32.mrb[0].mxu0
      %v2827 = vpop.f32.mrb[0].mxu0
      %2828 = vdwg.mxu0
      %v2829 = vadd.f32 %v2767, %v2824
      %v2830 = vld [vmem:[%s384 + $0x2] sm:$0xff]
      %v2831 = vpack.c.bf16 %v2830, %v2830
      %v2832 = vld [vmem:[%s533] sm:$0xf]
      %v2833 = vld [vmem:[%s533 + $0x4] sm:$0xf]
      %v2834 = vld [vmem:[%s533 + $0x8] sm:$0xf]
      %v2835 = vld [vmem:[%s533 + $0xc] sm:$0xf]
      %v2840 = vunpack.c.l.b16 %v2832
      %v2841 = vunpack.c.l.b16 %v2833
      %v2842 = vunpack.c.l.b16 %v2834
      %v2843 = vunpack.c.l.b16 %v2835
      %v2844 = vpack.c.b16 %v2841, %v2840
      %v2845 = vpack.c.b16 %v2843, %v2842
      %v2849 = vsel %vm356, %v2831, 0
      %2851 = vmatprep.subr.bf16.mxu0 0
      %2852 = vmatpush1.bf16.msra.mxu0 %v2844
      %2853 = vmatprep.subr.bf16.mxu0 0
      %2854 = vmatpush1.bf16.msra.mxu0 %v2845
      %2855 = vmatprep.subr.bf16.mxu0 0
      %2856 = vmatpush1.bf16.msra.mxu0 0
      %2857 = vmatprep.subr.bf16.mxu0 0
      %2858 = vmatpush1.bf16.msra.mxu0 0
      %2859 = vmatprep.subr.bf16.mxu0 0
      %2860 = vmatpush1.bf16.msra.mxu0 0
      %2861 = vmatprep.subr.bf16.mxu0 0
      %2862 = vmatpush1.bf16.msra.mxu0 0
      %2863 = vmatprep.subr.bf16.mxu0 0
      %2864 = vmatpush1.bf16.msra.mxu0 0
      %2865 = vmatprep.subr.bf16.mxu0 0
      %2866 = vmatpush1.bf16.msra.mxu0 0
      %2867 = vmatprep.subr.bf16.mxu0 0
      %2868 = vmatpush1.bf16.msra.mxu0 0
      %2869 = vmatprep.subr.bf16.mxu0 0
      %2870 = vmatpush1.bf16.msra.mxu0 0
      %2871 = vmatprep.subr.bf16.mxu0 0
      %2872 = vmatpush1.bf16.msra.mxu0 0
      %2873 = vmatprep.subr.bf16.mxu0 0
      %2874 = vmatpush1.bf16.msra.mxu0 0
      %2875 = vmatprep.subr.bf16.mxu0 0
      %2876 = vmatpush1.bf16.msra.mxu0 0
      %2877 = vmatprep.subr.bf16.mxu0 0
      %2878 = vmatpush1.bf16.msra.mxu0 0
      %2879 = vmatprep.subr.bf16.mxu0 0
      %2880 = vmatpush1.bf16.msra.mxu0 0
      %2881 = vmatprep.subr.bf16.mxu0 0
      %2882 = vmatpush1.bf16.msra.mxu0 0
      %2883 = vmatprep.mubr.bf16.mxu0 0
      %2884 = vmatmul.mubr.bf16.gmra.mrb[0].mxu0 %v2849
      %v2885 = vpop.f32.mrb[0].mxu0
      %v2886 = vadd.f32 0.0, %v2885
      %v2887 = vpop.f32.mrb[0].mxu0
      %v2888 = vpop.f32.mrb[0].mxu0
      %v2889 = vpop.f32.mrb[0].mxu0
      %2890 = vdwg.mxu0
      %v2891 = vadd.f32 %v2829, %v2886
      %v2892 = vld [vmem:[%s386] sm:$0xff]
      %v2893 = vpack.c.bf16 %v2892, %v2892
      %v2894 = vld [vmem:[%s596] sm:$0xf]
      %v2895 = vld [vmem:[%s596 + $0x4] sm:$0xf]
      %v2896 = vld [vmem:[%s596 + $0x8] sm:$0xf]
      %v2897 = vld [vmem:[%s596 + $0xc] sm:$0xf]
      %v2902 = vunpack.c.l.b16 %v2894
      %v2903 = vunpack.c.l.b16 %v2895
      %v2904 = vunpack.c.l.b16 %v2896
      %v2905 = vunpack.c.l.b16 %v2897
      %v2906 = vpack.c.b16 %v2903, %v2902
      %v2907 = vpack.c.b16 %v2905, %v2904
      %v2911 = vsel %vm356, %v2893, 0
      %2913 = vmatprep.subr.bf16.mxu0 0
      %2914 = vmatpush1.bf16.msra.mxu0 %v2906
      %2915 = vmatprep.subr.bf16.mxu0 0
      %2916 = vmatpush1.bf16.msra.mxu0 %v2907
      %2917 = vmatprep.subr.bf16.mxu0 0
      %2918 = vmatpush1.bf16.msra.mxu0 0
      %2919 = vmatprep.subr.bf16.mxu0 0
      %2920 = vmatpush1.bf16.msra.mxu0 0
      %2921 = vmatprep.subr.bf16.mxu0 0
      %2922 = vmatpush1.bf16.msra.mxu0 0
      %2923 = vmatprep.subr.bf16.mxu0 0
      %2924 = vmatpush1.bf16.msra.mxu0 0
      %2925 = vmatprep.subr.bf16.mxu0 0
      %2926 = vmatpush1.bf16.msra.mxu0 0
      %2927 = vmatprep.subr.bf16.mxu0 0
      %2928 = vmatpush1.bf16.msra.mxu0 0
      %2929 = vmatprep.subr.bf16.mxu0 0
      %2930 = vmatpush1.bf16.msra.mxu0 0
      %2931 = vmatprep.subr.bf16.mxu0 0
      %2932 = vmatpush1.bf16.msra.mxu0 0
      %2933 = vmatprep.subr.bf16.mxu0 0
      %2934 = vmatpush1.bf16.msra.mxu0 0
      %2935 = vmatprep.subr.bf16.mxu0 0
      %2936 = vmatpush1.bf16.msra.mxu0 0
      %2937 = vmatprep.subr.bf16.mxu0 0
      %2938 = vmatpush1.bf16.msra.mxu0 0
      %2939 = vmatprep.subr.bf16.mxu0 0
      %2940 = vmatpush1.bf16.msra.mxu0 0
      %2941 = vmatprep.subr.bf16.mxu0 0
      %2942 = vmatpush1.bf16.msra.mxu0 0
      %2943 = vmatprep.subr.bf16.mxu0 0
      %2944 = vmatpush1.bf16.msra.mxu0 0
      %2945 = vmatprep.mubr.bf16.mxu0 0
      %2946 = vmatmul.mubr.bf16.gmra.mrb[0].mxu0 %v2911
      %v2947 = vpop.f32.mrb[0].mxu0
      %v2948 = vadd.f32 0.0, %v2947
      %v2949 = vpop.f32.mrb[0].mxu0
      %v2950 = vpop.f32.mrb[0].mxu0
      %v2951 = vpop.f32.mrb[0].mxu0
      %2952 = vdwg.mxu0
      %v2953 = vadd.f32 %v2891, %v2948
      %v2954 = vld [vmem:[%s386 + $0x1] sm:$0xff]
      %v2955 = vpack.c.bf16 %v2954, %v2954
      %v2956 = vld [vmem:[%s659] sm:$0xf]
      %v2957 = vld [vmem:[%s659 + $0x4] sm:$0xf]
      %v2958 = vld [vmem:[%s659 + $0x8] sm:$0xf]
      %v2959 = vld [vmem:[%s659 + $0xc] sm:$0xf]
      %v2964 = vunpack.c.l.b16 %v2956
      %v2965 = vunpack.c.l.b16 %v2957
      %v2966 = vunpack.c.l.b16 %v2958
      %v2967 = vunpack.c.l.b16 %v2959
      %v2968 = vpack.c.b16 %v2965, %v2964
      %v2969 = vpack.c.b16 %v2967, %v2966
      %v2973 = vsel %vm356, %v2955, 0
      %2975 = vmatprep.subr.bf16.mxu0 0
      %2976 = vmatpush1.bf16.msra.mxu0 %v2968
      %2977 = vmatprep.subr.bf16.mxu0 0
      %2978 = vmatpush1.bf16.msra.mxu0 %v2969
      %2979 = vmatprep.subr.bf16.mxu0 0
      %2980 = vmatpush1.bf16.msra.mxu0 0
      %2981 = vmatprep.subr.bf16.mxu0 0
      %2982 = vmatpush1.bf16.msra.mxu0 0
      %2983 = vmatprep.subr.bf16.mxu0 0
      %2984 = vmatpush1.bf16.msra.mxu0 0
      %2985 = vmatprep.subr.bf16.mxu0 0
      %2986 = vmatpush1.bf16.msra.mxu0 0
      %2987 = vmatprep.subr.bf16.mxu0 0
      %2988 = vmatpush1.bf16.msra.mxu0 0
      %2989 = vmatprep.subr.bf16.mxu0 0
      %2990 = vmatpush1.bf16.msra.mxu0 0
      %2991 = vmatprep.subr.bf16.mxu0 0
      %2992 = vmatpush1.bf16.msra.mxu0 0
      %2993 = vmatprep.subr.bf16.mxu0 0
      %2994 = vmatpush1.bf16.msra.mxu0 0
      %2995 = vmatprep.subr.bf16.mxu0 0
      %2996 = vmatpush1.bf16.msra.mxu0 0
      %2997 = vmatprep.subr.bf16.mxu0 0
      %2998 = vmatpush1.bf16.msra.mxu0 0
      %2999 = vmatprep.subr.bf16.mxu0 0
      %3000 = vmatpush1.bf16.msra.mxu0 0
      %3001 = vmatprep.subr.bf16.mxu0 0
      %3002 = vmatpush1.bf16.msra.mxu0 0
      %3003 = vmatprep.subr.bf16.mxu0 0
      %3004 = vmatpush1.bf16.msra.mxu0 0
      %3005 = vmatprep.subr.bf16.mxu0 0
      %3006 = vmatpush1.bf16.msra.mxu0 0
      %3007 = vmatprep.mubr.bf16.mxu0 0
      %3008 = vmatmul.mubr.bf16.gmra.mrb[0].mxu0 %v2973
      %v3009 = vpop.f32.mrb[0].mxu0
      %v3010 = vadd.f32 0.0, %v3009
      %v3011 = vpop.f32.mrb[0].mxu0
      %v3012 = vpop.f32.mrb[0].mxu0
      %v3013 = vpop.f32.mrb[0].mxu0
      %3014 = vdwg.mxu0
      %v3015 = vadd.f32 %v2953, %v3010
      %v3016 = vld [vmem:[%s386 + $0x2] sm:$0xff]
      %v3017 = vpack.c.bf16 %v3016, %v3016
      %v3018 = vld [vmem:[%s722] sm:$0xf]
      %v3019 = vld [vmem:[%s722 + $0x4] sm:$0xf]
      %v3020 = vld [vmem:[%s722 + $0x8] sm:$0xf]
      %v3021 = vld [vmem:[%s722 + $0xc] sm:$0xf]
      %v3026 = vunpack.c.l.b16 %v3018
      %v3027 = vunpack.c.l.b16 %v3019
      %v3028 = vunpack.c.l.b16 %v3020
      %v3029 = vunpack.c.l.b16 %v3021
      %v3030 = vpack.c.b16 %v3027, %v3026
      %v3031 = vpack.c.b16 %v3029, %v3028
      %v3035 = vsel %vm356, %v3017, 0
      %3037 = vmatprep.subr.bf16.mxu0 0
      %3038 = vmatpush1.bf16.msra.mxu0 %v3030
      %3039 = vmatprep.subr.bf16.mxu0 0
      %3040 = vmatpush1.bf16.msra.mxu0 %v3031
      %3041 = vmatprep.subr.bf16.mxu0 0
      %3042 = vmatpush1.bf16.msra.mxu0 0
      %3043 = vmatprep.subr.bf16.mxu0 0
      %3044 = vmatpush1.bf16.msra.mxu0 0
      %3045 = vmatprep.subr.bf16.mxu0 0
      %3046 = vmatpush1.bf16.msra.mxu0 0
      %3047 = vmatprep.subr.bf16.mxu0 0
      %3048 = vmatpush1.bf16.msra.mxu0 0
      %3049 = vmatprep.subr.bf16.mxu0 0
      %3050 = vmatpush1.bf16.msra.mxu0 0
      %3051 = vmatprep.subr.bf16.mxu0 0
      %3052 = vmatpush1.bf16.msra.mxu0 0
      %3053 = vmatprep.subr.bf16.mxu0 0
      %3054 = vmatpush1.bf16.msra.mxu0 0
      %3055 = vmatprep.subr.bf16.mxu0 0
      %3056 = vmatpush1.bf16.msra.mxu0 0
      %3057 = vmatprep.subr.bf16.mxu0 0
      %3058 = vmatpush1.bf16.msra.mxu0 0
      %3059 = vmatprep.subr.bf16.mxu0 0
      %3060 = vmatpush1.bf16.msra.mxu0 0
      %3061 = vmatprep.subr.bf16.mxu0 0
      %3062 = vmatpush1.bf16.msra.mxu0 0
      %3063 = vmatprep.subr.bf16.mxu0 0
      %3064 = vmatpush1.bf16.msra.mxu0 0
      %3065 = vmatprep.subr.bf16.mxu0 0
      %3066 = vmatpush1.bf16.msra.mxu0 0
      %3067 = vmatprep.subr.bf16.mxu0 0
      %3068 = vmatpush1.bf16.msra.mxu0 0
      %3069 = vmatprep.mubr.bf16.mxu0 0
      %3070 = vmatmul.mubr.bf16.gmra.mrb[0].mxu0 %v3035
      %v3071 = vpop.f32.mrb[0].mxu0
      %v3072 = vadd.f32 0.0, %v3071
      %v3073 = vpop.f32.mrb[0].mxu0
      %v3074 = vpop.f32.mrb[0].mxu0
      %v3075 = vpop.f32.mrb[0].mxu0
      %3076 = vdwg.mxu0
      %v3077 = vadd.f32 %v3015, %v3072
      %v3078 = vld [vmem:[%s388] sm:$0xff]
      %v3079 = vpack.c.bf16 %v3078, %v3078
      %v3080 = vld [vmem:[%s785] sm:$0xf]
      %v3081 = vld [vmem:[%s785 + $0x4] sm:$0xf]
      %v3082 = vld [vmem:[%s785 + $0x8] sm:$0xf]
      %v3083 = vld [vmem:[%s785 + $0xc] sm:$0xf]
      %v3088 = vunpack.c.l.b16 %v3080
      %v3089 = vunpack.c.l.b16 %v3081
      %v3090 = vunpack.c.l.b16 %v3082
      %v3091 = vunpack.c.l.b16 %v3083
      %v3092 = vpack.c.b16 %v3089, %v3088
      %v3093 = vpack.c.b16 %v3091, %v3090
      %v3097 = vsel %vm356, %v3079, 0
      %3099 = vmatprep.subr.bf16.mxu0 0
      %3100 = vmatpush1.bf16.msra.mxu0 %v3092
      %3101 = vmatprep.subr.bf16.mxu0 0
      %3102 = vmatpush1.bf16.msra.mxu0 %v3093
      %3103 = vmatprep.subr.bf16.mxu0 0
      %3104 = vmatpush1.bf16.msra.mxu0 0
      %3105 = vmatprep.subr.bf16.mxu0 0
      %3106 = vmatpush1.bf16.msra.mxu0 0
      %3107 = vmatprep.subr.bf16.mxu0 0
      %3108 = vmatpush1.bf16.msra.mxu0 0
      %3109 = vmatprep.subr.bf16.mxu0 0
      %3110 = vmatpush1.bf16.msra.mxu0 0
      %3111 = vmatprep.subr.bf16.mxu0 0
      %3112 = vmatpush1.bf16.msra.mxu0 0
      %3113 = vmatprep.subr.bf16.mxu0 0
      %3114 = vmatpush1.bf16.msra.mxu0 0
      %3115 = vmatprep.subr.bf16.mxu0 0
      %3116 = vmatpush1.bf16.msra.mxu0 0
      %3117 = vmatprep.subr.bf16.mxu0 0
      %3118 = vmatpush1.bf16.msra.mxu0 0
      %3119 = vmatprep.subr.bf16.mxu0 0
      %3120 = vmatpush1.bf16.msra.mxu0 0
      %3121 = vmatprep.subr.bf16.mxu0 0
      %3122 = vmatpush1.bf16.msra.mxu0 0
      %3123 = vmatprep.subr.bf16.mxu0 0
      %3124 = vmatpush1.bf16.msra.mxu0 0
      %3125 = vmatprep.subr.bf16.mxu0 0
      %3126 = vmatpush1.bf16.msra.mxu0 0
      %3127 = vmatprep.subr.bf16.mxu0 0
      %3128 = vmatpush1.bf16.msra.mxu0 0
      %3129 = vmatprep.subr.bf16.mxu0 0
      %3130 = vmatpush1.bf16.msra.mxu0 0
      %3131 = vmatprep.mubr.bf16.mxu0 0
      %3132 = vmatmul.mubr.bf16.gmra.mrb[0].mxu0 %v3097
      %v3133 = vpop.f32.mrb[0].mxu0
      %v3134 = vadd.f32 0.0, %v3133
      %v3135 = vpop.f32.mrb[0].mxu0
      %v3136 = vpop.f32.mrb[0].mxu0
      %v3137 = vpop.f32.mrb[0].mxu0
      %3138 = vdwg.mxu0
      %v3139 = vadd.f32 %v3077, %v3134
      %v3140 = vld [vmem:[%s388 + $0x1] sm:$0xff]
      %v3141 = vpack.c.bf16 %v3140, %v3140
      %v3142 = vld [vmem:[%s848] sm:$0xf]
      %v3143 = vld [vmem:[%s848 + $0x4] sm:$0xf]
      %v3144 = vld [vmem:[%s848 + $0x8] sm:$0xf]
      %v3145 = vld [vmem:[%s848 + $0xc] sm:$0xf]
      %v3150 = vunpack.c.l.b16 %v3142
      %v3151 = vunpack.c.l.b16 %v3143
      %v3152 = vunpack.c.l.b16 %v3144
      %v3153 = vunpack.c.l.b16 %v3145
      %v3154 = vpack.c.b16 %v3151, %v3150
      %v3155 = vpack.c.b16 %v3153, %v3152
      %v3159 = vsel %vm356, %v3141, 0
      %3161 = vmatprep.subr.bf16.mxu0 0
      %3162 = vmatpush1.bf16.msra.mxu0 %v3154
      %3163 = vmatprep.subr.bf16.mxu0 0
      %3164 = vmatpush1.bf16.msra.mxu0 %v3155
      %3165 = vmatprep.subr.bf16.mxu0 0
      %3166 = vmatpush1.bf16.msra.mxu0 0
      %3167 = vmatprep.subr.bf16.mxu0 0
      %3168 = vmatpush1.bf16.msra.mxu0 0
      %3169 = vmatprep.subr.bf16.mxu0 0
      %3170 = vmatpush1.bf16.msra.mxu0 0
      %3171 = vmatprep.subr.bf16.mxu0 0
      %3172 = vmatpush1.bf16.msra.mxu0 0
      %3173 = vmatprep.subr.bf16.mxu0 0
      %3174 = vmatpush1.bf16.msra.mxu0 0
      %3175 = vmatprep.subr.bf16.mxu0 0
      %3176 = vmatpush1.bf16.msra.mxu0 0
      %3177 = vmatprep.subr.bf16.mxu0 0
      %3178 = vmatpush1.bf16.msra.mxu0 0
      %3179 = vmatprep.subr.bf16.mxu0 0
      %3180 = vmatpush1.bf16.msra.mxu0 0
      %3181 = vmatprep.subr.bf16.mxu0 0
      %3182 = vmatpush1.bf16.msra.mxu0 0
      %3183 = vmatprep.subr.bf16.mxu0 0
      %3184 = vmatpush1.bf16.msra.mxu0 0
      %3185 = vmatprep.subr.bf16.mxu0 0
      %3186 = vmatpush1.bf16.msra.mxu0 0
      %3187 = vmatprep.subr.bf16.mxu0 0
      %3188 = vmatpush1.bf16.msra.mxu0 0
      %3189 = vmatprep.subr.bf16.mxu0 0
      %3190 = vmatpush1.bf16.msra.mxu0 0
      %3191 = vmatprep.subr.bf16.mxu0 0
      %3192 = vmatpush1.bf16.msra.mxu0 0
      %3193 = vmatprep.mubr.bf16.mxu0 0
      %3194 = vmatmul.mubr.bf16.gmra.mrb[0].mxu0 %v3159
      %v3195 = vpop.f32.mrb[0].mxu0
      %v3196 = vadd.f32 0.0, %v3195
      %v3197 = vpop.f32.mrb[0].mxu0
      %v3198 = vpop.f32.mrb[0].mxu0
      %v3199 = vpop.f32.mrb[0].mxu0
      %3200 = vdwg.mxu0
      %v3201 = vadd.f32 %v3139, %v3196
      %v3202 = vld [vmem:[%s388 + $0x2] sm:$0xff]
      %v3203 = vpack.c.bf16 %v3202, %v3202
      %v3204 = vld [vmem:[%s911] sm:$0xf]
      %v3205 = vld [vmem:[%s911 + $0x4] sm:$0xf]
      %v3206 = vld [vmem:[%s911 + $0x8] sm:$0xf]
      %v3207 = vld [vmem:[%s911 + $0xc] sm:$0xf]
      %v3212 = vunpack.c.l.b16 %v3204
      %v3213 = vunpack.c.l.b16 %v3205
      %v3214 = vunpack.c.l.b16 %v3206
      %v3215 = vunpack.c.l.b16 %v3207
      %v3216 = vpack.c.b16 %v3213, %v3212
      %v3217 = vpack.c.b16 %v3215, %v3214
      %v3221 = vsel %vm356, %v3203, 0
      %3223 = vmatprep.subr.bf16.mxu0 0
      %3224 = vmatpush1.bf16.msra.mxu0 %v3216
      %3225 = vmatprep.subr.bf16.mxu0 0
      %3226 = vmatpush1.bf16.msra.mxu0 %v3217
      %3227 = vmatprep.subr.bf16.mxu0 0
      %3228 = vmatpush1.bf16.msra.mxu0 0
      %3229 = vmatprep.subr.bf16.mxu0 0
      %3230 = vmatpush1.bf16.msra.mxu0 0
      %3231 = vmatprep.subr.bf16.mxu0 0
      %3232 = vmatpush1.bf16.msra.mxu0 0
      %3233 = vmatprep.subr.bf16.mxu0 0
      %3234 = vmatpush1.bf16.msra.mxu0 0
      %3235 = vmatprep.subr.bf16.mxu0 0
      %3236 = vmatpush1.bf16.msra.mxu0 0
      %3237 = vmatprep.subr.bf16.mxu0 0
      %3238 = vmatpush1.bf16.msra.mxu0 0
      %3239 = vmatprep.subr.bf16.mxu0 0
      %3240 = vmatpush1.bf16.msra.mxu0 0
      %3241 = vmatprep.subr.bf16.mxu0 0
      %3242 = vmatpush1.bf16.msra.mxu0 0
      %3243 = vmatprep.subr.bf16.mxu0 0
      %3244 = vmatpush1.bf16.msra.mxu0 0
      %3245 = vmatprep.subr.bf16.mxu0 0
      %3246 = vmatpush1.bf16.msra.mxu0 0
      %3247 = vmatprep.subr.bf16.mxu0 0
      %3248 = vmatpush1.bf16.msra.mxu0 0
      %3249 = vmatprep.subr.bf16.mxu0 0
      %3250 = vmatpush1.bf16.msra.mxu0 0
      %3251 = vmatprep.subr.bf16.mxu0 0
      %3252 = vmatpush1.bf16.msra.mxu0 0
      %3253 = vmatprep.subr.bf16.mxu0 0
      %3254 = vmatpush1.bf16.msra.mxu0 0
      %3255 = vmatprep.mubr.bf16.mxu0 0
      %3256 = vmatmul.mubr.bf16.gmra.mrb[0].mxu0 %v3221
      %v3257 = vpop.f32.mrb[0].mxu0
      %v3258 = vadd.f32 0.0, %v3257
      %v3259 = vpop.f32.mrb[0].mxu0
      %v3260 = vpop.f32.mrb[0].mxu0
      %v3261 = vpop.f32.mrb[0].mxu0
      %3262 = vdwg.mxu0
      %v3263 = vadd.f32 %v3201, %v3258
      %v3264 = vmul.f32 %v3263, 0.01
      %v3265 = vmax.f32 %v3263, %v3264
      %3266 = vst.msk [vmem:[%s226 + $0x20] sm:$0xff] %vm356, %v3265
      %v3267 = vld [vmem:[%s4] sm:$0x1]
      %v3269 = vlaneseq
      %v3270 = vshrl.u32 %v3269, 7
      %v3271 = vsub.s32 0, %v3270
      %v3272 = vrot.slane %v3267, %v3271
      %3275 = vrot.lane.b32.xlu0 %v329, 96
      %v3276 = vpop.permute.xlu0 %3275
      %v3278 = vadd.f32 %v3272, %v3276
      %v3279 = vld [vmem:[%s386] sm:$0xff]
      %v3280 = vpack.c.bf16 %v3279, %v3279
      %v3281 = vld [vmem:[%s3] sm:$0xf]
      %v3282 = vld [vmem:[%s3 + $0x4] sm:$0xf]
      %v3283 = vld [vmem:[%s3 + $0x8] sm:$0xf]
      %v3284 = vld [vmem:[%s3 + $0xc] sm:$0xf]
      %v3289 = vunpack.c.l.b16 %v3281
      %v3290 = vunpack.c.l.b16 %v3282
      %v3291 = vunpack.c.l.b16 %v3283
      %v3292 = vunpack.c.l.b16 %v3284
      %v3293 = vpack.c.b16 %v3290, %v3289
      %v3294 = vpack.c.b16 %v3292, %v3291
      %v3298 = vsel %vm356, %v3280, 0
      %3300 = vmatprep.subr.bf16.mxu0 0
      %3301 = vmatpush1.bf16.msra.mxu0 %v3293
      %3302 = vmatprep.subr.bf16.mxu0 0
      %3303 = vmatpush1.bf16.msra.mxu0 %v3294
      %3304 = vmatprep.subr.bf16.mxu0 0
      %3305 = vmatpush1.bf16.msra.mxu0 0
      %3306 = vmatprep.subr.bf16.mxu0 0
      %3307 = vmatpush1.bf16.msra.mxu0 0
      %3308 = vmatprep.subr.bf16.mxu0 0
      %3309 = vmatpush1.bf16.msra.mxu0 0
      %3310 = vmatprep.subr.bf16.mxu0 0
      %3311 = vmatpush1.bf16.msra.mxu0 0
      %3312 = vmatprep.subr.bf16.mxu0 0
      %3313 = vmatpush1.bf16.msra.mxu0 0
      %3314 = vmatprep.subr.bf16.mxu0 0
      %3315 = vmatpush1.bf16.msra.mxu0 0
      %3316 = vmatprep.subr.bf16.mxu0 0
      %3317 = vmatpush1.bf16.msra.mxu0 0
      %3318 = vmatprep.subr.bf16.mxu0 0
      %3319 = vmatpush1.bf16.msra.mxu0 0
      %3320 = vmatprep.subr.bf16.mxu0 0
      %3321 = vmatpush1.bf16.msra.mxu0 0
      %3322 = vmatprep.subr.bf16.mxu0 0
      %3323 = vmatpush1.bf16.msra.mxu0 0
      %3324 = vmatprep.subr.bf16.mxu0 0
      %3325 = vmatpush1.bf16.msra.mxu0 0
      %3326 = vmatprep.subr.bf16.mxu0 0
      %3327 = vmatpush1.bf16.msra.mxu0 0
      %3328 = vmatprep.subr.bf16.mxu0 0
      %3329 = vmatpush1.bf16.msra.mxu0 0
      %3330 = vmatprep.subr.bf16.mxu0 0
      %3331 = vmatpush1.bf16.msra.mxu0 0
      %3332 = vmatprep.mubr.bf16.mxu0 0
      %3333 = vmatmul.mubr.bf16.gmra.mrb[0].mxu0 %v3298
      %v3334 = vpop.f32.mrb[0].mxu0
      %v3335 = vadd.f32 0.0, %v3334
      %v3336 = vpop.f32.mrb[0].mxu0
      %v3337 = vpop.f32.mrb[0].mxu0
      %v3338 = vpop.f32.mrb[0].mxu0
      %3339 = vdwg.mxu0
      %v3340 = vadd.f32 %v3278, %v3335
      %v3341 = vld [vmem:[%s386 + $0x1] sm:$0xff]
      %v3342 = vpack.c.bf16 %v3341, %v3341
      %v3343 = vld [vmem:[%s470] sm:$0xf]
      %v3344 = vld [vmem:[%s470 + $0x4] sm:$0xf]
      %v3345 = vld [vmem:[%s470 + $0x8] sm:$0xf]
      %v3346 = vld [vmem:[%s470 + $0xc] sm:$0xf]
      %v3351 = vunpack.c.l.b16 %v3343
      %v3352 = vunpack.c.l.b16 %v3344
      %v3353 = vunpack.c.l.b16 %v3345
      %v3354 = vunpack.c.l.b16 %v3346
      %v3355 = vpack.c.b16 %v3352, %v3351
      %v3356 = vpack.c.b16 %v3354, %v3353
      %v3360 = vsel %vm356, %v3342, 0
      %3362 = vmatprep.subr.bf16.mxu0 0
      %3363 = vmatpush1.bf16.msra.mxu0 %v3355
      %3364 = vmatprep.subr.bf16.mxu0 0
      %3365 = vmatpush1.bf16.msra.mxu0 %v3356
      %3366 = vmatprep.subr.bf16.mxu0 0
      %3367 = vmatpush1.bf16.msra.mxu0 0
      %3368 = vmatprep.subr.bf16.mxu0 0
      %3369 = vmatpush1.bf16.msra.mxu0 0
      %3370 = vmatprep.subr.bf16.mxu0 0
      %3371 = vmatpush1.bf16.msra.mxu0 0
      %3372 = vmatprep.subr.bf16.mxu0 0
      %3373 = vmatpush1.bf16.msra.mxu0 0
      %3374 = vmatprep.subr.bf16.mxu0 0
      %3375 = vmatpush1.bf16.msra.mxu0 0
      %3376 = vmatprep.subr.bf16.mxu0 0
      %3377 = vmatpush1.bf16.msra.mxu0 0
      %3378 = vmatprep.subr.bf16.mxu0 0
      %3379 = vmatpush1.bf16.msra.mxu0 0
      %3380 = vmatprep.subr.bf16.mxu0 0
      %3381 = vmatpush1.bf16.msra.mxu0 0
      %3382 = vmatprep.subr.bf16.mxu0 0
      %3383 = vmatpush1.bf16.msra.mxu0 0
      %3384 = vmatprep.subr.bf16.mxu0 0
      %3385 = vmatpush1.bf16.msra.mxu0 0
      %3386 = vmatprep.subr.bf16.mxu0 0
      %3387 = vmatpush1.bf16.msra.mxu0 0
      %3388 = vmatprep.subr.bf16.mxu0 0
      %3389 = vmatpush1.bf16.msra.mxu0 0
      %3390 = vmatprep.subr.bf16.mxu0 0
      %3391 = vmatpush1.bf16.msra.mxu0 0
      %3392 = vmatprep.subr.bf16.mxu0 0
      %3393 = vmatpush1.bf16.msra.mxu0 0
      %3394 = vmatprep.mubr.bf16.mxu0 0
      %3395 = vmatmul.mubr.bf16.gmra.mrb[0].mxu0 %v3360
      %v3396 = vpop.f32.mrb[0].mxu0
      %v3397 = vadd.f32 0.0, %v3396
      %v3398 = vpop.f32.mrb[0].mxu0
      %v3399 = vpop.f32.mrb[0].mxu0
      %v3400 = vpop.f32.mrb[0].mxu0
      %3401 = vdwg.mxu0
      %v3402 = vadd.f32 %v3340, %v3397
      %v3403 = vld [vmem:[%s386 + $0x2] sm:$0xff]
      %v3404 = vpack.c.bf16 %v3403, %v3403
      %v3405 = vld [vmem:[%s533] sm:$0xf]
      %v3406 = vld [vmem:[%s533 + $0x4] sm:$0xf]
      %v3407 = vld [vmem:[%s533 + $0x8] sm:$0xf]
      %v3408 = vld [vmem:[%s533 + $0xc] sm:$0xf]
      %v3413 = vunpack.c.l.b16 %v3405
      %v3414 = vunpack.c.l.b16 %v3406
      %v3415 = vunpack.c.l.b16 %v3407
      %v3416 = vunpack.c.l.b16 %v3408
      %v3417 = vpack.c.b16 %v3414, %v3413
      %v3418 = vpack.c.b16 %v3416, %v3415
      %v3422 = vsel %vm356, %v3404, 0
      %3424 = vmatprep.subr.bf16.mxu0 0
      %3425 = vmatpush1.bf16.msra.mxu0 %v3417
      %3426 = vmatprep.subr.bf16.mxu0 0
      %3427 = vmatpush1.bf16.msra.mxu0 %v3418
      %3428 = vmatprep.subr.bf16.mxu0 0
      %3429 = vmatpush1.bf16.msra.mxu0 0
      %3430 = vmatprep.subr.bf16.mxu0 0
      %3431 = vmatpush1.bf16.msra.mxu0 0
      %3432 = vmatprep.subr.bf16.mxu0 0
      %3433 = vmatpush1.bf16.msra.mxu0 0
      %3434 = vmatprep.subr.bf16.mxu0 0
      %3435 = vmatpush1.bf16.msra.mxu0 0
      %3436 = vmatprep.subr.bf16.mxu0 0
      %3437 = vmatpush1.bf16.msra.mxu0 0
      %3438 = vmatprep.subr.bf16.mxu0 0
      %3439 = vmatpush1.bf16.msra.mxu0 0
      %3440 = vmatprep.subr.bf16.mxu0 0
      %3441 = vmatpush1.bf16.msra.mxu0 0
      %3442 = vmatprep.subr.bf16.mxu0 0
      %3443 = vmatpush1.bf16.msra.mxu0 0
      %3444 = vmatprep.subr.bf16.mxu0 0
      %3445 = vmatpush1.bf16.msra.mxu0 0
      %3446 = vmatprep.subr.bf16.mxu0 0
      %3447 = vmatpush1.bf16.msra.mxu0 0
      %3448 = vmatprep.subr.bf16.mxu0 0
      %3449 = vmatpush1.bf16.msra.mxu0 0
      %3450 = vmatprep.subr.bf16.mxu0 0
      %3451 = vmatpush1.bf16.msra.mxu0 0
      %3452 = vmatprep.subr.bf16.mxu0 0
      %3453 = vmatpush1.bf16.msra.mxu0 0
      %3454 = vmatprep.subr.bf16.mxu0 0
      %3455 = vmatpush1.bf16.msra.mxu0 0
      %3456 = vmatprep.mubr.bf16.mxu0 0
      %3457 = vmatmul.mubr.bf16.gmra.mrb[0].mxu0 %v3422
      %v3458 = vpop.f32.mrb[0].mxu0
      %v3459 = vadd.f32 0.0, %v3458
      %v3460 = vpop.f32.mrb[0].mxu0
      %v3461 = vpop.f32.mrb[0].mxu0
      %v3462 = vpop.f32.mrb[0].mxu0
      %3463 = vdwg.mxu0
      %v3464 = vadd.f32 %v3402, %v3459
      %v3465 = vld [vmem:[%s388] sm:$0xff]
      %v3466 = vpack.c.bf16 %v3465, %v3465
      %v3467 = vld [vmem:[%s596] sm:$0xf]
      %v3468 = vld [vmem:[%s596 + $0x4] sm:$0xf]
      %v3469 = vld [vmem:[%s596 + $0x8] sm:$0xf]
      %v3470 = vld [vmem:[%s596 + $0xc] sm:$0xf]
      %v3475 = vunpack.c.l.b16 %v3467
      %v3476 = vunpack.c.l.b16 %v3468
      %v3477 = vunpack.c.l.b16 %v3469
      %v3478 = vunpack.c.l.b16 %v3470
      %v3479 = vpack.c.b16 %v3476, %v3475
      %v3480 = vpack.c.b16 %v3478, %v3477
      %v3484 = vsel %vm356, %v3466, 0
      %3486 = vmatprep.subr.bf16.mxu0 0
      %3487 = vmatpush1.bf16.msra.mxu0 %v3479
      %3488 = vmatprep.subr.bf16.mxu0 0
      %3489 = vmatpush1.bf16.msra.mxu0 %v3480
      %3490 = vmatprep.subr.bf16.mxu0 0
      %3491 = vmatpush1.bf16.msra.mxu0 0
      %3492 = vmatprep.subr.bf16.mxu0 0
      %3493 = vmatpush1.bf16.msra.mxu0 0
      %3494 = vmatprep.subr.bf16.mxu0 0
      %3495 = vmatpush1.bf16.msra.mxu0 0
      %3496 = vmatprep.subr.bf16.mxu0 0
      %3497 = vmatpush1.bf16.msra.mxu0 0
      %3498 = vmatprep.subr.bf16.mxu0 0
      %3499 = vmatpush1.bf16.msra.mxu0 0
      %3500 = vmatprep.subr.bf16.mxu0 0
      %3501 = vmatpush1.bf16.msra.mxu0 0
      %3502 = vmatprep.subr.bf16.mxu0 0
      %3503 = vmatpush1.bf16.msra.mxu0 0
      %3504 = vmatprep.subr.bf16.mxu0 0
      %3505 = vmatpush1.bf16.msra.mxu0 0
      %3506 = vmatprep.subr.bf16.mxu0 0
      %3507 = vmatpush1.bf16.msra.mxu0 0
      %3508 = vmatprep.subr.bf16.mxu0 0
      %3509 = vmatpush1.bf16.msra.mxu0 0
      %3510 = vmatprep.subr.bf16.mxu0 0
      %3511 = vmatpush1.bf16.msra.mxu0 0
      %3512 = vmatprep.subr.bf16.mxu0 0
      %3513 = vmatpush1.bf16.msra.mxu0 0
      %3514 = vmatprep.subr.bf16.mxu0 0
      %3515 = vmatpush1.bf16.msra.mxu0 0
      %3516 = vmatprep.subr.bf16.mxu0 0
      %3517 = vmatpush1.bf16.msra.mxu0 0
      %3518 = vmatprep.mubr.bf16.mxu0 0
      %3519 = vmatmul.mubr.bf16.gmra.mrb[0].mxu0 %v3484
      %v3520 = vpop.f32.mrb[0].mxu0
      %v3521 = vadd.f32 0.0, %v3520
      %v3522 = vpop.f32.mrb[0].mxu0
      %v3523 = vpop.f32.mrb[0].mxu0
      %v3524 = vpop.f32.mrb[0].mxu0
      %3525 = vdwg.mxu0
      %v3526 = vadd.f32 %v3464, %v3521
      %v3527 = vld [vmem:[%s388 + $0x1] sm:$0xff]
      %v3528 = vpack.c.bf16 %v3527, %v3527
      %v3529 = vld [vmem:[%s659] sm:$0xf]
      %v3530 = vld [vmem:[%s659 + $0x4] sm:$0xf]
      %v3531 = vld [vmem:[%s659 + $0x8] sm:$0xf]
      %v3532 = vld [vmem:[%s659 + $0xc] sm:$0xf]
      %v3537 = vunpack.c.l.b16 %v3529
      %v3538 = vunpack.c.l.b16 %v3530
      %v3539 = vunpack.c.l.b16 %v3531
      %v3540 = vunpack.c.l.b16 %v3532
      %v3541 = vpack.c.b16 %v3538, %v3537
      %v3542 = vpack.c.b16 %v3540, %v3539
      %v3546 = vsel %vm356, %v3528, 0
      %3548 = vmatprep.subr.bf16.mxu0 0
      %3549 = vmatpush1.bf16.msra.mxu0 %v3541
      %3550 = vmatprep.subr.bf16.mxu0 0
      %3551 = vmatpush1.bf16.msra.mxu0 %v3542
      %3552 = vmatprep.subr.bf16.mxu0 0
      %3553 = vmatpush1.bf16.msra.mxu0 0
      %3554 = vmatprep.subr.bf16.mxu0 0
      %3555 = vmatpush1.bf16.msra.mxu0 0
      %3556 = vmatprep.subr.bf16.mxu0 0
      %3557 = vmatpush1.bf16.msra.mxu0 0
      %3558 = vmatprep.subr.bf16.mxu0 0
      %3559 = vmatpush1.bf16.msra.mxu0 0
      %3560 = vmatprep.subr.bf16.mxu0 0
      %3561 = vmatpush1.bf16.msra.mxu0 0
      %3562 = vmatprep.subr.bf16.mxu0 0
      %3563 = vmatpush1.bf16.msra.mxu0 0
      %3564 = vmatprep.subr.bf16.mxu0 0
      %3565 = vmatpush1.bf16.msra.mxu0 0
      %3566 = vmatprep.subr.bf16.mxu0 0
      %3567 = vmatpush1.bf16.msra.mxu0 0
      %3568 = vmatprep.subr.bf16.mxu0 0
      %3569 = vmatpush1.bf16.msra.mxu0 0
      %3570 = vmatprep.subr.bf16.mxu0 0
      %3571 = vmatpush1.bf16.msra.mxu0 0
      %3572 = vmatprep.subr.bf16.mxu0 0
      %3573 = vmatpush1.bf16.msra.mxu0 0
      %3574 = vmatprep.subr.bf16.mxu0 0
      %3575 = vmatpush1.bf16.msra.mxu0 0
      %3576 = vmatprep.subr.bf16.mxu0 0
      %3577 = vmatpush1.bf16.msra.mxu0 0
      %3578 = vmatprep.subr.bf16.mxu0 0
      %3579 = vmatpush1.bf16.msra.mxu0 0
      %3580 = vmatprep.mubr.bf16.mxu0 0
      %3581 = vmatmul.mubr.bf16.gmra.mrb[0].mxu0 %v3546
      %v3582 = vpop.f32.mrb[0].mxu0
      %v3583 = vadd.f32 0.0, %v3582
      %v3584 = vpop.f32.mrb[0].mxu0
      %v3585 = vpop.f32.mrb[0].mxu0
      %v3586 = vpop.f32.mrb[0].mxu0
      %3587 = vdwg.mxu0
      %v3588 = vadd.f32 %v3526, %v3583
      %v3589 = vld [vmem:[%s388 + $0x2] sm:$0xff]
      %v3590 = vpack.c.bf16 %v3589, %v3589
      %v3591 = vld [vmem:[%s722] sm:$0xf]
      %v3592 = vld [vmem:[%s722 + $0x4] sm:$0xf]
      %v3593 = vld [vmem:[%s722 + $0x8] sm:$0xf]
      %v3594 = vld [vmem:[%s722 + $0xc] sm:$0xf]
      %v3599 = vunpack.c.l.b16 %v3591
      %v3600 = vunpack.c.l.b16 %v3592
      %v3601 = vunpack.c.l.b16 %v3593
      %v3602 = vunpack.c.l.b16 %v3594
      %v3603 = vpack.c.b16 %v3600, %v3599
      %v3604 = vpack.c.b16 %v3602, %v3601
      %v3608 = vsel %vm356, %v3590, 0
      %3610 = vmatprep.subr.bf16.mxu0 0
      %3611 = vmatpush1.bf16.msra.mxu0 %v3603
      %3612 = vmatprep.subr.bf16.mxu0 0
      %3613 = vmatpush1.bf16.msra.mxu0 %v3604
      %3614 = vmatprep.subr.bf16.mxu0 0
      %3615 = vmatpush1.bf16.msra.mxu0 0
      %3616 = vmatprep.subr.bf16.mxu0 0
      %3617 = vmatpush1.bf16.msra.mxu0 0
      %3618 = vmatprep.subr.bf16.mxu0 0
      %3619 = vmatpush1.bf16.msra.mxu0 0
      %3620 = vmatprep.subr.bf16.mxu0 0
      %3621 = vmatpush1.bf16.msra.mxu0 0
      %3622 = vmatprep.subr.bf16.mxu0 0
      %3623 = vmatpush1.bf16.msra.mxu0 0
      %3624 = vmatprep.subr.bf16.mxu0 0
      %3625 = vmatpush1.bf16.msra.mxu0 0
      %3626 = vmatprep.subr.bf16.mxu0 0
      %3627 = vmatpush1.bf16.msra.mxu0 0
      %3628 = vmatprep.subr.bf16.mxu0 0
      %3629 = vmatpush1.bf16.msra.mxu0 0
      %3630 = vmatprep.subr.bf16.mxu0 0
      %3631 = vmatpush1.bf16.msra.mxu0 0
      %3632 = vmatprep.subr.bf16.mxu0 0
      %3633 = vmatpush1.bf16.msra.mxu0 0
      %3634 = vmatprep.subr.bf16.mxu0 0
      %3635 = vmatpush1.bf16.msra.mxu0 0
      %3636 = vmatprep.subr.bf16.mxu0 0
      %3637 = vmatpush1.bf16.msra.mxu0 0
      %3638 = vmatprep.subr.bf16.mxu0 0
      %3639 = vmatpush1.bf16.msra.mxu0 0
      %3640 = vmatprep.subr.bf16.mxu0 0
      %3641 = vmatpush1.bf16.msra.mxu0 0
      %3642 = vmatprep.mubr.bf16.mxu0 0
      %3643 = vmatmul.mubr.bf16.gmra.mrb[0].mxu0 %v3608
      %v3644 = vpop.f32.mrb[0].mxu0
      %v3645 = vadd.f32 0.0, %v3644
      %v3646 = vpop.f32.mrb[0].mxu0
      %v3647 = vpop.f32.mrb[0].mxu0
      %v3648 = vpop.f32.mrb[0].mxu0
      %3649 = vdwg.mxu0
      %v3650 = vadd.f32 %v3588, %v3645
      %v3651 = vld [vmem:[%s390] sm:$0xff]
      %v3652 = vpack.c.bf16 %v3651, %v3651
      %v3653 = vld [vmem:[%s785] sm:$0xf]
      %v3654 = vld [vmem:[%s785 + $0x4] sm:$0xf]
      %v3655 = vld [vmem:[%s785 + $0x8] sm:$0xf]
      %v3656 = vld [vmem:[%s785 + $0xc] sm:$0xf]
      %v3661 = vunpack.c.l.b16 %v3653
      %v3662 = vunpack.c.l.b16 %v3654
      %v3663 = vunpack.c.l.b16 %v3655
      %v3664 = vunpack.c.l.b16 %v3656
      %v3665 = vpack.c.b16 %v3662, %v3661
      %v3666 = vpack.c.b16 %v3664, %v3663
      %v3670 = vsel %vm356, %v3652, 0
      %3672 = vmatprep.subr.bf16.mxu0 0
      %3673 = vmatpush1.bf16.msra.mxu0 %v3665
      %3674 = vmatprep.subr.bf16.mxu0 0
      %3675 = vmatpush1.bf16.msra.mxu0 %v3666
      %3676 = vmatprep.subr.bf16.mxu0 0
      %3677 = vmatpush1.bf16.msra.mxu0 0
      %3678 = vmatprep.subr.bf16.mxu0 0
      %3679 = vmatpush1.bf16.msra.mxu0 0
      %3680 = vmatprep.subr.bf16.mxu0 0
      %3681 = vmatpush1.bf16.msra.mxu0 0
      %3682 = vmatprep.subr.bf16.mxu0 0
      %3683 = vmatpush1.bf16.msra.mxu0 0
      %3684 = vmatprep.subr.bf16.mxu0 0
      %3685 = vmatpush1.bf16.msra.mxu0 0
      %3686 = vmatprep.subr.bf16.mxu0 0
      %3687 = vmatpush1.bf16.msra.mxu0 0
      %3688 = vmatprep.subr.bf16.mxu0 0
      %3689 = vmatpush1.bf16.msra.mxu0 0
      %3690 = vmatprep.subr.bf16.mxu0 0
      %3691 = vmatpush1.bf16.msra.mxu0 0
      %3692 = vmatprep.subr.bf16.mxu0 0
      %3693 = vmatpush1.bf16.msra.mxu0 0
      %3694 = vmatprep.subr.bf16.mxu0 0
      %3695 = vmatpush1.bf16.msra.mxu0 0
      %3696 = vmatprep.subr.bf16.mxu0 0
      %3697 = vmatpush1.bf16.msra.mxu0 0
      %3698 = vmatprep.subr.bf16.mxu0 0
      %3699 = vmatpush1.bf16.msra.mxu0 0
      %3700 = vmatprep.subr.bf16.mxu0 0
      %3701 = vmatpush1.bf16.msra.mxu0 0
      %3702 = vmatprep.subr.bf16.mxu0 0
      %3703 = vmatpush1.bf16.msra.mxu0 0
      %3704 = vmatprep.mubr.bf16.mxu0 0
      %3705 = vmatmul.mubr.bf16.gmra.mrb[0].mxu0 %v3670
      %v3706 = vpop.f32.mrb[0].mxu0
      %v3707 = vadd.f32 0.0, %v3706
      %v3708 = vpop.f32.mrb[0].mxu0
      %v3709 = vpop.f32.mrb[0].mxu0
      %v3710 = vpop.f32.mrb[0].mxu0
      %3711 = vdwg.mxu0
      %v3712 = vadd.f32 %v3650, %v3707
      %v3713 = vld [vmem:[%s390 + $0x1] sm:$0xff]
      %v3714 = vpack.c.bf16 %v3713, %v3713
      %v3715 = vld [vmem:[%s848] sm:$0xf]
      %v3716 = vld [vmem:[%s848 + $0x4] sm:$0xf]
      %v3717 = vld [vmem:[%s848 + $0x8] sm:$0xf]
      %v3718 = vld [vmem:[%s848 + $0xc] sm:$0xf]
      %v3723 = vunpack.c.l.b16 %v3715
      %v3724 = vunpack.c.l.b16 %v3716
      %v3725 = vunpack.c.l.b16 %v3717
      %v3726 = vunpack.c.l.b16 %v3718
      %v3727 = vpack.c.b16 %v3724, %v3723
      %v3728 = vpack.c.b16 %v3726, %v3725
      %v3732 = vsel %vm356, %v3714, 0
      %3734 = vmatprep.subr.bf16.mxu0 0
      %3735 = vmatpush1.bf16.msra.mxu0 %v3727
      %3736 = vmatprep.subr.bf16.mxu0 0
      %3737 = vmatpush1.bf16.msra.mxu0 %v3728
      %3738 = vmatprep.subr.bf16.mxu0 0
      %3739 = vmatpush1.bf16.msra.mxu0 0
      %3740 = vmatprep.subr.bf16.mxu0 0
      %3741 = vmatpush1.bf16.msra.mxu0 0
      %3742 = vmatprep.subr.bf16.mxu0 0
      %3743 = vmatpush1.bf16.msra.mxu0 0
      %3744 = vmatprep.subr.bf16.mxu0 0
      %3745 = vmatpush1.bf16.msra.mxu0 0
      %3746 = vmatprep.subr.bf16.mxu0 0
      %3747 = vmatpush1.bf16.msra.mxu0 0
      %3748 = vmatprep.subr.bf16.mxu0 0
      %3749 = vmatpush1.bf16.msra.mxu0 0
      %3750 = vmatprep.subr.bf16.mxu0 0
      %3751 = vmatpush1.bf16.msra.mxu0 0
      %3752 = vmatprep.subr.bf16.mxu0 0
      %3753 = vmatpush1.bf16.msra.mxu0 0
      %3754 = vmatprep.subr.bf16.mxu0 0
      %3755 = vmatpush1.bf16.msra.mxu0 0
      %3756 = vmatprep.subr.bf16.mxu0 0
      %3757 = vmatpush1.bf16.msra.mxu0 0
      %3758 = vmatprep.subr.bf16.mxu0 0
      %3759 = vmatpush1.bf16.msra.mxu0 0
      %3760 = vmatprep.subr.bf16.mxu0 0
      %3761 = vmatpush1.bf16.msra.mxu0 0
      %3762 = vmatprep.subr.bf16.mxu0 0
      %3763 = vmatpush1.bf16.msra.mxu0 0
      %3764 = vmatprep.subr.bf16.mxu0 0
      %3765 = vmatpush1.bf16.msra.mxu0 0
      %3766 = vmatprep.mubr.bf16.mxu0 0
      %3767 = vmatmul.mubr.bf16.gmra.mrb[0].mxu0 %v3732
      %v3768 = vpop.f32.mrb[0].mxu0
      %v3769 = vadd.f32 0.0, %v3768
      %v3770 = vpop.f32.mrb[0].mxu0
      %v3771 = vpop.f32.mrb[0].mxu0
      %v3772 = vpop.f32.mrb[0].mxu0
      %3773 = vdwg.mxu0
      %v3774 = vadd.f32 %v3712, %v3769
      %v3775 = vld [vmem:[%s390 + $0x2] sm:$0xff]
      %v3776 = vpack.c.bf16 %v3775, %v3775
      %v3777 = vld [vmem:[%s911] sm:$0xf]
      %v3778 = vld [vmem:[%s911 + $0x4] sm:$0xf]
      %v3779 = vld [vmem:[%s911 + $0x8] sm:$0xf]
      %v3780 = vld [vmem:[%s911 + $0xc] sm:$0xf]
      %v3785 = vunpack.c.l.b16 %v3777
      %v3786 = vunpack.c.l.b16 %v3778
      %v3787 = vunpack.c.l.b16 %v3779
      %v3788 = vunpack.c.l.b16 %v3780
      %v3789 = vpack.c.b16 %v3786, %v3785
      %v3790 = vpack.c.b16 %v3788, %v3787
      %v3794 = vsel %vm356, %v3776, 0
      %3796 = vmatprep.subr.bf16.mxu0 0
      %3797 = vmatpush1.bf16.msra.mxu0 %v3789
      %3798 = vmatprep.subr.bf16.mxu0 0
      %3799 = vmatpush1.bf16.msra.mxu0 %v3790
      %3800 = vmatprep.subr.bf16.mxu0 0
      %3801 = vmatpush1.bf16.msra.mxu0 0
      %3802 = vmatprep.subr.bf16.mxu0 0
      %3803 = vmatpush1.bf16.msra.mxu0 0
      %3804 = vmatprep.subr.bf16.mxu0 0
      %3805 = vmatpush1.bf16.msra.mxu0 0
      %3806 = vmatprep.subr.bf16.mxu0 0
      %3807 = vmatpush1.bf16.msra.mxu0 0
      %3808 = vmatprep.subr.bf16.mxu0 0
      %3809 = vmatpush1.bf16.msra.mxu0 0
      %3810 = vmatprep.subr.bf16.mxu0 0
      %3811 = vmatpush1.bf16.msra.mxu0 0
      %3812 = vmatprep.subr.bf16.mxu0 0
      %3813 = vmatpush1.bf16.msra.mxu0 0
      %3814 = vmatprep.subr.bf16.mxu0 0
      %3815 = vmatpush1.bf16.msra.mxu0 0
      %3816 = vmatprep.subr.bf16.mxu0 0
      %3817 = vmatpush1.bf16.msra.mxu0 0
      %3818 = vmatprep.subr.bf16.mxu0 0
      %3819 = vmatpush1.bf16.msra.mxu0 0
      %3820 = vmatprep.subr.bf16.mxu0 0
      %3821 = vmatpush1.bf16.msra.mxu0 0
      %3822 = vmatprep.subr.bf16.mxu0 0
      %3823 = vmatpush1.bf16.msra.mxu0 0
      %3824 = vmatprep.subr.bf16.mxu0 0
      %3825 = vmatpush1.bf16.msra.mxu0 0
      %3826 = vmatprep.subr.bf16.mxu0 0
      %3827 = vmatpush1.bf16.msra.mxu0 0
      %3828 = vmatprep.mubr.bf16.mxu0 0
      %3829 = vmatmul.mubr.bf16.gmra.mrb[0].mxu0 %v3794
      %v3830 = vpop.f32.mrb[0].mxu0
      %v3831 = vadd.f32 0.0, %v3830
      %v3832 = vpop.f32.mrb[0].mxu0
      %v3833 = vpop.f32.mrb[0].mxu0
      %v3834 = vpop.f32.mrb[0].mxu0
      %3835 = vdwg.mxu0
      %v3836 = vadd.f32 %v3774, %v3831
      %v3837 = vmul.f32 %v3836, 0.01
      %v3838 = vmax.f32 %v3836, %v3837
      %3839 = vst.msk [vmem:[%s226 + $0x28] sm:$0xff] %vm356, %v3838
      %v3840 = vld [vmem:[%s4] sm:$0x1]
      %v3842 = vlaneseq
      %v3843 = vshrl.u32 %v3842, 7
      %v3844 = vsub.s32 0, %v3843
      %v3845 = vrot.slane %v3840, %v3844
      %3848 = vrot.lane.b32.xlu0 %v334, 96
      %v3849 = vpop.permute.xlu0 %3848
      %v3851 = vadd.f32 %v3845, %v3849
      %v3852 = vld [vmem:[%s388] sm:$0xff]
      %v3853 = vpack.c.bf16 %v3852, %v3852
      %v3854 = vld [vmem:[%s3] sm:$0xf]
      %v3855 = vld [vmem:[%s3 + $0x4] sm:$0xf]
      %v3856 = vld [vmem:[%s3 + $0x8] sm:$0xf]
      %v3857 = vld [vmem:[%s3 + $0xc] sm:$0xf]
      %v3862 = vunpack.c.l.b16 %v3854
      %v3863 = vunpack.c.l.b16 %v3855
      %v3864 = vunpack.c.l.b16 %v3856
      %v3865 = vunpack.c.l.b16 %v3857
      %v3866 = vpack.c.b16 %v3863, %v3862
      %v3867 = vpack.c.b16 %v3865, %v3864
      %v3871 = vsel %vm356, %v3853, 0
      %3873 = vmatprep.subr.bf16.mxu0 0
      %3874 = vmatpush1.bf16.msra.mxu0 %v3866
      %3875 = vmatprep.subr.bf16.mxu0 0
      %3876 = vmatpush1.bf16.msra.mxu0 %v3867
      %3877 = vmatprep.subr.bf16.mxu0 0
      %3878 = vmatpush1.bf16.msra.mxu0 0
      %3879 = vmatprep.subr.bf16.mxu0 0
      %3880 = vmatpush1.bf16.msra.mxu0 0
      %3881 = vmatprep.subr.bf16.mxu0 0
      %3882 = vmatpush1.bf16.msra.mxu0 0
      %3883 = vmatprep.subr.bf16.mxu0 0
      %3884 = vmatpush1.bf16.msra.mxu0 0
      %3885 = vmatprep.subr.bf16.mxu0 0
      %3886 = vmatpush1.bf16.msra.mxu0 0
      %3887 = vmatprep.subr.bf16.mxu0 0
      %3888 = vmatpush1.bf16.msra.mxu0 0
      %3889 = vmatprep.subr.bf16.mxu0 0
      %3890 = vmatpush1.bf16.msra.mxu0 0
      %3891 = vmatprep.subr.bf16.mxu0 0
      %3892 = vmatpush1.bf16.msra.mxu0 0
      %3893 = vmatprep.subr.bf16.mxu0 0
      %3894 = vmatpush1.bf16.msra.mxu0 0
      %3895 = vmatprep.subr.bf16.mxu0 0
      %3896 = vmatpush1.bf16.msra.mxu0 0
      %3897 = vmatprep.subr.bf16.mxu0 0
      %3898 = vmatpush1.bf16.msra.mxu0 0
      %3899 = vmatprep.subr.bf16.mxu0 0
      %3900 = vmatpush1.bf16.msra.mxu0 0
      %3901 = vmatprep.subr.bf16.mxu0 0
      %3902 = vmatpush1.bf16.msra.mxu0 0
      %3903 = vmatprep.subr.bf16.mxu0 0
      %3904 = vmatpush1.bf16.msra.mxu0 0
      %3905 = vmatprep.mubr.bf16.mxu0 0
      %3906 = vmatmul.mubr.bf16.gmra.mrb[0].mxu0 %v3871
      %v3907 = vpop.f32.mrb[0].mxu0
      %v3908 = vadd.f32 0.0, %v3907
      %v3909 = vpop.f32.mrb[0].mxu0
      %v3910 = vpop.f32.mrb[0].mxu0
      %v3911 = vpop.f32.mrb[0].mxu0
      %3912 = vdwg.mxu0
      %v3913 = vadd.f32 %v3851, %v3908
      %v3914 = vld [vmem:[%s388 + $0x1] sm:$0xff]
      %v3915 = vpack.c.bf16 %v3914, %v3914
      %v3916 = vld [vmem:[%s470] sm:$0xf]
      %v3917 = vld [vmem:[%s470 + $0x4] sm:$0xf]
      %v3918 = vld [vmem:[%s470 + $0x8] sm:$0xf]
      %v3919 = vld [vmem:[%s470 + $0xc] sm:$0xf]
      %v3924 = vunpack.c.l.b16 %v3916
      %v3925 = vunpack.c.l.b16 %v3917
      %v3926 = vunpack.c.l.b16 %v3918
      %v3927 = vunpack.c.l.b16 %v3919
      %v3928 = vpack.c.b16 %v3925, %v3924
      %v3929 = vpack.c.b16 %v3927, %v3926
      %v3933 = vsel %vm356, %v3915, 0
      %3935 = vmatprep.subr.bf16.mxu0 0
      %3936 = vmatpush1.bf16.msra.mxu0 %v3928
      %3937 = vmatprep.subr.bf16.mxu0 0
      %3938 = vmatpush1.bf16.msra.mxu0 %v3929
      %3939 = vmatprep.subr.bf16.mxu0 0
      %3940 = vmatpush1.bf16.msra.mxu0 0
      %3941 = vmatprep.subr.bf16.mxu0 0
      %3942 = vmatpush1.bf16.msra.mxu0 0
      %3943 = vmatprep.subr.bf16.mxu0 0
      %3944 = vmatpush1.bf16.msra.mxu0 0
      %3945 = vmatprep.subr.bf16.mxu0 0
      %3946 = vmatpush1.bf16.msra.mxu0 0
      %3947 = vmatprep.subr.bf16.mxu0 0
      %3948 = vmatpush1.bf16.msra.mxu0 0
      %3949 = vmatprep.subr.bf16.mxu0 0
      %3950 = vmatpush1.bf16.msra.mxu0 0
      %3951 = vmatprep.subr.bf16.mxu0 0
      %3952 = vmatpush1.bf16.msra.mxu0 0
      %3953 = vmatprep.subr.bf16.mxu0 0
      %3954 = vmatpush1.bf16.msra.mxu0 0
      %3955 = vmatprep.subr.bf16.mxu0 0
      %3956 = vmatpush1.bf16.msra.mxu0 0
      %3957 = vmatprep.subr.bf16.mxu0 0
      %3958 = vmatpush1.bf16.msra.mxu0 0
      %3959 = vmatprep.subr.bf16.mxu0 0
      %3960 = vmatpush1.bf16.msra.mxu0 0
      %3961 = vmatprep.subr.bf16.mxu0 0
      %3962 = vmatpush1.bf16.msra.mxu0 0
      %3963 = vmatprep.subr.bf16.mxu0 0
      %3964 = vmatpush1.bf16.msra.mxu0 0
      %3965 = vmatprep.subr.bf16.mxu0 0
      %3966 = vmatpush1.bf16.msra.mxu0 0
      %3967 = vmatprep.mubr.bf16.mxu0 0
      %3968 = vmatmul.mubr.bf16.gmra.mrb[0].mxu0 %v3933
      %v3969 = vpop.f32.mrb[0].mxu0
      %v3970 = vadd.f32 0.0, %v3969
      %v3971 = vpop.f32.mrb[0].mxu0
      %v3972 = vpop.f32.mrb[0].mxu0
      %v3973 = vpop.f32.mrb[0].mxu0
      %3974 = vdwg.mxu0
      %v3975 = vadd.f32 %v3913, %v3970
      %v3976 = vld [vmem:[%s388 + $0x2] sm:$0xff]
      %v3977 = vpack.c.bf16 %v3976, %v3976
      %v3978 = vld [vmem:[%s533] sm:$0xf]
      %v3979 = vld [vmem:[%s533 + $0x4] sm:$0xf]
      %v3980 = vld [vmem:[%s533 + $0x8] sm:$0xf]
      %v3981 = vld [vmem:[%s533 + $0xc] sm:$0xf]
      %v3986 = vunpack.c.l.b16 %v3978
      %v3987 = vunpack.c.l.b16 %v3979
      %v3988 = vunpack.c.l.b16 %v3980
      %v3989 = vunpack.c.l.b16 %v3981
      %v3990 = vpack.c.b16 %v3987, %v3986
      %v3991 = vpack.c.b16 %v3989, %v3988
      %v3995 = vsel %vm356, %v3977, 0
      %3997 = vmatprep.subr.bf16.mxu0 0
      %3998 = vmatpush1.bf16.msra.mxu0 %v3990
      %3999 = vmatprep.subr.bf16.mxu0 0
      %4000 = vmatpush1.bf16.msra.mxu0 %v3991
      %4001 = vmatprep.subr.bf16.mxu0 0
      %4002 = vmatpush1.bf16.msra.mxu0 0
      %4003 = vmatprep.subr.bf16.mxu0 0
      %4004 = vmatpush1.bf16.msra.mxu0 0
      %4005 = vmatprep.subr.bf16.mxu0 0
      %4006 = vmatpush1.bf16.msra.mxu0 0
      %4007 = vmatprep.subr.bf16.mxu0 0
      %4008 = vmatpush1.bf16.msra.mxu0 0
      %4009 = vmatprep.subr.bf16.mxu0 0
      %4010 = vmatpush1.bf16.msra.mxu0 0
      %4011 = vmatprep.subr.bf16.mxu0 0
      %4012 = vmatpush1.bf16.msra.mxu0 0
      %4013 = vmatprep.subr.bf16.mxu0 0
      %4014 = vmatpush1.bf16.msra.mxu0 0
      %4015 = vmatprep.subr.bf16.mxu0 0
      %4016 = vmatpush1.bf16.msra.mxu0 0
      %4017 = vmatprep.subr.bf16.mxu0 0
      %4018 = vmatpush1.bf16.msra.mxu0 0
      %4019 = vmatprep.subr.bf16.mxu0 0
      %4020 = vmatpush1.bf16.msra.mxu0 0
      %4021 = vmatprep.subr.bf16.mxu0 0
      %4022 = vmatpush1.bf16.msra.mxu0 0
      %4023 = vmatprep.subr.bf16.mxu0 0
      %4024 = vmatpush1.bf16.msra.mxu0 0
      %4025 = vmatprep.subr.bf16.mxu0 0
      %4026 = vmatpush1.bf16.msra.mxu0 0
      %4027 = vmatprep.subr.bf16.mxu0 0
      %4028 = vmatpush1.bf16.msra.mxu0 0
      %4029 = vmatprep.mubr.bf16.mxu0 0
      %4030 = vmatmul.mubr.bf16.gmra.mrb[0].mxu0 %v3995
      %v4031 = vpop.f32.mrb[0].mxu0
      %v4032 = vadd.f32 0.0, %v4031
      %v4033 = vpop.f32.mrb[0].mxu0
      %v4034 = vpop.f32.mrb[0].mxu0
      %v4035 = vpop.f32.mrb[0].mxu0
      %4036 = vdwg.mxu0
      %v4037 = vadd.f32 %v3975, %v4032
      %v4038 = vld [vmem:[%s390] sm:$0xff]
      %v4039 = vpack.c.bf16 %v4038, %v4038
      %v4040 = vld [vmem:[%s596] sm:$0xf]
      %v4041 = vld [vmem:[%s596 + $0x4] sm:$0xf]
      %v4042 = vld [vmem:[%s596 + $0x8] sm:$0xf]
      %v4043 = vld [vmem:[%s596 + $0xc] sm:$0xf]
      %v4048 = vunpack.c.l.b16 %v4040
      %v4049 = vunpack.c.l.b16 %v4041
      %v4050 = vunpack.c.l.b16 %v4042
      %v4051 = vunpack.c.l.b16 %v4043
      %v4052 = vpack.c.b16 %v4049, %v4048
      %v4053 = vpack.c.b16 %v4051, %v4050
      %v4057 = vsel %vm356, %v4039, 0
      %4059 = vmatprep.subr.bf16.mxu0 0
      %4060 = vmatpush1.bf16.msra.mxu0 %v4052
      %4061 = vmatprep.subr.bf16.mxu0 0
      %4062 = vmatpush1.bf16.msra.mxu0 %v4053
      %4063 = vmatprep.subr.bf16.mxu0 0
      %4064 = vmatpush1.bf16.msra.mxu0 0
      %4065 = vmatprep.subr.bf16.mxu0 0
      %4066 = vmatpush1.bf16.msra.mxu0 0
      %4067 = vmatprep.subr.bf16.mxu0 0
      %4068 = vmatpush1.bf16.msra.mxu0 0
      %4069 = vmatprep.subr.bf16.mxu0 0
      %4070 = vmatpush1.bf16.msra.mxu0 0
      %4071 = vmatprep.subr.bf16.mxu0 0
      %4072 = vmatpush1.bf16.msra.mxu0 0
      %4073 = vmatprep.subr.bf16.mxu0 0
      %4074 = vmatpush1.bf16.msra.mxu0 0
      %4075 = vmatprep.subr.bf16.mxu0 0
      %4076 = vmatpush1.bf16.msra.mxu0 0
      %4077 = vmatprep.subr.bf16.mxu0 0
      %4078 = vmatpush1.bf16.msra.mxu0 0
      %4079 = vmatprep.subr.bf16.mxu0 0
      %4080 = vmatpush1.bf16.msra.mxu0 0
      %4081 = vmatprep.subr.bf16.mxu0 0
      %4082 = vmatpush1.bf16.msra.mxu0 0
      %4083 = vmatprep.subr.bf16.mxu0 0
      %4084 = vmatpush1.bf16.msra.mxu0 0
      %4085 = vmatprep.subr.bf16.mxu0 0
      %4086 = vmatpush1.bf16.msra.mxu0 0
      %4087 = vmatprep.subr.bf16.mxu0 0
      %4088 = vmatpush1.bf16.msra.mxu0 0
      %4089 = vmatprep.subr.bf16.mxu0 0
      %4090 = vmatpush1.bf16.msra.mxu0 0
      %4091 = vmatprep.mubr.bf16.mxu0 0
      %4092 = vmatmul.mubr.bf16.gmra.mrb[0].mxu0 %v4057
      %v4093 = vpop.f32.mrb[0].mxu0
      %v4094 = vadd.f32 0.0, %v4093
      %v4095 = vpop.f32.mrb[0].mxu0
      %v4096 = vpop.f32.mrb[0].mxu0
      %v4097 = vpop.f32.mrb[0].mxu0
      %4098 = vdwg.mxu0
      %v4099 = vadd.f32 %v4037, %v4094
      %v4100 = vld [vmem:[%s390 + $0x1] sm:$0xff]
      %v4101 = vpack.c.bf16 %v4100, %v4100
      %v4102 = vld [vmem:[%s659] sm:$0xf]
      %v4103 = vld [vmem:[%s659 + $0x4] sm:$0xf]
      %v4104 = vld [vmem:[%s659 + $0x8] sm:$0xf]
      %v4105 = vld [vmem:[%s659 + $0xc] sm:$0xf]
      %v4110 = vunpack.c.l.b16 %v4102
      %v4111 = vunpack.c.l.b16 %v4103
      %v4112 = vunpack.c.l.b16 %v4104
      %v4113 = vunpack.c.l.b16 %v4105
      %v4114 = vpack.c.b16 %v4111, %v4110
      %v4115 = vpack.c.b16 %v4113, %v4112
      %v4119 = vsel %vm356, %v4101, 0
      %4121 = vmatprep.subr.bf16.mxu0 0
      %4122 = vmatpush1.bf16.msra.mxu0 %v4114
      %4123 = vmatprep.subr.bf16.mxu0 0
      %4124 = vmatpush1.bf16.msra.mxu0 %v4115
      %4125 = vmatprep.subr.bf16.mxu0 0
      %4126 = vmatpush1.bf16.msra.mxu0 0
      %4127 = vmatprep.subr.bf16.mxu0 0
      %4128 = vmatpush1.bf16.msra.mxu0 0
      %4129 = vmatprep.subr.bf16.mxu0 0
      %4130 = vmatpush1.bf16.msra.mxu0 0
      %4131 = vmatprep.subr.bf16.mxu0 0
      %4132 = vmatpush1.bf16.msra.mxu0 0
      %4133 = vmatprep.subr.bf16.mxu0 0
      %4134 = vmatpush1.bf16.msra.mxu0 0
      %4135 = vmatprep.subr.bf16.mxu0 0
      %4136 = vmatpush1.bf16.msra.mxu0 0
      %4137 = vmatprep.subr.bf16.mxu0 0
      %4138 = vmatpush1.bf16.msra.mxu0 0
      %4139 = vmatprep.subr.bf16.mxu0 0
      %4140 = vmatpush1.bf16.msra.mxu0 0
      %4141 = vmatprep.subr.bf16.mxu0 0
      %4142 = vmatpush1.bf16.msra.mxu0 0
      %4143 = vmatprep.subr.bf16.mxu0 0
      %4144 = vmatpush1.bf16.msra.mxu0 0
      %4145 = vmatprep.subr.bf16.mxu0 0
      %4146 = vmatpush1.bf16.msra.mxu0 0
      %4147 = vmatprep.subr.bf16.mxu0 0
      %4148 = vmatpush1.bf16.msra.mxu0 0
      %4149 = vmatprep.subr.bf16.mxu0 0
      %4150 = vmatpush1.bf16.msra.mxu0 0
      %4151 = vmatprep.subr.bf16.mxu0 0
      %4152 = vmatpush1.bf16.msra.mxu0 0
      %4153 = vmatprep.mubr.bf16.mxu0 0
      %4154 = vmatmul.mubr.bf16.gmra.mrb[0].mxu0 %v4119
      %v4155 = vpop.f32.mrb[0].mxu0
      %v4156 = vadd.f32 0.0, %v4155
      %v4157 = vpop.f32.mrb[0].mxu0
      %v4158 = vpop.f32.mrb[0].mxu0
      %v4159 = vpop.f32.mrb[0].mxu0
      %4160 = vdwg.mxu0
      %v4161 = vadd.f32 %v4099, %v4156
      %v4162 = vld [vmem:[%s390 + $0x2] sm:$0xff]
      %v4163 = vpack.c.bf16 %v4162, %v4162
      %v4164 = vld [vmem:[%s722] sm:$0xf]
      %v4165 = vld [vmem:[%s722 + $0x4] sm:$0xf]
      %v4166 = vld [vmem:[%s722 + $0x8] sm:$0xf]
      %v4167 = vld [vmem:[%s722 + $0xc] sm:$0xf]
      %v4172 = vunpack.c.l.b16 %v4164
      %v4173 = vunpack.c.l.b16 %v4165
      %v4174 = vunpack.c.l.b16 %v4166
      %v4175 = vunpack.c.l.b16 %v4167
      %v4176 = vpack.c.b16 %v4173, %v4172
      %v4177 = vpack.c.b16 %v4175, %v4174
      %v4181 = vsel %vm356, %v4163, 0
      %4183 = vmatprep.subr.bf16.mxu0 0
      %4184 = vmatpush1.bf16.msra.mxu0 %v4176
      %4185 = vmatprep.subr.bf16.mxu0 0
      %4186 = vmatpush1.bf16.msra.mxu0 %v4177
      %4187 = vmatprep.subr.bf16.mxu0 0
      %4188 = vmatpush1.bf16.msra.mxu0 0
      %4189 = vmatprep.subr.bf16.mxu0 0
      %4190 = vmatpush1.bf16.msra.mxu0 0
      %4191 = vmatprep.subr.bf16.mxu0 0
      %4192 = vmatpush1.bf16.msra.mxu0 0
      %4193 = vmatprep.subr.bf16.mxu0 0
      %4194 = vmatpush1.bf16.msra.mxu0 0
      %4195 = vmatprep.subr.bf16.mxu0 0
      %4196 = vmatpush1.bf16.msra.mxu0 0
      %4197 = vmatprep.subr.bf16.mxu0 0
      %4198 = vmatpush1.bf16.msra.mxu0 0
      %4199 = vmatprep.subr.bf16.mxu0 0
      %4200 = vmatpush1.bf16.msra.mxu0 0
      %4201 = vmatprep.subr.bf16.mxu0 0
      %4202 = vmatpush1.bf16.msra.mxu0 0
      %4203 = vmatprep.subr.bf16.mxu0 0
      %4204 = vmatpush1.bf16.msra.mxu0 0
      %4205 = vmatprep.subr.bf16.mxu0 0
      %4206 = vmatpush1.bf16.msra.mxu0 0
      %4207 = vmatprep.subr.bf16.mxu0 0
      %4208 = vmatpush1.bf16.msra.mxu0 0
      %4209 = vmatprep.subr.bf16.mxu0 0
      %4210 = vmatpush1.bf16.msra.mxu0 0
      %4211 = vmatprep.subr.bf16.mxu0 0
      %4212 = vmatpush1.bf16.msra.mxu0 0
      %4213 = vmatprep.subr.bf16.mxu0 0
      %4214 = vmatpush1.bf16.msra.mxu0 0
      %4215 = vmatprep.mubr.bf16.mxu0 0
      %4216 = vmatmul.mubr.bf16.gmra.mrb[0].mxu0 %v4181
      %v4217 = vpop.f32.mrb[0].mxu0
      %v4218 = vadd.f32 0.0, %v4217
      %v4219 = vpop.f32.mrb[0].mxu0
      %v4220 = vpop.f32.mrb[0].mxu0
      %v4221 = vpop.f32.mrb[0].mxu0
      %4222 = vdwg.mxu0
      %v4223 = vadd.f32 %v4161, %v4218
      %v4224 = vld [vmem:[%s392] sm:$0xff]
      %v4225 = vpack.c.bf16 %v4224, %v4224
      %v4226 = vld [vmem:[%s785] sm:$0xf]
      %v4227 = vld [vmem:[%s785 + $0x4] sm:$0xf]
      %v4228 = vld [vmem:[%s785 + $0x8] sm:$0xf]
      %v4229 = vld [vmem:[%s785 + $0xc] sm:$0xf]
      %v4234 = vunpack.c.l.b16 %v4226
      %v4235 = vunpack.c.l.b16 %v4227
      %v4236 = vunpack.c.l.b16 %v4228
      %v4237 = vunpack.c.l.b16 %v4229
      %v4238 = vpack.c.b16 %v4235, %v4234
      %v4239 = vpack.c.b16 %v4237, %v4236
      %v4243 = vsel %vm356, %v4225, 0
      %4245 = vmatprep.subr.bf16.mxu0 0
      %4246 = vmatpush1.bf16.msra.mxu0 %v4238
      %4247 = vmatprep.subr.bf16.mxu0 0
      %4248 = vmatpush1.bf16.msra.mxu0 %v4239
      %4249 = vmatprep.subr.bf16.mxu0 0
      %4250 = vmatpush1.bf16.msra.mxu0 0
      %4251 = vmatprep.subr.bf16.mxu0 0
      %4252 = vmatpush1.bf16.msra.mxu0 0
      %4253 = vmatprep.subr.bf16.mxu0 0
      %4254 = vmatpush1.bf16.msra.mxu0 0
      %4255 = vmatprep.subr.bf16.mxu0 0
      %4256 = vmatpush1.bf16.msra.mxu0 0
      %4257 = vmatprep.subr.bf16.mxu0 0
      %4258 = vmatpush1.bf16.msra.mxu0 0
      %4259 = vmatprep.subr.bf16.mxu0 0
      %4260 = vmatpush1.bf16.msra.mxu0 0
      %4261 = vmatprep.subr.bf16.mxu0 0
      %4262 = vmatpush1.bf16.msra.mxu0 0
      %4263 = vmatprep.subr.bf16.mxu0 0
      %4264 = vmatpush1.bf16.msra.mxu0 0
      %4265 = vmatprep.subr.bf16.mxu0 0
      %4266 = vmatpush1.bf16.msra.mxu0 0
      %4267 = vmatprep.subr.bf16.mxu0 0
      %4268 = vmatpush1.bf16.msra.mxu0 0
      %4269 = vmatprep.subr.bf16.mxu0 0
      %4270 = vmatpush1.bf16.msra.mxu0 0
      %4271 = vmatprep.subr.bf16.mxu0 0
      %4272 = vmatpush1.bf16.msra.mxu0 0
      %4273 = vmatprep.subr.bf16.mxu0 0
      %4274 = vmatpush1.bf16.msra.mxu0 0
      %4275 = vmatprep.subr.bf16.mxu0 0
      %4276 = vmatpush1.bf16.msra.mxu0 0
      %4277 = vmatprep.mubr.bf16.mxu0 0
      %4278 = vmatmul.mubr.bf16.gmra.mrb[0].mxu0 %v4243
      %v4279 = vpop.f32.mrb[0].mxu0
      %v4280 = vadd.f32 0.0, %v4279
      %v4281 = vpop.f32.mrb[0].mxu0
      %v4282 = vpop.f32.mrb[0].mxu0
      %v4283 = vpop.f32.mrb[0].mxu0
      %4284 = vdwg.mxu0
      %v4285 = vadd.f32 %v4223, %v4280
      %v4286 = vld [vmem:[%s392 + $0x1] sm:$0xff]
      %v4287 = vpack.c.bf16 %v4286, %v4286
      %v4288 = vld [vmem:[%s848] sm:$0xf]
      %v4289 = vld [vmem:[%s848 + $0x4] sm:$0xf]
      %v4290 = vld [vmem:[%s848 + $0x8] sm:$0xf]
      %v4291 = vld [vmem:[%s848 + $0xc] sm:$0xf]
      %v4296 = vunpack.c.l.b16 %v4288
      %v4297 = vunpack.c.l.b16 %v4289
      %v4298 = vunpack.c.l.b16 %v4290
      %v4299 = vunpack.c.l.b16 %v4291
      %v4300 = vpack.c.b16 %v4297, %v4296
      %v4301 = vpack.c.b16 %v4299, %v4298
      %v4305 = vsel %vm356, %v4287, 0
      %4307 = vmatprep.subr.bf16.mxu0 0
      %4308 = vmatpush1.bf16.msra.mxu0 %v4300
      %4309 = vmatprep.subr.bf16.mxu0 0
      %4310 = vmatpush1.bf16.msra.mxu0 %v4301
      %4311 = vmatprep.subr.bf16.mxu0 0
      %4312 = vmatpush1.bf16.msra.mxu0 0
      %4313 = vmatprep.subr.bf16.mxu0 0
      %4314 = vmatpush1.bf16.msra.mxu0 0
      %4315 = vmatprep.subr.bf16.mxu0 0
      %4316 = vmatpush1.bf16.msra.mxu0 0
      %4317 = vmatprep.subr.bf16.mxu0 0
      %4318 = vmatpush1.bf16.msra.mxu0 0
      %4319 = vmatprep.subr.bf16.mxu0 0
      %4320 = vmatpush1.bf16.msra.mxu0 0
      %4321 = vmatprep.subr.bf16.mxu0 0
      %4322 = vmatpush1.bf16.msra.mxu0 0
      %4323 = vmatprep.subr.bf16.mxu0 0
      %4324 = vmatpush1.bf16.msra.mxu0 0
      %4325 = vmatprep.subr.bf16.mxu0 0
      %4326 = vmatpush1.bf16.msra.mxu0 0
      %4327 = vmatprep.subr.bf16.mxu0 0
      %4328 = vmatpush1.bf16.msra.mxu0 0
      %4329 = vmatprep.subr.bf16.mxu0 0
      %4330 = vmatpush1.bf16.msra.mxu0 0
      %4331 = vmatprep.subr.bf16.mxu0 0
      %4332 = vmatpush1.bf16.msra.mxu0 0
      %4333 = vmatprep.subr.bf16.mxu0 0
      %4334 = vmatpush1.bf16.msra.mxu0 0
      %4335 = vmatprep.subr.bf16.mxu0 0
      %4336 = vmatpush1.bf16.msra.mxu0 0
      %4337 = vmatprep.subr.bf16.mxu0 0
      %4338 = vmatpush1.bf16.msra.mxu0 0
      %4339 = vmatprep.mubr.bf16.mxu0 0
      %4340 = vmatmul.mubr.bf16.gmra.mrb[0].mxu0 %v4305
      %v4341 = vpop.f32.mrb[0].mxu0
      %v4342 = vadd.f32 0.0, %v4341
      %v4343 = vpop.f32.mrb[0].mxu0
      %v4344 = vpop.f32.mrb[0].mxu0
      %v4345 = vpop.f32.mrb[0].mxu0
      %4346 = vdwg.mxu0
      %v4347 = vadd.f32 %v4285, %v4342
      %v4348 = vld [vmem:[%s392 + $0x2] sm:$0xff]
      %v4349 = vpack.c.bf16 %v4348, %v4348
      %v4350 = vld [vmem:[%s911] sm:$0xf]
      %v4351 = vld [vmem:[%s911 + $0x4] sm:$0xf]
      %v4352 = vld [vmem:[%s911 + $0x8] sm:$0xf]
      %v4353 = vld [vmem:[%s911 + $0xc] sm:$0xf]
      %v4358 = vunpack.c.l.b16 %v4350
      %v4359 = vunpack.c.l.b16 %v4351
      %v4360 = vunpack.c.l.b16 %v4352
      %v4361 = vunpack.c.l.b16 %v4353
      %v4362 = vpack.c.b16 %v4359, %v4358
      %v4363 = vpack.c.b16 %v4361, %v4360
      %v4367 = vsel %vm356, %v4349, 0
      %4369 = vmatprep.subr.bf16.mxu0 0
      %4370 = vmatpush1.bf16.msra.mxu0 %v4362
      %4371 = vmatprep.subr.bf16.mxu0 0
      %4372 = vmatpush1.bf16.msra.mxu0 %v4363
      %4373 = vmatprep.subr.bf16.mxu0 0
      %4374 = vmatpush1.bf16.msra.mxu0 0
      %4375 = vmatprep.subr.bf16.mxu0 0
      %4376 = vmatpush1.bf16.msra.mxu0 0
      %4377 = vmatprep.subr.bf16.mxu0 0
      %4378 = vmatpush1.bf16.msra.mxu0 0
      %4379 = vmatprep.subr.bf16.mxu0 0
      %4380 = vmatpush1.bf16.msra.mxu0 0
      %4381 = vmatprep.subr.bf16.mxu0 0
      %4382 = vmatpush1.bf16.msra.mxu0 0
      %4383 = vmatprep.subr.bf16.mxu0 0
      %4384 = vmatpush1.bf16.msra.mxu0 0
      %4385 = vmatprep.subr.bf16.mxu0 0
      %4386 = vmatpush1.bf16.msra.mxu0 0
      %4387 = vmatprep.subr.bf16.mxu0 0
      %4388 = vmatpush1.bf16.msra.mxu0 0
      %4389 = vmatprep.subr.bf16.mxu0 0
      %4390 = vmatpush1.bf16.msra.mxu0 0
      %4391 = vmatprep.subr.bf16.mxu0 0
      %4392 = vmatpush1.bf16.msra.mxu0 0
      %4393 = vmatprep.subr.bf16.mxu0 0
      %4394 = vmatpush1.bf16.msra.mxu0 0
      %4395 = vmatprep.subr.bf16.mxu0 0
      %4396 = vmatpush1.bf16.msra.mxu0 0
      %4397 = vmatprep.subr.bf16.mxu0 0
      %4398 = vmatpush1.bf16.msra.mxu0 0
      %4399 = vmatprep.subr.bf16.mxu0 0
      %4400 = vmatpush1.bf16.msra.mxu0 0
      %4401 = vmatprep.mubr.bf16.mxu0 0
      %4402 = vmatmul.mubr.bf16.gmra.mrb[0].mxu0 %v4367
      %v4403 = vpop.f32.mrb[0].mxu0
      %v4404 = vadd.f32 0.0, %v4403
      %v4405 = vpop.f32.mrb[0].mxu0
      %v4406 = vpop.f32.mrb[0].mxu0
      %v4407 = vpop.f32.mrb[0].mxu0
      %4408 = vdwg.mxu0
      %v4409 = vadd.f32 %v4347, %v4404
      %v4410 = vmul.f32 %v4409, 0.01
      %v4411 = vmax.f32 %v4409, %v4410
      %4412 = vst.msk [vmem:[%s226 + $0x30] sm:$0xff] %vm356, %v4411
      %v4413 = vld [vmem:[%s4] sm:$0x1]
      %v4415 = vlaneseq
      %v4416 = vshrl.u32 %v4415, 7
      %v4417 = vsub.s32 0, %v4416
      %v4418 = vrot.slane %v4413, %v4417
      %4421 = vrot.lane.b32.xlu0 %v337, 96
      %v4422 = vpop.permute.xlu0 %4421
      %v4424 = vadd.f32 %v4418, %v4422
      %v4425 = vld [vmem:[%s390] sm:$0xff]
      %v4426 = vpack.c.bf16 %v4425, %v4425
      %v4427 = vld [vmem:[%s3] sm:$0xf]
      %v4428 = vld [vmem:[%s3 + $0x4] sm:$0xf]
      %v4429 = vld [vmem:[%s3 + $0x8] sm:$0xf]
      %v4430 = vld [vmem:[%s3 + $0xc] sm:$0xf]
      %v4435 = vunpack.c.l.b16 %v4427
      %v4436 = vunpack.c.l.b16 %v4428
      %v4437 = vunpack.c.l.b16 %v4429
      %v4438 = vunpack.c.l.b16 %v4430
      %v4439 = vpack.c.b16 %v4436, %v4435
      %v4440 = vpack.c.b16 %v4438, %v4437
      %v4444 = vsel %vm356, %v4426, 0
      %4446 = vmatprep.subr.bf16.mxu0 0
      %4447 = vmatpush1.bf16.msra.mxu0 %v4439
      %4448 = vmatprep.subr.bf16.mxu0 0
      %4449 = vmatpush1.bf16.msra.mxu0 %v4440
      %4450 = vmatprep.subr.bf16.mxu0 0
      %4451 = vmatpush1.bf16.msra.mxu0 0
      %4452 = vmatprep.subr.bf16.mxu0 0
      %4453 = vmatpush1.bf16.msra.mxu0 0
      %4454 = vmatprep.subr.bf16.mxu0 0
      %4455 = vmatpush1.bf16.msra.mxu0 0
      %4456 = vmatprep.subr.bf16.mxu0 0
      %4457 = vmatpush1.bf16.msra.mxu0 0
      %4458 = vmatprep.subr.bf16.mxu0 0
      %4459 = vmatpush1.bf16.msra.mxu0 0
      %4460 = vmatprep.subr.bf16.mxu0 0
      %4461 = vmatpush1.bf16.msra.mxu0 0
      %4462 = vmatprep.subr.bf16.mxu0 0
      %4463 = vmatpush1.bf16.msra.mxu0 0
      %4464 = vmatprep.subr.bf16.mxu0 0
      %4465 = vmatpush1.bf16.msra.mxu0 0
      %4466 = vmatprep.subr.bf16.mxu0 0
      %4467 = vmatpush1.bf16.msra.mxu0 0
      %4468 = vmatprep.subr.bf16.mxu0 0
      %4469 = vmatpush1.bf16.msra.mxu0 0
      %4470 = vmatprep.subr.bf16.mxu0 0
      %4471 = vmatpush1.bf16.msra.mxu0 0
      %4472 = vmatprep.subr.bf16.mxu0 0
      %4473 = vmatpush1.bf16.msra.mxu0 0
      %4474 = vmatprep.subr.bf16.mxu0 0
      %4475 = vmatpush1.bf16.msra.mxu0 0
      %4476 = vmatprep.subr.bf16.mxu0 0
      %4477 = vmatpush1.bf16.msra.mxu0 0
      %4478 = vmatprep.mubr.bf16.mxu0 0
      %4479 = vmatmul.mubr.bf16.gmra.mrb[0].mxu0 %v4444
      %v4480 = vpop.f32.mrb[0].mxu0
      %v4481 = vadd.f32 0.0, %v4480
      %v4482 = vpop.f32.mrb[0].mxu0
      %v4483 = vpop.f32.mrb[0].mxu0
      %v4484 = vpop.f32.mrb[0].mxu0
      %4485 = vdwg.mxu0
      %v4486 = vadd.f32 %v4424, %v4481
      %v4487 = vld [vmem:[%s390 + $0x1] sm:$0xff]
      %v4488 = vpack.c.bf16 %v4487, %v4487
      %v4489 = vld [vmem:[%s470] sm:$0xf]
      %v4490 = vld [vmem:[%s470 + $0x4] sm:$0xf]
      %v4491 = vld [vmem:[%s470 + $0x8] sm:$0xf]
      %v4492 = vld [vmem:[%s470 + $0xc] sm:$0xf]
      %v4497 = vunpack.c.l.b16 %v4489
      %v4498 = vunpack.c.l.b16 %v4490
      %v4499 = vunpack.c.l.b16 %v4491
      %v4500 = vunpack.c.l.b16 %v4492
      %v4501 = vpack.c.b16 %v4498, %v4497
      %v4502 = vpack.c.b16 %v4500, %v4499
      %v4506 = vsel %vm356, %v4488, 0
      %4508 = vmatprep.subr.bf16.mxu0 0
      %4509 = vmatpush1.bf16.msra.mxu0 %v4501
      %4510 = vmatprep.subr.bf16.mxu0 0
      %4511 = vmatpush1.bf16.msra.mxu0 %v4502
      %4512 = vmatprep.subr.bf16.mxu0 0
      %4513 = vmatpush1.bf16.msra.mxu0 0
      %4514 = vmatprep.subr.bf16.mxu0 0
      %4515 = vmatpush1.bf16.msra.mxu0 0
      %4516 = vmatprep.subr.bf16.mxu0 0
      %4517 = vmatpush1.bf16.msra.mxu0 0
      %4518 = vmatprep.subr.bf16.mxu0 0
      %4519 = vmatpush1.bf16.msra.mxu0 0
      %4520 = vmatprep.subr.bf16.mxu0 0
      %4521 = vmatpush1.bf16.msra.mxu0 0
      %4522 = vmatprep.subr.bf16.mxu0 0
      %4523 = vmatpush1.bf16.msra.mxu0 0
      %4524 = vmatprep.subr.bf16.mxu0 0
      %4525 = vmatpush1.bf16.msra.mxu0 0
      %4526 = vmatprep.subr.bf16.mxu0 0
      %4527 = vmatpush1.bf16.msra.mxu0 0
      %4528 = vmatprep.subr.bf16.mxu0 0
      %4529 = vmatpush1.bf16.msra.mxu0 0
      %4530 = vmatprep.subr.bf16.mxu0 0
      %4531 = vmatpush1.bf16.msra.mxu0 0
      %4532 = vmatprep.subr.bf16.mxu0 0
      %4533 = vmatpush1.bf16.msra.mxu0 0
      %4534 = vmatprep.subr.bf16.mxu0 0
      %4535 = vmatpush1.bf16.msra.mxu0 0
      %4536 = vmatprep.subr.bf16.mxu0 0
      %4537 = vmatpush1.bf16.msra.mxu0 0
      %4538 = vmatprep.subr.bf16.mxu0 0
      %4539 = vmatpush1.bf16.msra.mxu0 0
      %4540 = vmatprep.mubr.bf16.mxu0 0
      %4541 = vmatmul.mubr.bf16.gmra.mrb[0].mxu0 %v4506
      %v4542 = vpop.f32.mrb[0].mxu0
      %v4543 = vadd.f32 0.0, %v4542
      %v4544 = vpop.f32.mrb[0].mxu0
      %v4545 = vpop.f32.mrb[0].mxu0
      %v4546 = vpop.f32.mrb[0].mxu0
      %4547 = vdwg.mxu0
      %v4548 = vadd.f32 %v4486, %v4543
      %v4549 = vld [vmem:[%s390 + $0x2] sm:$0xff]
      %v4550 = vpack.c.bf16 %v4549, %v4549
      %v4551 = vld [vmem:[%s533] sm:$0xf]
      %v4552 = vld [vmem:[%s533 + $0x4] sm:$0xf]
      %v4553 = vld [vmem:[%s533 + $0x8] sm:$0xf]
      %v4554 = vld [vmem:[%s533 + $0xc] sm:$0xf]
      %v4559 = vunpack.c.l.b16 %v4551
      %v4560 = vunpack.c.l.b16 %v4552
      %v4561 = vunpack.c.l.b16 %v4553
      %v4562 = vunpack.c.l.b16 %v4554
      %v4563 = vpack.c.b16 %v4560, %v4559
      %v4564 = vpack.c.b16 %v4562, %v4561
      %v4568 = vsel %vm356, %v4550, 0
      %4570 = vmatprep.subr.bf16.mxu0 0
      %4571 = vmatpush1.bf16.msra.mxu0 %v4563
      %4572 = vmatprep.subr.bf16.mxu0 0
      %4573 = vmatpush1.bf16.msra.mxu0 %v4564
      %4574 = vmatprep.subr.bf16.mxu0 0
      %4575 = vmatpush1.bf16.msra.mxu0 0
      %4576 = vmatprep.subr.bf16.mxu0 0
      %4577 = vmatpush1.bf16.msra.mxu0 0
      %4578 = vmatprep.subr.bf16.mxu0 0
      %4579 = vmatpush1.bf16.msra.mxu0 0
      %4580 = vmatprep.subr.bf16.mxu0 0
      %4581 = vmatpush1.bf16.msra.mxu0 0
      %4582 = vmatprep.subr.bf16.mxu0 0
      %4583 = vmatpush1.bf16.msra.mxu0 0
      %4584 = vmatprep.subr.bf16.mxu0 0
      %4585 = vmatpush1.bf16.msra.mxu0 0
      %4586 = vmatprep.subr.bf16.mxu0 0
      %4587 = vmatpush1.bf16.msra.mxu0 0
      %4588 = vmatprep.subr.bf16.mxu0 0
      %4589 = vmatpush1.bf16.msra.mxu0 0
      %4590 = vmatprep.subr.bf16.mxu0 0
      %4591 = vmatpush1.bf16.msra.mxu0 0
      %4592 = vmatprep.subr.bf16.mxu0 0
      %4593 = vmatpush1.bf16.msra.mxu0 0
      %4594 = vmatprep.subr.bf16.mxu0 0
      %4595 = vmatpush1.bf16.msra.mxu0 0
      %4596 = vmatprep.subr.bf16.mxu0 0
      %4597 = vmatpush1.bf16.msra.mxu0 0
      %4598 = vmatprep.subr.bf16.mxu0 0
      %4599 = vmatpush1.bf16.msra.mxu0 0
      %4600 = vmatprep.subr.bf16.mxu0 0
      %4601 = vmatpush1.bf16.msra.mxu0 0
      %4602 = vmatprep.mubr.bf16.mxu0 0
      %4603 = vmatmul.mubr.bf16.gmra.mrb[0].mxu0 %v4568
      %v4604 = vpop.f32.mrb[0].mxu0
      %v4605 = vadd.f32 0.0, %v4604
      %v4606 = vpop.f32.mrb[0].mxu0
      %v4607 = vpop.f32.mrb[0].mxu0
      %v4608 = vpop.f32.mrb[0].mxu0
      %4609 = vdwg.mxu0
      %v4610 = vadd.f32 %v4548, %v4605
      %v4611 = vld [vmem:[%s392] sm:$0xff]
      %v4612 = vpack.c.bf16 %v4611, %v4611
      %v4613 = vld [vmem:[%s596] sm:$0xf]
      %v4614 = vld [vmem:[%s596 + $0x4] sm:$0xf]
      %v4615 = vld [vmem:[%s596 + $0x8] sm:$0xf]
      %v4616 = vld [vmem:[%s596 + $0xc] sm:$0xf]
      %v4621 = vunpack.c.l.b16 %v4613
      %v4622 = vunpack.c.l.b16 %v4614
      %v4623 = vunpack.c.l.b16 %v4615
      %v4624 = vunpack.c.l.b16 %v4616
      %v4625 = vpack.c.b16 %v4622, %v4621
      %v4626 = vpack.c.b16 %v4624, %v4623
      %v4630 = vsel %vm356, %v4612, 0
      %4632 = vmatprep.subr.bf16.mxu0 0
      %4633 = vmatpush1.bf16.msra.mxu0 %v4625
      %4634 = vmatprep.subr.bf16.mxu0 0
      %4635 = vmatpush1.bf16.msra.mxu0 %v4626
      %4636 = vmatprep.subr.bf16.mxu0 0
      %4637 = vmatpush1.bf16.msra.mxu0 0
      %4638 = vmatprep.subr.bf16.mxu0 0
      %4639 = vmatpush1.bf16.msra.mxu0 0
      %4640 = vmatprep.subr.bf16.mxu0 0
      %4641 = vmatpush1.bf16.msra.mxu0 0
      %4642 = vmatprep.subr.bf16.mxu0 0
      %4643 = vmatpush1.bf16.msra.mxu0 0
      %4644 = vmatprep.subr.bf16.mxu0 0
      %4645 = vmatpush1.bf16.msra.mxu0 0
      %4646 = vmatprep.subr.bf16.mxu0 0
      %4647 = vmatpush1.bf16.msra.mxu0 0
      %4648 = vmatprep.subr.bf16.mxu0 0
      %4649 = vmatpush1.bf16.msra.mxu0 0
      %4650 = vmatprep.subr.bf16.mxu0 0
      %4651 = vmatpush1.bf16.msra.mxu0 0
      %4652 = vmatprep.subr.bf16.mxu0 0
      %4653 = vmatpush1.bf16.msra.mxu0 0
      %4654 = vmatprep.subr.bf16.mxu0 0
      %4655 = vmatpush1.bf16.msra.mxu0 0
      %4656 = vmatprep.subr.bf16.mxu0 0
      %4657 = vmatpush1.bf16.msra.mxu0 0
      %4658 = vmatprep.subr.bf16.mxu0 0
      %4659 = vmatpush1.bf16.msra.mxu0 0
      %4660 = vmatprep.subr.bf16.mxu0 0
      %4661 = vmatpush1.bf16.msra.mxu0 0
      %4662 = vmatprep.subr.bf16.mxu0 0
      %4663 = vmatpush1.bf16.msra.mxu0 0
      %4664 = vmatprep.mubr.bf16.mxu0 0
      %4665 = vmatmul.mubr.bf16.gmra.mrb[0].mxu0 %v4630
      %v4666 = vpop.f32.mrb[0].mxu0
      %v4667 = vadd.f32 0.0, %v4666
      %v4668 = vpop.f32.mrb[0].mxu0
      %v4669 = vpop.f32.mrb[0].mxu0
      %v4670 = vpop.f32.mrb[0].mxu0
      %4671 = vdwg.mxu0
      %v4672 = vadd.f32 %v4610, %v4667
      %v4673 = vld [vmem:[%s392 + $0x1] sm:$0xff]
      %v4674 = vpack.c.bf16 %v4673, %v4673
      %v4675 = vld [vmem:[%s659] sm:$0xf]
      %v4676 = vld [vmem:[%s659 + $0x4] sm:$0xf]
      %v4677 = vld [vmem:[%s659 + $0x8] sm:$0xf]
      %v4678 = vld [vmem:[%s659 + $0xc] sm:$0xf]
      %v4683 = vunpack.c.l.b16 %v4675
      %v4684 = vunpack.c.l.b16 %v4676
      %v4685 = vunpack.c.l.b16 %v4677
      %v4686 = vunpack.c.l.b16 %v4678
      %v4687 = vpack.c.b16 %v4684, %v4683
      %v4688 = vpack.c.b16 %v4686, %v4685
      %v4692 = vsel %vm356, %v4674, 0
      %4694 = vmatprep.subr.bf16.mxu0 0
      %4695 = vmatpush1.bf16.msra.mxu0 %v4687
      %4696 = vmatprep.subr.bf16.mxu0 0
      %4697 = vmatpush1.bf16.msra.mxu0 %v4688
      %4698 = vmatprep.subr.bf16.mxu0 0
      %4699 = vmatpush1.bf16.msra.mxu0 0
      %4700 = vmatprep.subr.bf16.mxu0 0
      %4701 = vmatpush1.bf16.msra.mxu0 0
      %4702 = vmatprep.subr.bf16.mxu0 0
      %4703 = vmatpush1.bf16.msra.mxu0 0
      %4704 = vmatprep.subr.bf16.mxu0 0
      %4705 = vmatpush1.bf16.msra.mxu0 0
      %4706 = vmatprep.subr.bf16.mxu0 0
      %4707 = vmatpush1.bf16.msra.mxu0 0
      %4708 = vmatprep.subr.bf16.mxu0 0
      %4709 = vmatpush1.bf16.msra.mxu0 0
      %4710 = vmatprep.subr.bf16.mxu0 0
      %4711 = vmatpush1.bf16.msra.mxu0 0
      %4712 = vmatprep.subr.bf16.mxu0 0
      %4713 = vmatpush1.bf16.msra.mxu0 0
      %4714 = vmatprep.subr.bf16.mxu0 0
      %4715 = vmatpush1.bf16.msra.mxu0 0
      %4716 = vmatprep.subr.bf16.mxu0 0
      %4717 = vmatpush1.bf16.msra.mxu0 0
      %4718 = vmatprep.subr.bf16.mxu0 0
      %4719 = vmatpush1.bf16.msra.mxu0 0
      %4720 = vmatprep.subr.bf16.mxu0 0
      %4721 = vmatpush1.bf16.msra.mxu0 0
      %4722 = vmatprep.subr.bf16.mxu0 0
      %4723 = vmatpush1.bf16.msra.mxu0 0
      %4724 = vmatprep.subr.bf16.mxu0 0
      %4725 = vmatpush1.bf16.msra.mxu0 0
      %4726 = vmatprep.mubr.bf16.mxu0 0
      %4727 = vmatmul.mubr.bf16.gmra.mrb[0].mxu0 %v4692
      %v4728 = vpop.f32.mrb[0].mxu0
      %v4729 = vadd.f32 0.0, %v4728
      %v4730 = vpop.f32.mrb[0].mxu0
      %v4731 = vpop.f32.mrb[0].mxu0
      %v4732 = vpop.f32.mrb[0].mxu0
      %4733 = vdwg.mxu0
      %v4734 = vadd.f32 %v4672, %v4729
      %v4735 = vld [vmem:[%s392 + $0x2] sm:$0xff]
      %v4736 = vpack.c.bf16 %v4735, %v4735
      %v4737 = vld [vmem:[%s722] sm:$0xf]
      %v4738 = vld [vmem:[%s722 + $0x4] sm:$0xf]
      %v4739 = vld [vmem:[%s722 + $0x8] sm:$0xf]
      %v4740 = vld [vmem:[%s722 + $0xc] sm:$0xf]
      %v4745 = vunpack.c.l.b16 %v4737
      %v4746 = vunpack.c.l.b16 %v4738
      %v4747 = vunpack.c.l.b16 %v4739
      %v4748 = vunpack.c.l.b16 %v4740
      %v4749 = vpack.c.b16 %v4746, %v4745
      %v4750 = vpack.c.b16 %v4748, %v4747
      %v4754 = vsel %vm356, %v4736, 0
      %4756 = vmatprep.subr.bf16.mxu0 0
      %4757 = vmatpush1.bf16.msra.mxu0 %v4749
      %4758 = vmatprep.subr.bf16.mxu0 0
      %4759 = vmatpush1.bf16.msra.mxu0 %v4750
      %4760 = vmatprep.subr.bf16.mxu0 0
      %4761 = vmatpush1.bf16.msra.mxu0 0
      %4762 = vmatprep.subr.bf16.mxu0 0
      %4763 = vmatpush1.bf16.msra.mxu0 0
      %4764 = vmatprep.subr.bf16.mxu0 0
      %4765 = vmatpush1.bf16.msra.mxu0 0
      %4766 = vmatprep.subr.bf16.mxu0 0
      %4767 = vmatpush1.bf16.msra.mxu0 0
      %4768 = vmatprep.subr.bf16.mxu0 0
      %4769 = vmatpush1.bf16.msra.mxu0 0
      %4770 = vmatprep.subr.bf16.mxu0 0
      %4771 = vmatpush1.bf16.msra.mxu0 0
      %4772 = vmatprep.subr.bf16.mxu0 0
      %4773 = vmatpush1.bf16.msra.mxu0 0
      %4774 = vmatprep.subr.bf16.mxu0 0
      %4775 = vmatpush1.bf16.msra.mxu0 0
      %4776 = vmatprep.subr.bf16.mxu0 0
      %4777 = vmatpush1.bf16.msra.mxu0 0
      %4778 = vmatprep.subr.bf16.mxu0 0
      %4779 = vmatpush1.bf16.msra.mxu0 0
      %4780 = vmatprep.subr.bf16.mxu0 0
      %4781 = vmatpush1.bf16.msra.mxu0 0
      %4782 = vmatprep.subr.bf16.mxu0 0
      %4783 = vmatpush1.bf16.msra.mxu0 0
      %4784 = vmatprep.subr.bf16.mxu0 0
      %4785 = vmatpush1.bf16.msra.mxu0 0
      %4786 = vmatprep.subr.bf16.mxu0 0
      %4787 = vmatpush1.bf16.msra.mxu0 0
      %4788 = vmatprep.mubr.bf16.mxu0 0
      %4789 = vmatmul.mubr.bf16.gmra.mrb[0].mxu0 %v4754
      %v4790 = vpop.f32.mrb[0].mxu0
      %v4791 = vadd.f32 0.0, %v4790
      %v4792 = vpop.f32.mrb[0].mxu0
      %v4793 = vpop.f32.mrb[0].mxu0
      %v4794 = vpop.f32.mrb[0].mxu0
      %4795 = vdwg.mxu0
      %v4796 = vadd.f32 %v4734, %v4791
      %s4797 = scalar_lea.vmem [#allocation2], 144
      %v4798 = vld [vmem:[%s4797] sm:$0xff]
      %v4799 = vpack.c.bf16 %v4798, %v4798
      %v4800 = vld [vmem:[%s785] sm:$0xf]
      %v4801 = vld [vmem:[%s785 + $0x4] sm:$0xf]
      %v4802 = vld [vmem:[%s785 + $0x8] sm:$0xf]
      %v4803 = vld [vmem:[%s785 + $0xc] sm:$0xf]
      %v4808 = vunpack.c.l.b16 %v4800
      %v4809 = vunpack.c.l.b16 %v4801
      %v4810 = vunpack.c.l.b16 %v4802
      %v4811 = vunpack.c.l.b16 %v4803
      %v4812 = vpack.c.b16 %v4809, %v4808
      %v4813 = vpack.c.b16 %v4811, %v4810
      %v4817 = vsel %vm356, %v4799, 0
      %4819 = vmatprep.subr.bf16.mxu0 0
      %4820 = vmatpush1.bf16.msra.mxu0 %v4812
      %4821 = vmatprep.subr.bf16.mxu0 0
      %4822 = vmatpush1.bf16.msra.mxu0 %v4813
      %4823 = vmatprep.subr.bf16.mxu0 0
      %4824 = vmatpush1.bf16.msra.mxu0 0
      %4825 = vmatprep.subr.bf16.mxu0 0
      %4826 = vmatpush1.bf16.msra.mxu0 0
      %4827 = vmatprep.subr.bf16.mxu0 0
      %4828 = vmatpush1.bf16.msra.mxu0 0
      %4829 = vmatprep.subr.bf16.mxu0 0
      %4830 = vmatpush1.bf16.msra.mxu0 0
      %4831 = vmatprep.subr.bf16.mxu0 0
      %4832 = vmatpush1.bf16.msra.mxu0 0
      %4833 = vmatprep.subr.bf16.mxu0 0
      %4834 = vmatpush1.bf16.msra.mxu0 0
      %4835 = vmatprep.subr.bf16.mxu0 0
      %4836 = vmatpush1.bf16.msra.mxu0 0
      %4837 = vmatprep.subr.bf16.mxu0 0
      %4838 = vmatpush1.bf16.msra.mxu0 0
      %4839 = vmatprep.subr.bf16.mxu0 0
      %4840 = vmatpush1.bf16.msra.mxu0 0
      %4841 = vmatprep.subr.bf16.mxu0 0
      %4842 = vmatpush1.bf16.msra.mxu0 0
      %4843 = vmatprep.subr.bf16.mxu0 0
      %4844 = vmatpush1.bf16.msra.mxu0 0
      %4845 = vmatprep.subr.bf16.mxu0 0
      %4846 = vmatpush1.bf16.msra.mxu0 0
      %4847 = vmatprep.subr.bf16.mxu0 0
      %4848 = vmatpush1.bf16.msra.mxu0 0
      %4849 = vmatprep.subr.bf16.mxu0 0
      %4850 = vmatpush1.bf16.msra.mxu0 0
      %4851 = vmatprep.mubr.bf16.mxu0 0
      %4852 = vmatmul.mubr.bf16.gmra.mrb[0].mxu0 %v4817
      %v4853 = vpop.f32.mrb[0].mxu0
      %v4854 = vadd.f32 0.0, %v4853
      %v4855 = vpop.f32.mrb[0].mxu0
      %v4856 = vpop.f32.mrb[0].mxu0
      %v4857 = vpop.f32.mrb[0].mxu0
      %4858 = vdwg.mxu0
      %v4859 = vadd.f32 %v4796, %v4854
      %v4860 = vld [vmem:[%s4797 + $0x1] sm:$0xff]
      %v4861 = vpack.c.bf16 %v4860, %v4860
      %v4862 = vld [vmem:[%s848] sm:$0xf]
      %v4863 = vld [vmem:[%s848 + $0x4] sm:$0xf]
      %v4864 = vld [vmem:[%s848 + $0x8] sm:$0xf]
      %v4865 = vld [vmem:[%s848 + $0xc] sm:$0xf]
      %v4870 = vunpack.c.l.b16 %v4862
      %v4871 = vunpack.c.l.b16 %v4863
      %v4872 = vunpack.c.l.b16 %v4864
      %v4873 = vunpack.c.l.b16 %v4865
      %v4874 = vpack.c.b16 %v4871, %v4870
      %v4875 = vpack.c.b16 %v4873, %v4872
      %v4879 = vsel %vm356, %v4861, 0
      %4881 = vmatprep.subr.bf16.mxu0 0
      %4882 = vmatpush1.bf16.msra.mxu0 %v4874
      %4883 = vmatprep.subr.bf16.mxu0 0
      %4884 = vmatpush1.bf16.msra.mxu0 %v4875
      %4885 = vmatprep.subr.bf16.mxu0 0
      %4886 = vmatpush1.bf16.msra.mxu0 0
      %4887 = vmatprep.subr.bf16.mxu0 0
      %4888 = vmatpush1.bf16.msra.mxu0 0
      %4889 = vmatprep.subr.bf16.mxu0 0
      %4890 = vmatpush1.bf16.msra.mxu0 0
      %4891 = vmatprep.subr.bf16.mxu0 0
      %4892 = vmatpush1.bf16.msra.mxu0 0
      %4893 = vmatprep.subr.bf16.mxu0 0
      %4894 = vmatpush1.bf16.msra.mxu0 0
      %4895 = vmatprep.subr.bf16.mxu0 0
      %4896 = vmatpush1.bf16.msra.mxu0 0
      %4897 = vmatprep.subr.bf16.mxu0 0
      %4898 = vmatpush1.bf16.msra.mxu0 0
      %4899 = vmatprep.subr.bf16.mxu0 0
      %4900 = vmatpush1.bf16.msra.mxu0 0
      %4901 = vmatprep.subr.bf16.mxu0 0
      %4902 = vmatpush1.bf16.msra.mxu0 0
      %4903 = vmatprep.subr.bf16.mxu0 0
      %4904 = vmatpush1.bf16.msra.mxu0 0
      %4905 = vmatprep.subr.bf16.mxu0 0
      %4906 = vmatpush1.bf16.msra.mxu0 0
      %4907 = vmatprep.subr.bf16.mxu0 0
      %4908 = vmatpush1.bf16.msra.mxu0 0
      %4909 = vmatprep.subr.bf16.mxu0 0
      %4910 = vmatpush1.bf16.msra.mxu0 0
      %4911 = vmatprep.subr.bf16.mxu0 0
      %4912 = vmatpush1.bf16.msra.mxu0 0
      %4913 = vmatprep.mubr.bf16.mxu0 0
      %4914 = vmatmul.mubr.bf16.gmra.mrb[0].mxu0 %v4879
      %v4915 = vpop.f32.mrb[0].mxu0
      %v4916 = vadd.f32 0.0, %v4915
      %v4917 = vpop.f32.mrb[0].mxu0
      %v4918 = vpop.f32.mrb[0].mxu0
      %v4919 = vpop.f32.mrb[0].mxu0
      %4920 = vdwg.mxu0
      %v4921 = vadd.f32 %v4859, %v4916
      %v4922 = vld [vmem:[%s4797 + $0x2] sm:$0xff]
      %v4923 = vpack.c.bf16 %v4922, %v4922
      %v4924 = vld [vmem:[%s911] sm:$0xf]
      %v4925 = vld [vmem:[%s911 + $0x4] sm:$0xf]
      %v4926 = vld [vmem:[%s911 + $0x8] sm:$0xf]
      %v4927 = vld [vmem:[%s911 + $0xc] sm:$0xf]
      %v4932 = vunpack.c.l.b16 %v4924
      %v4933 = vunpack.c.l.b16 %v4925
      %v4934 = vunpack.c.l.b16 %v4926
      %v4935 = vunpack.c.l.b16 %v4927
      %v4936 = vpack.c.b16 %v4933, %v4932
      %v4937 = vpack.c.b16 %v4935, %v4934
      %v4941 = vsel %vm356, %v4923, 0
      %4943 = vmatprep.subr.bf16.mxu0 0
      %4944 = vmatpush1.bf16.msra.mxu0 %v4936
      %4945 = vmatprep.subr.bf16.mxu0 0
      %4946 = vmatpush1.bf16.msra.mxu0 %v4937
      %4947 = vmatprep.subr.bf16.mxu0 0
      %4948 = vmatpush1.bf16.msra.mxu0 0
      %4949 = vmatprep.subr.bf16.mxu0 0
      %4950 = vmatpush1.bf16.msra.mxu0 0
      %4951 = vmatprep.subr.bf16.mxu0 0
      %4952 = vmatpush1.bf16.msra.mxu0 0
      %4953 = vmatprep.subr.bf16.mxu0 0
      %4954 = vmatpush1.bf16.msra.mxu0 0
      %4955 = vmatprep.subr.bf16.mxu0 0
      %4956 = vmatpush1.bf16.msra.mxu0 0
      %4957 = vmatprep.subr.bf16.mxu0 0
      %4958 = vmatpush1.bf16.msra.mxu0 0
      %4959 = vmatprep.subr.bf16.mxu0 0
      %4960 = vmatpush1.bf16.msra.mxu0 0
      %4961 = vmatprep.subr.bf16.mxu0 0
      %4962 = vmatpush1.bf16.msra.mxu0 0
      %4963 = vmatprep.subr.bf16.mxu0 0
      %4964 = vmatpush1.bf16.msra.mxu0 0
      %4965 = vmatprep.subr.bf16.mxu0 0
      %4966 = vmatpush1.bf16.msra.mxu0 0
      %4967 = vmatprep.subr.bf16.mxu0 0
      %4968 = vmatpush1.bf16.msra.mxu0 0
      %4969 = vmatprep.subr.bf16.mxu0 0
      %4970 = vmatpush1.bf16.msra.mxu0 0
      %4971 = vmatprep.subr.bf16.mxu0 0
      %4972 = vmatpush1.bf16.msra.mxu0 0
      %4973 = vmatprep.subr.bf16.mxu0 0
      %4974 = vmatpush1.bf16.msra.mxu0 0
      %4975 = vmatprep.mubr.bf16.mxu0 0
      %4976 = vmatmul.mubr.bf16.gmra.mrb[0].mxu0 %v4941
      %v4977 = vpop.f32.mrb[0].mxu0
      %v4978 = vadd.f32 0.0, %v4977
      %v4979 = vpop.f32.mrb[0].mxu0
      %v4980 = vpop.f32.mrb[0].mxu0
      %v4981 = vpop.f32.mrb[0].mxu0
      %4982 = vdwg.mxu0
      %v4983 = vadd.f32 %v4921, %v4978
      %v4984 = vmul.f32 %v4983, 0.01
      %v4985 = vmax.f32 %v4983, %v4984
      %4986 = vst.msk [vmem:[%s226 + $0x38] sm:$0xff] %vm356, %v4985
      %s4987 = smul.u32 8, %s16
      %p4988 = scmp.lt.s32.totalorder %s4987, 15
      %s4989 = scalar_select %p4988, %s4987, 15
      %s4990 = smul.addr %s4989, 8
      %s4991 = scalar_lea.vmem %s5, %s4990
      // Predicated region
      $region41: #{encoder_forward.3} parent=39 // pred_check
        %p4992 = pneg %p144
      $region42: #{encoder_forward.3} parent=39 // pred_check_branch
        %4994 = sbr.rel (%p4992) target = $region44
      $region43: #{encoder_forward.3} parent=39 // pred_region
        %s4995 = smul.u32 8, %s16
      $region44: #{encoder_forward.3} parent=39 // pred_fallthru
        _
    $region40: #{encoder_forward.3} parent=5 // pred_fallthru
      _
    %p4996 = scmp.le.s32.totalorder 2, %s11
    // Predicated region
    $region45: #{encoder_forward.3} parent=5 // pred_check
      %p4997 = pneg %p4996
    $region46: #{encoder_forward.3} parent=5 // pred_check_branch
      %4999 = sbr.rel (%p4997) target = $region48
    $region47: #{encoder_forward.3} parent=5 // pred_region
      %s5000 = ssub.s32 %s11, 2
      // Predicated region
      $region49: #{encoder_forward.3} parent=47 // pred_check
        %p5001 = pneg %p150
      $region50: #{encoder_forward.3} parent=47 // pred_check_branch
        %5003 = sbr.rel (%p5001) target = $region52
      $region51: #{encoder_forward.3} parent=47 // pred_region
        %s5004 = smul.u32 8, %s17
        %p5005 = scmp.lt.s32.totalorder %s5004, 15
        %s5006 = scalar_select %p5005, %s5004, 15
        %s5007 = smul.addr %s5006, 8
        %s5008 = scalar_lea.vmem %s5, %s5007
      $region52: #{encoder_forward.3} parent=47 // pred_fallthru
        _
    $region48: #{encoder_forward.3} parent=5 // pred_fallthru
      _
  $region6: #{encoder_forward.3} parent=0 // loop_footer
    %s15 = sadd.s32 1, %s11
  $region7: #{encoder_forward.3} parent=0 // loop_footer_branch
    %10 = sbr.rel target = $region3
  $region8: #{encoder_forward.3} parent=0 // loop_exit
    _

</llo_original>
